<compile_context>
chip_gen: v5e
topology: v5e:2x2
jax: 0.10.0
libtpu: 0.0.40
codegen_flags: <defaults>
</compile_context>

<pallas_src>
import jax
import jax.numpy as jnp
from jax import lax
from jax.experimental import pallas as pl
from jax.experimental.pallas import tpu as pltpu


# --------------------------------------------------------------------------- #
# One-time weight / constant preparation (plain JAX, runs once outside the jit)
# --------------------------------------------------------------------------- #

def _pool_select(h_in, w_in):
    """(4, h_in//2*w_in//2, h_in*w_in) one-hot row-gather matrices for MaxPool2d(2,2)."""
    h_o, w_o = h_in // 2, w_in // 2
    hi = jnp.arange(h_o)[:, None]
    wi = jnp.arange(w_o)[None, :]
    mats = []
    for dy in range(2):
        for dx in range(2):
            src = (2 * hi + dy) * w_in + (2 * wi + dx)
            mats.append(jax.nn.one_hot(src.reshape(-1), h_in * w_in, dtype=jnp.float32))
    return jnp.stack(mats)


def _tap_select(h, w):
    """(9, h*w, h*w) 0/1 row-gather matrices for the 9 taps of a 3x3 / padding=1 conv
    (rows whose source pixel falls into the zero padding are all-zero)."""
    hi = jnp.arange(h)[:, None]
    wi = jnp.arange(w)[None, :]
    mats = []
    for dy in range(3):
        for dx in range(3):
            hs = hi + dy - 1
            ws = wi + dx - 1
            valid = (hs >= 0) & (hs < h) & (ws >= 0) & (ws < w)
            src = jnp.where(valid, hs * w + ws, 0).reshape(-1)
            m = jax.nn.one_hot(src, h * w, dtype=jnp.float32)
            m = m * valid.reshape(-1, 1).astype(jnp.float32)
            mats.append(m)
    return jnp.stack(mats)


def _convt2x2_as_matrix(wt, h_in, w_in):
    """ConvTranspose2d(k=2, stride=2) as a dense (Cin*h_in*w_in, Cout*2h_in*2w_in) matrix
    with channel-major (PyTorch NCHW-flatten) row/column ordering."""
    c_in, c_out, kh, kw = wt.shape
    h_out, w_out = 2 * h_in, 2 * w_in
    h = jnp.arange(h_in)[:, None, None, None]
    w = jnp.arange(w_in)[None, :, None, None]
    dy = jnp.arange(kh)[None, None, :, None]
    dx = jnp.arange(kw)[None, None, None, :]
    pout = (2 * h + dy) * w_out + (2 * w + dx)                        # (h_in, w_in, kh, kw)
    onehot = jax.nn.one_hot(pout, h_out * w_out, dtype=jnp.float32)   # (h,w,kh,kw,HoWo)
    m = jnp.einsum("cokl,hwklp->chwop", wt.astype(jnp.float32), onehot)
    return m.reshape(c_in * h_in * w_in, c_out * h_out * w_out)


def prepare_params(params, input_shape, feature_dim):
    """Convert PyTorch-layout parameters into the fused-kernel operand set."""
    C, H, W = input_shape
    H2, W2 = H // 2, W // 2
    H4, W4 = H // 4, W // 4
    bf16, f32 = jnp.bfloat16, jnp.float32
    return {
        # encoder conv1 (Cout=16, Cin, 3, 3) -> (9*Cin, 16), rows ordered (dy, dx, ci)
        "w1m": jnp.transpose(params["enc_w1"], (2, 3, 1, 0)).reshape(9 * C, 16).astype(bf16),
        "b1": params["enc_b1"].reshape(1, 16).astype(f32),
        # encoder conv2 (4, 16, 3, 3) -> per-tap (16, 4) blocks
        "w2m": jnp.transpose(params["enc_w2"], (2, 3, 1, 0)).reshape(9, 16, 4).astype(bf16),
        "b2": params["enc_b2"].reshape(1, 4).astype(f32),
        # exact 0/1 gather matrices (maxpool / conv2 tap shifts) - kept f32 for exactness
        "s1": _pool_select(H, W),              # (4, H2*W2, H*W)
        "t2": _tap_select(H2, W2),             # (9, H2*W2, H2*W2)
        "s2": _pool_select(H2, W2),            # (4, H4*W4, H2*W2)
        # mu / logvar: rows of the (flat, feat) weight regrouped channel-major
        "wmu": params["mu_w"].reshape(4, H4 * W4, feature_dim).astype(f32),
        "bmu": params["mu_b"].astype(f32),
        "wlv": params["lv_w"].reshape(4, H4 * W4, feature_dim).astype(f32),
        "blv": params["lv_b"].astype(f32),
        # decoder linear
        "wd": params["dec_w"].astype(bf16),
        "bd": params["dec_b"].astype(f32),
        # ConvTranspose2d layers (and the channel-major Unflatten) as dense matrices
        "m1": _convt2x2_as_matrix(params["ct1_w"], H4, W4).astype(bf16),
        "bm1": jnp.repeat(params["ct1_b"], H2 * W2).reshape(1, -1).astype(f32),
        "m2": _convt2x2_as_matrix(params["ct2_w"], H2, W2).astype(bf16),
        "bm2": jnp.repeat(params["ct2_b"], H * W).reshape(1, -1).astype(f32),
        # classifier
        "wc": params["cls_w"].astype(bf16),
        "bc": params["cls_b"].astype(f32),
    }


# --------------------------------------------------------------------------- #
# The fused Pallas kernel (one grid step == one batch element)
# --------------------------------------------------------------------------- #

def _netcnn_kernel(
    patches_ref, w1m_ref, b1_ref, s1_ref, t2_ref, w2m_ref, b2_ref, s2_ref,
    wmu_ref, bmu_ref, wlv_ref, blv_ref, eps_ref, wd_ref, bd_ref,
    m1_ref, bm1_ref, m2_ref, bm2_ref, wc_ref, bc_ref,
    xr_ref, z_ref, mu_ref, lv_ref, qy_ref,
):
    f32 = jnp.float32
    bf16 = jnp.bfloat16

    # ---- encoder conv1 (3x3, pad=1) + ReLU: one K=9*Cin matmul over im2col patches ----
    patches = patches_ref[0]                                              # (H*W, 9*Cin)
    h1 = jnp.dot(patches, w1m_ref[...], preferred_element_type=f32) + b1_ref[...]
    h1 = jnp.maximum(h1, 0.0)                                             # (H*W, 16)

    # ---- MaxPool2d(2,2): 4 exact gather-matmuls + elementwise max ----
    p1 = jnp.dot(s1_ref[0], h1, preferred_element_type=f32)
    for q in range(1, s1_ref.shape[0]):
        p1 = jnp.maximum(p1, jnp.dot(s1_ref[q], h1, preferred_element_type=f32))
    # p1: (H/2*W/2, 16)

    # ---- encoder conv2 (3x3, pad=1, no ReLU): 9 taps, spatial shift via gather-matmul ----
    p1b = p1.astype(bf16)
    acc = jnp.zeros((t2_ref.shape[1], w2m_ref.shape[2]), f32)
    for t in range(t2_ref.shape[0]):
        u = jnp.dot(p1b, w2m_ref[t], preferred_element_type=f32)          # (H/2*W/2, 4)
        acc = acc + jnp.dot(t2_ref[t], u, preferred_element_type=f32)
    h2 = acc + b2_ref[...]                                                # (H/2*W/2, 4)

    # ---- MaxPool2d(2,2) ----
    p2 = jnp.dot(s2_ref[0], h2, preferred_element_type=f32)
    for q in range(1, s2_ref.shape[0]):
        p2 = jnp.maximum(p2, jnp.dot(s2_ref[q], h2, preferred_element_type=f32))
    # p2: (H/4*W/4, 4)  rows = pixel, lanes = channel

    # ---- mu / logvar heads (PyTorch channel-major Flatten folded into the weights) ----
    lane = lax.broadcasted_iota(jnp.int32, p2.shape, 1)

    def head(w_ref, b_ref):
        acc_h = jnp.zeros((p2.shape[0], w_ref.shape[2]), f32)
        for c in range(w_ref.shape[0]):
            col = jnp.sum(jnp.where(lane == c, p2, 0.0), axis=1, keepdims=True)
            acc_h = acc_h + col * w_ref[c]
        return jnp.sum(acc_h, axis=0, keepdims=True) + b_ref[...]          # (1, feat)

    mu = head(wmu_ref, bmu_ref)
    logvar = head(wlv_ref, blv_ref)

    # ---- reparameterized sample (Normal prior): z = mu + exp(0.5*logvar) * eps ----
    z = mu + jnp.exp(0.5 * logvar) * eps_ref[0]                            # (1, feat)

    # ---- decoder: Linear+ReLU, then the two ConvTranspose2d(2,s=2) as dense matmuls ----
    zb = z.astype(bf16)
    d = jnp.dot(zb, wd_ref[...], preferred_element_type=f32) + bd_ref[...]
    d = jnp.maximum(d, 0.0)                                                # (1, 4*H/4*W/4)
    g = jnp.dot(d.astype(bf16), m1_ref[...], preferred_element_type=f32) + bm1_ref[...]
    g = jnp.maximum(g, 0.0)                                                # (1, 16*H/2*W/2)
    r = jnp.dot(g.astype(bf16), m2_ref[...], preferred_element_type=f32) + bm2_ref[...]
    xr = pl.reciprocal(1.0 + jnp.exp(-r), approx=True)                     # sigmoid (EUP)

    # ---- classifier: softmax(z @ Wc + bc) ----
    logits = jnp.dot(zb, wc_ref[...], preferred_element_type=f32) + bc_ref[...]
    logits = logits - jnp.max(logits, axis=-1, keepdims=True)
    e = jnp.exp(logits)
    qy = e * pl.reciprocal(jnp.sum(e, axis=-1, keepdims=True), approx=True)

    # ---- stores (xr is NCHW-flattened -> lane-dense 1024-wide store) ----
    xr_ref[0] = xr
    z_ref[0] = z
    mu_ref[0] = mu
    lv_ref[0] = logvar
    qy_ref[0] = qy


# --------------------------------------------------------------------------- #
# Forward wrapper
# --------------------------------------------------------------------------- #

def net_cnn_forward(prep, x_nchw, eps):
    """Returns (xr, z, mu, logvar, qycz) exactly like NetCNN.forward (prior='normal')."""
    B, C, H, W = x_nchw.shape
    feat = eps.shape[1]
    ncls = prep["bc"].shape[1]
    HW = H * W

    # Tiny input prep: NCHW->NHWC + im2col of the (16 KB) raw input. Everything downstream
    # stays inside the single VMEM-resident kernel (no HBM intermediates between layers).
    x = jnp.transpose(x_nchw, (0, 2, 3, 1)).astype(jnp.float32)
    xp = jnp.pad(x, ((0, 0), (1, 1), (1, 1), (0, 0)))
    cols = [xp[:, dy:dy + H, dx:dx + W, :] for dy in range(3) for dx in range(3)]
    patches = jnp.concatenate(cols, axis=-1).reshape(B, HW, 9 * C).astype(jnp.bfloat16)
    eps3 = eps.reshape(B, 1, feat).astype(jnp.float32)

    def const_spec(arr):
        nd = arr.ndim
        return pl.BlockSpec(arr.shape, lambda b, _nd=nd: (0,) * _nd)

    in_arrays = (
        patches, prep["w1m"], prep["b1"], prep["s1"], prep["t2"], prep["w2m"],
        prep["b2"], prep["s2"], prep["wmu"], prep["bmu"], prep["wlv"], prep["blv"],
        eps3, prep["wd"], prep["bd"], prep["m1"], prep["bm1"], prep["m2"],
        prep["bm2"], prep["wc"], prep["bc"],
    )
    in_specs = (
        [pl.BlockSpec((1, HW, 9 * C), lambda b: (b, 0, 0))]        # per-batch patches
        + [const_spec(a) for a in in_arrays[1:12]]                 # shared weights / gathers
        + [pl.BlockSpec((1, 1, feat), lambda b: (b, 0, 0))]        # per-batch eps
        + [const_spec(a) for a in in_arrays[13:]]                  # shared decoder / cls
    )
    out_shape = (
        jax.ShapeDtypeStruct((B, 1, C * H * W), jnp.float32),      # xr (NCHW-flattened)
        jax.ShapeDtypeStruct((B, 1, feat), jnp.float32),           # z
        jax.ShapeDtypeStruct((B, 1, feat), jnp.float32),           # mu
        jax.ShapeDtypeStruct((B, 1, feat), jnp.float32),           # logvar
        jax.ShapeDtypeStruct((B, 1, ncls), jnp.float32),           # qycz
    )
    out_specs = (
        pl.BlockSpec((1, 1, C * H * W), lambda b: (b, 0, 0)),
        pl.BlockSpec((1, 1, feat), lambda b: (b, 0, 0)),
        pl.BlockSpec((1, 1, feat), lambda b: (b, 0, 0)),
        pl.BlockSpec((1, 1, feat), lambda b: (b, 0, 0)),
        pl.BlockSpec((1, 1, ncls), lambda b: (b, 0, 0)),
    )

    xr2, z3, mu3, lv3, qy3 = pl.pallas_call(
        _netcnn_kernel,
        out_shape=out_shape,
        grid=(B,),
        in_specs=in_specs,
        out_specs=out_specs,
        compiler_params=pltpu.CompilerParams(
            dimension_semantics=("parallel",),   # batch axis -> both TensorCores on v7x
        ),
    )(*in_arrays)

    xr = xr2.reshape(B, C, H, W)   # NCHW-flattened -> NCHW: pure reshape, no transpose
    return (xr, z3.reshape(B, feat), mu3.reshape(B, feat),
            lv3.reshape(B, feat), qy3.reshape(B, ncls))


# --------------------------------------------------------------------------- #
# Parameter init (PyTorch-equivalent layouts)
# --------------------------------------------------------------------------- #

def init_params(key, input_shape, feature_dim, num_classes):
    C, H, W = input_shape
    flat = 4 * H * W // 16
    ks = jax.random.split(key, 16)

    def w(k, shape, scale=0.1):
        return scale * jax.random.normal(k, shape, dtype=jnp.float32)

    # TODO(synk): pz_params / pz() and freeze_* are training-time utilities with no
    # effect on forward(); they are intentionally not ported.
    return {
        # encoder convs, PyTorch layout (Cout, Cin, 3, 3)
        "enc_w1": w(ks[0], (16, C, 3, 3)), "enc_b1": w(ks[1], (16,)),
        "enc_w2": w(ks[2], (4, 16, 3, 3)), "enc_b2": w(ks[3], (4,)),
        # mu / logvar linears, stored (in, out)
        "mu_w": w(ks[4], (flat, feature_dim)), "mu_b": w(ks[5], (1, feature_dim)),
        "lv_w": w(ks[6], (flat, feature_dim)), "lv_b": w(ks[7], (1, feature_dim)),
        # decoder linear
        "dec_w": w(ks[8], (feature_dim, flat)), "dec_b": w(ks[9], (1, flat)),
        # decoder transposed convs, PyTorch layout (Cin, Cout, 2, 2)
        "ct1_w": w(ks[10], (4, 16, 2, 2)), "ct1_b": w(ks[11], (16,)),
        "ct2_w": w(ks[12], (16, C, 2, 2)), "ct2_b": w(ks[13], (C,)),
        # classifier
        "cls_w": w(ks[14], (feature_dim, num_classes)), "cls_b": w(ks[15], (1, num_classes)),
    }


# ----------------------------------- main ----------------------------------- #

if __name__ == "__main__":
    input_shape = (4, 16, 16)   # (C, H, W)
    feature_dim = 32
    num_classes = 10
    batch = 2

    key = jax.random.PRNGKey(0)
    k_param, k_x, k_eps = jax.random.split(key, 3)
    params = init_params(k_param, input_shape, feature_dim, num_classes)
    prep = prepare_params(params, input_shape, feature_dim)

    x = jax.random.normal(k_x, (batch,) + input_shape, dtype=jnp.float32)     # NCHW
    eps = jax.random.normal(k_eps, (batch, feature_dim), dtype=jnp.float32)   # rsample noise

    fwd = jax.jit(net_cnn_forward)
    xr, z, mu, logvar, qycz = fwd(prep, x, eps)
    jax.block_until_ready((xr, z, mu, logvar, qycz))

    assert xr.shape == (batch,) + input_shape
    assert z.shape == (batch, feature_dim)
    assert mu.shape == (batch, feature_dim)
    assert logvar.shape == (batch, feature_dim)
    assert qycz.shape == (batch, num_classes)
    print("KERNEL_OK")
</pallas_src>

<mosaic_0001>
module attributes {stable_mosaic.version = 11 : i64} {
  func.func @_netcnn_kernel(%arg0: i32, %arg1: memref<1x256x36xbf16, #tpu.memory_space<vmem>>, %arg2: memref<36x16xbf16, #tpu.memory_space<vmem>>, %arg3: memref<1x16xf32, #tpu.memory_space<vmem>>, %arg4: memref<4x64x256xf32, #tpu.memory_space<vmem>>, %arg5: memref<9x64x64xf32, #tpu.memory_space<vmem>>, %arg6: memref<9x16x4xbf16, #tpu.memory_space<vmem>>, %arg7: memref<1x4xf32, #tpu.memory_space<vmem>>, %arg8: memref<4x16x64xf32, #tpu.memory_space<vmem>>, %arg9: memref<4x16x32xf32, #tpu.memory_space<vmem>>, %arg10: memref<1x32xf32, #tpu.memory_space<vmem>>, %arg11: memref<4x16x32xf32, #tpu.memory_space<vmem>>, %arg12: memref<1x32xf32, #tpu.memory_space<vmem>>, %arg13: memref<1x1x32xf32, #tpu.memory_space<vmem>>, %arg14: memref<32x64xbf16, #tpu.memory_space<vmem>>, %arg15: memref<1x64xf32, #tpu.memory_space<vmem>>, %arg16: memref<64x1024xbf16, #tpu.memory_space<vmem>>, %arg17: memref<1x1024xf32, #tpu.memory_space<vmem>>, %arg18: memref<1024x1024xbf16, #tpu.memory_space<vmem>>, %arg19: memref<1x1024xf32, #tpu.memory_space<vmem>>, %arg20: memref<32x10xbf16, #tpu.memory_space<vmem>>, %arg21: memref<1x10xf32, #tpu.memory_space<vmem>>, %arg22: memref<1x1x1024xf32, #tpu.memory_space<vmem>>, %arg23: memref<1x1x32xf32, #tpu.memory_space<vmem>>, %arg24: memref<1x1x32xf32, #tpu.memory_space<vmem>>, %arg25: memref<1x1x32xf32, #tpu.memory_space<vmem>>, %arg26: memref<1x1x10xf32, #tpu.memory_space<vmem>>) attributes {dimension_semantics = [#tpu.dimension_semantics<parallel>], iteration_bounds = array<i64: 2>, scalar_prefetch = 0 : i64, scratch_operands = 0 : i64, tpu.core_type = #tpu.core_type<tc>, window_params = [{transform_indices = @transform_0, window_bounds = array<i64: 1, 256, 36>}, {pipeline_mode = #tpu.pipeline_mode<synchronous>, transform_indices = @transform_1, window_bounds = array<i64: 36, 16>}, {pipeline_mode = #tpu.pipeline_mode<synchronous>, transform_indices = @transform_2, window_bounds = array<i64: 1, 16>}, {pipeline_mode = #tpu.pipeline_mode<synchronous>, transform_indices = @transform_3, window_bounds = array<i64: 4, 64, 256>}, {pipeline_mode = #tpu.pipeline_mode<synchronous>, transform_indices = @transform_4, window_bounds = array<i64: 9, 64, 64>}, {pipeline_mode = #tpu.pipeline_mode<synchronous>, transform_indices = @transform_5, window_bounds = array<i64: 9, 16, 4>}, {pipeline_mode = #tpu.pipeline_mode<synchronous>, transform_indices = @transform_6, window_bounds = array<i64: 1, 4>}, {pipeline_mode = #tpu.pipeline_mode<synchronous>, transform_indices = @transform_7, window_bounds = array<i64: 4, 16, 64>}, {pipeline_mode = #tpu.pipeline_mode<synchronous>, transform_indices = @transform_8, window_bounds = array<i64: 4, 16, 32>}, {pipeline_mode = #tpu.pipeline_mode<synchronous>, transform_indices = @transform_9, window_bounds = array<i64: 1, 32>}, {pipeline_mode = #tpu.pipeline_mode<synchronous>, transform_indices = @transform_10, window_bounds = array<i64: 4, 16, 32>}, {pipeline_mode = #tpu.pipeline_mode<synchronous>, transform_indices = @transform_11, window_bounds = array<i64: 1, 32>}, {transform_indices = @transform_12, window_bounds = array<i64: 1, 1, 32>}, {pipeline_mode = #tpu.pipeline_mode<synchronous>, transform_indices = @transform_13, window_bounds = array<i64: 32, 64>}, {pipeline_mode = #tpu.pipeline_mode<synchronous>, transform_indices = @transform_14, window_bounds = array<i64: 1, 64>}, {pipeline_mode = #tpu.pipeline_mode<synchronous>, transform_indices = @transform_15, window_bounds = array<i64: 64, 1024>}, {pipeline_mode = #tpu.pipeline_mode<synchronous>, transform_indices = @transform_16, window_bounds = array<i64: 1, 1024>}, {pipeline_mode = #tpu.pipeline_mode<synchronous>, transform_indices = @transform_17, window_bounds = array<i64: 1024, 1024>}, {pipeline_mode = #tpu.pipeline_mode<synchronous>, transform_indices = @transform_18, window_bounds = array<i64: 1, 1024>}, {pipeline_mode = #tpu.pipeline_mode<synchronous>, transform_indices = @transform_19, window_bounds = array<i64: 32, 10>}, {pipeline_mode = #tpu.pipeline_mode<synchronous>, transform_indices = @transform_20, window_bounds = array<i64: 1, 10>}, {transform_indices = @transform_21, window_bounds = array<i64: 1, 1, 1024>}, {transform_indices = @transform_22, window_bounds = array<i64: 1, 1, 32>}, {transform_indices = @transform_23, window_bounds = array<i64: 1, 1, 32>}, {transform_indices = @transform_24, window_bounds = array<i64: 1, 1, 32>}, {transform_indices = @transform_25, window_bounds = array<i64: 1, 1, 10>}]} {
    %c0 = arith.constant 0 : index
    %c0_0 = arith.constant 0 : index
    %c0_1 = arith.constant 0 : index
    %0 = vector.load %arg1[%c0, %c0_0, %c0_1] : memref<1x256x36xbf16, #tpu.memory_space<vmem>>, vector<1x256x36xbf16>
    %1 = vector.shape_cast %0 : vector<1x256x36xbf16> to vector<256x36xbf16>
    %c0_2 = arith.constant 0 : index
    %c0_3 = arith.constant 0 : index
    %2 = vector.load %arg2[%c0_2, %c0_3] : memref<36x16xbf16, #tpu.memory_space<vmem>>, vector<36x16xbf16>
    %cst = arith.constant dense<0.000000e+00> : vector<256x16xf32>
    %3 = tpu.matmul %1, %2, %cst {dimension_numbers = #tpu.dot_dimension_numbers<[1], [0], [0], [1], [0, 0, 1, 1], [], []>} : vector<256x36xbf16>, vector<36x16xbf16>, vector<256x16xf32> -> vector<256x16xf32>
    %c0_4 = arith.constant 0 : index
    %c0_5 = arith.constant 0 : index
    %4 = vector.load %arg3[%c0_4, %c0_5] : memref<1x16xf32, #tpu.memory_space<vmem>>, vector<1x16xf32>
    %5 = vector.broadcast %4 : vector<1x16xf32> to vector<256x16xf32>
    %6 = arith.addf %3, %5 : vector<256x16xf32>
    %cst_6 = arith.constant 0.000000e+00 : f32
    %7 = vector.broadcast %cst_6 : f32 to vector<256x16xf32>
    %8 = arith.maximumf %6, %7 : vector<256x16xf32>
    %c0_7 = arith.constant 0 : index
    %c0_8 = arith.constant 0 : index
    %c0_9 = arith.constant 0 : index
    %9 = vector.load %arg4[%c0_7, %c0_8, %c0_9] : memref<4x64x256xf32, #tpu.memory_space<vmem>>, vector<1x64x256xf32>
    %10 = vector.shape_cast %9 : vector<1x64x256xf32> to vector<64x256xf32>
    %cst_10 = arith.constant dense<0.000000e+00> : vector<64x16xf32>
    %11 = tpu.matmul %10, %8, %cst_10 {dimension_numbers = #tpu.dot_dimension_numbers<[1], [0], [0], [1], [0, 0, 1, 1], [], []>} : vector<64x256xf32>, vector<256x16xf32>, vector<64x16xf32> -> vector<64x16xf32>
    %c1 = arith.constant 1 : index
    %c0_11 = arith.constant 0 : index
    %c0_12 = arith.constant 0 : index
    %12 = vector.load %arg4[%c1, %c0_11, %c0_12] : memref<4x64x256xf32, #tpu.memory_space<vmem>>, vector<1x64x256xf32>
    %13 = vector.shape_cast %12 : vector<1x64x256xf32> to vector<64x256xf32>
    %cst_13 = arith.constant dense<0.000000e+00> : vector<64x16xf32>
    %14 = tpu.matmul %13, %8, %cst_13 {dimension_numbers = #tpu.dot_dimension_numbers<[1], [0], [0], [1], [0, 0, 1, 1], [], []>} : vector<64x256xf32>, vector<256x16xf32>, vector<64x16xf32> -> vector<64x16xf32>
    %15 = arith.maximumf %11, %14 : vector<64x16xf32>
    %c2 = arith.constant 2 : index
    %c0_14 = arith.constant 0 : index
    %c0_15 = arith.constant 0 : index
    %16 = vector.load %arg4[%c2, %c0_14, %c0_15] : memref<4x64x256xf32, #tpu.memory_space<vmem>>, vector<1x64x256xf32>
    %17 = vector.shape_cast %16 : vector<1x64x256xf32> to vector<64x256xf32>
    %cst_16 = arith.constant dense<0.000000e+00> : vector<64x16xf32>
    %18 = tpu.matmul %17, %8, %cst_16 {dimension_numbers = #tpu.dot_dimension_numbers<[1], [0], [0], [1], [0, 0, 1, 1], [], []>} : vector<64x256xf32>, vector<256x16xf32>, vector<64x16xf32> -> vector<64x16xf32>
    %19 = arith.maximumf %15, %18 : vector<64x16xf32>
    %c3 = arith.constant 3 : index
    %c0_17 = arith.constant 0 : index
    %c0_18 = arith.constant 0 : index
    %20 = vector.load %arg4[%c3, %c0_17, %c0_18] : memref<4x64x256xf32, #tpu.memory_space<vmem>>, vector<1x64x256xf32>
    %21 = vector.shape_cast %20 : vector<1x64x256xf32> to vector<64x256xf32>
    %cst_19 = arith.constant dense<0.000000e+00> : vector<64x16xf32>
    %22 = tpu.matmul %21, %8, %cst_19 {dimension_numbers = #tpu.dot_dimension_numbers<[1], [0], [0], [1], [0, 0, 1, 1], [], []>} : vector<64x256xf32>, vector<256x16xf32>, vector<64x16xf32> -> vector<64x16xf32>
    %23 = arith.maximumf %19, %22 : vector<64x16xf32>
    %24 = arith.truncf %23 : vector<64x16xf32> to vector<64x16xbf16>
    %cst_20 = arith.constant 0.000000e+00 : f32
    %25 = vector.broadcast %cst_20 : f32 to vector<64x4xf32>
    %c0_21 = arith.constant 0 : index
    %c0_22 = arith.constant 0 : index
    %c0_23 = arith.constant 0 : index
    %26 = vector.load %arg6[%c0_21, %c0_22, %c0_23] : memref<9x16x4xbf16, #tpu.memory_space<vmem>>, vector<1x16x4xbf16>
    %27 = vector.shape_cast %26 : vector<1x16x4xbf16> to vector<16x4xbf16>
    %cst_24 = arith.constant dense<0.000000e+00> : vector<64x4xf32>
    %28 = tpu.matmul %24, %27, %cst_24 {dimension_numbers = #tpu.dot_dimension_numbers<[1], [0], [0], [1], [0, 0, 1, 1], [], []>} : vector<64x16xbf16>, vector<16x4xbf16>, vector<64x4xf32> -> vector<64x4xf32>
    %c0_25 = arith.constant 0 : index
    %c0_26 = arith.constant 0 : index
    %c0_27 = arith.constant 0 : index
    %29 = vector.load %arg5[%c0_25, %c0_26, %c0_27] : memref<9x64x64xf32, #tpu.memory_space<vmem>>, vector<1x64x64xf32>
    %30 = vector.shape_cast %29 : vector<1x64x64xf32> to vector<64x64xf32>
    %cst_28 = arith.constant dense<0.000000e+00> : vector<64x4xf32>
    %31 = tpu.matmul %30, %28, %cst_28 {dimension_numbers = #tpu.dot_dimension_numbers<[1], [0], [0], [1], [0, 0, 1, 1], [], []>} : vector<64x64xf32>, vector<64x4xf32>, vector<64x4xf32> -> vector<64x4xf32>
    %32 = arith.addf %25, %31 : vector<64x4xf32>
    %c1_29 = arith.constant 1 : index
    %c0_30 = arith.constant 0 : index
    %c0_31 = arith.constant 0 : index
    %33 = vector.load %arg6[%c1_29, %c0_30, %c0_31] : memref<9x16x4xbf16, #tpu.memory_space<vmem>>, vector<1x16x4xbf16>
    %34 = vector.shape_cast %33 : vector<1x16x4xbf16> to vector<16x4xbf16>
    %cst_32 = arith.constant dense<0.000000e+00> : vector<64x4xf32>
    %35 = tpu.matmul %24, %34, %cst_32 {dimension_numbers = #tpu.dot_dimension_numbers<[1], [0], [0], [1], [0, 0, 1, 1], [], []>} : vector<64x16xbf16>, vector<16x4xbf16>, vector<64x4xf32> -> vector<64x4xf32>
    %c1_33 = arith.constant 1 : index
    %c0_34 = arith.constant 0 : index
    %c0_35 = arith.constant 0 : index
    %36 = vector.load %arg5[%c1_33, %c0_34, %c0_35] : memref<9x64x64xf32, #tpu.memory_space<vmem>>, vector<1x64x64xf32>
    %37 = vector.shape_cast %36 : vector<1x64x64xf32> to vector<64x64xf32>
    %cst_36 = arith.constant dense<0.000000e+00> : vector<64x4xf32>
    %38 = tpu.matmul %37, %35, %cst_36 {dimension_numbers = #tpu.dot_dimension_numbers<[1], [0], [0], [1], [0, 0, 1, 1], [], []>} : vector<64x64xf32>, vector<64x4xf32>, vector<64x4xf32> -> vector<64x4xf32>
    %39 = arith.addf %32, %38 : vector<64x4xf32>
    %c2_37 = arith.constant 2 : index
    %c0_38 = arith.constant 0 : index
    %c0_39 = arith.constant 0 : index
    %40 = vector.load %arg6[%c2_37, %c0_38, %c0_39] : memref<9x16x4xbf16, #tpu.memory_space<vmem>>, vector<1x16x4xbf16>
    %41 = vector.shape_cast %40 : vector<1x16x4xbf16> to vector<16x4xbf16>
    %cst_40 = arith.constant dense<0.000000e+00> : vector<64x4xf32>
    %42 = tpu.matmul %24, %41, %cst_40 {dimension_numbers = #tpu.dot_dimension_numbers<[1], [0], [0], [1], [0, 0, 1, 1], [], []>} : vector<64x16xbf16>, vector<16x4xbf16>, vector<64x4xf32> -> vector<64x4xf32>
    %c2_41 = arith.constant 2 : index
    %c0_42 = arith.constant 0 : index
    %c0_43 = arith.constant 0 : index
    %43 = vector.load %arg5[%c2_41, %c0_42, %c0_43] : memref<9x64x64xf32, #tpu.memory_space<vmem>>, vector<1x64x64xf32>
    %44 = vector.shape_cast %43 : vector<1x64x64xf32> to vector<64x64xf32>
    %cst_44 = arith.constant dense<0.000000e+00> : vector<64x4xf32>
    %45 = tpu.matmul %44, %42, %cst_44 {dimension_numbers = #tpu.dot_dimension_numbers<[1], [0], [0], [1], [0, 0, 1, 1], [], []>} : vector<64x64xf32>, vector<64x4xf32>, vector<64x4xf32> -> vector<64x4xf32>
    %46 = arith.addf %39, %45 : vector<64x4xf32>
    %c3_45 = arith.constant 3 : index
    %c0_46 = arith.constant 0 : index
    %c0_47 = arith.constant 0 : index
    %47 = vector.load %arg6[%c3_45, %c0_46, %c0_47] : memref<9x16x4xbf16, #tpu.memory_space<vmem>>, vector<1x16x4xbf16>
    %48 = vector.shape_cast %47 : vector<1x16x4xbf16> to vector<16x4xbf16>
    %cst_48 = arith.constant dense<0.000000e+00> : vector<64x4xf32>
    %49 = tpu.matmul %24, %48, %cst_48 {dimension_numbers = #tpu.dot_dimension_numbers<[1], [0], [0], [1], [0, 0, 1, 1], [], []>} : vector<64x16xbf16>, vector<16x4xbf16>, vector<64x4xf32> -> vector<64x4xf32>
    %c3_49 = arith.constant 3 : index
    %c0_50 = arith.constant 0 : index
    %c0_51 = arith.constant 0 : index
    %50 = vector.load %arg5[%c3_49, %c0_50, %c0_51] : memref<9x64x64xf32, #tpu.memory_space<vmem>>, vector<1x64x64xf32>
    %51 = vector.shape_cast %50 : vector<1x64x64xf32> to vector<64x64xf32>
    %cst_52 = arith.constant dense<0.000000e+00> : vector<64x4xf32>
    %52 = tpu.matmul %51, %49, %cst_52 {dimension_numbers = #tpu.dot_dimension_numbers<[1], [0], [0], [1], [0, 0, 1, 1], [], []>} : vector<64x64xf32>, vector<64x4xf32>, vector<64x4xf32> -> vector<64x4xf32>
    %53 = arith.addf %46, %52 : vector<64x4xf32>
    %c4 = arith.constant 4 : index
    %c0_53 = arith.constant 0 : index
    %c0_54 = arith.constant 0 : index
    %54 = vector.load %arg6[%c4, %c0_53, %c0_54] : memref<9x16x4xbf16, #tpu.memory_space<vmem>>, vector<1x16x4xbf16>
    %55 = vector.shape_cast %54 : vector<1x16x4xbf16> to vector<16x4xbf16>
    %cst_55 = arith.constant dense<0.000000e+00> : vector<64x4xf32>
    %56 = tpu.matmul %24, %55, %cst_55 {dimension_numbers = #tpu.dot_dimension_numbers<[1], [0], [0], [1], [0, 0, 1, 1], [], []>} : vector<64x16xbf16>, vector<16x4xbf16>, vector<64x4xf32> -> vector<64x4xf32>
    %c4_56 = arith.constant 4 : index
    %c0_57 = arith.constant 0 : index
    %c0_58 = arith.constant 0 : index
    %57 = vector.load %arg5[%c4_56, %c0_57, %c0_58] : memref<9x64x64xf32, #tpu.memory_space<vmem>>, vector<1x64x64xf32>
    %58 = vector.shape_cast %57 : vector<1x64x64xf32> to vector<64x64xf32>
    %cst_59 = arith.constant dense<0.000000e+00> : vector<64x4xf32>
    %59 = tpu.matmul %58, %56, %cst_59 {dimension_numbers = #tpu.dot_dimension_numbers<[1], [0], [0], [1], [0, 0, 1, 1], [], []>} : vector<64x64xf32>, vector<64x4xf32>, vector<64x4xf32> -> vector<64x4xf32>
    %60 = arith.addf %53, %59 : vector<64x4xf32>
    %c5 = arith.constant 5 : index
    %c0_60 = arith.constant 0 : index
    %c0_61 = arith.constant 0 : index
    %61 = vector.load %arg6[%c5, %c0_60, %c0_61] : memref<9x16x4xbf16, #tpu.memory_space<vmem>>, vector<1x16x4xbf16>
    %62 = vector.shape_cast %61 : vector<1x16x4xbf16> to vector<16x4xbf16>
    %cst_62 = arith.constant dense<0.000000e+00> : vector<64x4xf32>
    %63 = tpu.matmul %24, %62, %cst_62 {dimension_numbers = #tpu.dot_dimension_numbers<[1], [0], [0], [1], [0, 0, 1, 1], [], []>} : vector<64x16xbf16>, vector<16x4xbf16>, vector<64x4xf32> -> vector<64x4xf32>
    %c5_63 = arith.constant 5 : index
    %c0_64 = arith.constant 0 : index
    %c0_65 = arith.constant 0 : index
    %64 = vector.load %arg5[%c5_63, %c0_64, %c0_65] : memref<9x64x64xf32, #tpu.memory_space<vmem>>, vector<1x64x64xf32>
    %65 = vector.shape_cast %64 : vector<1x64x64xf32> to vector<64x64xf32>
    %cst_66 = arith.constant dense<0.000000e+00> : vector<64x4xf32>
    %66 = tpu.matmul %65, %63, %cst_66 {dimension_numbers = #tpu.dot_dimension_numbers<[1], [0], [0], [1], [0, 0, 1, 1], [], []>} : vector<64x64xf32>, vector<64x4xf32>, vector<64x4xf32> -> vector<64x4xf32>
    %67 = arith.addf %60, %66 : vector<64x4xf32>
    %c6 = arith.constant 6 : index
    %c0_67 = arith.constant 0 : index
    %c0_68 = arith.constant 0 : index
    %68 = vector.load %arg6[%c6, %c0_67, %c0_68] : memref<9x16x4xbf16, #tpu.memory_space<vmem>>, vector<1x16x4xbf16>
    %69 = vector.shape_cast %68 : vector<1x16x4xbf16> to vector<16x4xbf16>
    %cst_69 = arith.constant dense<0.000000e+00> : vector<64x4xf32>
    %70 = tpu.matmul %24, %69, %cst_69 {dimension_numbers = #tpu.dot_dimension_numbers<[1], [0], [0], [1], [0, 0, 1, 1], [], []>} : vector<64x16xbf16>, vector<16x4xbf16>, vector<64x4xf32> -> vector<64x4xf32>
    %c6_70 = arith.constant 6 : index
    %c0_71 = arith.constant 0 : index
    %c0_72 = arith.constant 0 : index
    %71 = vector.load %arg5[%c6_70, %c0_71, %c0_72] : memref<9x64x64xf32, #tpu.memory_space<vmem>>, vector<1x64x64xf32>
    %72 = vector.shape_cast %71 : vector<1x64x64xf32> to vector<64x64xf32>
    %cst_73 = arith.constant dense<0.000000e+00> : vector<64x4xf32>
    %73 = tpu.matmul %72, %70, %cst_73 {dimension_numbers = #tpu.dot_dimension_numbers<[1], [0], [0], [1], [0, 0, 1, 1], [], []>} : vector<64x64xf32>, vector<64x4xf32>, vector<64x4xf32> -> vector<64x4xf32>
    %74 = arith.addf %67, %73 : vector<64x4xf32>
    %c7 = arith.constant 7 : index
    %c0_74 = arith.constant 0 : index
    %c0_75 = arith.constant 0 : index
    %75 = vector.load %arg6[%c7, %c0_74, %c0_75] : memref<9x16x4xbf16, #tpu.memory_space<vmem>>, vector<1x16x4xbf16>
    %76 = vector.shape_cast %75 : vector<1x16x4xbf16> to vector<16x4xbf16>
    %cst_76 = arith.constant dense<0.000000e+00> : vector<64x4xf32>
    %77 = tpu.matmul %24, %76, %cst_76 {dimension_numbers = #tpu.dot_dimension_numbers<[1], [0], [0], [1], [0, 0, 1, 1], [], []>} : vector<64x16xbf16>, vector<16x4xbf16>, vector<64x4xf32> -> vector<64x4xf32>
    %c7_77 = arith.constant 7 : index
    %c0_78 = arith.constant 0 : index
    %c0_79 = arith.constant 0 : index
    %78 = vector.load %arg5[%c7_77, %c0_78, %c0_79] : memref<9x64x64xf32, #tpu.memory_space<vmem>>, vector<1x64x64xf32>
    %79 = vector.shape_cast %78 : vector<1x64x64xf32> to vector<64x64xf32>
    %cst_80 = arith.constant dense<0.000000e+00> : vector<64x4xf32>
    %80 = tpu.matmul %79, %77, %cst_80 {dimension_numbers = #tpu.dot_dimension_numbers<[1], [0], [0], [1], [0, 0, 1, 1], [], []>} : vector<64x64xf32>, vector<64x4xf32>, vector<64x4xf32> -> vector<64x4xf32>
    %81 = arith.addf %74, %80 : vector<64x4xf32>
    %c8 = arith.constant 8 : index
    %c0_81 = arith.constant 0 : index
    %c0_82 = arith.constant 0 : index
    %82 = vector.load %arg6[%c8, %c0_81, %c0_82] : memref<9x16x4xbf16, #tpu.memory_space<vmem>>, vector<1x16x4xbf16>
    %83 = vector.shape_cast %82 : vector<1x16x4xbf16> to vector<16x4xbf16>
    %cst_83 = arith.constant dense<0.000000e+00> : vector<64x4xf32>
    %84 = tpu.matmul %24, %83, %cst_83 {dimension_numbers = #tpu.dot_dimension_numbers<[1], [0], [0], [1], [0, 0, 1, 1], [], []>} : vector<64x16xbf16>, vector<16x4xbf16>, vector<64x4xf32> -> vector<64x4xf32>
    %c8_84 = arith.constant 8 : index
    %c0_85 = arith.constant 0 : index
    %c0_86 = arith.constant 0 : index
    %85 = vector.load %arg5[%c8_84, %c0_85, %c0_86] : memref<9x64x64xf32, #tpu.memory_space<vmem>>, vector<1x64x64xf32>
    %86 = vector.shape_cast %85 : vector<1x64x64xf32> to vector<64x64xf32>
    %cst_87 = arith.constant dense<0.000000e+00> : vector<64x4xf32>
    %87 = tpu.matmul %86, %84, %cst_87 {dimension_numbers = #tpu.dot_dimension_numbers<[1], [0], [0], [1], [0, 0, 1, 1], [], []>} : vector<64x64xf32>, vector<64x4xf32>, vector<64x4xf32> -> vector<64x4xf32>
    %88 = arith.addf %81, %87 : vector<64x4xf32>
    %c0_88 = arith.constant 0 : index
    %c0_89 = arith.constant 0 : index
    %89 = vector.load %arg7[%c0_88, %c0_89] : memref<1x4xf32, #tpu.memory_space<vmem>>, vector<1x4xf32>
    %90 = vector.broadcast %89 : vector<1x4xf32> to vector<64x4xf32>
    %91 = arith.addf %88, %90 : vector<64x4xf32>
    %c0_90 = arith.constant 0 : index
    %c0_91 = arith.constant 0 : index
    %c0_92 = arith.constant 0 : index
    %92 = vector.load %arg8[%c0_90, %c0_91, %c0_92] : memref<4x16x64xf32, #tpu.memory_space<vmem>>, vector<1x16x64xf32>
    %93 = vector.shape_cast %92 : vector<1x16x64xf32> to vector<16x64xf32>
    %cst_93 = arith.constant dense<0.000000e+00> : vector<16x4xf32>
    %94 = tpu.matmul %93, %91, %cst_93 {dimension_numbers = #tpu.dot_dimension_numbers<[1], [0], [0], [1], [0, 0, 1, 1], [], []>} : vector<16x64xf32>, vector<64x4xf32>, vector<16x4xf32> -> vector<16x4xf32>
    %c1_94 = arith.constant 1 : index
    %c0_95 = arith.constant 0 : index
    %c0_96 = arith.constant 0 : index
    %95 = vector.load %arg8[%c1_94, %c0_95, %c0_96] : memref<4x16x64xf32, #tpu.memory_space<vmem>>, vector<1x16x64xf32>
    %96 = vector.shape_cast %95 : vector<1x16x64xf32> to vector<16x64xf32>
    %cst_97 = arith.constant dense<0.000000e+00> : vector<16x4xf32>
    %97 = tpu.matmul %96, %91, %cst_97 {dimension_numbers = #tpu.dot_dimension_numbers<[1], [0], [0], [1], [0, 0, 1, 1], [], []>} : vector<16x64xf32>, vector<64x4xf32>, vector<16x4xf32> -> vector<16x4xf32>
    %98 = arith.maximumf %94, %97 : vector<16x4xf32>
    %c2_98 = arith.constant 2 : index
    %c0_99 = arith.constant 0 : index
    %c0_100 = arith.constant 0 : index
    %99 = vector.load %arg8[%c2_98, %c0_99, %c0_100] : memref<4x16x64xf32, #tpu.memory_space<vmem>>, vector<1x16x64xf32>
    %100 = vector.shape_cast %99 : vector<1x16x64xf32> to vector<16x64xf32>
    %cst_101 = arith.constant dense<0.000000e+00> : vector<16x4xf32>
    %101 = tpu.matmul %100, %91, %cst_101 {dimension_numbers = #tpu.dot_dimension_numbers<[1], [0], [0], [1], [0, 0, 1, 1], [], []>} : vector<16x64xf32>, vector<64x4xf32>, vector<16x4xf32> -> vector<16x4xf32>
    %102 = arith.maximumf %98, %101 : vector<16x4xf32>
    %c3_102 = arith.constant 3 : index
    %c0_103 = arith.constant 0 : index
    %c0_104 = arith.constant 0 : index
    %103 = vector.load %arg8[%c3_102, %c0_103, %c0_104] : memref<4x16x64xf32, #tpu.memory_space<vmem>>, vector<1x16x64xf32>
    %104 = vector.shape_cast %103 : vector<1x16x64xf32> to vector<16x64xf32>
    %cst_105 = arith.constant dense<0.000000e+00> : vector<16x4xf32>
    %105 = tpu.matmul %104, %91, %cst_105 {dimension_numbers = #tpu.dot_dimension_numbers<[1], [0], [0], [1], [0, 0, 1, 1], [], []>} : vector<16x64xf32>, vector<64x4xf32>, vector<16x4xf32> -> vector<16x4xf32>
    %106 = arith.maximumf %102, %105 : vector<16x4xf32>
    %107 = tpu.iota {dimensions = array<i32: 1>} : vector<16x4xi32>
    %cst_106 = arith.constant 0.000000e+00 : f32
    %108 = vector.broadcast %cst_106 : f32 to vector<16x32xf32>
    %c0_i32 = arith.constant 0 : i32
    %109 = vector.broadcast %c0_i32 : i32 to vector<16x4xi32>
    %110 = arith.cmpi eq, %107, %109 : vector<16x4xi32>
    %cst_107 = arith.constant 0.000000e+00 : f32
    %111 = vector.broadcast %cst_107 : f32 to vector<16x4xf32>
    %112 = arith.select %110, %106, %111 : vector<16x4xi1>, vector<16x4xf32>
    %cst_108 = arith.constant dense<0.000000e+00> : vector<16xf32>
    %113 = vector.multi_reduction <add>, %112, %cst_108 [1] : vector<16x4xf32> to vector<16xf32>
    %114 = vector.shape_cast %113 : vector<16xf32> to vector<16x1xf32>
    %c0_109 = arith.constant 0 : index
    %c0_110 = arith.constant 0 : index
    %c0_111 = arith.constant 0 : index
    %115 = vector.load %arg9[%c0_109, %c0_110, %c0_111] : memref<4x16x32xf32, #tpu.memory_space<vmem>>, vector<1x16x32xf32>
    %116 = vector.shape_cast %115 : vector<1x16x32xf32> to vector<16x32xf32>
    %117 = vector.broadcast %114 : vector<16x1xf32> to vector<16x32xf32>
    %118 = arith.mulf %117, %116 : vector<16x32xf32>
    %119 = arith.addf %108, %118 : vector<16x32xf32>
    %c1_i32 = arith.constant 1 : i32
    %120 = vector.broadcast %c1_i32 : i32 to vector<16x4xi32>
    %121 = arith.cmpi eq, %107, %120 : vector<16x4xi32>
    %cst_112 = arith.constant 0.000000e+00 : f32
    %122 = vector.broadcast %cst_112 : f32 to vector<16x4xf32>
    %123 = arith.select %121, %106, %122 : vector<16x4xi1>, vector<16x4xf32>
    %cst_113 = arith.constant dense<0.000000e+00> : vector<16xf32>
    %124 = vector.multi_reduction <add>, %123, %cst_113 [1] : vector<16x4xf32> to vector<16xf32>
    %125 = vector.shape_cast %124 : vector<16xf32> to vector<16x1xf32>
    %c1_114 = arith.constant 1 : index
    %c0_115 = arith.constant 0 : index
    %c0_116 = arith.constant 0 : index
    %126 = vector.load %arg9[%c1_114, %c0_115, %c0_116] : memref<4x16x32xf32, #tpu.memory_space<vmem>>, vector<1x16x32xf32>
    %127 = vector.shape_cast %126 : vector<1x16x32xf32> to vector<16x32xf32>
    %128 = vector.broadcast %125 : vector<16x1xf32> to vector<16x32xf32>
    %129 = arith.mulf %128, %127 : vector<16x32xf32>
    %130 = arith.addf %119, %129 : vector<16x32xf32>
    %c2_i32 = arith.constant 2 : i32
    %131 = vector.broadcast %c2_i32 : i32 to vector<16x4xi32>
    %132 = arith.cmpi eq, %107, %131 : vector<16x4xi32>
    %cst_117 = arith.constant 0.000000e+00 : f32
    %133 = vector.broadcast %cst_117 : f32 to vector<16x4xf32>
    %134 = arith.select %132, %106, %133 : vector<16x4xi1>, vector<16x4xf32>
    %cst_118 = arith.constant dense<0.000000e+00> : vector<16xf32>
    %135 = vector.multi_reduction <add>, %134, %cst_118 [1] : vector<16x4xf32> to vector<16xf32>
    %136 = vector.shape_cast %135 : vector<16xf32> to vector<16x1xf32>
    %c2_119 = arith.constant 2 : index
    %c0_120 = arith.constant 0 : index
    %c0_121 = arith.constant 0 : index
    %137 = vector.load %arg9[%c2_119, %c0_120, %c0_121] : memref<4x16x32xf32, #tpu.memory_space<vmem>>, vector<1x16x32xf32>
    %138 = vector.shape_cast %137 : vector<1x16x32xf32> to vector<16x32xf32>
    %139 = vector.broadcast %136 : vector<16x1xf32> to vector<16x32xf32>
    %140 = arith.mulf %139, %138 : vector<16x32xf32>
    %141 = arith.addf %130, %140 : vector<16x32xf32>
    %c3_i32 = arith.constant 3 : i32
    %142 = vector.broadcast %c3_i32 : i32 to vector<16x4xi32>
    %143 = arith.cmpi eq, %107, %142 : vector<16x4xi32>
    %cst_122 = arith.constant 0.000000e+00 : f32
    %144 = vector.broadcast %cst_122 : f32 to vector<16x4xf32>
    %145 = arith.select %143, %106, %144 : vector<16x4xi1>, vector<16x4xf32>
    %cst_123 = arith.constant dense<0.000000e+00> : vector<16xf32>
    %146 = vector.multi_reduction <add>, %145, %cst_123 [1] : vector<16x4xf32> to vector<16xf32>
    %147 = vector.shape_cast %146 : vector<16xf32> to vector<16x1xf32>
    %c3_124 = arith.constant 3 : index
    %c0_125 = arith.constant 0 : index
    %c0_126 = arith.constant 0 : index
    %148 = vector.load %arg9[%c3_124, %c0_125, %c0_126] : memref<4x16x32xf32, #tpu.memory_space<vmem>>, vector<1x16x32xf32>
    %149 = vector.shape_cast %148 : vector<1x16x32xf32> to vector<16x32xf32>
    %150 = vector.broadcast %147 : vector<16x1xf32> to vector<16x32xf32>
    %151 = arith.mulf %150, %149 : vector<16x32xf32>
    %152 = arith.addf %141, %151 : vector<16x32xf32>
    %cst_127 = arith.constant dense<0.000000e+00> : vector<32xf32>
    %153 = vector.multi_reduction <add>, %152, %cst_127 [0] : vector<16x32xf32> to vector<32xf32>
    %154 = vector.shape_cast %153 : vector<32xf32> to vector<1x32xf32>
    %c0_128 = arith.constant 0 : index
    %c0_129 = arith.constant 0 : index
    %155 = vector.load %arg10[%c0_128, %c0_129] : memref<1x32xf32, #tpu.memory_space<vmem>>, vector<1x32xf32>
    %156 = arith.addf %154, %155 : vector<1x32xf32>
    %cst_130 = arith.constant 0.000000e+00 : f32
    %157 = vector.broadcast %cst_130 : f32 to vector<16x32xf32>
    %c0_i32_131 = arith.constant 0 : i32
    %158 = vector.broadcast %c0_i32_131 : i32 to vector<16x4xi32>
    %159 = arith.cmpi eq, %107, %158 : vector<16x4xi32>
    %cst_132 = arith.constant 0.000000e+00 : f32
    %160 = vector.broadcast %cst_132 : f32 to vector<16x4xf32>
    %161 = arith.select %159, %106, %160 : vector<16x4xi1>, vector<16x4xf32>
    %cst_133 = arith.constant dense<0.000000e+00> : vector<16xf32>
    %162 = vector.multi_reduction <add>, %161, %cst_133 [1] : vector<16x4xf32> to vector<16xf32>
    %163 = vector.shape_cast %162 : vector<16xf32> to vector<16x1xf32>
    %c0_134 = arith.constant 0 : index
    %c0_135 = arith.constant 0 : index
    %c0_136 = arith.constant 0 : index
    %164 = vector.load %arg11[%c0_134, %c0_135, %c0_136] : memref<4x16x32xf32, #tpu.memory_space<vmem>>, vector<1x16x32xf32>
    %165 = vector.shape_cast %164 : vector<1x16x32xf32> to vector<16x32xf32>
    %166 = vector.broadcast %163 : vector<16x1xf32> to vector<16x32xf32>
    %167 = arith.mulf %166, %165 : vector<16x32xf32>
    %168 = arith.addf %157, %167 : vector<16x32xf32>
    %c1_i32_137 = arith.constant 1 : i32
    %169 = vector.broadcast %c1_i32_137 : i32 to vector<16x4xi32>
    %170 = arith.cmpi eq, %107, %169 : vector<16x4xi32>
    %cst_138 = arith.constant 0.000000e+00 : f32
    %171 = vector.broadcast %cst_138 : f32 to vector<16x4xf32>
    %172 = arith.select %170, %106, %171 : vector<16x4xi1>, vector<16x4xf32>
    %cst_139 = arith.constant dense<0.000000e+00> : vector<16xf32>
    %173 = vector.multi_reduction <add>, %172, %cst_139 [1] : vector<16x4xf32> to vector<16xf32>
    %174 = vector.shape_cast %173 : vector<16xf32> to vector<16x1xf32>
    %c1_140 = arith.constant 1 : index
    %c0_141 = arith.constant 0 : index
    %c0_142 = arith.constant 0 : index
    %175 = vector.load %arg11[%c1_140, %c0_141, %c0_142] : memref<4x16x32xf32, #tpu.memory_space<vmem>>, vector<1x16x32xf32>
    %176 = vector.shape_cast %175 : vector<1x16x32xf32> to vector<16x32xf32>
    %177 = vector.broadcast %174 : vector<16x1xf32> to vector<16x32xf32>
    %178 = arith.mulf %177, %176 : vector<16x32xf32>
    %179 = arith.addf %168, %178 : vector<16x32xf32>
    %c2_i32_143 = arith.constant 2 : i32
    %180 = vector.broadcast %c2_i32_143 : i32 to vector<16x4xi32>
    %181 = arith.cmpi eq, %107, %180 : vector<16x4xi32>
    %cst_144 = arith.constant 0.000000e+00 : f32
    %182 = vector.broadcast %cst_144 : f32 to vector<16x4xf32>
    %183 = arith.select %181, %106, %182 : vector<16x4xi1>, vector<16x4xf32>
    %cst_145 = arith.constant dense<0.000000e+00> : vector<16xf32>
    %184 = vector.multi_reduction <add>, %183, %cst_145 [1] : vector<16x4xf32> to vector<16xf32>
    %185 = vector.shape_cast %184 : vector<16xf32> to vector<16x1xf32>
    %c2_146 = arith.constant 2 : index
    %c0_147 = arith.constant 0 : index
    %c0_148 = arith.constant 0 : index
    %186 = vector.load %arg11[%c2_146, %c0_147, %c0_148] : memref<4x16x32xf32, #tpu.memory_space<vmem>>, vector<1x16x32xf32>
    %187 = vector.shape_cast %186 : vector<1x16x32xf32> to vector<16x32xf32>
    %188 = vector.broadcast %185 : vector<16x1xf32> to vector<16x32xf32>
    %189 = arith.mulf %188, %187 : vector<16x32xf32>
    %190 = arith.addf %179, %189 : vector<16x32xf32>
    %c3_i32_149 = arith.constant 3 : i32
    %191 = vector.broadcast %c3_i32_149 : i32 to vector<16x4xi32>
    %192 = arith.cmpi eq, %107, %191 : vector<16x4xi32>
    %cst_150 = arith.constant 0.000000e+00 : f32
    %193 = vector.broadcast %cst_150 : f32 to vector<16x4xf32>
    %194 = arith.select %192, %106, %193 : vector<16x4xi1>, vector<16x4xf32>
    %cst_151 = arith.constant dense<0.000000e+00> : vector<16xf32>
    %195 = vector.multi_reduction <add>, %194, %cst_151 [1] : vector<16x4xf32> to vector<16xf32>
    %196 = vector.shape_cast %195 : vector<16xf32> to vector<16x1xf32>
    %c3_152 = arith.constant 3 : index
    %c0_153 = arith.constant 0 : index
    %c0_154 = arith.constant 0 : index
    %197 = vector.load %arg11[%c3_152, %c0_153, %c0_154] : memref<4x16x32xf32, #tpu.memory_space<vmem>>, vector<1x16x32xf32>
    %198 = vector.shape_cast %197 : vector<1x16x32xf32> to vector<16x32xf32>
    %199 = vector.broadcast %196 : vector<16x1xf32> to vector<16x32xf32>
    %200 = arith.mulf %199, %198 : vector<16x32xf32>
    %201 = arith.addf %190, %200 : vector<16x32xf32>
    %cst_155 = arith.constant dense<0.000000e+00> : vector<32xf32>
    %202 = vector.multi_reduction <add>, %201, %cst_155 [0] : vector<16x32xf32> to vector<32xf32>
    %203 = vector.shape_cast %202 : vector<32xf32> to vector<1x32xf32>
    %c0_156 = arith.constant 0 : index
    %c0_157 = arith.constant 0 : index
    %204 = vector.load %arg12[%c0_156, %c0_157] : memref<1x32xf32, #tpu.memory_space<vmem>>, vector<1x32xf32>
    %205 = arith.addf %203, %204 : vector<1x32xf32>
    %cst_158 = arith.constant 5.000000e-01 : f32
    %206 = vector.broadcast %cst_158 : f32 to vector<1x32xf32>
    %207 = arith.mulf %206, %205 : vector<1x32xf32>
    %208 = math.exp %207 : vector<1x32xf32>
    %c0_159 = arith.constant 0 : index
    %c0_160 = arith.constant 0 : index
    %c0_161 = arith.constant 0 : index
    %209 = vector.load %arg13[%c0_159, %c0_160, %c0_161] : memref<1x1x32xf32, #tpu.memory_space<vmem>>, vector<1x1x32xf32>
    %210 = vector.shape_cast %209 : vector<1x1x32xf32> to vector<1x32xf32>
    %211 = arith.mulf %208, %210 : vector<1x32xf32>
    %212 = arith.addf %156, %211 : vector<1x32xf32>
    %213 = arith.truncf %212 : vector<1x32xf32> to vector<1x32xbf16>
    %c0_162 = arith.constant 0 : index
    %c0_163 = arith.constant 0 : index
    %214 = vector.load %arg14[%c0_162, %c0_163] : memref<32x64xbf16, #tpu.memory_space<vmem>>, vector<32x64xbf16>
    %cst_164 = arith.constant dense<0.000000e+00> : vector<1x64xf32>
    %215 = tpu.matmul %213, %214, %cst_164 {dimension_numbers = #tpu.dot_dimension_numbers<[1], [0], [0], [1], [0, 0, 1, 1], [], []>} : vector<1x32xbf16>, vector<32x64xbf16>, vector<1x64xf32> -> vector<1x64xf32>
    %c0_165 = arith.constant 0 : index
    %c0_166 = arith.constant 0 : index
    %216 = vector.load %arg15[%c0_165, %c0_166] : memref<1x64xf32, #tpu.memory_space<vmem>>, vector<1x64xf32>
    %217 = arith.addf %215, %216 : vector<1x64xf32>
    %cst_167 = arith.constant 0.000000e+00 : f32
    %218 = vector.broadcast %cst_167 : f32 to vector<1x64xf32>
    %219 = arith.maximumf %217, %218 : vector<1x64xf32>
    %220 = arith.truncf %219 : vector<1x64xf32> to vector<1x64xbf16>
    %c0_168 = arith.constant 0 : index
    %c0_169 = arith.constant 0 : index
    %221 = vector.load %arg16[%c0_168, %c0_169] : memref<64x1024xbf16, #tpu.memory_space<vmem>>, vector<64x1024xbf16>
    %cst_170 = arith.constant dense<0.000000e+00> : vector<1x1024xf32>
    %222 = tpu.matmul %220, %221, %cst_170 {dimension_numbers = #tpu.dot_dimension_numbers<[1], [0], [0], [1], [0, 0, 1, 1], [], []>} : vector<1x64xbf16>, vector<64x1024xbf16>, vector<1x1024xf32> -> vector<1x1024xf32>
    %c0_171 = arith.constant 0 : index
    %c0_172 = arith.constant 0 : index
    %223 = vector.load %arg17[%c0_171, %c0_172] : memref<1x1024xf32, #tpu.memory_space<vmem>>, vector<1x1024xf32>
    %224 = arith.addf %222, %223 : vector<1x1024xf32>
    %cst_173 = arith.constant 0.000000e+00 : f32
    %225 = vector.broadcast %cst_173 : f32 to vector<1x1024xf32>
    %226 = arith.maximumf %224, %225 : vector<1x1024xf32>
    %227 = arith.truncf %226 : vector<1x1024xf32> to vector<1x1024xbf16>
    %c0_174 = arith.constant 0 : index
    %c0_175 = arith.constant 0 : index
    %228 = vector.load %arg18[%c0_174, %c0_175] : memref<1024x1024xbf16, #tpu.memory_space<vmem>>, vector<1024x1024xbf16>
    %cst_176 = arith.constant dense<0.000000e+00> : vector<1x1024xf32>
    %229 = tpu.matmul %227, %228, %cst_176 {dimension_numbers = #tpu.dot_dimension_numbers<[1], [0], [0], [1], [0, 0, 1, 1], [], []>} : vector<1x1024xbf16>, vector<1024x1024xbf16>, vector<1x1024xf32> -> vector<1x1024xf32>
    %c0_177 = arith.constant 0 : index
    %c0_178 = arith.constant 0 : index
    %230 = vector.load %arg19[%c0_177, %c0_178] : memref<1x1024xf32, #tpu.memory_space<vmem>>, vector<1x1024xf32>
    %231 = arith.addf %229, %230 : vector<1x1024xf32>
    %cst_179 = arith.constant 0.000000e+00 : f32
    %232 = vector.broadcast %cst_179 : f32 to vector<1x1024xf32>
    %233 = arith.subf %232, %231 : vector<1x1024xf32>
    %234 = math.exp %233 : vector<1x1024xf32>
    %cst_180 = arith.constant 1.000000e+00 : f32
    %235 = vector.broadcast %cst_180 : f32 to vector<1x1024xf32>
    %236 = arith.addf %235, %234 : vector<1x1024xf32>
    %237 = tpu.reciprocal %236 {approx = true} : vector<1x1024xf32> -> vector<1x1024xf32>
    %c0_181 = arith.constant 0 : index
    %c0_182 = arith.constant 0 : index
    %238 = vector.load %arg20[%c0_181, %c0_182] : memref<32x10xbf16, #tpu.memory_space<vmem>>, vector<32x10xbf16>
    %cst_183 = arith.constant dense<0.000000e+00> : vector<1x10xf32>
    %239 = tpu.matmul %213, %238, %cst_183 {dimension_numbers = #tpu.dot_dimension_numbers<[1], [0], [0], [1], [0, 0, 1, 1], [], []>} : vector<1x32xbf16>, vector<32x10xbf16>, vector<1x10xf32> -> vector<1x10xf32>
    %c0_184 = arith.constant 0 : index
    %c0_185 = arith.constant 0 : index
    %240 = vector.load %arg21[%c0_184, %c0_185] : memref<1x10xf32, #tpu.memory_space<vmem>>, vector<1x10xf32>
    %241 = arith.addf %239, %240 : vector<1x10xf32>
    %cst_186 = arith.constant dense<0xFF800000> : vector<1xf32>
    %242 = vector.multi_reduction <maximumf>, %241, %cst_186 [1] : vector<1x10xf32> to vector<1xf32>
    %243 = vector.shape_cast %242 : vector<1xf32> to vector<1x1xf32>
    %244 = vector.broadcast %243 : vector<1x1xf32> to vector<1x10xf32>
    %245 = arith.subf %241, %244 : vector<1x10xf32>
    %246 = math.exp %245 : vector<1x10xf32>
    %cst_187 = arith.constant dense<0.000000e+00> : vector<1xf32>
    %247 = vector.multi_reduction <add>, %246, %cst_187 [1] : vector<1x10xf32> to vector<1xf32>
    %248 = vector.shape_cast %247 : vector<1xf32> to vector<1x1xf32>
    %249 = tpu.reciprocal %248 {approx = true} : vector<1x1xf32> -> vector<1x1xf32>
    %250 = vector.broadcast %249 : vector<1x1xf32> to vector<1x10xf32>
    %251 = arith.mulf %246, %250 : vector<1x10xf32>
    %c0_188 = arith.constant 0 : index
    %c0_189 = arith.constant 0 : index
    %c0_190 = arith.constant 0 : index
    %252 = vector.load %arg22[%c0_188, %c0_189, %c0_190] : memref<1x1x1024xf32, #tpu.memory_space<vmem>>, vector<1x1x1024xf32>
    %253 = vector.shape_cast %252 : vector<1x1x1024xf32> to vector<1x1024xf32>
    %254 = vector.shape_cast %237 : vector<1x1024xf32> to vector<1x1x1024xf32>
    tpu.vector_store %arg22[%c0_188, %c0_189, %c0_190], %254 {strides = array<i32>} : memref<1x1x1024xf32, #tpu.memory_space<vmem>>, vector<1x1x1024xf32>,
    %c0_191 = arith.constant 0 : index
    %c0_192 = arith.constant 0 : index
    %c0_193 = arith.constant 0 : index
    %255 = vector.load %arg23[%c0_191, %c0_192, %c0_193] : memref<1x1x32xf32, #tpu.memory_space<vmem>>, vector<1x1x32xf32>
    %256 = vector.shape_cast %255 : vector<1x1x32xf32> to vector<1x32xf32>
    %257 = vector.shape_cast %212 : vector<1x32xf32> to vector<1x1x32xf32>
    tpu.vector_store %arg23[%c0_191, %c0_192, %c0_193], %257 {strides = array<i32>} : memref<1x1x32xf32, #tpu.memory_space<vmem>>, vector<1x1x32xf32>,
    %c0_194 = arith.constant 0 : index
    %c0_195 = arith.constant 0 : index
    %c0_196 = arith.constant 0 : index
    %258 = vector.load %arg24[%c0_194, %c0_195, %c0_196] : memref<1x1x32xf32, #tpu.memory_space<vmem>>, vector<1x1x32xf32>
    %259 = vector.shape_cast %258 : vector<1x1x32xf32> to vector<1x32xf32>
    %260 = vector.shape_cast %156 : vector<1x32xf32> to vector<1x1x32xf32>
    tpu.vector_store %arg24[%c0_194, %c0_195, %c0_196], %260 {strides = array<i32>} : memref<1x1x32xf32, #tpu.memory_space<vmem>>, vector<1x1x32xf32>,
    %c0_197 = arith.constant 0 : index
    %c0_198 = arith.constant 0 : index
    %c0_199 = arith.constant 0 : index
    %261 = vector.load %arg25[%c0_197, %c0_198, %c0_199] : memref<1x1x32xf32, #tpu.memory_space<vmem>>, vector<1x1x32xf32>
    %262 = vector.shape_cast %261 : vector<1x1x32xf32> to vector<1x32xf32>
    %263 = vector.shape_cast %205 : vector<1x32xf32> to vector<1x1x32xf32>
    tpu.vector_store %arg25[%c0_197, %c0_198, %c0_199], %263 {strides = array<i32>} : memref<1x1x32xf32, #tpu.memory_space<vmem>>, vector<1x1x32xf32>,
    %c0_200 = arith.constant 0 : index
    %c0_201 = arith.constant 0 : index
    %c0_202 = arith.constant 0 : index
    %264 = vector.load %arg26[%c0_200, %c0_201, %c0_202] : memref<1x1x10xf32, #tpu.memory_space<vmem>>, vector<1x1x10xf32>
    %265 = vector.shape_cast %264 : vector<1x1x10xf32> to vector<1x10xf32>
    %266 = vector.shape_cast %251 : vector<1x10xf32> to vector<1x1x10xf32>
    tpu.vector_store %arg26[%c0_200, %c0_201, %c0_202], %266 {strides = array<i32>} : memref<1x1x10xf32, #tpu.memory_space<vmem>>, vector<1x1x10xf32>,
    return
  }
  func.func @transform_0(%arg0: i32) -> (i32, i32, i32) {
    %c0_i32 = arith.constant 0 : i32
    %c0_i32_0 = arith.constant 0 : i32
    %c0_i32_1 = arith.constant 0 : i32
    return %arg0, %c0_i32, %c0_i32_0 : i32, i32, i32
  }
  func.func @transform_1(%arg0: i32) -> (i32, i32) {
    %c0_i32 = arith.constant 0 : i32
    %c0_i32_0 = arith.constant 0 : i32
    %c0_i32_1 = arith.constant 0 : i32
    return %c0_i32, %c0_i32_0 : i32, i32
  }
  func.func @transform_2(%arg0: i32) -> (i32, i32) {
    %c0_i32 = arith.constant 0 : i32
    %c0_i32_0 = arith.constant 0 : i32
    %c0_i32_1 = arith.constant 0 : i32
    return %c0_i32, %c0_i32_0 : i32, i32
  }
  func.func @transform_3(%arg0: i32) -> (i32, i32, i32) {
    %c0_i32 = arith.constant 0 : i32
    %c0_i32_0 = arith.constant 0 : i32
    %c0_i32_1 = arith.constant 0 : i32
    %c0_i32_2 = arith.constant 0 : i32
    return %c0_i32, %c0_i32_0, %c0_i32_1 : i32, i32, i32
  }
  func.func @transform_4(%arg0: i32) -> (i32, i32, i32) {
    %c0_i32 = arith.constant 0 : i32
    %c0_i32_0 = arith.constant 0 : i32
    %c0_i32_1 = arith.constant 0 : i32
    %c0_i32_2 = arith.constant 0 : i32
    return %c0_i32, %c0_i32_0, %c0_i32_1 : i32, i32, i32
  }
  func.func @transform_5(%arg0: i32) -> (i32, i32, i32) {
    %c0_i32 = arith.constant 0 : i32
    %c0_i32_0 = arith.constant 0 : i32
    %c0_i32_1 = arith.constant 0 : i32
    %c0_i32_2 = arith.constant 0 : i32
    return %c0_i32, %c0_i32_0, %c0_i32_1 : i32, i32, i32
  }
  func.func @transform_6(%arg0: i32) -> (i32, i32) {
    %c0_i32 = arith.constant 0 : i32
    %c0_i32_0 = arith.constant 0 : i32
    %c0_i32_1 = arith.constant 0 : i32
    return %c0_i32, %c0_i32_0 : i32, i32
  }
  func.func @transform_7(%arg0: i32) -> (i32, i32, i32) {
    %c0_i32 = arith.constant 0 : i32
    %c0_i32_0 = arith.constant 0 : i32
    %c0_i32_1 = arith.constant 0 : i32
    %c0_i32_2 = arith.constant 0 : i32
    return %c0_i32, %c0_i32_0, %c0_i32_1 : i32, i32, i32
  }
  func.func @transform_8(%arg0: i32) -> (i32, i32, i32) {
    %c0_i32 = arith.constant 0 : i32
    %c0_i32_0 = arith.constant 0 : i32
    %c0_i32_1 = arith.constant 0 : i32
    %c0_i32_2 = arith.constant 0 : i32
    return %c0_i32, %c0_i32_0, %c0_i32_1 : i32, i32, i32
  }
  func.func @transform_9(%arg0: i32) -> (i32, i32) {
    %c0_i32 = arith.constant 0 : i32
    %c0_i32_0 = arith.constant 0 : i32
    %c0_i32_1 = arith.constant 0 : i32
    return %c0_i32, %c0_i32_0 : i32, i32
  }
  func.func @transform_10(%arg0: i32) -> (i32, i32, i32) {
    %c0_i32 = arith.constant 0 : i32
    %c0_i32_0 = arith.constant 0 : i32
    %c0_i32_1 = arith.constant 0 : i32
    %c0_i32_2 = arith.constant 0 : i32
    return %c0_i32, %c0_i32_0, %c0_i32_1 : i32, i32, i32
  }
  func.func @transform_11(%arg0: i32) -> (i32, i32) {
    %c0_i32 = arith.constant 0 : i32
    %c0_i32_0 = arith.constant 0 : i32
    %c0_i32_1 = arith.constant 0 : i32
    return %c0_i32, %c0_i32_0 : i32, i32
  }
  func.func @transform_12(%arg0: i32) -> (i32, i32, i32) {
    %c0_i32 = arith.constant 0 : i32
    %c0_i32_0 = arith.constant 0 : i32
    %c0_i32_1 = arith.constant 0 : i32
    return %arg0, %c0_i32, %c0_i32_0 : i32, i32, i32
  }
  func.func @transform_13(%arg0: i32) -> (i32, i32) {
    %c0_i32 = arith.constant 0 : i32
    %c0_i32_0 = arith.constant 0 : i32
    %c0_i32_1 = arith.constant 0 : i32
    return %c0_i32, %c0_i32_0 : i32, i32
  }
  func.func @transform_14(%arg0: i32) -> (i32, i32) {
    %c0_i32 = arith.constant 0 : i32
    %c0_i32_0 = arith.constant 0 : i32
    %c0_i32_1 = arith.constant 0 : i32
    return %c0_i32, %c0_i32_0 : i32, i32
  }
  func.func @transform_15(%arg0: i32) -> (i32, i32) {
    %c0_i32 = arith.constant 0 : i32
    %c0_i32_0 = arith.constant 0 : i32
    %c0_i32_1 = arith.constant 0 : i32
    return %c0_i32, %c0_i32_0 : i32, i32
  }
  func.func @transform_16(%arg0: i32) -> (i32, i32) {
    %c0_i32 = arith.constant 0 : i32
    %c0_i32_0 = arith.constant 0 : i32
    %c0_i32_1 = arith.constant 0 : i32
    return %c0_i32, %c0_i32_0 : i32, i32
  }
  func.func @transform_17(%arg0: i32) -> (i32, i32) {
    %c0_i32 = arith.constant 0 : i32
    %c0_i32_0 = arith.constant 0 : i32
    %c0_i32_1 = arith.constant 0 : i32
    return %c0_i32, %c0_i32_0 : i32, i32
  }
  func.func @transform_18(%arg0: i32) -> (i32, i32) {
    %c0_i32 = arith.constant 0 : i32
    %c0_i32_0 = arith.constant 0 : i32
    %c0_i32_1 = arith.constant 0 : i32
    return %c0_i32, %c0_i32_0 : i32, i32
  }
  func.func @transform_19(%arg0: i32) -> (i32, i32) {
    %c0_i32 = arith.constant 0 : i32
    %c0_i32_0 = arith.constant 0 : i32
    %c0_i32_1 = arith.constant 0 : i32
    return %c0_i32, %c0_i32_0 : i32, i32
  }
  func.func @transform_20(%arg0: i32) -> (i32, i32) {
    %c0_i32 = arith.constant 0 : i32
    %c0_i32_0 = arith.constant 0 : i32
    %c0_i32_1 = arith.constant 0 : i32
    return %c0_i32, %c0_i32_0 : i32, i32
  }
  func.func @transform_21(%arg0: i32) -> (i32, i32, i32) {
    %c0_i32 = arith.constant 0 : i32
    %c0_i32_0 = arith.constant 0 : i32
    %c0_i32_1 = arith.constant 0 : i32
    return %arg0, %c0_i32, %c0_i32_0 : i32, i32, i32
  }
  func.func @transform_22(%arg0: i32) -> (i32, i32, i32) {
    %c0_i32 = arith.constant 0 : i32
    %c0_i32_0 = arith.constant 0 : i32
    %c0_i32_1 = arith.constant 0 : i32
    return %arg0, %c0_i32, %c0_i32_0 : i32, i32, i32
  }
  func.func @transform_23(%arg0: i32) -> (i32, i32, i32) {
    %c0_i32 = arith.constant 0 : i32
    %c0_i32_0 = arith.constant 0 : i32
    %c0_i32_1 = arith.constant 0 : i32
    return %arg0, %c0_i32, %c0_i32_0 : i32, i32, i32
  }
  func.func @transform_24(%arg0: i32) -> (i32, i32, i32) {
    %c0_i32 = arith.constant 0 : i32
    %c0_i32_0 = arith.constant 0 : i32
    %c0_i32_1 = arith.constant 0 : i32
    return %arg0, %c0_i32, %c0_i32_0 : i32, i32, i32
  }
  func.func @transform_25(%arg0: i32) -> (i32, i32, i32) {
    %c0_i32 = arith.constant 0 : i32
    %c0_i32_0 = arith.constant 0 : i32
    %c0_i32_1 = arith.constant 0 : i32
    return %arg0, %c0_i32, %c0_i32_0 : i32, i32, i32
  }
}

</mosaic_0001>

<llo_original>
// kernel: net_cnn_forward.1
$region0: #{net_cnn_forward.1}
  #allocation0 [shape = 'u32[]', space=smem, size = 0x4, offset = 0x4, fixed_abs, tag = 'smem constant byte address 0x4 - core index']
  #allocation1 [shape = 'u32[72,128]{1,0:T(1,128)}', space=vmem, size = 0x9000, scoped, tag = 'internal scratch']
  %s0 = inlined_call_operand.vmem [shape: bf16[2,256,36], index: 0, kind: input, shape index: {}]
  %s1 = inlined_call_operand.vmem [shape: bf16[36,16], index: 1, kind: input, shape index: {}]
  %s2 = inlined_call_operand.vmem [shape: f32[1,16], index: 2, kind: input, shape index: {}]
  %s3 = inlined_call_operand.vmem [shape: f32[4,64,256], index: 3, kind: input, shape index: {}]
  %s4 = inlined_call_operand.vmem [shape: f32[9,64,64], index: 4, kind: input, shape index: {}]
  %s5 = inlined_call_operand.vmem [shape: bf16[9,16,4], index: 5, kind: input, shape index: {}]
  %s6 = inlined_call_operand.vmem [shape: f32[1,4], index: 6, kind: input, shape index: {}]
  %s7 = inlined_call_operand.vmem [shape: f32[4,16,64], index: 7, kind: input, shape index: {}]
  %s8 = inlined_call_operand.vmem [shape: f32[4,16,32], index: 8, kind: input, shape index: {}]
  %s9 = inlined_call_operand.vmem [shape: f32[1,32], index: 9, kind: input, shape index: {}]
  %s10 = inlined_call_operand.vmem [shape: f32[4,16,32], index: 10, kind: input, shape index: {}]
  %s11 = inlined_call_operand.vmem [shape: f32[1,32], index: 11, kind: input, shape index: {}]
  %s12 = inlined_call_operand.vmem [shape: f32[2,1,32], index: 12, kind: input, shape index: {}]
  %s13 = inlined_call_operand.vmem [shape: bf16[32,64], index: 13, kind: input, shape index: {}]
  %s14 = inlined_call_operand.vmem [shape: f32[1,64], index: 14, kind: input, shape index: {}]
  %s15 = inlined_call_operand.vmem [shape: bf16[64,1024], index: 15, kind: input, shape index: {}]
  %s16 = inlined_call_operand.vmem [shape: f32[1,1024], index: 16, kind: input, shape index: {}]
  %s17 = inlined_call_operand.vmem [shape: bf16[1024,1024], index: 17, kind: input, shape index: {}]
  %s18 = inlined_call_operand.vmem [shape: f32[1,1024], index: 18, kind: input, shape index: {}]
  %s19 = inlined_call_operand.vmem [shape: bf16[32,10], index: 19, kind: input, shape index: {}]
  %s20 = inlined_call_operand.vmem [shape: f32[1,10], index: 20, kind: input, shape index: {}]
  %s21 = inlined_call_operand.vmem [shape: f32[2,1,1024], index: 21, kind: output, shape index: {0}]
  %s22 = inlined_call_operand.hbm [shape: f32[2,1,32], index: 22, kind: output, shape index: {1}]
  %s23 = inlined_call_operand.hbm [shape: f32[2,1,32], index: 23, kind: output, shape index: {2}]
  %s24 = inlined_call_operand.hbm [shape: f32[2,1,32], index: 24, kind: output, shape index: {3}]
  %s25 = inlined_call_operand.hbm [shape: f32[2,1,10], index: 25, kind: output, shape index: {4}]
  %26 = xla_tuple %s21, %s22, %s23, %s24, %s25
  %s27 = sld [smem:[#allocation0]]
  $region149: #{net_cnn_forward.1} parent=0
    _
  %s29 = ssub.s32 1, %s27
  %s30 = scalar_select 0, %s29, %s27
  $region1: #{net_cnn_forward.1} parent=0
    #allocation2 [shape = 'u8[1024]{0}', space=vmem, size = 0x400, scoped, tag = 'output window, operand 1']
    #allocation3 [shape = 's32[2]{0}', space=sflag, size = 0x8, scoped, tag = 'scoped memory for net_cnn_forward.1']
    #allocation4 [shape = 'u8[1024]{0}', space=vmem, size = 0x400, scoped, tag = 'output window, operand 2']
    #allocation5 [shape = 's32[2]{0}', space=sflag, size = 0x8, scoped, tag = 'scoped memory for net_cnn_forward.1']
    #allocation6 [shape = 'u8[1024]{0}', space=vmem, size = 0x400, scoped, tag = 'output window, operand 3']
    #allocation7 [shape = 'u8[1024]{0}', space=vmem, size = 0x400, scoped, tag = 'output window, operand 4']
    #allocation8 [shape = 's32[2]{0}', space=sflag, size = 0x8, scoped, tag = 'scoped memory for net_cnn_forward.1']
    %31 = vsyncpa [#allocation3], 0
    %s32 = scalar_lea.sflag [#allocation3], 1
    %33 = vsyncpa %s32, 0
    %34 = vsyncpa [#allocation5], 0
    %s35 = scalar_lea.sflag [#allocation5], 1
    %36 = vsyncpa %s35, 0
    %37 = vsyncpa [#allocation8], 0
    %s38 = scalar_lea.sflag [#allocation8], 1
    %39 = vsyncpa %s38, 0
    loop: start=0, step=1, limit=4
    $region2: #{net_cnn_forward.1} parent=1 // loop_pre_header
      _
    $region3: #{net_cnn_forward.1} parent=1 // loop_header
      %s41 = sphi 0, %s45
      %p42 = scmp.ge.s32.totalorder %s41, 4
      %s51 = sphi 0, %s53
      %s54 = sphi 0, %s51
      %s55 = sphi 0, %s54
      %s71 = sphi 0, %s55
      %s75 = sphi 0, %s75
      %s77 = sphi 0, %s75
      %s78 = sphi 0, %s77
      %s92 = sphi 0, %s78
      %s96 = sphi 0, %s96
      %s98 = sphi 0, %s96
      %s99 = sphi 0, %s98
      %s113 = sphi 0, %s99
      %s117 = sphi 0, %s117
      %s119 = sphi 0, %s117
      %s120 = sphi 0, %s119
      %s134 = sphi 0, %s120
      %s138 = sphi 0, %s138
      %s140 = sphi 0, %s138
      %s141 = sphi 0, %s140
      %s155 = sphi 0, %s141
      %s159 = sphi 0, %s159
      %s161 = sphi 0, %s159
      %s162 = sphi 0, %s161
      %s176 = sphi 0, %s162
      %s180 = sphi 0, %s180
      %s182 = sphi 0, %s180
      %s183 = sphi 0, %s182
      %s197 = sphi 0, %s183
      %s201 = sphi 0, %s201
      %s203 = sphi 0, %s201
      %s204 = sphi 0, %s203
      %s218 = sphi 0, %s204
      %s222 = sphi 0, %s222
      %s224 = sphi 0, %s222
      %s225 = sphi 0, %s224
      %s239 = sphi 0, %s225
      %s243 = sphi 0, %s243
      %s245 = sphi 0, %s243
      %s246 = sphi 0, %s245
      %s260 = sphi 0, %s246
      %s264 = sphi 0, %s264
      %s266 = sphi 0, %s264
      %s267 = sphi 0, %s266
      %s281 = sphi 0, %s267
      %s285 = sphi 0, %s285
      %s287 = sphi 0, %s285
      %s288 = sphi 0, %s287
      %s302 = sphi 0, %s288
      %s308 = sphi 0, %s310
      %s311 = sphi 0, %s308
      %s312 = sphi 0, %s311
      %s328 = sphi 0, %s312
      %s332 = sphi 0, %s332
      %s334 = sphi 0, %s332
      %s335 = sphi 0, %s334
      %s349 = sphi 0, %s335
      %s353 = sphi 0, %s353
      %s355 = sphi 0, %s353
      %s356 = sphi 0, %s355
      %s370 = sphi 0, %s356
      %s374 = sphi 0, %s374
      %s376 = sphi 0, %s374
      %s377 = sphi 0, %s376
      %s391 = sphi 0, %s377
      %s395 = sphi 0, %s395
      %s397 = sphi 0, %s395
      %s398 = sphi 0, %s397
      %s412 = sphi 0, %s398
      %s416 = sphi 0, %s416
      %s418 = sphi 0, %s416
      %s419 = sphi 0, %s418
      %s433 = sphi 0, %s419
      %s437 = sphi 0, %s437
      %s439 = sphi 0, %s437
      %s440 = sphi 0, %s439
      %s454 = sphi 0, %s440
      %s458 = sphi 0, %s458
      %s460 = sphi 0, %s458
      %s461 = sphi 0, %s460
      %s475 = sphi 0, %s461
      %s479 = sphi 0, %s479
      %s481 = sphi 0, %s479
      %s482 = sphi 0, %s481
      %s496 = sphi 0, %s482
      %s502 = sphi 0, %s504
      %s505 = sphi 0, %s502
      %s506 = sphi 0, %s505
      %s522 = sphi 0, %s506
      %s528 = sphi 0, %s530
      %s531 = sphi 0, %s528
      %s532 = sphi 0, %s531
      %s548 = sphi 0, %s532
      %s554 = sphi 0, %s556
      %s557 = sphi 0, %s554
      %s558 = sphi 0, %s557
      %s574 = sphi 0, %s558
      %s580 = sphi 0, %s582
      %s583 = sphi 0, %s580
      %s584 = sphi 0, %s583
      %s600 = sphi 0, %s584
      %s606 = sphi 0, %s608
      %s609 = sphi 0, %s606
      %s610 = sphi 0, %s609
      %s626 = sphi 0, %s610
    $region4: #{net_cnn_forward.1} parent=1 // loop_header_branch
      %44 = sbr.rel (%p42) target = $region8
    $region5: #{net_cnn_forward.1} parent=1 // loop_body
      %s46 = ssub.s32 %s41, 1
      %s47 = ssub.s32 %s41, 2
      %s48 = sadd.s32 %s41, 1
      %s49 = ssub.s32 %s41, %s48
      %p50 = scmp.eq.s32.totalorder %s49, 0
      %s52 = sadd.s32 %s51, 1
      %s53 = scalar_select %p50, %s51, %s52
      %p56 = pneg %p50
      %p57 = scmp.eq.s32.totalorder %s41, 1
      %p58 = por %p56, %p57
      %p59 = scmp.ne.s32.totalorder %s51, %s54
      %p60 = scmp.eq.s32.totalorder %s41, 0
      %p61 = por %p59, %p60
      %p62 = scmp.ne.s32.totalorder %s51, %s54
      %p63 = scmp.eq.s32.totalorder %s46, 1
      %p64 = por %p62, %p63
      %p65 = scmp.ne.s32.totalorder %s54, %s55
      %p66 = scmp.eq.s32.totalorder %s46, 0
      %p67 = por %p65, %p66
      %p68 = scmp.ne.s32.totalorder %s54, %s55
      %p69 = scmp.eq.s32.totalorder %s47, 1
      %p70 = por %p68, %p69
      %p72 = scmp.ne.s32.totalorder %s55, %s71
      %p73 = scmp.eq.s32.totalorder %s47, 0
      %p74 = por %p72, %p73
      %s76 = sadd.s32 %s75, 1
      %p79 = scmp.eq.s32.totalorder %s41, 1
      %p80 = scmp.ne.s32.totalorder %s75, %s77
      %p81 = scmp.eq.s32.totalorder %s41, 0
      %p82 = por %p80, %p81
      %p83 = scmp.ne.s32.totalorder %s75, %s77
      %p84 = scmp.eq.s32.totalorder %s46, 1
      %p85 = por %p83, %p84
      %p86 = scmp.ne.s32.totalorder %s77, %s78
      %p87 = scmp.eq.s32.totalorder %s46, 0
      %p88 = por %p86, %p87
      %p89 = scmp.ne.s32.totalorder %s77, %s78
      %p90 = scmp.eq.s32.totalorder %s47, 1
      %p91 = por %p89, %p90
      %p93 = scmp.ne.s32.totalorder %s78, %s92
      %p94 = scmp.eq.s32.totalorder %s47, 0
      %p95 = por %p93, %p94
      %s97 = sadd.s32 %s96, 1
      %p100 = scmp.eq.s32.totalorder %s41, 1
      %p101 = scmp.ne.s32.totalorder %s96, %s98
      %p102 = scmp.eq.s32.totalorder %s41, 0
      %p103 = por %p101, %p102
      %p104 = scmp.ne.s32.totalorder %s96, %s98
      %p105 = scmp.eq.s32.totalorder %s46, 1
      %p106 = por %p104, %p105
      %p107 = scmp.ne.s32.totalorder %s98, %s99
      %p108 = scmp.eq.s32.totalorder %s46, 0
      %p109 = por %p107, %p108
      %p110 = scmp.ne.s32.totalorder %s98, %s99
      %p111 = scmp.eq.s32.totalorder %s47, 1
      %p112 = por %p110, %p111
      %p114 = scmp.ne.s32.totalorder %s99, %s113
      %p115 = scmp.eq.s32.totalorder %s47, 0
      %p116 = por %p114, %p115
      %s118 = sadd.s32 %s117, 1
      %p121 = scmp.eq.s32.totalorder %s41, 1
      %p122 = scmp.ne.s32.totalorder %s117, %s119
      %p123 = scmp.eq.s32.totalorder %s41, 0
      %p124 = por %p122, %p123
      %p125 = scmp.ne.s32.totalorder %s117, %s119
      %p126 = scmp.eq.s32.totalorder %s46, 1
      %p127 = por %p125, %p126
      %p128 = scmp.ne.s32.totalorder %s119, %s120
      %p129 = scmp.eq.s32.totalorder %s46, 0
      %p130 = por %p128, %p129
      %p131 = scmp.ne.s32.totalorder %s119, %s120
      %p132 = scmp.eq.s32.totalorder %s47, 1
      %p133 = por %p131, %p132
      %p135 = scmp.ne.s32.totalorder %s120, %s134
      %p136 = scmp.eq.s32.totalorder %s47, 0
      %p137 = por %p135, %p136
      %s139 = sadd.s32 %s138, 1
      %p142 = scmp.eq.s32.totalorder %s41, 1
      %p143 = scmp.ne.s32.totalorder %s138, %s140
      %p144 = scmp.eq.s32.totalorder %s41, 0
      %p145 = por %p143, %p144
      %p146 = scmp.ne.s32.totalorder %s138, %s140
      %p147 = scmp.eq.s32.totalorder %s46, 1
      %p148 = por %p146, %p147
      %p149 = scmp.ne.s32.totalorder %s140, %s141
      %p150 = scmp.eq.s32.totalorder %s46, 0
      %p151 = por %p149, %p150
      %p152 = scmp.ne.s32.totalorder %s140, %s141
      %p153 = scmp.eq.s32.totalorder %s47, 1
      %p154 = por %p152, %p153
      %p156 = scmp.ne.s32.totalorder %s141, %s155
      %p157 = scmp.eq.s32.totalorder %s47, 0
      %p158 = por %p156, %p157
      %s160 = sadd.s32 %s159, 1
      %p163 = scmp.eq.s32.totalorder %s41, 1
      %p164 = scmp.ne.s32.totalorder %s159, %s161
      %p165 = scmp.eq.s32.totalorder %s41, 0
      %p166 = por %p164, %p165
      %p167 = scmp.ne.s32.totalorder %s159, %s161
      %p168 = scmp.eq.s32.totalorder %s46, 1
      %p169 = por %p167, %p168
      %p170 = scmp.ne.s32.totalorder %s161, %s162
      %p171 = scmp.eq.s32.totalorder %s46, 0
      %p172 = por %p170, %p171
      %p173 = scmp.ne.s32.totalorder %s161, %s162
      %p174 = scmp.eq.s32.totalorder %s47, 1
      %p175 = por %p173, %p174
      %p177 = scmp.ne.s32.totalorder %s162, %s176
      %p178 = scmp.eq.s32.totalorder %s47, 0
      %p179 = por %p177, %p178
      %s181 = sadd.s32 %s180, 1
      %p184 = scmp.eq.s32.totalorder %s41, 1
      %p185 = scmp.ne.s32.totalorder %s180, %s182
      %p186 = scmp.eq.s32.totalorder %s41, 0
      %p187 = por %p185, %p186
      %p188 = scmp.ne.s32.totalorder %s180, %s182
      %p189 = scmp.eq.s32.totalorder %s46, 1
      %p190 = por %p188, %p189
      %p191 = scmp.ne.s32.totalorder %s182, %s183
      %p192 = scmp.eq.s32.totalorder %s46, 0
      %p193 = por %p191, %p192
      %p194 = scmp.ne.s32.totalorder %s182, %s183
      %p195 = scmp.eq.s32.totalorder %s47, 1
      %p196 = por %p194, %p195
      %p198 = scmp.ne.s32.totalorder %s183, %s197
      %p199 = scmp.eq.s32.totalorder %s47, 0
      %p200 = por %p198, %p199
      %s202 = sadd.s32 %s201, 1
      %p205 = scmp.eq.s32.totalorder %s41, 1
      %p206 = scmp.ne.s32.totalorder %s201, %s203
      %p207 = scmp.eq.s32.totalorder %s41, 0
      %p208 = por %p206, %p207
      %p209 = scmp.ne.s32.totalorder %s201, %s203
      %p210 = scmp.eq.s32.totalorder %s46, 1
      %p211 = por %p209, %p210
      %p212 = scmp.ne.s32.totalorder %s203, %s204
      %p213 = scmp.eq.s32.totalorder %s46, 0
      %p214 = por %p212, %p213
      %p215 = scmp.ne.s32.totalorder %s203, %s204
      %p216 = scmp.eq.s32.totalorder %s47, 1
      %p217 = por %p215, %p216
      %p219 = scmp.ne.s32.totalorder %s204, %s218
      %p220 = scmp.eq.s32.totalorder %s47, 0
      %p221 = por %p219, %p220
      %s223 = sadd.s32 %s222, 1
      %p226 = scmp.eq.s32.totalorder %s41, 1
      %p227 = scmp.ne.s32.totalorder %s222, %s224
      %p228 = scmp.eq.s32.totalorder %s41, 0
      %p229 = por %p227, %p228
      %p230 = scmp.ne.s32.totalorder %s222, %s224
      %p231 = scmp.eq.s32.totalorder %s46, 1
      %p232 = por %p230, %p231
      %p233 = scmp.ne.s32.totalorder %s224, %s225
      %p234 = scmp.eq.s32.totalorder %s46, 0
      %p235 = por %p233, %p234
      %p236 = scmp.ne.s32.totalorder %s224, %s225
      %p237 = scmp.eq.s32.totalorder %s47, 1
      %p238 = por %p236, %p237
      %p240 = scmp.ne.s32.totalorder %s225, %s239
      %p241 = scmp.eq.s32.totalorder %s47, 0
      %p242 = por %p240, %p241
      %s244 = sadd.s32 %s243, 1
      %p247 = scmp.eq.s32.totalorder %s41, 1
      %p248 = scmp.ne.s32.totalorder %s243, %s245
      %p249 = scmp.eq.s32.totalorder %s41, 0
      %p250 = por %p248, %p249
      %p251 = scmp.ne.s32.totalorder %s243, %s245
      %p252 = scmp.eq.s32.totalorder %s46, 1
      %p253 = por %p251, %p252
      %p254 = scmp.ne.s32.totalorder %s245, %s246
      %p255 = scmp.eq.s32.totalorder %s46, 0
      %p256 = por %p254, %p255
      %p257 = scmp.ne.s32.totalorder %s245, %s246
      %p258 = scmp.eq.s32.totalorder %s47, 1
      %p259 = por %p257, %p258
      %p261 = scmp.ne.s32.totalorder %s246, %s260
      %p262 = scmp.eq.s32.totalorder %s47, 0
      %p263 = por %p261, %p262
      %s265 = sadd.s32 %s264, 1
      %p268 = scmp.eq.s32.totalorder %s41, 1
      %p269 = scmp.ne.s32.totalorder %s264, %s266
      %p270 = scmp.eq.s32.totalorder %s41, 0
      %p271 = por %p269, %p270
      %p272 = scmp.ne.s32.totalorder %s264, %s266
      %p273 = scmp.eq.s32.totalorder %s46, 1
      %p274 = por %p272, %p273
      %p275 = scmp.ne.s32.totalorder %s266, %s267
      %p276 = scmp.eq.s32.totalorder %s46, 0
      %p277 = por %p275, %p276
      %p278 = scmp.ne.s32.totalorder %s266, %s267
      %p279 = scmp.eq.s32.totalorder %s47, 1
      %p280 = por %p278, %p279
      %p282 = scmp.ne.s32.totalorder %s267, %s281
      %p283 = scmp.eq.s32.totalorder %s47, 0
      %p284 = por %p282, %p283
      %s286 = sadd.s32 %s285, 1
      %p289 = scmp.eq.s32.totalorder %s41, 1
      %p290 = scmp.ne.s32.totalorder %s285, %s287
      %p291 = scmp.eq.s32.totalorder %s41, 0
      %p292 = por %p290, %p291
      %p293 = scmp.ne.s32.totalorder %s285, %s287
      %p294 = scmp.eq.s32.totalorder %s46, 1
      %p295 = por %p293, %p294
      %p296 = scmp.ne.s32.totalorder %s287, %s288
      %p297 = scmp.eq.s32.totalorder %s46, 0
      %p298 = por %p296, %p297
      %p299 = scmp.ne.s32.totalorder %s287, %s288
      %p300 = scmp.eq.s32.totalorder %s47, 1
      %p301 = por %p299, %p300
      %p303 = scmp.ne.s32.totalorder %s288, %s302
      %p304 = scmp.eq.s32.totalorder %s47, 0
      %p305 = por %p303, %p304
      %s306 = ssub.s32 %s41, %s48
      %p307 = scmp.eq.s32.totalorder %s306, 0
      %s309 = sadd.s32 %s308, 1
      %s310 = scalar_select %p307, %s308, %s309
      %p313 = pneg %p307
      %p314 = scmp.eq.s32.totalorder %s41, 1
      %p315 = por %p313, %p314
      %p316 = scmp.ne.s32.totalorder %s308, %s311
      %p317 = scmp.eq.s32.totalorder %s41, 0
      %p318 = por %p316, %p317
      %p319 = scmp.ne.s32.totalorder %s308, %s311
      %p320 = scmp.eq.s32.totalorder %s46, 1
      %p321 = por %p319, %p320
      %p322 = scmp.ne.s32.totalorder %s311, %s312
      %p323 = scmp.eq.s32.totalorder %s46, 0
      %p324 = por %p322, %p323
      %p325 = scmp.ne.s32.totalorder %s311, %s312
      %p326 = scmp.eq.s32.totalorder %s47, 1
      %p327 = por %p325, %p326
      %p329 = scmp.ne.s32.totalorder %s312, %s328
      %p330 = scmp.eq.s32.totalorder %s47, 0
      %p331 = por %p329, %p330
      %s333 = sadd.s32 %s332, 1
      %p336 = scmp.eq.s32.totalorder %s41, 1
      %p337 = scmp.ne.s32.totalorder %s332, %s334
      %p338 = scmp.eq.s32.totalorder %s41, 0
      %p339 = por %p337, %p338
      %p340 = scmp.ne.s32.totalorder %s332, %s334
      %p341 = scmp.eq.s32.totalorder %s46, 1
      %p342 = por %p340, %p341
      %p343 = scmp.ne.s32.totalorder %s334, %s335
      %p344 = scmp.eq.s32.totalorder %s46, 0
      %p345 = por %p343, %p344
      %p346 = scmp.ne.s32.totalorder %s334, %s335
      %p347 = scmp.eq.s32.totalorder %s47, 1
      %p348 = por %p346, %p347
      %p350 = scmp.ne.s32.totalorder %s335, %s349
      %p351 = scmp.eq.s32.totalorder %s47, 0
      %p352 = por %p350, %p351
      %s354 = sadd.s32 %s353, 1
      %p357 = scmp.eq.s32.totalorder %s41, 1
      %p358 = scmp.ne.s32.totalorder %s353, %s355
      %p359 = scmp.eq.s32.totalorder %s41, 0
      %p360 = por %p358, %p359
      %p361 = scmp.ne.s32.totalorder %s353, %s355
      %p362 = scmp.eq.s32.totalorder %s46, 1
      %p363 = por %p361, %p362
      %p364 = scmp.ne.s32.totalorder %s355, %s356
      %p365 = scmp.eq.s32.totalorder %s46, 0
      %p366 = por %p364, %p365
      %p367 = scmp.ne.s32.totalorder %s355, %s356
      %p368 = scmp.eq.s32.totalorder %s47, 1
      %p369 = por %p367, %p368
      %p371 = scmp.ne.s32.totalorder %s356, %s370
      %p372 = scmp.eq.s32.totalorder %s47, 0
      %p373 = por %p371, %p372
      %s375 = sadd.s32 %s374, 1
      %p378 = scmp.eq.s32.totalorder %s41, 1
      %p379 = scmp.ne.s32.totalorder %s374, %s376
      %p380 = scmp.eq.s32.totalorder %s41, 0
      %p381 = por %p379, %p380
      %p382 = scmp.ne.s32.totalorder %s374, %s376
      %p383 = scmp.eq.s32.totalorder %s46, 1
      %p384 = por %p382, %p383
      %p385 = scmp.ne.s32.totalorder %s376, %s377
      %p386 = scmp.eq.s32.totalorder %s46, 0
      %p387 = por %p385, %p386
      %p388 = scmp.ne.s32.totalorder %s376, %s377
      %p389 = scmp.eq.s32.totalorder %s47, 1
      %p390 = por %p388, %p389
      %p392 = scmp.ne.s32.totalorder %s377, %s391
      %p393 = scmp.eq.s32.totalorder %s47, 0
      %p394 = por %p392, %p393
      %s396 = sadd.s32 %s395, 1
      %p399 = scmp.eq.s32.totalorder %s41, 1
      %p400 = scmp.ne.s32.totalorder %s395, %s397
      %p401 = scmp.eq.s32.totalorder %s41, 0
      %p402 = por %p400, %p401
      %p403 = scmp.ne.s32.totalorder %s395, %s397
      %p404 = scmp.eq.s32.totalorder %s46, 1
      %p405 = por %p403, %p404
      %p406 = scmp.ne.s32.totalorder %s397, %s398
      %p407 = scmp.eq.s32.totalorder %s46, 0
      %p408 = por %p406, %p407
      %p409 = scmp.ne.s32.totalorder %s397, %s398
      %p410 = scmp.eq.s32.totalorder %s47, 1
      %p411 = por %p409, %p410
      %p413 = scmp.ne.s32.totalorder %s398, %s412
      %p414 = scmp.eq.s32.totalorder %s47, 0
      %p415 = por %p413, %p414
      %s417 = sadd.s32 %s416, 1
      %p420 = scmp.eq.s32.totalorder %s41, 1
      %p421 = scmp.ne.s32.totalorder %s416, %s418
      %p422 = scmp.eq.s32.totalorder %s41, 0
      %p423 = por %p421, %p422
      %p424 = scmp.ne.s32.totalorder %s416, %s418
      %p425 = scmp.eq.s32.totalorder %s46, 1
      %p426 = por %p424, %p425
      %p427 = scmp.ne.s32.totalorder %s418, %s419
      %p428 = scmp.eq.s32.totalorder %s46, 0
      %p429 = por %p427, %p428
      %p430 = scmp.ne.s32.totalorder %s418, %s419
      %p431 = scmp.eq.s32.totalorder %s47, 1
      %p432 = por %p430, %p431
      %p434 = scmp.ne.s32.totalorder %s419, %s433
      %p435 = scmp.eq.s32.totalorder %s47, 0
      %p436 = por %p434, %p435
      %s438 = sadd.s32 %s437, 1
      %p441 = scmp.eq.s32.totalorder %s41, 1
      %p442 = scmp.ne.s32.totalorder %s437, %s439
      %p443 = scmp.eq.s32.totalorder %s41, 0
      %p444 = por %p442, %p443
      %p445 = scmp.ne.s32.totalorder %s437, %s439
      %p446 = scmp.eq.s32.totalorder %s46, 1
      %p447 = por %p445, %p446
      %p448 = scmp.ne.s32.totalorder %s439, %s440
      %p449 = scmp.eq.s32.totalorder %s46, 0
      %p450 = por %p448, %p449
      %p451 = scmp.ne.s32.totalorder %s439, %s440
      %p452 = scmp.eq.s32.totalorder %s47, 1
      %p453 = por %p451, %p452
      %p455 = scmp.ne.s32.totalorder %s440, %s454
      %p456 = scmp.eq.s32.totalorder %s47, 0
      %p457 = por %p455, %p456
      %s459 = sadd.s32 %s458, 1
      %p462 = scmp.eq.s32.totalorder %s41, 1
      %p463 = scmp.ne.s32.totalorder %s458, %s460
      %p464 = scmp.eq.s32.totalorder %s41, 0
      %p465 = por %p463, %p464
      %p466 = scmp.ne.s32.totalorder %s458, %s460
      %p467 = scmp.eq.s32.totalorder %s46, 1
      %p468 = por %p466, %p467
      %p469 = scmp.ne.s32.totalorder %s460, %s461
      %p470 = scmp.eq.s32.totalorder %s46, 0
      %p471 = por %p469, %p470
      %p472 = scmp.ne.s32.totalorder %s460, %s461
      %p473 = scmp.eq.s32.totalorder %s47, 1
      %p474 = por %p472, %p473
      %p476 = scmp.ne.s32.totalorder %s461, %s475
      %p477 = scmp.eq.s32.totalorder %s47, 0
      %p478 = por %p476, %p477
      %s480 = sadd.s32 %s479, 1
      %p483 = scmp.eq.s32.totalorder %s41, 1
      %p484 = scmp.ne.s32.totalorder %s479, %s481
      %p485 = scmp.eq.s32.totalorder %s41, 0
      %p486 = por %p484, %p485
      %p487 = scmp.ne.s32.totalorder %s479, %s481
      %p488 = scmp.eq.s32.totalorder %s46, 1
      %p489 = por %p487, %p488
      %p490 = scmp.ne.s32.totalorder %s481, %s482
      %p491 = scmp.eq.s32.totalorder %s46, 0
      %p492 = por %p490, %p491
      %p493 = scmp.ne.s32.totalorder %s481, %s482
      %p494 = scmp.eq.s32.totalorder %s47, 1
      %p495 = por %p493, %p494
      %p497 = scmp.ne.s32.totalorder %s482, %s496
      %p498 = scmp.eq.s32.totalorder %s47, 0
      %p499 = por %p497, %p498
      %s500 = ssub.s32 %s41, %s48
      %p501 = scmp.eq.s32.totalorder %s500, 0
      %s503 = sadd.s32 %s502, 1
      %s504 = scalar_select %p501, %s502, %s503
      %p507 = pneg %p501
      %p508 = scmp.eq.s32.totalorder %s41, 1
      %p509 = por %p507, %p508
      %p510 = scmp.ne.s32.totalorder %s502, %s505
      %p511 = scmp.eq.s32.totalorder %s41, 0
      %p512 = por %p510, %p511
      %p513 = scmp.ne.s32.totalorder %s502, %s505
      %p514 = scmp.eq.s32.totalorder %s46, 1
      %p515 = por %p513, %p514
      %p516 = scmp.ne.s32.totalorder %s505, %s506
      %p517 = scmp.eq.s32.totalorder %s46, 0
      %p518 = por %p516, %p517
      %p519 = scmp.ne.s32.totalorder %s505, %s506
      %p520 = scmp.eq.s32.totalorder %s47, 1
      %p521 = por %p519, %p520
      %p523 = scmp.ne.s32.totalorder %s506, %s522
      %p524 = scmp.eq.s32.totalorder %s47, 0
      %p525 = por %p523, %p524
      %s526 = ssub.s32 %s41, %s48
      %p527 = scmp.eq.s32.totalorder %s526, 0
      %s529 = sadd.s32 %s528, 1
      %s530 = scalar_select %p527, %s528, %s529
      %p533 = pneg %p527
      %p534 = scmp.eq.s32.totalorder %s41, 1
      %p535 = por %p533, %p534
      %p536 = scmp.ne.s32.totalorder %s528, %s531
      %p537 = scmp.eq.s32.totalorder %s41, 0
      %p538 = por %p536, %p537
      %p539 = scmp.ne.s32.totalorder %s528, %s531
      %p540 = scmp.eq.s32.totalorder %s46, 1
      %p541 = por %p539, %p540
      %p542 = scmp.ne.s32.totalorder %s531, %s532
      %p543 = scmp.eq.s32.totalorder %s46, 0
      %p544 = por %p542, %p543
      %p545 = scmp.ne.s32.totalorder %s531, %s532
      %p546 = scmp.eq.s32.totalorder %s47, 1
      %p547 = por %p545, %p546
      %p549 = scmp.ne.s32.totalorder %s532, %s548
      %p550 = scmp.eq.s32.totalorder %s47, 0
      %p551 = por %p549, %p550
      %s552 = ssub.s32 %s41, %s48
      %p553 = scmp.eq.s32.totalorder %s552, 0
      %s555 = sadd.s32 %s554, 1
      %s556 = scalar_select %p553, %s554, %s555
      %p559 = pneg %p553
      %p560 = scmp.eq.s32.totalorder %s41, 1
      %p561 = por %p559, %p560
      %p562 = scmp.ne.s32.totalorder %s554, %s557
      %p563 = scmp.eq.s32.totalorder %s41, 0
      %p564 = por %p562, %p563
      %p565 = scmp.ne.s32.totalorder %s554, %s557
      %p566 = scmp.eq.s32.totalorder %s46, 1
      %p567 = por %p565, %p566
      %p568 = scmp.ne.s32.totalorder %s557, %s558
      %p569 = scmp.eq.s32.totalorder %s46, 0
      %p570 = por %p568, %p569
      %p571 = scmp.ne.s32.totalorder %s557, %s558
      %p572 = scmp.eq.s32.totalorder %s47, 1
      %p573 = por %p571, %p572
      %p575 = scmp.ne.s32.totalorder %s558, %s574
      %p576 = scmp.eq.s32.totalorder %s47, 0
      %p577 = por %p575, %p576
      %s578 = ssub.s32 %s41, %s48
      %p579 = scmp.eq.s32.totalorder %s578, 0
      %s581 = sadd.s32 %s580, 1
      %s582 = scalar_select %p579, %s580, %s581
      %p585 = pneg %p579
      %p586 = scmp.eq.s32.totalorder %s41, 1
      %p587 = por %p585, %p586
      %p588 = scmp.ne.s32.totalorder %s580, %s583
      %p589 = scmp.eq.s32.totalorder %s41, 0
      %p590 = por %p588, %p589
      %p591 = scmp.ne.s32.totalorder %s580, %s583
      %p592 = scmp.eq.s32.totalorder %s46, 1
      %p593 = por %p591, %p592
      %p594 = scmp.ne.s32.totalorder %s583, %s584
      %p595 = scmp.eq.s32.totalorder %s46, 0
      %p596 = por %p594, %p595
      %p597 = scmp.ne.s32.totalorder %s583, %s584
      %p598 = scmp.eq.s32.totalorder %s47, 1
      %p599 = por %p597, %p598
      %p601 = scmp.ne.s32.totalorder %s584, %s600
      %p602 = scmp.eq.s32.totalorder %s47, 0
      %p603 = por %p601, %p602
      %s604 = ssub.s32 %s41, %s48
      %p605 = scmp.eq.s32.totalorder %s604, 0
      %s607 = sadd.s32 %s606, 1
      %s608 = scalar_select %p605, %s606, %s607
      %p611 = pneg %p605
      %p612 = scmp.eq.s32.totalorder %s41, 1
      %p613 = por %p611, %p612
      %p614 = scmp.ne.s32.totalorder %s606, %s609
      %p615 = scmp.eq.s32.totalorder %s41, 0
      %p616 = por %p614, %p615
      %p617 = scmp.ne.s32.totalorder %s606, %s609
      %p618 = scmp.eq.s32.totalorder %s46, 1
      %p619 = por %p617, %p618
      %p620 = scmp.ne.s32.totalorder %s609, %s610
      %p621 = scmp.eq.s32.totalorder %s46, 0
      %p622 = por %p620, %p621
      %p623 = scmp.ne.s32.totalorder %s609, %s610
      %p624 = scmp.eq.s32.totalorder %s47, 1
      %p625 = por %p623, %p624
      %p627 = scmp.ne.s32.totalorder %s610, %s626
      %p628 = scmp.eq.s32.totalorder %s47, 0
      %p629 = por %p627, %p628
      %p630 = scmp.le.s32.totalorder 1, %s41
      %p631 = scmp.lt.s32.totalorder %s41, 3
      %p632 = pnand %p630, %p631
      %p633 = pneg %p632
      // Predicated region
      $region9: #{net_cnn_forward.1} parent=5 // pred_check
        _
      $region10: #{net_cnn_forward.1} parent=5 // pred_check_branch
        %635 = sbr.rel (%p632) target = $region12
      $region11: #{net_cnn_forward.1} parent=5 // pred_region
        %s636 = ssub.s32 %s41, 1
        // Predicated region
        $region13: #{net_cnn_forward.1} parent=11 // pred_check
          %p637 = pneg %p88
        $region14: #{net_cnn_forward.1} parent=11 // pred_check_branch
          %639 = sbr.rel (%p637) target = $region16
        $region15: #{net_cnn_forward.1} parent=11 // pred_region
          _
        $region16: #{net_cnn_forward.1} parent=11 // pred_fallthru
          _
        // Predicated region
        $region17: #{net_cnn_forward.1} parent=11 // pred_check
          %p640 = pneg %p109
        $region18: #{net_cnn_forward.1} parent=11 // pred_check_branch
          %642 = sbr.rel (%p640) target = $region20
        $region19: #{net_cnn_forward.1} parent=11 // pred_region
          _
        $region20: #{net_cnn_forward.1} parent=11 // pred_fallthru
          _
        // Predicated region
        $region21: #{net_cnn_forward.1} parent=11 // pred_check
          %p643 = pneg %p130
        $region22: #{net_cnn_forward.1} parent=11 // pred_check_branch
          %645 = sbr.rel (%p643) target = $region24
        $region23: #{net_cnn_forward.1} parent=11 // pred_region
          _
        $region24: #{net_cnn_forward.1} parent=11 // pred_fallthru
          _
        // Predicated region
        $region25: #{net_cnn_forward.1} parent=11 // pred_check
          %p646 = pneg %p151
        $region26: #{net_cnn_forward.1} parent=11 // pred_check_branch
          %648 = sbr.rel (%p646) target = $region28
        $region27: #{net_cnn_forward.1} parent=11 // pred_region
          _
        $region28: #{net_cnn_forward.1} parent=11 // pred_fallthru
          _
        // Predicated region
        $region29: #{net_cnn_forward.1} parent=11 // pred_check
          %p649 = pneg %p172
        $region30: #{net_cnn_forward.1} parent=11 // pred_check_branch
          %651 = sbr.rel (%p649) target = $region32
        $region31: #{net_cnn_forward.1} parent=11 // pred_region
          _
        $region32: #{net_cnn_forward.1} parent=11 // pred_fallthru
          _
        // Predicated region
        $region33: #{net_cnn_forward.1} parent=11 // pred_check
          %p652 = pneg %p193
        $region34: #{net_cnn_forward.1} parent=11 // pred_check_branch
          %654 = sbr.rel (%p652) target = $region36
        $region35: #{net_cnn_forward.1} parent=11 // pred_region
          _
        $region36: #{net_cnn_forward.1} parent=11 // pred_fallthru
          _
        // Predicated region
        $region37: #{net_cnn_forward.1} parent=11 // pred_check
          %p655 = pneg %p214
        $region38: #{net_cnn_forward.1} parent=11 // pred_check_branch
          %657 = sbr.rel (%p655) target = $region40
        $region39: #{net_cnn_forward.1} parent=11 // pred_region
          _
        $region40: #{net_cnn_forward.1} parent=11 // pred_fallthru
          _
        // Predicated region
        $region41: #{net_cnn_forward.1} parent=11 // pred_check
          %p658 = pneg %p235
        $region42: #{net_cnn_forward.1} parent=11 // pred_check_branch
          %660 = sbr.rel (%p658) target = $region44
        $region43: #{net_cnn_forward.1} parent=11 // pred_region
          _
        $region44: #{net_cnn_forward.1} parent=11 // pred_fallthru
          _
        // Predicated region
        $region45: #{net_cnn_forward.1} parent=11 // pred_check
          %p661 = pneg %p256
        $region46: #{net_cnn_forward.1} parent=11 // pred_check_branch
          %663 = sbr.rel (%p661) target = $region48
        $region47: #{net_cnn_forward.1} parent=11 // pred_region
          _
        $region48: #{net_cnn_forward.1} parent=11 // pred_fallthru
          _
        // Predicated region
        $region49: #{net_cnn_forward.1} parent=11 // pred_check
          %p664 = pneg %p277
        $region50: #{net_cnn_forward.1} parent=11 // pred_check_branch
          %666 = sbr.rel (%p664) target = $region52
        $region51: #{net_cnn_forward.1} parent=11 // pred_region
          _
        $region52: #{net_cnn_forward.1} parent=11 // pred_fallthru
          _
        // Predicated region
        $region53: #{net_cnn_forward.1} parent=11 // pred_check
          %p667 = pneg %p298
        $region54: #{net_cnn_forward.1} parent=11 // pred_check_branch
          %669 = sbr.rel (%p667) target = $region56
        $region55: #{net_cnn_forward.1} parent=11 // pred_region
          _
        $region56: #{net_cnn_forward.1} parent=11 // pred_fallthru
          _
        // Predicated region
        $region57: #{net_cnn_forward.1} parent=11 // pred_check
          %p670 = pneg %p345
        $region58: #{net_cnn_forward.1} parent=11 // pred_check_branch
          %672 = sbr.rel (%p670) target = $region60
        $region59: #{net_cnn_forward.1} parent=11 // pred_region
          _
        $region60: #{net_cnn_forward.1} parent=11 // pred_fallthru
          _
        // Predicated region
        $region61: #{net_cnn_forward.1} parent=11 // pred_check
          %p673 = pneg %p366
        $region62: #{net_cnn_forward.1} parent=11 // pred_check_branch
          %675 = sbr.rel (%p673) target = $region64
        $region63: #{net_cnn_forward.1} parent=11 // pred_region
          _
        $region64: #{net_cnn_forward.1} parent=11 // pred_fallthru
          _
        // Predicated region
        $region65: #{net_cnn_forward.1} parent=11 // pred_check
          %p676 = pneg %p387
        $region66: #{net_cnn_forward.1} parent=11 // pred_check_branch
          %678 = sbr.rel (%p676) target = $region68
        $region67: #{net_cnn_forward.1} parent=11 // pred_region
          _
        $region68: #{net_cnn_forward.1} parent=11 // pred_fallthru
          _
        // Predicated region
        $region69: #{net_cnn_forward.1} parent=11 // pred_check
          %p679 = pneg %p408
        $region70: #{net_cnn_forward.1} parent=11 // pred_check_branch
          %681 = sbr.rel (%p679) target = $region72
        $region71: #{net_cnn_forward.1} parent=11 // pred_region
          _
        $region72: #{net_cnn_forward.1} parent=11 // pred_fallthru
          _
        // Predicated region
        $region73: #{net_cnn_forward.1} parent=11 // pred_check
          %p682 = pneg %p429
        $region74: #{net_cnn_forward.1} parent=11 // pred_check_branch
          %684 = sbr.rel (%p682) target = $region76
        $region75: #{net_cnn_forward.1} parent=11 // pred_region
          _
        $region76: #{net_cnn_forward.1} parent=11 // pred_fallthru
          _
        // Predicated region
        $region77: #{net_cnn_forward.1} parent=11 // pred_check
          %p685 = pneg %p450
        $region78: #{net_cnn_forward.1} parent=11 // pred_check_branch
          %687 = sbr.rel (%p685) target = $region80
        $region79: #{net_cnn_forward.1} parent=11 // pred_region
          _
        $region80: #{net_cnn_forward.1} parent=11 // pred_fallthru
          _
        // Predicated region
        $region81: #{net_cnn_forward.1} parent=11 // pred_check
          %p688 = pneg %p471
        $region82: #{net_cnn_forward.1} parent=11 // pred_check_branch
          %690 = sbr.rel (%p688) target = $region84
        $region83: #{net_cnn_forward.1} parent=11 // pred_region
          _
        $region84: #{net_cnn_forward.1} parent=11 // pred_fallthru
          _
        // Predicated region
        $region85: #{net_cnn_forward.1} parent=11 // pred_check
          %p691 = pneg %p492
        $region86: #{net_cnn_forward.1} parent=11 // pred_check_branch
          %693 = sbr.rel (%p691) target = $region88
        $region87: #{net_cnn_forward.1} parent=11 // pred_region
          _
        $region88: #{net_cnn_forward.1} parent=11 // pred_fallthru
          _
      $region12: #{net_cnn_forward.1} parent=5 // pred_fallthru
        _
      %p694 = scmp.lt.s32.totalorder %s41, 2
      // Predicated region
      $region89: #{net_cnn_forward.1} parent=5 // pred_check
        %p695 = pneg %p694
      $region90: #{net_cnn_forward.1} parent=5 // pred_check_branch
        %697 = sbr.rel (%p695) target = $region92
      $region91: #{net_cnn_forward.1} parent=5 // pred_region
        // Predicated region
        $region93: #{net_cnn_forward.1} parent=91 // pred_check
          %p698 = pneg %p61
        $region94: #{net_cnn_forward.1} parent=91 // pred_check_branch
          %700 = sbr.rel (%p698) target = $region96
        $region95: #{net_cnn_forward.1} parent=91 // pred_region
          %p701 = scmp.lt.s32.totalorder %s41, 1
          %s702 = scalar_select %p701, %s41, 1
          %s703 = smul.addr %s702, 32
          %s704 = smul.addr %s703, 4
          %s705 = scalar_lea.vmem %s0, %s704
        $region96: #{net_cnn_forward.1} parent=91 // pred_fallthru
          _
        // Predicated region
        $region97: #{net_cnn_forward.1} parent=91 // pred_check
          %p706 = pneg %p318
        $region98: #{net_cnn_forward.1} parent=91 // pred_check_branch
          %708 = sbr.rel (%p706) target = $region100
        $region99: #{net_cnn_forward.1} parent=91 // pred_region
          %p709 = scmp.lt.s32.totalorder %s41, 1
          %s710 = scalar_select %p709, %s41, 1
          %s711 = scalar_lea.vmem %s12, %s710
        $region100: #{net_cnn_forward.1} parent=91 // pred_fallthru
          _
      $region92: #{net_cnn_forward.1} parent=5 // pred_fallthru
        _
      %p712 = scmp.le.s32.totalorder 1, %s41
      %p713 = scmp.lt.s32.totalorder %s41, 3
      %p714 = pnand %p712, %p713
      %p715 = pneg %p714
      // Predicated region
      $region101: #{net_cnn_forward.1} parent=5 // pred_check
        _
      $region102: #{net_cnn_forward.1} parent=5 // pred_check_branch
        %717 = sbr.rel (%p714) target = $region104
      $region103: #{net_cnn_forward.1} parent=5 // pred_region
        %s718 = ssub.s32 %s41, 1
        %p719 = scmp.lt.s32.totalorder %s46, 1
        %s720 = scalar_select %p719, %s46, 1
        %s721 = smul.addr %s720, 32
        %s722 = smul.addr %s721, 4
        %s723 = scalar_lea.vmem %s0, %s722
        %p724 = pneg %p67
        %p725 = pneg %p64
        %p726 = pneg %p88
        %p727 = pneg %p85
        %p728 = pneg %p109
        %p729 = pneg %p106
        %p730 = pneg %p130
        %p731 = pneg %p127
        %p732 = pneg %p151
        %p733 = pneg %p148
        %p734 = pneg %p172
        %p735 = pneg %p169
        %p736 = pneg %p193
        %p737 = pneg %p190
        %p738 = pneg %p214
        %p739 = pneg %p211
        %p740 = pneg %p235
        %p741 = pneg %p232
        %p742 = pneg %p256
        %p743 = pneg %p253
        %p744 = pneg %p277
        %p745 = pneg %p274
        %p746 = pneg %p298
        %p747 = pneg %p295
        %p748 = scmp.lt.s32.totalorder %s46, 1
        %s749 = scalar_select %p748, %s46, 1
        %s750 = scalar_lea.vmem %s12, %s749
        %p751 = pneg %p324
        %p752 = pneg %p321
        %p753 = pneg %p345
        %p754 = pneg %p342
        %p755 = pneg %p366
        %p756 = pneg %p363
        %p757 = pneg %p387
        %p758 = pneg %p384
        %p759 = pneg %p408
        %p760 = pneg %p405
        %p761 = pneg %p429
        %p762 = pneg %p426
        %p763 = pneg %p450
        %p764 = pneg %p447
        %p765 = pneg %p471
        %p766 = pneg %p468
        %p767 = pneg %p492
        %p768 = pneg %p489
        %p769 = pneg %p518
        %p770 = pneg %p515
        %p771 = scmp.lt.s32.totalorder %s46, 1
        %s772 = scalar_select %p771, %s46, 1
        %s773 = smul.addr %s772, 8
        %s774 = scalar_lea.vmem %s21, %s773
        %p775 = pneg %p544
        %p776 = pneg %p541
        %s777 = sand.u32 %s531, 1
        %s778 = scalar_lea.sflag [#allocation3], %s777
        %s779 = sand.u32 %s531, 1
        %s780 = scalar_lea.vmem [#allocation2], %s779
        %p781 = pneg %p570
        %p782 = pneg %p567
        %s783 = sand.u32 %s46, 1
        %s784 = scalar_lea.sflag [#allocation5], %s783
        %s785 = sand.u32 %s557, 1
        %s786 = scalar_lea.vmem [#allocation4], %s785
        %p787 = pneg %p596
        %p788 = pneg %p593
        %s789 = sand.u32 %s46, 1
        %s790 = scalar_lea.sflag [#allocation5], %s789
        %s791 = sand.u32 %s583, 1
        %s792 = scalar_lea.vmem [#allocation6], %s791
        %p793 = pneg %p622
        %p794 = pneg %p619
        %s795 = sand.u32 %s609, 1
        %s796 = scalar_lea.sflag [#allocation8], %s795
        %s797 = sand.u32 %s609, 1
        %s798 = scalar_lea.vmem [#allocation7], %s797
        %p799 = scmp.lt.s32.totalorder %s46, 1
        %s800 = scalar_select %p799, %s46, 1
        %s801 = smul.addr %s800, 32
        %s802 = smul.addr %s801, 4
        %s803 = scalar_lea.vmem %s0, %s802
        %p804 = scmp.lt.s32.totalorder %s46, 1
        %s805 = scalar_select %p804, %s46, 1
        %s806 = scalar_lea.vmem %s12, %s805
        %p807 = scmp.lt.s32.totalorder %s46, 1
        %s808 = scalar_select %p807, %s46, 1
        %s809 = smul.addr %s808, 8
        %s810 = scalar_lea.vmem %s21, %s809
        %v812 = vld [vmem:[%s803] sm:$0xf]
        %v813 = vld [vmem:[%s803 + $0x4] sm:$0xf]
        %v814 = vld [vmem:[%s803 + $0x8] sm:$0xf]
        %v815 = vld [vmem:[%s803 + $0xc] sm:$0xf]
        %v816 = vld [vmem:[%s803 + $0x10] sm:$0xf]
        %v817 = vld [vmem:[%s803 + $0x14] sm:$0xf]
        %v818 = vld [vmem:[%s803 + $0x18] sm:$0xf]
        %v819 = vld [vmem:[%s803 + $0x1c] sm:$0xf]
        %v820 = vld [vmem:[%s803 + $0x20] sm:$0xf]
        %v821 = vld [vmem:[%s803 + $0x24] sm:$0xf]
        %v822 = vld [vmem:[%s803 + $0x28] sm:$0xf]
        %v823 = vld [vmem:[%s803 + $0x2c] sm:$0xf]
        %v824 = vld [vmem:[%s803 + $0x30] sm:$0xf]
        %v825 = vld [vmem:[%s803 + $0x34] sm:$0xf]
        %v826 = vld [vmem:[%s803 + $0x38] sm:$0xf]
        %v827 = vld [vmem:[%s803 + $0x3c] sm:$0xf]
        %v828 = vld [vmem:[%s803 + $0x40] sm:$0xf]
        %v829 = vld [vmem:[%s803 + $0x44] sm:$0xf]
        %v830 = vld [vmem:[%s803 + $0x48] sm:$0xf]
        %v831 = vld [vmem:[%s803 + $0x4c] sm:$0xf]
        %v832 = vld [vmem:[%s803 + $0x50] sm:$0xf]
        %v833 = vld [vmem:[%s803 + $0x54] sm:$0xf]
        %v834 = vld [vmem:[%s803 + $0x58] sm:$0xf]
        %v835 = vld [vmem:[%s803 + $0x5c] sm:$0xf]
        %v836 = vld [vmem:[%s803 + $0x60] sm:$0xf]
        %v837 = vld [vmem:[%s803 + $0x64] sm:$0xf]
        %v838 = vld [vmem:[%s803 + $0x68] sm:$0xf]
        %v839 = vld [vmem:[%s803 + $0x6c] sm:$0xf]
        %v840 = vld [vmem:[%s803 + $0x70] sm:$0xf]
        %v841 = vld [vmem:[%s803 + $0x74] sm:$0xf]
        %v842 = vld [vmem:[%s803 + $0x78] sm:$0xf]
        %v843 = vld [vmem:[%s803 + $0x7c] sm:$0xf]
        %v844 = vld [vmem:[%s1] sm:$0xf]
        %v845 = vld [vmem:[%s1 + $0x4] sm:$0xf]
        %v846 = vld [vmem:[%s1 + $0x8] sm:$0xf]
        %v847 = vld [vmem:[%s1 + $0xc] sm:$0xf]
        %v848 = vld [vmem:[%s1 + $0x10] sm:$0x3]
        %v849 = vld [vmem:[%s2] sm:$0x1]
        %v851 = vperm.slane %v849, 0
        %v885 = vunpack.c.l.b16 %v812
        %v886 = vunpack.c.l.b16 %v813
        %v887 = vunpack.c.l.b16 %v814
        %v888 = vunpack.c.l.b16 %v815
        %v889 = vunpack.c.l.b16 %v816
        %v890 = vunpack.c.l.b16 %v817
        %v891 = vunpack.c.l.b16 %v818
        %v892 = vunpack.c.l.b16 %v819
        %v893 = vunpack.c.l.b16 %v820
        %v894 = vunpack.c.l.b16 %v821
        %v895 = vunpack.c.l.b16 %v822
        %v896 = vunpack.c.l.b16 %v823
        %v897 = vunpack.c.l.b16 %v824
        %v898 = vunpack.c.l.b16 %v825
        %v899 = vunpack.c.l.b16 %v826
        %v900 = vunpack.c.l.b16 %v827
        %v901 = vunpack.c.l.b16 %v828
        %v902 = vunpack.c.l.b16 %v829
        %v903 = vunpack.c.l.b16 %v830
        %v904 = vunpack.c.l.b16 %v831
        %v905 = vunpack.c.l.b16 %v832
        %v906 = vunpack.c.l.b16 %v833
        %v907 = vunpack.c.l.b16 %v834
        %v908 = vunpack.c.l.b16 %v835
        %v909 = vunpack.c.l.b16 %v836
        %v910 = vunpack.c.l.b16 %v837
        %v911 = vunpack.c.l.b16 %v838
        %v912 = vunpack.c.l.b16 %v839
        %v913 = vunpack.c.l.b16 %v840
        %v914 = vunpack.c.l.b16 %v841
        %v915 = vunpack.c.l.b16 %v842
        %v916 = vunpack.c.l.b16 %v843
        %v917 = vpack.c.b16 %v886, %v885
        %v918 = vpack.c.b16 %v888, %v887
        %v919 = vpack.c.b16 %v890, %v889
        %v920 = vpack.c.b16 %v892, %v891
        %v921 = vpack.c.b16 %v894, %v893
        %v922 = vpack.c.b16 %v896, %v895
        %v923 = vpack.c.b16 %v898, %v897
        %v924 = vpack.c.b16 %v900, %v899
        %v925 = vpack.c.b16 %v902, %v901
        %v926 = vpack.c.b16 %v904, %v903
        %v927 = vpack.c.b16 %v906, %v905
        %v928 = vpack.c.b16 %v908, %v907
        %v929 = vpack.c.b16 %v910, %v909
        %v930 = vpack.c.b16 %v912, %v911
        %v931 = vpack.c.b16 %v914, %v913
        %v932 = vpack.c.b16 %v916, %v915
        %v938 = vunpack.c.l.b16 %v844
        %v939 = vunpack.c.l.b16 %v845
        %v940 = vunpack.c.l.b16 %v846
        %v941 = vunpack.c.l.b16 %v847
        %v942 = vunpack.c.l.b16 %v848
        %v943 = vpack.c.b16 %v939, %v938
        %v944 = vpack.c.b16 %v941, %v940
        %v945 = vpack.c.b16 %v942, %v942
        %vm948 = vcmask 293888
        %v950 = vsel %vm948, %v917, 0
        %v953 = vsel %vm948, %v918, 0
        %v956 = vsel %vm948, %v919, 0
        %v959 = vsel %vm948, %v920, 0
        %v962 = vsel %vm948, %v921, 0
        %v965 = vsel %vm948, %v922, 0
        %v968 = vsel %vm948, %v923, 0
        %v971 = vsel %vm948, %v924, 0
        %v974 = vsel %vm948, %v925, 0
        %v977 = vsel %vm948, %v926, 0
        %v980 = vsel %vm948, %v927, 0
        %v983 = vsel %vm948, %v928, 0
        %v986 = vsel %vm948, %v929, 0
        %v989 = vsel %vm948, %v930, 0
        %v992 = vsel %vm948, %v931, 0
        %v995 = vsel %vm948, %v932, 0
        %vm997 = vcmask 1041408
        %v999 = vsel %vm997, %v945, 0
        %1001 = vmatpush.bf16.msra.mxu0 0
        %1002 = vmatpush.bf16.msra.mxu0 0
        %1003 = vmatpush.bf16.msra.mxu0 0
        %1004 = vmatpush.bf16.msra.mxu0 0
        %1005 = vmatpush.bf16.msra.mxu0 0
        %1006 = vmatpush.bf16.msra.mxu0 %v999
        %1007 = vmatpush.bf16.msra.mxu0 %v944
        %1008 = vmatpush.bf16.msra.mxu0 %v943
        %1009 = vmatmul.bf16.gmra.mxu0 %v950
        %v1010 = vpop.f32.mrf.mxu0
        %v1011 = vadd.f32 %v851, %v1010
        %v1012 = vpop.f32.mrf.mxu0
        %v1013 = vadd.f32 %v851, %v1012
        %1014 = vmatmul.bf16.gmra.mxu0 %v953
        %v1015 = vpop.f32.mrf.mxu0
        %v1016 = vadd.f32 %v851, %v1015
        %v1017 = vpop.f32.mrf.mxu0
        %v1018 = vadd.f32 %v851, %v1017
        %1019 = vmatmul.bf16.gmra.mxu0 %v956
        %v1020 = vpop.f32.mrf.mxu0
        %v1021 = vadd.f32 %v851, %v1020
        %v1022 = vpop.f32.mrf.mxu0
        %v1023 = vadd.f32 %v851, %v1022
        %1024 = vmatmul.bf16.gmra.mxu0 %v959
        %v1025 = vpop.f32.mrf.mxu0
        %v1026 = vadd.f32 %v851, %v1025
        %v1027 = vpop.f32.mrf.mxu0
        %v1028 = vadd.f32 %v851, %v1027
        %1029 = vmatmul.bf16.gmra.mxu0 %v962
        %v1030 = vpop.f32.mrf.mxu0
        %v1031 = vadd.f32 %v851, %v1030
        %v1032 = vpop.f32.mrf.mxu0
        %v1033 = vadd.f32 %v851, %v1032
        %1034 = vmatmul.bf16.gmra.mxu0 %v965
        %v1035 = vpop.f32.mrf.mxu0
        %v1036 = vadd.f32 %v851, %v1035
        %v1037 = vpop.f32.mrf.mxu0
        %v1038 = vadd.f32 %v851, %v1037
        %1039 = vmatmul.bf16.gmra.mxu0 %v968
        %v1040 = vpop.f32.mrf.mxu0
        %v1041 = vadd.f32 %v851, %v1040
        %v1042 = vpop.f32.mrf.mxu0
        %v1043 = vadd.f32 %v851, %v1042
        %1044 = vmatmul.bf16.gmra.mxu0 %v971
        %v1045 = vpop.f32.mrf.mxu0
        %v1046 = vadd.f32 %v851, %v1045
        %v1047 = vpop.f32.mrf.mxu0
        %v1048 = vadd.f32 %v851, %v1047
        %1049 = vmatmul.bf16.gmra.mxu0 %v974
        %v1050 = vpop.f32.mrf.mxu0
        %v1051 = vadd.f32 %v851, %v1050
        %v1052 = vpop.f32.mrf.mxu0
        %v1053 = vadd.f32 %v851, %v1052
        %1054 = vmatmul.bf16.gmra.mxu0 %v977
        %v1055 = vpop.f32.mrf.mxu0
        %v1056 = vadd.f32 %v851, %v1055
        %v1057 = vpop.f32.mrf.mxu0
        %v1058 = vadd.f32 %v851, %v1057
        %1059 = vmatmul.bf16.gmra.mxu0 %v980
        %v1060 = vpop.f32.mrf.mxu0
        %v1061 = vadd.f32 %v851, %v1060
        %v1062 = vpop.f32.mrf.mxu0
        %v1063 = vadd.f32 %v851, %v1062
        %1064 = vmatmul.bf16.gmra.mxu0 %v983
        %v1065 = vpop.f32.mrf.mxu0
        %v1066 = vadd.f32 %v851, %v1065
        %v1067 = vpop.f32.mrf.mxu0
        %v1068 = vadd.f32 %v851, %v1067
        %1069 = vmatmul.bf16.gmra.mxu0 %v986
        %v1070 = vpop.f32.mrf.mxu0
        %v1071 = vadd.f32 %v851, %v1070
        %v1072 = vpop.f32.mrf.mxu0
        %v1073 = vadd.f32 %v851, %v1072
        %1074 = vmatmul.bf16.gmra.mxu0 %v989
        %v1075 = vpop.f32.mrf.mxu0
        %v1076 = vadd.f32 %v851, %v1075
        %v1077 = vpop.f32.mrf.mxu0
        %v1078 = vadd.f32 %v851, %v1077
        %1079 = vmatmul.bf16.gmra.mxu0 %v992
        %v1080 = vpop.f32.mrf.mxu0
        %v1081 = vadd.f32 %v851, %v1080
        %v1082 = vpop.f32.mrf.mxu0
        %v1083 = vadd.f32 %v851, %v1082
        %1084 = vmatmul.bf16.gmra.mxu0 %v995
        %v1085 = vpop.f32.mrf.mxu0
        %v1086 = vadd.f32 %v851, %v1085
        %v1087 = vpop.f32.mrf.mxu0
        %v1088 = vadd.f32 %v851, %v1087
        %1089 = vdwg.mxu0
        %v1090 = vmax.f32 %v1011, 0.0
        %v1091 = vmax.f32 %v1013, 0.0
        %v1092 = vmax.f32 %v1016, 0.0
        %v1093 = vmax.f32 %v1018, 0.0
        %v1094 = vmax.f32 %v1021, 0.0
        %v1095 = vmax.f32 %v1023, 0.0
        %v1096 = vmax.f32 %v1026, 0.0
        %v1097 = vmax.f32 %v1028, 0.0
        %v1098 = vmax.f32 %v1031, 0.0
        %v1099 = vmax.f32 %v1033, 0.0
        %v1100 = vmax.f32 %v1036, 0.0
        %v1101 = vmax.f32 %v1038, 0.0
        %v1102 = vmax.f32 %v1041, 0.0
        %v1103 = vmax.f32 %v1043, 0.0
        %v1104 = vmax.f32 %v1046, 0.0
        %v1105 = vmax.f32 %v1048, 0.0
        %v1106 = vmax.f32 %v1051, 0.0
        %v1107 = vmax.f32 %v1053, 0.0
        %v1108 = vmax.f32 %v1056, 0.0
        %v1109 = vmax.f32 %v1058, 0.0
        %v1110 = vmax.f32 %v1061, 0.0
        %v1111 = vmax.f32 %v1063, 0.0
        %v1112 = vmax.f32 %v1066, 0.0
        %v1113 = vmax.f32 %v1068, 0.0
        %v1114 = vmax.f32 %v1071, 0.0
        %v1115 = vmax.f32 %v1073, 0.0
        %v1116 = vmax.f32 %v1076, 0.0
        %v1117 = vmax.f32 %v1078, 0.0
        %v1118 = vmax.f32 %v1081, 0.0
        %v1119 = vmax.f32 %v1083, 0.0
        %v1120 = vmax.f32 %v1086, 0.0
        %v1121 = vmax.f32 %v1088, 0.0
        %v1122 = vld [vmem:[%s3] sm:$0xff]
        %v1123 = vld [vmem:[%s3 + $0x8] sm:$0xff]
        %v1124 = vld [vmem:[%s3 + $0x10] sm:$0xff]
        %v1125 = vld [vmem:[%s3 + $0x18] sm:$0xff]
        %v1126 = vld [vmem:[%s3 + $0x20] sm:$0xff]
        %v1127 = vld [vmem:[%s3 + $0x28] sm:$0xff]
        %v1128 = vld [vmem:[%s3 + $0x30] sm:$0xff]
        %v1129 = vld [vmem:[%s3 + $0x38] sm:$0xff]
        %v1130 = vld [vmem:[%s3 + $0x40] sm:$0xff]
        %v1131 = vld [vmem:[%s3 + $0x48] sm:$0xff]
        %v1132 = vld [vmem:[%s3 + $0x50] sm:$0xff]
        %v1133 = vld [vmem:[%s3 + $0x58] sm:$0xff]
        %v1134 = vld [vmem:[%s3 + $0x60] sm:$0xff]
        %v1135 = vld [vmem:[%s3 + $0x68] sm:$0xff]
        %v1136 = vld [vmem:[%s3 + $0x70] sm:$0xff]
        %v1137 = vld [vmem:[%s3 + $0x78] sm:$0xff]
        %1138 = vmatpush.msra.mxu0 %v1105
        %1139 = vmatpush.msra.mxu0 %v1104
        %1140 = vmatpush.msra.mxu0 %v1103
        %1141 = vmatpush.msra.mxu0 %v1102
        %1142 = vmatpush.msra.mxu0 %v1101
        %1143 = vmatpush.msra.mxu0 %v1100
        %1144 = vmatpush.msra.mxu0 %v1099
        %1145 = vmatpush.msra.mxu0 %v1098
        %1146 = vmatpush.msra.mxu0 %v1097
        %1147 = vmatpush.msra.mxu0 %v1096
        %1148 = vmatpush.msra.mxu0 %v1095
        %1149 = vmatpush.msra.mxu0 %v1094
        %1150 = vmatpush.msra.mxu0 %v1093
        %1151 = vmatpush.msra.mxu0 %v1092
        %1152 = vmatpush.msra.mxu0 %v1091
        %1153 = vmatpush.msra.mxu0 %v1090
        %1154 = vmatmul.f32.gmra.mxu0 %v1122
        %v1155 = vpop.f32.mrf.mxu0
        %v1156 = vadd.f32 0.0, %v1155
        %1157 = vmatmul.f32.gmra.mxu0 %v1124
        %v1158 = vpop.f32.mrf.mxu0
        %v1159 = vadd.f32 0.0, %v1158
        %1160 = vmatmul.f32.gmra.mxu0 %v1126
        %v1161 = vpop.f32.mrf.mxu0
        %v1162 = vadd.f32 0.0, %v1161
        %1163 = vmatmul.f32.gmra.mxu0 %v1128
        %v1164 = vpop.f32.mrf.mxu0
        %v1165 = vadd.f32 0.0, %v1164
        %1166 = vmatmul.f32.gmra.mxu0 %v1130
        %v1167 = vpop.f32.mrf.mxu0
        %v1168 = vadd.f32 0.0, %v1167
        %1169 = vmatmul.f32.gmra.mxu0 %v1132
        %v1170 = vpop.f32.mrf.mxu0
        %v1171 = vadd.f32 0.0, %v1170
        %1172 = vmatmul.f32.gmra.mxu0 %v1134
        %v1173 = vpop.f32.mrf.mxu0
        %v1174 = vadd.f32 0.0, %v1173
        %1175 = vmatmul.f32.gmra.mxu0 %v1136
        %v1176 = vpop.f32.mrf.mxu0
        %v1177 = vadd.f32 0.0, %v1176
        %1178 = vdwg.mxu0
        %1179 = vmatpush.msra.mxu0 %v1121
        %1180 = vmatpush.msra.mxu0 %v1120
        %1181 = vmatpush.msra.mxu0 %v1119
        %1182 = vmatpush.msra.mxu0 %v1118
        %1183 = vmatpush.msra.mxu0 %v1117
        %1184 = vmatpush.msra.mxu0 %v1116
        %1185 = vmatpush.msra.mxu0 %v1115
        %1186 = vmatpush.msra.mxu0 %v1114
        %1187 = vmatpush.msra.mxu0 %v1113
        %1188 = vmatpush.msra.mxu0 %v1112
        %1189 = vmatpush.msra.mxu0 %v1111
        %1190 = vmatpush.msra.mxu0 %v1110
        %1191 = vmatpush.msra.mxu0 %v1109
        %1192 = vmatpush.msra.mxu0 %v1108
        %1193 = vmatpush.msra.mxu0 %v1107
        %1194 = vmatpush.msra.mxu0 %v1106
        %1195 = vmatmul.f32.gmra.mxu0 %v1123
        %v1196 = vpop.f32.mrf.mxu0
        %v1197 = vadd.f32 %v1156, %v1196
        %1198 = vmatmul.f32.gmra.mxu0 %v1125
        %v1199 = vpop.f32.mrf.mxu0
        %v1200 = vadd.f32 %v1159, %v1199
        %1201 = vmatmul.f32.gmra.mxu0 %v1127
        %v1202 = vpop.f32.mrf.mxu0
        %v1203 = vadd.f32 %v1162, %v1202
        %1204 = vmatmul.f32.gmra.mxu0 %v1129
        %v1205 = vpop.f32.mrf.mxu0
        %v1206 = vadd.f32 %v1165, %v1205
        %1207 = vmatmul.f32.gmra.mxu0 %v1131
        %v1208 = vpop.f32.mrf.mxu0
        %v1209 = vadd.f32 %v1168, %v1208
        %1210 = vmatmul.f32.gmra.mxu0 %v1133
        %v1211 = vpop.f32.mrf.mxu0
        %v1212 = vadd.f32 %v1171, %v1211
        %1213 = vmatmul.f32.gmra.mxu0 %v1135
        %v1214 = vpop.f32.mrf.mxu0
        %v1215 = vadd.f32 %v1174, %v1214
        %1216 = vmatmul.f32.gmra.mxu0 %v1137
        %v1217 = vpop.f32.mrf.mxu0
        %v1218 = vadd.f32 %v1177, %v1217
        %1219 = vdwg.mxu0
        %s1220 = scalar_lea.vmem %s3, 128
        %v1221 = vld [vmem:[%s1220] sm:$0xff]
        %v1222 = vld [vmem:[%s1220 + $0x8] sm:$0xff]
        %v1223 = vld [vmem:[%s1220 + $0x10] sm:$0xff]
        %v1224 = vld [vmem:[%s1220 + $0x18] sm:$0xff]
        %v1225 = vld [vmem:[%s1220 + $0x20] sm:$0xff]
        %v1226 = vld [vmem:[%s1220 + $0x28] sm:$0xff]
        %v1227 = vld [vmem:[%s1220 + $0x30] sm:$0xff]
        %v1228 = vld [vmem:[%s1220 + $0x38] sm:$0xff]
        %v1229 = vld [vmem:[%s1220 + $0x40] sm:$0xff]
        %v1230 = vld [vmem:[%s1220 + $0x48] sm:$0xff]
        %v1231 = vld [vmem:[%s1220 + $0x50] sm:$0xff]
        %v1232 = vld [vmem:[%s1220 + $0x58] sm:$0xff]
        %v1233 = vld [vmem:[%s1220 + $0x60] sm:$0xff]
        %v1234 = vld [vmem:[%s1220 + $0x68] sm:$0xff]
        %v1235 = vld [vmem:[%s1220 + $0x70] sm:$0xff]
        %v1236 = vld [vmem:[%s1220 + $0x78] sm:$0xff]
        %1237 = vmatpush.msra.mxu0 %v1105
        %1238 = vmatpush.msra.mxu0 %v1104
        %1239 = vmatpush.msra.mxu0 %v1103
        %1240 = vmatpush.msra.mxu0 %v1102
        %1241 = vmatpush.msra.mxu0 %v1101
        %1242 = vmatpush.msra.mxu0 %v1100
        %1243 = vmatpush.msra.mxu0 %v1099
        %1244 = vmatpush.msra.mxu0 %v1098
        %1245 = vmatpush.msra.mxu0 %v1097
        %1246 = vmatpush.msra.mxu0 %v1096
        %1247 = vmatpush.msra.mxu0 %v1095
        %1248 = vmatpush.msra.mxu0 %v1094
        %1249 = vmatpush.msra.mxu0 %v1093
        %1250 = vmatpush.msra.mxu0 %v1092
        %1251 = vmatpush.msra.mxu0 %v1091
        %1252 = vmatpush.msra.mxu0 %v1090
        %1253 = vmatmul.f32.gmra.mxu0 %v1221
        %v1254 = vpop.f32.mrf.mxu0
        %v1255 = vadd.f32 0.0, %v1254
        %1256 = vmatmul.f32.gmra.mxu0 %v1223
        %v1257 = vpop.f32.mrf.mxu0
        %v1258 = vadd.f32 0.0, %v1257
        %1259 = vmatmul.f32.gmra.mxu0 %v1225
        %v1260 = vpop.f32.mrf.mxu0
        %v1261 = vadd.f32 0.0, %v1260
        %1262 = vmatmul.f32.gmra.mxu0 %v1227
        %v1263 = vpop.f32.mrf.mxu0
        %v1264 = vadd.f32 0.0, %v1263
        %1265 = vmatmul.f32.gmra.mxu0 %v1229
        %v1266 = vpop.f32.mrf.mxu0
        %v1267 = vadd.f32 0.0, %v1266
        %1268 = vmatmul.f32.gmra.mxu0 %v1231
        %v1269 = vpop.f32.mrf.mxu0
        %v1270 = vadd.f32 0.0, %v1269
        %1271 = vmatmul.f32.gmra.mxu0 %v1233
        %v1272 = vpop.f32.mrf.mxu0
        %v1273 = vadd.f32 0.0, %v1272
        %1274 = vmatmul.f32.gmra.mxu0 %v1235
        %v1275 = vpop.f32.mrf.mxu0
        %v1276 = vadd.f32 0.0, %v1275
        %1277 = vdwg.mxu0
        %1278 = vmatpush.msra.mxu0 %v1121
        %1279 = vmatpush.msra.mxu0 %v1120
        %1280 = vmatpush.msra.mxu0 %v1119
        %1281 = vmatpush.msra.mxu0 %v1118
        %1282 = vmatpush.msra.mxu0 %v1117
        %1283 = vmatpush.msra.mxu0 %v1116
        %1284 = vmatpush.msra.mxu0 %v1115
        %1285 = vmatpush.msra.mxu0 %v1114
        %1286 = vmatpush.msra.mxu0 %v1113
        %1287 = vmatpush.msra.mxu0 %v1112
        %1288 = vmatpush.msra.mxu0 %v1111
        %1289 = vmatpush.msra.mxu0 %v1110
        %1290 = vmatpush.msra.mxu0 %v1109
        %1291 = vmatpush.msra.mxu0 %v1108
        %1292 = vmatpush.msra.mxu0 %v1107
        %1293 = vmatpush.msra.mxu0 %v1106
        %1294 = vmatmul.f32.gmra.mxu0 %v1222
        %v1295 = vpop.f32.mrf.mxu0
        %v1296 = vadd.f32 %v1255, %v1295
        %1297 = vmatmul.f32.gmra.mxu0 %v1224
        %v1298 = vpop.f32.mrf.mxu0
        %v1299 = vadd.f32 %v1258, %v1298
        %1300 = vmatmul.f32.gmra.mxu0 %v1226
        %v1301 = vpop.f32.mrf.mxu0
        %v1302 = vadd.f32 %v1261, %v1301
        %1303 = vmatmul.f32.gmra.mxu0 %v1228
        %v1304 = vpop.f32.mrf.mxu0
        %v1305 = vadd.f32 %v1264, %v1304
        %1306 = vmatmul.f32.gmra.mxu0 %v1230
        %v1307 = vpop.f32.mrf.mxu0
        %v1308 = vadd.f32 %v1267, %v1307
        %1309 = vmatmul.f32.gmra.mxu0 %v1232
        %v1310 = vpop.f32.mrf.mxu0
        %v1311 = vadd.f32 %v1270, %v1310
        %1312 = vmatmul.f32.gmra.mxu0 %v1234
        %v1313 = vpop.f32.mrf.mxu0
        %v1314 = vadd.f32 %v1273, %v1313
        %1315 = vmatmul.f32.gmra.mxu0 %v1236
        %v1316 = vpop.f32.mrf.mxu0
        %v1317 = vadd.f32 %v1276, %v1316
        %1318 = vdwg.mxu0
        %v1319 = vmax.f32 %v1197, %v1296
        %v1320 = vmax.f32 %v1200, %v1299
        %v1321 = vmax.f32 %v1203, %v1302
        %v1322 = vmax.f32 %v1206, %v1305
        %v1323 = vmax.f32 %v1209, %v1308
        %v1324 = vmax.f32 %v1212, %v1311
        %v1325 = vmax.f32 %v1215, %v1314
        %v1326 = vmax.f32 %v1218, %v1317
        %s1327 = scalar_lea.vmem %s3, 256
        %v1328 = vld [vmem:[%s1327] sm:$0xff]
        %v1329 = vld [vmem:[%s1327 + $0x8] sm:$0xff]
        %v1330 = vld [vmem:[%s1327 + $0x10] sm:$0xff]
        %v1331 = vld [vmem:[%s1327 + $0x18] sm:$0xff]
        %v1332 = vld [vmem:[%s1327 + $0x20] sm:$0xff]
        %v1333 = vld [vmem:[%s1327 + $0x28] sm:$0xff]
        %v1334 = vld [vmem:[%s1327 + $0x30] sm:$0xff]
        %v1335 = vld [vmem:[%s1327 + $0x38] sm:$0xff]
        %v1336 = vld [vmem:[%s1327 + $0x40] sm:$0xff]
        %v1337 = vld [vmem:[%s1327 + $0x48] sm:$0xff]
        %v1338 = vld [vmem:[%s1327 + $0x50] sm:$0xff]
        %v1339 = vld [vmem:[%s1327 + $0x58] sm:$0xff]
        %v1340 = vld [vmem:[%s1327 + $0x60] sm:$0xff]
        %v1341 = vld [vmem:[%s1327 + $0x68] sm:$0xff]
        %v1342 = vld [vmem:[%s1327 + $0x70] sm:$0xff]
        %v1343 = vld [vmem:[%s1327 + $0x78] sm:$0xff]
        %1344 = vmatpush.msra.mxu0 %v1105
        %1345 = vmatpush.msra.mxu0 %v1104
        %1346 = vmatpush.msra.mxu0 %v1103
        %1347 = vmatpush.msra.mxu0 %v1102
        %1348 = vmatpush.msra.mxu0 %v1101
        %1349 = vmatpush.msra.mxu0 %v1100
        %1350 = vmatpush.msra.mxu0 %v1099
        %1351 = vmatpush.msra.mxu0 %v1098
        %1352 = vmatpush.msra.mxu0 %v1097
        %1353 = vmatpush.msra.mxu0 %v1096
        %1354 = vmatpush.msra.mxu0 %v1095
        %1355 = vmatpush.msra.mxu0 %v1094
        %1356 = vmatpush.msra.mxu0 %v1093
        %1357 = vmatpush.msra.mxu0 %v1092
        %1358 = vmatpush.msra.mxu0 %v1091
        %1359 = vmatpush.msra.mxu0 %v1090
        %1360 = vmatmul.f32.gmra.mxu0 %v1328
        %v1361 = vpop.f32.mrf.mxu0
        %v1362 = vadd.f32 0.0, %v1361
        %1363 = vmatmul.f32.gmra.mxu0 %v1330
        %v1364 = vpop.f32.mrf.mxu0
        %v1365 = vadd.f32 0.0, %v1364
        %1366 = vmatmul.f32.gmra.mxu0 %v1332
        %v1367 = vpop.f32.mrf.mxu0
        %v1368 = vadd.f32 0.0, %v1367
        %1369 = vmatmul.f32.gmra.mxu0 %v1334
        %v1370 = vpop.f32.mrf.mxu0
        %v1371 = vadd.f32 0.0, %v1370
        %1372 = vmatmul.f32.gmra.mxu0 %v1336
        %v1373 = vpop.f32.mrf.mxu0
        %v1374 = vadd.f32 0.0, %v1373
        %1375 = vmatmul.f32.gmra.mxu0 %v1338
        %v1376 = vpop.f32.mrf.mxu0
        %v1377 = vadd.f32 0.0, %v1376
        %1378 = vmatmul.f32.gmra.mxu0 %v1340
        %v1379 = vpop.f32.mrf.mxu0
        %v1380 = vadd.f32 0.0, %v1379
        %1381 = vmatmul.f32.gmra.mxu0 %v1342
        %v1382 = vpop.f32.mrf.mxu0
        %v1383 = vadd.f32 0.0, %v1382
        %1384 = vdwg.mxu0
        %1385 = vmatpush.msra.mxu0 %v1121
        %1386 = vmatpush.msra.mxu0 %v1120
        %1387 = vmatpush.msra.mxu0 %v1119
        %1388 = vmatpush.msra.mxu0 %v1118
        %1389 = vmatpush.msra.mxu0 %v1117
        %1390 = vmatpush.msra.mxu0 %v1116
        %1391 = vmatpush.msra.mxu0 %v1115
        %1392 = vmatpush.msra.mxu0 %v1114
        %1393 = vmatpush.msra.mxu0 %v1113
        %1394 = vmatpush.msra.mxu0 %v1112
        %1395 = vmatpush.msra.mxu0 %v1111
        %1396 = vmatpush.msra.mxu0 %v1110
        %1397 = vmatpush.msra.mxu0 %v1109
        %1398 = vmatpush.msra.mxu0 %v1108
        %1399 = vmatpush.msra.mxu0 %v1107
        %1400 = vmatpush.msra.mxu0 %v1106
        %1401 = vmatmul.f32.gmra.mxu0 %v1329
        %v1402 = vpop.f32.mrf.mxu0
        %v1403 = vadd.f32 %v1362, %v1402
        %1404 = vmatmul.f32.gmra.mxu0 %v1331
        %v1405 = vpop.f32.mrf.mxu0
        %v1406 = vadd.f32 %v1365, %v1405
        %1407 = vmatmul.f32.gmra.mxu0 %v1333
        %v1408 = vpop.f32.mrf.mxu0
        %v1409 = vadd.f32 %v1368, %v1408
        %1410 = vmatmul.f32.gmra.mxu0 %v1335
        %v1411 = vpop.f32.mrf.mxu0
        %v1412 = vadd.f32 %v1371, %v1411
        %1413 = vmatmul.f32.gmra.mxu0 %v1337
        %v1414 = vpop.f32.mrf.mxu0
        %v1415 = vadd.f32 %v1374, %v1414
        %1416 = vmatmul.f32.gmra.mxu0 %v1339
        %v1417 = vpop.f32.mrf.mxu0
        %v1418 = vadd.f32 %v1377, %v1417
        %1419 = vmatmul.f32.gmra.mxu0 %v1341
        %v1420 = vpop.f32.mrf.mxu0
        %v1421 = vadd.f32 %v1380, %v1420
        %1422 = vmatmul.f32.gmra.mxu0 %v1343
        %v1423 = vpop.f32.mrf.mxu0
        %v1424 = vadd.f32 %v1383, %v1423
        %1425 = vdwg.mxu0
        %v1426 = vmax.f32 %v1319, %v1403
        %v1427 = vmax.f32 %v1320, %v1406
        %v1428 = vmax.f32 %v1321, %v1409
        %v1429 = vmax.f32 %v1322, %v1412
        %v1430 = vmax.f32 %v1323, %v1415
        %v1431 = vmax.f32 %v1324, %v1418
        %v1432 = vmax.f32 %v1325, %v1421
        %v1433 = vmax.f32 %v1326, %v1424
        %s1434 = scalar_lea.vmem %s3, 384
        %v1435 = vld [vmem:[%s1434] sm:$0xff]
        %v1436 = vld [vmem:[%s1434 + $0x8] sm:$0xff]
        %v1437 = vld [vmem:[%s1434 + $0x10] sm:$0xff]
        %v1438 = vld [vmem:[%s1434 + $0x18] sm:$0xff]
        %v1439 = vld [vmem:[%s1434 + $0x20] sm:$0xff]
        %v1440 = vld [vmem:[%s1434 + $0x28] sm:$0xff]
        %v1441 = vld [vmem:[%s1434 + $0x30] sm:$0xff]
        %v1442 = vld [vmem:[%s1434 + $0x38] sm:$0xff]
        %v1443 = vld [vmem:[%s1434 + $0x40] sm:$0xff]
        %v1444 = vld [vmem:[%s1434 + $0x48] sm:$0xff]
        %v1445 = vld [vmem:[%s1434 + $0x50] sm:$0xff]
        %v1446 = vld [vmem:[%s1434 + $0x58] sm:$0xff]
        %v1447 = vld [vmem:[%s1434 + $0x60] sm:$0xff]
        %v1448 = vld [vmem:[%s1434 + $0x68] sm:$0xff]
        %v1449 = vld [vmem:[%s1434 + $0x70] sm:$0xff]
        %v1450 = vld [vmem:[%s1434 + $0x78] sm:$0xff]
        %1451 = vmatpush.msra.mxu0 %v1105
        %1452 = vmatpush.msra.mxu0 %v1104
        %1453 = vmatpush.msra.mxu0 %v1103
        %1454 = vmatpush.msra.mxu0 %v1102
        %1455 = vmatpush.msra.mxu0 %v1101
        %1456 = vmatpush.msra.mxu0 %v1100
        %1457 = vmatpush.msra.mxu0 %v1099
        %1458 = vmatpush.msra.mxu0 %v1098
        %1459 = vmatpush.msra.mxu0 %v1097
        %1460 = vmatpush.msra.mxu0 %v1096
        %1461 = vmatpush.msra.mxu0 %v1095
        %1462 = vmatpush.msra.mxu0 %v1094
        %1463 = vmatpush.msra.mxu0 %v1093
        %1464 = vmatpush.msra.mxu0 %v1092
        %1465 = vmatpush.msra.mxu0 %v1091
        %1466 = vmatpush.msra.mxu0 %v1090
        %1467 = vmatmul.f32.gmra.mxu0 %v1435
        %v1468 = vpop.f32.mrf.mxu0
        %v1469 = vadd.f32 0.0, %v1468
        %1470 = vmatmul.f32.gmra.mxu0 %v1437
        %v1471 = vpop.f32.mrf.mxu0
        %v1472 = vadd.f32 0.0, %v1471
        %1473 = vmatmul.f32.gmra.mxu0 %v1439
        %v1474 = vpop.f32.mrf.mxu0
        %v1475 = vadd.f32 0.0, %v1474
        %1476 = vmatmul.f32.gmra.mxu0 %v1441
        %v1477 = vpop.f32.mrf.mxu0
        %v1478 = vadd.f32 0.0, %v1477
        %1479 = vmatmul.f32.gmra.mxu0 %v1443
        %v1480 = vpop.f32.mrf.mxu0
        %v1481 = vadd.f32 0.0, %v1480
        %1482 = vmatmul.f32.gmra.mxu0 %v1445
        %v1483 = vpop.f32.mrf.mxu0
        %v1484 = vadd.f32 0.0, %v1483
        %1485 = vmatmul.f32.gmra.mxu0 %v1447
        %v1486 = vpop.f32.mrf.mxu0
        %v1487 = vadd.f32 0.0, %v1486
        %1488 = vmatmul.f32.gmra.mxu0 %v1449
        %v1489 = vpop.f32.mrf.mxu0
        %v1490 = vadd.f32 0.0, %v1489
        %1491 = vdwg.mxu0
        %1492 = vmatpush.msra.mxu0 %v1121
        %1493 = vmatpush.msra.mxu0 %v1120
        %1494 = vmatpush.msra.mxu0 %v1119
        %1495 = vmatpush.msra.mxu0 %v1118
        %1496 = vmatpush.msra.mxu0 %v1117
        %1497 = vmatpush.msra.mxu0 %v1116
        %1498 = vmatpush.msra.mxu0 %v1115
        %1499 = vmatpush.msra.mxu0 %v1114
        %1500 = vmatpush.msra.mxu0 %v1113
        %1501 = vmatpush.msra.mxu0 %v1112
        %1502 = vmatpush.msra.mxu0 %v1111
        %1503 = vmatpush.msra.mxu0 %v1110
        %1504 = vmatpush.msra.mxu0 %v1109
        %1505 = vmatpush.msra.mxu0 %v1108
        %1506 = vmatpush.msra.mxu0 %v1107
        %1507 = vmatpush.msra.mxu0 %v1106
        %1508 = vmatmul.f32.gmra.mxu0 %v1436
        %v1509 = vpop.f32.mrf.mxu0
        %v1510 = vadd.f32 %v1469, %v1509
        %1511 = vmatmul.f32.gmra.mxu0 %v1438
        %v1512 = vpop.f32.mrf.mxu0
        %v1513 = vadd.f32 %v1472, %v1512
        %1514 = vmatmul.f32.gmra.mxu0 %v1440
        %v1515 = vpop.f32.mrf.mxu0
        %v1516 = vadd.f32 %v1475, %v1515
        %1517 = vmatmul.f32.gmra.mxu0 %v1442
        %v1518 = vpop.f32.mrf.mxu0
        %v1519 = vadd.f32 %v1478, %v1518
        %1520 = vmatmul.f32.gmra.mxu0 %v1444
        %v1521 = vpop.f32.mrf.mxu0
        %v1522 = vadd.f32 %v1481, %v1521
        %1523 = vmatmul.f32.gmra.mxu0 %v1446
        %v1524 = vpop.f32.mrf.mxu0
        %v1525 = vadd.f32 %v1484, %v1524
        %1526 = vmatmul.f32.gmra.mxu0 %v1448
        %v1527 = vpop.f32.mrf.mxu0
        %v1528 = vadd.f32 %v1487, %v1527
        %1529 = vmatmul.f32.gmra.mxu0 %v1450
        %v1530 = vpop.f32.mrf.mxu0
        %v1531 = vadd.f32 %v1490, %v1530
        %1532 = vdwg.mxu0
        %v1533 = vmax.f32 %v1426, %v1510
        %v1534 = vmax.f32 %v1427, %v1513
        %v1535 = vmax.f32 %v1428, %v1516
        %v1536 = vmax.f32 %v1429, %v1519
        %v1537 = vmax.f32 %v1430, %v1522
        %v1538 = vmax.f32 %v1431, %v1525
        %v1539 = vmax.f32 %v1432, %v1528
        %v1540 = vmax.f32 %v1433, %v1531
        %v1541 = vpack.c.bf16 %v1534, %v1533
        %v1542 = vpack.c.bf16 %v1536, %v1535
        %v1543 = vpack.c.bf16 %v1538, %v1537
        %v1544 = vpack.c.bf16 %v1540, %v1539
        %v1545 = vld [vmem:[%s5] sm:$0xf]
        %v1546 = vld [vmem:[%s5 + $0x4] sm:$0xf]
        %v1549 = vunpack.c.l.b16 %v1545
        %v1550 = vunpack.c.l.b16 %v1546
        %v1551 = vpack.c.b16 %v1550, %v1549
        %vm1553 = vcmask 130048
        %v1555 = vsel %vm1553, %v1541, 0
        %v1558 = vsel %vm1553, %v1542, 0
        %v1561 = vsel %vm1553, %v1543, 0
        %v1564 = vsel %vm1553, %v1544, 0
        %1566 = vmatpush.bf16.msra.mxu0 0
        %1567 = vmatpush.bf16.msra.mxu0 0
        %1568 = vmatpush.bf16.msra.mxu0 0
        %1569 = vmatpush.bf16.msra.mxu0 0
        %1570 = vmatpush.bf16.msra.mxu0 0
        %1571 = vmatpush.bf16.msra.mxu0 0
        %1572 = vmatpush.bf16.msra.mxu0 0
        %1573 = vmatpush.bf16.msra.mxu0 %v1551
        %1574 = vmatmul.bf16.gmra.mxu0 %v1555
        %v1575 = vpop.f32.mrf.mxu0
        %v1576 = vadd.f32 0.0, %v1575
        %v1577 = vpop.f32.mrf.mxu0
        %v1578 = vadd.f32 0.0, %v1577
        %1579 = vmatmul.bf16.gmra.mxu0 %v1558
        %v1580 = vpop.f32.mrf.mxu0
        %v1581 = vadd.f32 0.0, %v1580
        %v1582 = vpop.f32.mrf.mxu0
        %v1583 = vadd.f32 0.0, %v1582
        %1584 = vmatmul.bf16.gmra.mxu0 %v1561
        %v1585 = vpop.f32.mrf.mxu0
        %v1586 = vadd.f32 0.0, %v1585
        %v1587 = vpop.f32.mrf.mxu0
        %v1588 = vadd.f32 0.0, %v1587
        %1589 = vmatmul.bf16.gmra.mxu0 %v1564
        %v1590 = vpop.f32.mrf.mxu0
        %v1591 = vadd.f32 0.0, %v1590
        %v1592 = vpop.f32.mrf.mxu0
        %v1593 = vadd.f32 0.0, %v1592
        %1594 = vdwg.mxu0
        %v1595 = vld [vmem:[%s4] sm:$0xff]
        %v1596 = vld [vmem:[%s4 + $0x8] sm:$0xff]
        %v1597 = vld [vmem:[%s4 + $0x10] sm:$0xff]
        %v1598 = vld [vmem:[%s4 + $0x18] sm:$0xff]
        %v1599 = vld [vmem:[%s4 + $0x20] sm:$0xff]
        %v1600 = vld [vmem:[%s4 + $0x28] sm:$0xff]
        %v1601 = vld [vmem:[%s4 + $0x30] sm:$0xff]
        %v1602 = vld [vmem:[%s4 + $0x38] sm:$0xff]
        %s1603 = scalar_lea.vmem %s5, 8
        %v1604 = vld [vmem:[%s1603] sm:$0xf]
        %v1605 = vld [vmem:[%s1603 + $0x4] sm:$0xf]
        %v1608 = vunpack.c.l.b16 %v1604
        %v1609 = vunpack.c.l.b16 %v1605
        %v1610 = vpack.c.b16 %v1609, %v1608
        %1612 = vmatpush.bf16.msra.mxu0 0
        %1613 = vmatpush.bf16.msra.mxu0 0
        %1614 = vmatpush.bf16.msra.mxu0 0
        %1615 = vmatpush.bf16.msra.mxu0 0
        %1616 = vmatpush.bf16.msra.mxu0 0
        %1617 = vmatpush.bf16.msra.mxu0 0
        %1618 = vmatpush.bf16.msra.mxu0 0
        %1619 = vmatpush.bf16.msra.mxu0 %v1610
        %1620 = vmatmul.bf16.gmra.mxu0 %v1555
        %v1621 = vpop.f32.mrf.mxu0
        %v1622 = vadd.f32 0.0, %v1621
        %v1623 = vpop.f32.mrf.mxu0
        %v1624 = vadd.f32 0.0, %v1623
        %1625 = vmatmul.bf16.gmra.mxu0 %v1558
        %v1626 = vpop.f32.mrf.mxu0
        %v1627 = vadd.f32 0.0, %v1626
        %v1628 = vpop.f32.mrf.mxu0
        %v1629 = vadd.f32 0.0, %v1628
        %1630 = vmatmul.bf16.gmra.mxu0 %v1561
        %v1631 = vpop.f32.mrf.mxu0
        %v1632 = vadd.f32 0.0, %v1631
        %v1633 = vpop.f32.mrf.mxu0
        %v1634 = vadd.f32 0.0, %v1633
        %1635 = vmatmul.bf16.gmra.mxu0 %v1564
        %v1636 = vpop.f32.mrf.mxu0
        %v1637 = vadd.f32 0.0, %v1636
        %v1638 = vpop.f32.mrf.mxu0
        %v1639 = vadd.f32 0.0, %v1638
        %1640 = vdwg.mxu0
        %s1641 = scalar_lea.vmem %s4, 64
        %v1642 = vld [vmem:[%s1641] sm:$0xff]
        %v1643 = vld [vmem:[%s1641 + $0x8] sm:$0xff]
        %v1644 = vld [vmem:[%s1641 + $0x10] sm:$0xff]
        %v1645 = vld [vmem:[%s1641 + $0x18] sm:$0xff]
        %v1646 = vld [vmem:[%s1641 + $0x20] sm:$0xff]
        %v1647 = vld [vmem:[%s1641 + $0x28] sm:$0xff]
        %v1648 = vld [vmem:[%s1641 + $0x30] sm:$0xff]
        %v1649 = vld [vmem:[%s1641 + $0x38] sm:$0xff]
        %vm1650 = vcmask 523264
        %v1652 = vsel %vm1650, %v1642, 0
        %v1655 = vsel %vm1650, %v1643, 0
        %v1658 = vsel %vm1650, %v1644, 0
        %v1661 = vsel %vm1650, %v1645, 0
        %v1664 = vsel %vm1650, %v1646, 0
        %v1667 = vsel %vm1650, %v1647, 0
        %v1670 = vsel %vm1650, %v1648, 0
        %v1673 = vsel %vm1650, %v1649, 0
        %1675 = vmatpush.msra.mxu0 0.0
        %1676 = vmatpush.msra.mxu0 0.0
        %1677 = vmatpush.msra.mxu0 0.0
        %1678 = vmatpush.msra.mxu0 0.0
        %1679 = vmatpush.msra.mxu0 0.0
        %1680 = vmatpush.msra.mxu0 0.0
        %1681 = vmatpush.msra.mxu0 0.0
        %1682 = vmatpush.msra.mxu0 0.0
        %1683 = vmatpush.msra.mxu0 %v1639
        %1684 = vmatpush.msra.mxu0 %v1637
        %1685 = vmatpush.msra.mxu0 %v1634
        %1686 = vmatpush.msra.mxu0 %v1632
        %1687 = vmatpush.msra.mxu0 %v1629
        %1688 = vmatpush.msra.mxu0 %v1627
        %1689 = vmatpush.msra.mxu0 %v1624
        %1690 = vmatpush.msra.mxu0 %v1622
        %1691 = vmatmul.f32.gmra.mxu0 %v1652
        %v1692 = vpop.f32.mrf.mxu0
        %v1693 = vadd.f32 0.0, %v1692
        %1694 = vmatmul.f32.gmra.mxu0 %v1655
        %v1695 = vpop.f32.mrf.mxu0
        %v1696 = vadd.f32 0.0, %v1695
        %1697 = vmatmul.f32.gmra.mxu0 %v1658
        %v1698 = vpop.f32.mrf.mxu0
        %v1699 = vadd.f32 0.0, %v1698
        %1700 = vmatmul.f32.gmra.mxu0 %v1661
        %v1701 = vpop.f32.mrf.mxu0
        %v1702 = vadd.f32 0.0, %v1701
        %1703 = vmatmul.f32.gmra.mxu0 %v1664
        %v1704 = vpop.f32.mrf.mxu0
        %v1705 = vadd.f32 0.0, %v1704
        %1706 = vmatmul.f32.gmra.mxu0 %v1667
        %v1707 = vpop.f32.mrf.mxu0
        %v1708 = vadd.f32 0.0, %v1707
        %1709 = vmatmul.f32.gmra.mxu0 %v1670
        %v1710 = vpop.f32.mrf.mxu0
        %v1711 = vadd.f32 0.0, %v1710
        %1712 = vmatmul.f32.gmra.mxu0 %v1673
        %v1713 = vpop.f32.mrf.mxu0
        %v1714 = vadd.f32 0.0, %v1713
        %1715 = vdwg.mxu0
        %v1717 = vsel %vm1650, %v1595, 0
        %v1720 = vsel %vm1650, %v1596, 0
        %v1723 = vsel %vm1650, %v1597, 0
        %v1726 = vsel %vm1650, %v1598, 0
        %v1729 = vsel %vm1650, %v1599, 0
        %v1732 = vsel %vm1650, %v1600, 0
        %v1735 = vsel %vm1650, %v1601, 0
        %v1738 = vsel %vm1650, %v1602, 0
        %1740 = vmatpush.msra.mxu0 0.0
        %1741 = vmatpush.msra.mxu0 0.0
        %1742 = vmatpush.msra.mxu0 0.0
        %1743 = vmatpush.msra.mxu0 0.0
        %1744 = vmatpush.msra.mxu0 0.0
        %1745 = vmatpush.msra.mxu0 0.0
        %1746 = vmatpush.msra.mxu0 0.0
        %1747 = vmatpush.msra.mxu0 0.0
        %1748 = vmatpush.msra.mxu0 %v1593
        %1749 = vmatpush.msra.mxu0 %v1591
        %1750 = vmatpush.msra.mxu0 %v1588
        %1751 = vmatpush.msra.mxu0 %v1586
        %1752 = vmatpush.msra.mxu0 %v1583
        %1753 = vmatpush.msra.mxu0 %v1581
        %1754 = vmatpush.msra.mxu0 %v1578
        %1755 = vmatpush.msra.mxu0 %v1576
        %1756 = vmatmul.f32.gmra.mxu0 %v1717
        %v1757 = vpop.f32.mrf.mxu0
        %v1758 = vadd.f32 %v1693, %v1757
        %1759 = vmatmul.f32.gmra.mxu0 %v1720
        %v1760 = vpop.f32.mrf.mxu0
        %v1761 = vadd.f32 %v1696, %v1760
        %1762 = vmatmul.f32.gmra.mxu0 %v1723
        %v1763 = vpop.f32.mrf.mxu0
        %v1764 = vadd.f32 %v1699, %v1763
        %1765 = vmatmul.f32.gmra.mxu0 %v1726
        %v1766 = vpop.f32.mrf.mxu0
        %v1767 = vadd.f32 %v1702, %v1766
        %1768 = vmatmul.f32.gmra.mxu0 %v1729
        %v1769 = vpop.f32.mrf.mxu0
        %v1770 = vadd.f32 %v1705, %v1769
        %1771 = vmatmul.f32.gmra.mxu0 %v1732
        %v1772 = vpop.f32.mrf.mxu0
        %v1773 = vadd.f32 %v1708, %v1772
        %1774 = vmatmul.f32.gmra.mxu0 %v1735
        %v1775 = vpop.f32.mrf.mxu0
        %v1776 = vadd.f32 %v1711, %v1775
        %1777 = vmatmul.f32.gmra.mxu0 %v1738
        %v1778 = vpop.f32.mrf.mxu0
        %v1779 = vadd.f32 %v1714, %v1778
        %1780 = vdwg.mxu0
        %s1781 = scalar_lea.vmem %s5, 16
        %v1782 = vld [vmem:[%s1781] sm:$0xf]
        %v1783 = vld [vmem:[%s1781 + $0x4] sm:$0xf]
        %v1786 = vunpack.c.l.b16 %v1782
        %v1787 = vunpack.c.l.b16 %v1783
        %v1788 = vpack.c.b16 %v1787, %v1786
        %1790 = vmatpush.bf16.msra.mxu0 0
        %1791 = vmatpush.bf16.msra.mxu0 0
        %1792 = vmatpush.bf16.msra.mxu0 0
        %1793 = vmatpush.bf16.msra.mxu0 0
        %1794 = vmatpush.bf16.msra.mxu0 0
        %1795 = vmatpush.bf16.msra.mxu0 0
        %1796 = vmatpush.bf16.msra.mxu0 0
        %1797 = vmatpush.bf16.msra.mxu0 %v1788
        %1798 = vmatmul.bf16.gmra.mxu0 %v1555
        %v1799 = vpop.f32.mrf.mxu0
        %v1800 = vadd.f32 0.0, %v1799
        %v1801 = vpop.f32.mrf.mxu0
        %v1802 = vadd.f32 0.0, %v1801
        %1803 = vmatmul.bf16.gmra.mxu0 %v1558
        %v1804 = vpop.f32.mrf.mxu0
        %v1805 = vadd.f32 0.0, %v1804
        %v1806 = vpop.f32.mrf.mxu0
        %v1807 = vadd.f32 0.0, %v1806
        %1808 = vmatmul.bf16.gmra.mxu0 %v1561
        %v1809 = vpop.f32.mrf.mxu0
        %v1810 = vadd.f32 0.0, %v1809
        %v1811 = vpop.f32.mrf.mxu0
        %v1812 = vadd.f32 0.0, %v1811
        %1813 = vmatmul.bf16.gmra.mxu0 %v1564
        %v1814 = vpop.f32.mrf.mxu0
        %v1815 = vadd.f32 0.0, %v1814
        %v1816 = vpop.f32.mrf.mxu0
        %v1817 = vadd.f32 0.0, %v1816
        %1818 = vdwg.mxu0
        %s1819 = scalar_lea.vmem %s4, 128
        %v1820 = vld [vmem:[%s1819] sm:$0xff]
        %v1821 = vld [vmem:[%s1819 + $0x8] sm:$0xff]
        %v1822 = vld [vmem:[%s1819 + $0x10] sm:$0xff]
        %v1823 = vld [vmem:[%s1819 + $0x18] sm:$0xff]
        %v1824 = vld [vmem:[%s1819 + $0x20] sm:$0xff]
        %v1825 = vld [vmem:[%s1819 + $0x28] sm:$0xff]
        %v1826 = vld [vmem:[%s1819 + $0x30] sm:$0xff]
        %v1827 = vld [vmem:[%s1819 + $0x38] sm:$0xff]
        %v1829 = vsel %vm1650, %v1820, 0
        %v1832 = vsel %vm1650, %v1821, 0
        %v1835 = vsel %vm1650, %v1822, 0
        %v1838 = vsel %vm1650, %v1823, 0
        %v1841 = vsel %vm1650, %v1824, 0
        %v1844 = vsel %vm1650, %v1825, 0
        %v1847 = vsel %vm1650, %v1826, 0
        %v1850 = vsel %vm1650, %v1827, 0
        %1852 = vmatpush.msra.mxu0 0.0
        %1853 = vmatpush.msra.mxu0 0.0
        %1854 = vmatpush.msra.mxu0 0.0
        %1855 = vmatpush.msra.mxu0 0.0
        %1856 = vmatpush.msra.mxu0 0.0
        %1857 = vmatpush.msra.mxu0 0.0
        %1858 = vmatpush.msra.mxu0 0.0
        %1859 = vmatpush.msra.mxu0 0.0
        %1860 = vmatpush.msra.mxu0 %v1817
        %1861 = vmatpush.msra.mxu0 %v1815
        %1862 = vmatpush.msra.mxu0 %v1812
        %1863 = vmatpush.msra.mxu0 %v1810
        %1864 = vmatpush.msra.mxu0 %v1807
        %1865 = vmatpush.msra.mxu0 %v1805
        %1866 = vmatpush.msra.mxu0 %v1802
        %1867 = vmatpush.msra.mxu0 %v1800
        %1868 = vmatmul.f32.gmra.mxu0 %v1829
        %v1869 = vpop.f32.mrf.mxu0
        %v1870 = vadd.f32 0.0, %v1869
        %1871 = vmatmul.f32.gmra.mxu0 %v1832
        %v1872 = vpop.f32.mrf.mxu0
        %v1873 = vadd.f32 0.0, %v1872
        %1874 = vmatmul.f32.gmra.mxu0 %v1835
        %v1875 = vpop.f32.mrf.mxu0
        %v1876 = vadd.f32 0.0, %v1875
        %1877 = vmatmul.f32.gmra.mxu0 %v1838
        %v1878 = vpop.f32.mrf.mxu0
        %v1879 = vadd.f32 0.0, %v1878
        %1880 = vmatmul.f32.gmra.mxu0 %v1841
        %v1881 = vpop.f32.mrf.mxu0
        %v1882 = vadd.f32 0.0, %v1881
        %1883 = vmatmul.f32.gmra.mxu0 %v1844
        %v1884 = vpop.f32.mrf.mxu0
        %v1885 = vadd.f32 0.0, %v1884
        %1886 = vmatmul.f32.gmra.mxu0 %v1847
        %v1887 = vpop.f32.mrf.mxu0
        %v1888 = vadd.f32 0.0, %v1887
        %1889 = vmatmul.f32.gmra.mxu0 %v1850
        %v1890 = vpop.f32.mrf.mxu0
        %v1891 = vadd.f32 0.0, %v1890
        %1892 = vdwg.mxu0
        %v1893 = vadd.f32 %v1758, %v1870
        %v1894 = vadd.f32 %v1761, %v1873
        %v1895 = vadd.f32 %v1764, %v1876
        %v1896 = vadd.f32 %v1767, %v1879
        %v1897 = vadd.f32 %v1770, %v1882
        %v1898 = vadd.f32 %v1773, %v1885
        %v1899 = vadd.f32 %v1776, %v1888
        %v1900 = vadd.f32 %v1779, %v1891
        %s1901 = scalar_lea.vmem %s5, 24
        %v1902 = vld [vmem:[%s1901] sm:$0xf]
        %v1903 = vld [vmem:[%s1901 + $0x4] sm:$0xf]
        %v1906 = vunpack.c.l.b16 %v1902
        %v1907 = vunpack.c.l.b16 %v1903
        %v1908 = vpack.c.b16 %v1907, %v1906
        %1910 = vmatpush.bf16.msra.mxu0 0
        %1911 = vmatpush.bf16.msra.mxu0 0
        %1912 = vmatpush.bf16.msra.mxu0 0
        %1913 = vmatpush.bf16.msra.mxu0 0
        %1914 = vmatpush.bf16.msra.mxu0 0
        %1915 = vmatpush.bf16.msra.mxu0 0
        %1916 = vmatpush.bf16.msra.mxu0 0
        %1917 = vmatpush.bf16.msra.mxu0 %v1908
        %1918 = vmatmul.bf16.gmra.mxu0 %v1555
        %v1919 = vpop.f32.mrf.mxu0
        %v1920 = vadd.f32 0.0, %v1919
        %v1921 = vpop.f32.mrf.mxu0
        %v1922 = vadd.f32 0.0, %v1921
        %1923 = vmatmul.bf16.gmra.mxu0 %v1558
        %v1924 = vpop.f32.mrf.mxu0
        %v1925 = vadd.f32 0.0, %v1924
        %v1926 = vpop.f32.mrf.mxu0
        %v1927 = vadd.f32 0.0, %v1926
        %1928 = vmatmul.bf16.gmra.mxu0 %v1561
        %v1929 = vpop.f32.mrf.mxu0
        %v1930 = vadd.f32 0.0, %v1929
        %v1931 = vpop.f32.mrf.mxu0
        %v1932 = vadd.f32 0.0, %v1931
        %1933 = vmatmul.bf16.gmra.mxu0 %v1564
        %v1934 = vpop.f32.mrf.mxu0
        %v1935 = vadd.f32 0.0, %v1934
        %v1936 = vpop.f32.mrf.mxu0
        %v1937 = vadd.f32 0.0, %v1936
        %1938 = vdwg.mxu0
        %s1939 = scalar_lea.vmem %s4, 192
        %v1940 = vld [vmem:[%s1939] sm:$0xff]
        %v1941 = vld [vmem:[%s1939 + $0x8] sm:$0xff]
        %v1942 = vld [vmem:[%s1939 + $0x10] sm:$0xff]
        %v1943 = vld [vmem:[%s1939 + $0x18] sm:$0xff]
        %v1944 = vld [vmem:[%s1939 + $0x20] sm:$0xff]
        %v1945 = vld [vmem:[%s1939 + $0x28] sm:$0xff]
        %v1946 = vld [vmem:[%s1939 + $0x30] sm:$0xff]
        %v1947 = vld [vmem:[%s1939 + $0x38] sm:$0xff]
        %v1949 = vsel %vm1650, %v1940, 0
        %v1952 = vsel %vm1650, %v1941, 0
        %v1955 = vsel %vm1650, %v1942, 0
        %v1958 = vsel %vm1650, %v1943, 0
        %v1961 = vsel %vm1650, %v1944, 0
        %v1964 = vsel %vm1650, %v1945, 0
        %v1967 = vsel %vm1650, %v1946, 0
        %v1970 = vsel %vm1650, %v1947, 0
        %1972 = vmatpush.msra.mxu0 0.0
        %1973 = vmatpush.msra.mxu0 0.0
        %1974 = vmatpush.msra.mxu0 0.0
        %1975 = vmatpush.msra.mxu0 0.0
        %1976 = vmatpush.msra.mxu0 0.0
        %1977 = vmatpush.msra.mxu0 0.0
        %1978 = vmatpush.msra.mxu0 0.0
        %1979 = vmatpush.msra.mxu0 0.0
        %1980 = vmatpush.msra.mxu0 %v1937
        %1981 = vmatpush.msra.mxu0 %v1935
        %1982 = vmatpush.msra.mxu0 %v1932
        %1983 = vmatpush.msra.mxu0 %v1930
        %1984 = vmatpush.msra.mxu0 %v1927
        %1985 = vmatpush.msra.mxu0 %v1925
        %1986 = vmatpush.msra.mxu0 %v1922
        %1987 = vmatpush.msra.mxu0 %v1920
        %1988 = vmatmul.f32.gmra.mxu0 %v1949
        %v1989 = vpop.f32.mrf.mxu0
        %v1990 = vadd.f32 0.0, %v1989
        %1991 = vmatmul.f32.gmra.mxu0 %v1952
        %v1992 = vpop.f32.mrf.mxu0
        %v1993 = vadd.f32 0.0, %v1992
        %1994 = vmatmul.f32.gmra.mxu0 %v1955
        %v1995 = vpop.f32.mrf.mxu0
        %v1996 = vadd.f32 0.0, %v1995
        %1997 = vmatmul.f32.gmra.mxu0 %v1958
        %v1998 = vpop.f32.mrf.mxu0
        %v1999 = vadd.f32 0.0, %v1998
        %2000 = vmatmul.f32.gmra.mxu0 %v1961
        %v2001 = vpop.f32.mrf.mxu0
        %v2002 = vadd.f32 0.0, %v2001
        %2003 = vmatmul.f32.gmra.mxu0 %v1964
        %v2004 = vpop.f32.mrf.mxu0
        %v2005 = vadd.f32 0.0, %v2004
        %2006 = vmatmul.f32.gmra.mxu0 %v1967
        %v2007 = vpop.f32.mrf.mxu0
        %v2008 = vadd.f32 0.0, %v2007
        %2009 = vmatmul.f32.gmra.mxu0 %v1970
        %v2010 = vpop.f32.mrf.mxu0
        %v2011 = vadd.f32 0.0, %v2010
        %2012 = vdwg.mxu0
        %v2013 = vadd.f32 %v1893, %v1990
        %v2014 = vadd.f32 %v1894, %v1993
        %v2015 = vadd.f32 %v1895, %v1996
        %v2016 = vadd.f32 %v1896, %v1999
        %v2017 = vadd.f32 %v1897, %v2002
        %v2018 = vadd.f32 %v1898, %v2005
        %v2019 = vadd.f32 %v1899, %v2008
        %v2020 = vadd.f32 %v1900, %v2011
        %s2021 = scalar_lea.vmem %s5, 32
        %v2022 = vld [vmem:[%s2021] sm:$0xf]
        %v2023 = vld [vmem:[%s2021 + $0x4] sm:$0xf]
        %v2026 = vunpack.c.l.b16 %v2022
        %v2027 = vunpack.c.l.b16 %v2023
        %v2028 = vpack.c.b16 %v2027, %v2026
        %2030 = vmatpush.bf16.msra.mxu0 0
        %2031 = vmatpush.bf16.msra.mxu0 0
        %2032 = vmatpush.bf16.msra.mxu0 0
        %2033 = vmatpush.bf16.msra.mxu0 0
        %2034 = vmatpush.bf16.msra.mxu0 0
        %2035 = vmatpush.bf16.msra.mxu0 0
        %2036 = vmatpush.bf16.msra.mxu0 0
        %2037 = vmatpush.bf16.msra.mxu0 %v2028
        %2038 = vmatmul.bf16.gmra.mxu0 %v1555
        %v2039 = vpop.f32.mrf.mxu0
        %v2040 = vadd.f32 0.0, %v2039
        %v2041 = vpop.f32.mrf.mxu0
        %v2042 = vadd.f32 0.0, %v2041
        %2043 = vmatmul.bf16.gmra.mxu0 %v1558
        %v2044 = vpop.f32.mrf.mxu0
        %v2045 = vadd.f32 0.0, %v2044
        %v2046 = vpop.f32.mrf.mxu0
        %v2047 = vadd.f32 0.0, %v2046
        %2048 = vmatmul.bf16.gmra.mxu0 %v1561
        %v2049 = vpop.f32.mrf.mxu0
        %v2050 = vadd.f32 0.0, %v2049
        %v2051 = vpop.f32.mrf.mxu0
        %v2052 = vadd.f32 0.0, %v2051
        %2053 = vmatmul.bf16.gmra.mxu0 %v1564
        %v2054 = vpop.f32.mrf.mxu0
        %v2055 = vadd.f32 0.0, %v2054
        %v2056 = vpop.f32.mrf.mxu0
        %v2057 = vadd.f32 0.0, %v2056
        %2058 = vdwg.mxu0
        %s2059 = scalar_lea.vmem %s4, 256
        %v2060 = vld [vmem:[%s2059] sm:$0xff]
        %v2061 = vld [vmem:[%s2059 + $0x8] sm:$0xff]
        %v2062 = vld [vmem:[%s2059 + $0x10] sm:$0xff]
        %v2063 = vld [vmem:[%s2059 + $0x18] sm:$0xff]
        %v2064 = vld [vmem:[%s2059 + $0x20] sm:$0xff]
        %v2065 = vld [vmem:[%s2059 + $0x28] sm:$0xff]
        %v2066 = vld [vmem:[%s2059 + $0x30] sm:$0xff]
        %v2067 = vld [vmem:[%s2059 + $0x38] sm:$0xff]
        %v2069 = vsel %vm1650, %v2060, 0
        %v2072 = vsel %vm1650, %v2061, 0
        %v2075 = vsel %vm1650, %v2062, 0
        %v2078 = vsel %vm1650, %v2063, 0
        %v2081 = vsel %vm1650, %v2064, 0
        %v2084 = vsel %vm1650, %v2065, 0
        %v2087 = vsel %vm1650, %v2066, 0
        %v2090 = vsel %vm1650, %v2067, 0
        %2092 = vmatpush.msra.mxu0 0.0
        %2093 = vmatpush.msra.mxu0 0.0
        %2094 = vmatpush.msra.mxu0 0.0
        %2095 = vmatpush.msra.mxu0 0.0
        %2096 = vmatpush.msra.mxu0 0.0
        %2097 = vmatpush.msra.mxu0 0.0
        %2098 = vmatpush.msra.mxu0 0.0
        %2099 = vmatpush.msra.mxu0 0.0
        %2100 = vmatpush.msra.mxu0 %v2057
        %2101 = vmatpush.msra.mxu0 %v2055
        %2102 = vmatpush.msra.mxu0 %v2052
        %2103 = vmatpush.msra.mxu0 %v2050
        %2104 = vmatpush.msra.mxu0 %v2047
        %2105 = vmatpush.msra.mxu0 %v2045
        %2106 = vmatpush.msra.mxu0 %v2042
        %2107 = vmatpush.msra.mxu0 %v2040
        %2108 = vmatmul.f32.gmra.mxu0 %v2069
        %v2109 = vpop.f32.mrf.mxu0
        %v2110 = vadd.f32 0.0, %v2109
        %2111 = vmatmul.f32.gmra.mxu0 %v2072
        %v2112 = vpop.f32.mrf.mxu0
        %v2113 = vadd.f32 0.0, %v2112
        %2114 = vmatmul.f32.gmra.mxu0 %v2075
        %v2115 = vpop.f32.mrf.mxu0
        %v2116 = vadd.f32 0.0, %v2115
        %2117 = vmatmul.f32.gmra.mxu0 %v2078
        %v2118 = vpop.f32.mrf.mxu0
        %v2119 = vadd.f32 0.0, %v2118
        %2120 = vmatmul.f32.gmra.mxu0 %v2081
        %v2121 = vpop.f32.mrf.mxu0
        %v2122 = vadd.f32 0.0, %v2121
        %2123 = vmatmul.f32.gmra.mxu0 %v2084
        %v2124 = vpop.f32.mrf.mxu0
        %v2125 = vadd.f32 0.0, %v2124
        %2126 = vmatmul.f32.gmra.mxu0 %v2087
        %v2127 = vpop.f32.mrf.mxu0
        %v2128 = vadd.f32 0.0, %v2127
        %2129 = vmatmul.f32.gmra.mxu0 %v2090
        %v2130 = vpop.f32.mrf.mxu0
        %v2131 = vadd.f32 0.0, %v2130
        %2132 = vdwg.mxu0
        %v2133 = vadd.f32 %v2013, %v2110
        %v2134 = vadd.f32 %v2014, %v2113
        %v2135 = vadd.f32 %v2015, %v2116
        %v2136 = vadd.f32 %v2016, %v2119
        %v2137 = vadd.f32 %v2017, %v2122
        %v2138 = vadd.f32 %v2018, %v2125
        %v2139 = vadd.f32 %v2019, %v2128
        %v2140 = vadd.f32 %v2020, %v2131
        %s2141 = scalar_lea.vmem %s5, 40
        %v2142 = vld [vmem:[%s2141] sm:$0xf]
        %v2143 = vld [vmem:[%s2141 + $0x4] sm:$0xf]
        %v2146 = vunpack.c.l.b16 %v2142
        %v2147 = vunpack.c.l.b16 %v2143
        %v2148 = vpack.c.b16 %v2147, %v2146
        %2150 = vmatpush.bf16.msra.mxu0 0
        %2151 = vmatpush.bf16.msra.mxu0 0
        %2152 = vmatpush.bf16.msra.mxu0 0
        %2153 = vmatpush.bf16.msra.mxu0 0
        %2154 = vmatpush.bf16.msra.mxu0 0
        %2155 = vmatpush.bf16.msra.mxu0 0
        %2156 = vmatpush.bf16.msra.mxu0 0
        %2157 = vmatpush.bf16.msra.mxu0 %v2148
        %2158 = vmatmul.bf16.gmra.mxu0 %v1555
        %v2159 = vpop.f32.mrf.mxu0
        %v2160 = vadd.f32 0.0, %v2159
        %v2161 = vpop.f32.mrf.mxu0
        %v2162 = vadd.f32 0.0, %v2161
        %2163 = vmatmul.bf16.gmra.mxu0 %v1558
        %v2164 = vpop.f32.mrf.mxu0
        %v2165 = vadd.f32 0.0, %v2164
        %v2166 = vpop.f32.mrf.mxu0
        %v2167 = vadd.f32 0.0, %v2166
        %2168 = vmatmul.bf16.gmra.mxu0 %v1561
        %v2169 = vpop.f32.mrf.mxu0
        %v2170 = vadd.f32 0.0, %v2169
        %v2171 = vpop.f32.mrf.mxu0
        %v2172 = vadd.f32 0.0, %v2171
        %2173 = vmatmul.bf16.gmra.mxu0 %v1564
        %v2174 = vpop.f32.mrf.mxu0
        %v2175 = vadd.f32 0.0, %v2174
        %v2176 = vpop.f32.mrf.mxu0
        %v2177 = vadd.f32 0.0, %v2176
        %2178 = vdwg.mxu0
        %s2179 = scalar_lea.vmem %s4, 320
        %v2180 = vld [vmem:[%s2179] sm:$0xff]
        %v2181 = vld [vmem:[%s2179 + $0x8] sm:$0xff]
        %v2182 = vld [vmem:[%s2179 + $0x10] sm:$0xff]
        %v2183 = vld [vmem:[%s2179 + $0x18] sm:$0xff]
        %v2184 = vld [vmem:[%s2179 + $0x20] sm:$0xff]
        %v2185 = vld [vmem:[%s2179 + $0x28] sm:$0xff]
        %v2186 = vld [vmem:[%s2179 + $0x30] sm:$0xff]
        %v2187 = vld [vmem:[%s2179 + $0x38] sm:$0xff]
        %v2189 = vsel %vm1650, %v2180, 0
        %v2192 = vsel %vm1650, %v2181, 0
        %v2195 = vsel %vm1650, %v2182, 0
        %v2198 = vsel %vm1650, %v2183, 0
        %v2201 = vsel %vm1650, %v2184, 0
        %v2204 = vsel %vm1650, %v2185, 0
        %v2207 = vsel %vm1650, %v2186, 0
        %v2210 = vsel %vm1650, %v2187, 0
        %2212 = vmatpush.msra.mxu0 0.0
        %2213 = vmatpush.msra.mxu0 0.0
        %2214 = vmatpush.msra.mxu0 0.0
        %2215 = vmatpush.msra.mxu0 0.0
        %2216 = vmatpush.msra.mxu0 0.0
        %2217 = vmatpush.msra.mxu0 0.0
        %2218 = vmatpush.msra.mxu0 0.0
        %2219 = vmatpush.msra.mxu0 0.0
        %2220 = vmatpush.msra.mxu0 %v2177
        %2221 = vmatpush.msra.mxu0 %v2175
        %2222 = vmatpush.msra.mxu0 %v2172
        %2223 = vmatpush.msra.mxu0 %v2170
        %2224 = vmatpush.msra.mxu0 %v2167
        %2225 = vmatpush.msra.mxu0 %v2165
        %2226 = vmatpush.msra.mxu0 %v2162
        %2227 = vmatpush.msra.mxu0 %v2160
        %2228 = vmatmul.f32.gmra.mxu0 %v2189
        %v2229 = vpop.f32.mrf.mxu0
        %v2230 = vadd.f32 0.0, %v2229
        %2231 = vmatmul.f32.gmra.mxu0 %v2192
        %v2232 = vpop.f32.mrf.mxu0
        %v2233 = vadd.f32 0.0, %v2232
        %2234 = vmatmul.f32.gmra.mxu0 %v2195
        %v2235 = vpop.f32.mrf.mxu0
        %v2236 = vadd.f32 0.0, %v2235
        %2237 = vmatmul.f32.gmra.mxu0 %v2198
        %v2238 = vpop.f32.mrf.mxu0
        %v2239 = vadd.f32 0.0, %v2238
        %2240 = vmatmul.f32.gmra.mxu0 %v2201
        %v2241 = vpop.f32.mrf.mxu0
        %v2242 = vadd.f32 0.0, %v2241
        %2243 = vmatmul.f32.gmra.mxu0 %v2204
        %v2244 = vpop.f32.mrf.mxu0
        %v2245 = vadd.f32 0.0, %v2244
        %2246 = vmatmul.f32.gmra.mxu0 %v2207
        %v2247 = vpop.f32.mrf.mxu0
        %v2248 = vadd.f32 0.0, %v2247
        %2249 = vmatmul.f32.gmra.mxu0 %v2210
        %v2250 = vpop.f32.mrf.mxu0
        %v2251 = vadd.f32 0.0, %v2250
        %2252 = vdwg.mxu0
        %v2253 = vadd.f32 %v2133, %v2230
        %v2254 = vadd.f32 %v2134, %v2233
        %v2255 = vadd.f32 %v2135, %v2236
        %v2256 = vadd.f32 %v2136, %v2239
        %v2257 = vadd.f32 %v2137, %v2242
        %v2258 = vadd.f32 %v2138, %v2245
        %v2259 = vadd.f32 %v2139, %v2248
        %v2260 = vadd.f32 %v2140, %v2251
        %s2261 = scalar_lea.vmem %s5, 48
        %v2262 = vld [vmem:[%s2261] sm:$0xf]
        %v2263 = vld [vmem:[%s2261 + $0x4] sm:$0xf]
        %v2266 = vunpack.c.l.b16 %v2262
        %v2267 = vunpack.c.l.b16 %v2263
        %v2268 = vpack.c.b16 %v2267, %v2266
        %2270 = vmatpush.bf16.msra.mxu0 0
        %2271 = vmatpush.bf16.msra.mxu0 0
        %2272 = vmatpush.bf16.msra.mxu0 0
        %2273 = vmatpush.bf16.msra.mxu0 0
        %2274 = vmatpush.bf16.msra.mxu0 0
        %2275 = vmatpush.bf16.msra.mxu0 0
        %2276 = vmatpush.bf16.msra.mxu0 0
        %2277 = vmatpush.bf16.msra.mxu0 %v2268
        %2278 = vmatmul.bf16.gmra.mxu0 %v1555
        %v2279 = vpop.f32.mrf.mxu0
        %v2280 = vadd.f32 0.0, %v2279
        %v2281 = vpop.f32.mrf.mxu0
        %v2282 = vadd.f32 0.0, %v2281
        %2283 = vmatmul.bf16.gmra.mxu0 %v1558
        %v2284 = vpop.f32.mrf.mxu0
        %v2285 = vadd.f32 0.0, %v2284
        %v2286 = vpop.f32.mrf.mxu0
        %v2287 = vadd.f32 0.0, %v2286
        %2288 = vmatmul.bf16.gmra.mxu0 %v1561
        %v2289 = vpop.f32.mrf.mxu0
        %v2290 = vadd.f32 0.0, %v2289
        %v2291 = vpop.f32.mrf.mxu0
        %v2292 = vadd.f32 0.0, %v2291
        %2293 = vmatmul.bf16.gmra.mxu0 %v1564
        %v2294 = vpop.f32.mrf.mxu0
        %v2295 = vadd.f32 0.0, %v2294
        %v2296 = vpop.f32.mrf.mxu0
        %v2297 = vadd.f32 0.0, %v2296
        %2298 = vdwg.mxu0
        %s2299 = scalar_lea.vmem %s4, 384
        %v2300 = vld [vmem:[%s2299] sm:$0xff]
        %v2301 = vld [vmem:[%s2299 + $0x8] sm:$0xff]
        %v2302 = vld [vmem:[%s2299 + $0x10] sm:$0xff]
        %v2303 = vld [vmem:[%s2299 + $0x18] sm:$0xff]
        %v2304 = vld [vmem:[%s2299 + $0x20] sm:$0xff]
        %v2305 = vld [vmem:[%s2299 + $0x28] sm:$0xff]
        %v2306 = vld [vmem:[%s2299 + $0x30] sm:$0xff]
        %v2307 = vld [vmem:[%s2299 + $0x38] sm:$0xff]
        %v2309 = vsel %vm1650, %v2300, 0
        %v2312 = vsel %vm1650, %v2301, 0
        %v2315 = vsel %vm1650, %v2302, 0
        %v2318 = vsel %vm1650, %v2303, 0
        %v2321 = vsel %vm1650, %v2304, 0
        %v2324 = vsel %vm1650, %v2305, 0
        %v2327 = vsel %vm1650, %v2306, 0
        %v2330 = vsel %vm1650, %v2307, 0
        %2332 = vmatpush.msra.mxu0 0.0
        %2333 = vmatpush.msra.mxu0 0.0
        %2334 = vmatpush.msra.mxu0 0.0
        %2335 = vmatpush.msra.mxu0 0.0
        %2336 = vmatpush.msra.mxu0 0.0
        %2337 = vmatpush.msra.mxu0 0.0
        %2338 = vmatpush.msra.mxu0 0.0
        %2339 = vmatpush.msra.mxu0 0.0
        %2340 = vmatpush.msra.mxu0 %v2297
        %2341 = vmatpush.msra.mxu0 %v2295
        %2342 = vmatpush.msra.mxu0 %v2292
        %2343 = vmatpush.msra.mxu0 %v2290
        %2344 = vmatpush.msra.mxu0 %v2287
        %2345 = vmatpush.msra.mxu0 %v2285
        %2346 = vmatpush.msra.mxu0 %v2282
        %2347 = vmatpush.msra.mxu0 %v2280
        %2348 = vmatmul.f32.gmra.mxu0 %v2309
        %v2349 = vpop.f32.mrf.mxu0
        %v2350 = vadd.f32 0.0, %v2349
        %2351 = vmatmul.f32.gmra.mxu0 %v2312
        %v2352 = vpop.f32.mrf.mxu0
        %v2353 = vadd.f32 0.0, %v2352
        %2354 = vmatmul.f32.gmra.mxu0 %v2315
        %v2355 = vpop.f32.mrf.mxu0
        %v2356 = vadd.f32 0.0, %v2355
        %2357 = vmatmul.f32.gmra.mxu0 %v2318
        %v2358 = vpop.f32.mrf.mxu0
        %v2359 = vadd.f32 0.0, %v2358
        %2360 = vmatmul.f32.gmra.mxu0 %v2321
        %v2361 = vpop.f32.mrf.mxu0
        %v2362 = vadd.f32 0.0, %v2361
        %2363 = vmatmul.f32.gmra.mxu0 %v2324
        %v2364 = vpop.f32.mrf.mxu0
        %v2365 = vadd.f32 0.0, %v2364
        %2366 = vmatmul.f32.gmra.mxu0 %v2327
        %v2367 = vpop.f32.mrf.mxu0
        %v2368 = vadd.f32 0.0, %v2367
        %2369 = vmatmul.f32.gmra.mxu0 %v2330
        %v2370 = vpop.f32.mrf.mxu0
        %v2371 = vadd.f32 0.0, %v2370
        %2372 = vdwg.mxu0
        %v2373 = vadd.f32 %v2253, %v2350
        %v2374 = vadd.f32 %v2254, %v2353
        %v2375 = vadd.f32 %v2255, %v2356
        %v2376 = vadd.f32 %v2256, %v2359
        %v2377 = vadd.f32 %v2257, %v2362
        %v2378 = vadd.f32 %v2258, %v2365
        %v2379 = vadd.f32 %v2259, %v2368
        %v2380 = vadd.f32 %v2260, %v2371
        %s2381 = scalar_lea.vmem %s5, 56
        %v2382 = vld [vmem:[%s2381] sm:$0xf]
        %v2383 = vld [vmem:[%s2381 + $0x4] sm:$0xf]
        %v2386 = vunpack.c.l.b16 %v2382
        %v2387 = vunpack.c.l.b16 %v2383
        %v2388 = vpack.c.b16 %v2387, %v2386
        %2390 = vmatpush.bf16.msra.mxu0 0
        %2391 = vmatpush.bf16.msra.mxu0 0
        %2392 = vmatpush.bf16.msra.mxu0 0
        %2393 = vmatpush.bf16.msra.mxu0 0
        %2394 = vmatpush.bf16.msra.mxu0 0
        %2395 = vmatpush.bf16.msra.mxu0 0
        %2396 = vmatpush.bf16.msra.mxu0 0
        %2397 = vmatpush.bf16.msra.mxu0 %v2388
        %2398 = vmatmul.bf16.gmra.mxu0 %v1555
        %v2399 = vpop.f32.mrf.mxu0
        %v2400 = vadd.f32 0.0, %v2399
        %v2401 = vpop.f32.mrf.mxu0
        %v2402 = vadd.f32 0.0, %v2401
        %2403 = vmatmul.bf16.gmra.mxu0 %v1558
        %v2404 = vpop.f32.mrf.mxu0
        %v2405 = vadd.f32 0.0, %v2404
        %v2406 = vpop.f32.mrf.mxu0
        %v2407 = vadd.f32 0.0, %v2406
        %2408 = vmatmul.bf16.gmra.mxu0 %v1561
        %v2409 = vpop.f32.mrf.mxu0
        %v2410 = vadd.f32 0.0, %v2409
        %v2411 = vpop.f32.mrf.mxu0
        %v2412 = vadd.f32 0.0, %v2411
        %2413 = vmatmul.bf16.gmra.mxu0 %v1564
        %v2414 = vpop.f32.mrf.mxu0
        %v2415 = vadd.f32 0.0, %v2414
        %v2416 = vpop.f32.mrf.mxu0
        %v2417 = vadd.f32 0.0, %v2416
        %2418 = vdwg.mxu0
        %s2419 = scalar_lea.vmem %s4, 448
        %v2420 = vld [vmem:[%s2419] sm:$0xff]
        %v2421 = vld [vmem:[%s2419 + $0x8] sm:$0xff]
        %v2422 = vld [vmem:[%s2419 + $0x10] sm:$0xff]
        %v2423 = vld [vmem:[%s2419 + $0x18] sm:$0xff]
        %v2424 = vld [vmem:[%s2419 + $0x20] sm:$0xff]
        %v2425 = vld [vmem:[%s2419 + $0x28] sm:$0xff]
        %v2426 = vld [vmem:[%s2419 + $0x30] sm:$0xff]
        %v2427 = vld [vmem:[%s2419 + $0x38] sm:$0xff]
        %v2429 = vsel %vm1650, %v2420, 0
        %v2432 = vsel %vm1650, %v2421, 0
        %v2435 = vsel %vm1650, %v2422, 0
        %v2438 = vsel %vm1650, %v2423, 0
        %v2441 = vsel %vm1650, %v2424, 0
        %v2444 = vsel %vm1650, %v2425, 0
        %v2447 = vsel %vm1650, %v2426, 0
        %v2450 = vsel %vm1650, %v2427, 0
        %2452 = vmatpush.msra.mxu0 0.0
        %2453 = vmatpush.msra.mxu0 0.0
        %2454 = vmatpush.msra.mxu0 0.0
        %2455 = vmatpush.msra.mxu0 0.0
        %2456 = vmatpush.msra.mxu0 0.0
        %2457 = vmatpush.msra.mxu0 0.0
        %2458 = vmatpush.msra.mxu0 0.0
        %2459 = vmatpush.msra.mxu0 0.0
        %2460 = vmatpush.msra.mxu0 %v2417
        %2461 = vmatpush.msra.mxu0 %v2415
        %2462 = vmatpush.msra.mxu0 %v2412
        %2463 = vmatpush.msra.mxu0 %v2410
        %2464 = vmatpush.msra.mxu0 %v2407
        %2465 = vmatpush.msra.mxu0 %v2405
        %2466 = vmatpush.msra.mxu0 %v2402
        %2467 = vmatpush.msra.mxu0 %v2400
        %2468 = vmatmul.f32.gmra.mxu0 %v2429
        %v2469 = vpop.f32.mrf.mxu0
        %v2470 = vadd.f32 0.0, %v2469
        %2471 = vmatmul.f32.gmra.mxu0 %v2432
        %v2472 = vpop.f32.mrf.mxu0
        %v2473 = vadd.f32 0.0, %v2472
        %2474 = vmatmul.f32.gmra.mxu0 %v2435
        %v2475 = vpop.f32.mrf.mxu0
        %v2476 = vadd.f32 0.0, %v2475
        %2477 = vmatmul.f32.gmra.mxu0 %v2438
        %v2478 = vpop.f32.mrf.mxu0
        %v2479 = vadd.f32 0.0, %v2478
        %2480 = vmatmul.f32.gmra.mxu0 %v2441
        %v2481 = vpop.f32.mrf.mxu0
        %v2482 = vadd.f32 0.0, %v2481
        %2483 = vmatmul.f32.gmra.mxu0 %v2444
        %v2484 = vpop.f32.mrf.mxu0
        %v2485 = vadd.f32 0.0, %v2484
        %2486 = vmatmul.f32.gmra.mxu0 %v2447
        %v2487 = vpop.f32.mrf.mxu0
        %v2488 = vadd.f32 0.0, %v2487
        %2489 = vmatmul.f32.gmra.mxu0 %v2450
        %v2490 = vpop.f32.mrf.mxu0
        %v2491 = vadd.f32 0.0, %v2490
        %2492 = vdwg.mxu0
        %v2493 = vadd.f32 %v2373, %v2470
        %v2494 = vadd.f32 %v2374, %v2473
        %v2495 = vadd.f32 %v2375, %v2476
        %v2496 = vadd.f32 %v2376, %v2479
        %v2497 = vadd.f32 %v2377, %v2482
        %v2498 = vadd.f32 %v2378, %v2485
        %v2499 = vadd.f32 %v2379, %v2488
        %v2500 = vadd.f32 %v2380, %v2491
        %s2501 = scalar_lea.vmem %s5, 64
        %v2502 = vld [vmem:[%s2501] sm:$0xf]
        %v2503 = vld [vmem:[%s2501 + $0x4] sm:$0xf]
        %v2506 = vunpack.c.l.b16 %v2502
        %v2507 = vunpack.c.l.b16 %v2503
        %v2508 = vpack.c.b16 %v2507, %v2506
        %2510 = vmatpush.bf16.msra.mxu0 0
        %2511 = vmatpush.bf16.msra.mxu0 0
        %2512 = vmatpush.bf16.msra.mxu0 0
        %2513 = vmatpush.bf16.msra.mxu0 0
        %2514 = vmatpush.bf16.msra.mxu0 0
        %2515 = vmatpush.bf16.msra.mxu0 0
        %2516 = vmatpush.bf16.msra.mxu0 0
        %2517 = vmatpush.bf16.msra.mxu0 %v2508
        %2518 = vmatmul.bf16.gmra.mxu0 %v1555
        %v2519 = vpop.f32.mrf.mxu0
        %v2520 = vadd.f32 0.0, %v2519
        %v2521 = vpop.f32.mrf.mxu0
        %v2522 = vadd.f32 0.0, %v2521
        %2523 = vmatmul.bf16.gmra.mxu0 %v1558
        %v2524 = vpop.f32.mrf.mxu0
        %v2525 = vadd.f32 0.0, %v2524
        %v2526 = vpop.f32.mrf.mxu0
        %v2527 = vadd.f32 0.0, %v2526
        %2528 = vmatmul.bf16.gmra.mxu0 %v1561
        %v2529 = vpop.f32.mrf.mxu0
        %v2530 = vadd.f32 0.0, %v2529
        %v2531 = vpop.f32.mrf.mxu0
        %v2532 = vadd.f32 0.0, %v2531
        %2533 = vmatmul.bf16.gmra.mxu0 %v1564
        %v2534 = vpop.f32.mrf.mxu0
        %v2535 = vadd.f32 0.0, %v2534
        %v2536 = vpop.f32.mrf.mxu0
        %v2537 = vadd.f32 0.0, %v2536
        %2538 = vdwg.mxu0
        %s2539 = scalar_lea.vmem %s4, 512
        %v2540 = vld [vmem:[%s2539] sm:$0xff]
        %v2541 = vld [vmem:[%s2539 + $0x8] sm:$0xff]
        %v2542 = vld [vmem:[%s2539 + $0x10] sm:$0xff]
        %v2543 = vld [vmem:[%s2539 + $0x18] sm:$0xff]
        %v2544 = vld [vmem:[%s2539 + $0x20] sm:$0xff]
        %v2545 = vld [vmem:[%s2539 + $0x28] sm:$0xff]
        %v2546 = vld [vmem:[%s2539 + $0x30] sm:$0xff]
        %v2547 = vld [vmem:[%s2539 + $0x38] sm:$0xff]
        %v2549 = vsel %vm1650, %v2540, 0
        %v2552 = vsel %vm1650, %v2541, 0
        %v2555 = vsel %vm1650, %v2542, 0
        %v2558 = vsel %vm1650, %v2543, 0
        %v2561 = vsel %vm1650, %v2544, 0
        %v2564 = vsel %vm1650, %v2545, 0
        %v2567 = vsel %vm1650, %v2546, 0
        %v2570 = vsel %vm1650, %v2547, 0
        %2572 = vmatpush.msra.mxu0 0.0
        %2573 = vmatpush.msra.mxu0 0.0
        %2574 = vmatpush.msra.mxu0 0.0
        %2575 = vmatpush.msra.mxu0 0.0
        %2576 = vmatpush.msra.mxu0 0.0
        %2577 = vmatpush.msra.mxu0 0.0
        %2578 = vmatpush.msra.mxu0 0.0
        %2579 = vmatpush.msra.mxu0 0.0
        %2580 = vmatpush.msra.mxu0 %v2537
        %2581 = vmatpush.msra.mxu0 %v2535
        %2582 = vmatpush.msra.mxu0 %v2532
        %2583 = vmatpush.msra.mxu0 %v2530
        %2584 = vmatpush.msra.mxu0 %v2527
        %2585 = vmatpush.msra.mxu0 %v2525
        %2586 = vmatpush.msra.mxu0 %v2522
        %2587 = vmatpush.msra.mxu0 %v2520
        %2588 = vmatmul.f32.gmra.mxu0 %v2549
        %v2589 = vpop.f32.mrf.mxu0
        %v2590 = vadd.f32 0.0, %v2589
        %2591 = vmatmul.f32.gmra.mxu0 %v2552
        %v2592 = vpop.f32.mrf.mxu0
        %v2593 = vadd.f32 0.0, %v2592
        %2594 = vmatmul.f32.gmra.mxu0 %v2555
        %v2595 = vpop.f32.mrf.mxu0
        %v2596 = vadd.f32 0.0, %v2595
        %2597 = vmatmul.f32.gmra.mxu0 %v2558
        %v2598 = vpop.f32.mrf.mxu0
        %v2599 = vadd.f32 0.0, %v2598
        %2600 = vmatmul.f32.gmra.mxu0 %v2561
        %v2601 = vpop.f32.mrf.mxu0
        %v2602 = vadd.f32 0.0, %v2601
        %2603 = vmatmul.f32.gmra.mxu0 %v2564
        %v2604 = vpop.f32.mrf.mxu0
        %v2605 = vadd.f32 0.0, %v2604
        %2606 = vmatmul.f32.gmra.mxu0 %v2567
        %v2607 = vpop.f32.mrf.mxu0
        %v2608 = vadd.f32 0.0, %v2607
        %2609 = vmatmul.f32.gmra.mxu0 %v2570
        %v2610 = vpop.f32.mrf.mxu0
        %v2611 = vadd.f32 0.0, %v2610
        %2612 = vdwg.mxu0
        %v2613 = vadd.f32 %v2493, %v2590
        %v2614 = vadd.f32 %v2494, %v2593
        %v2615 = vadd.f32 %v2495, %v2596
        %v2616 = vadd.f32 %v2496, %v2599
        %v2617 = vadd.f32 %v2497, %v2602
        %v2618 = vadd.f32 %v2498, %v2605
        %v2619 = vadd.f32 %v2499, %v2608
        %v2620 = vadd.f32 %v2500, %v2611
        %v2621 = vld [vmem:[%s6] sm:$0x1]
        %v2623 = vperm.slane %v2621, 0
        %v2625 = vadd.f32 %v2613, %v2623
        %v2626 = vadd.f32 %v2614, %v2623
        %v2627 = vadd.f32 %v2615, %v2623
        %v2628 = vadd.f32 %v2616, %v2623
        %v2629 = vadd.f32 %v2617, %v2623
        %v2630 = vadd.f32 %v2618, %v2623
        %v2631 = vadd.f32 %v2619, %v2623
        %v2632 = vadd.f32 %v2620, %v2623
        %v2633 = vld [vmem:[%s7] sm:$0xff]
        %v2634 = vld [vmem:[%s7 + $0x8] sm:$0xff]
        %v2636 = vsel %vm1650, %v2633, 0
        %v2639 = vsel %vm1650, %v2634, 0
        %2641 = vmatpush.msra.mxu0 0.0
        %2642 = vmatpush.msra.mxu0 0.0
        %2643 = vmatpush.msra.mxu0 0.0
        %2644 = vmatpush.msra.mxu0 0.0
        %2645 = vmatpush.msra.mxu0 0.0
        %2646 = vmatpush.msra.mxu0 0.0
        %2647 = vmatpush.msra.mxu0 0.0
        %2648 = vmatpush.msra.mxu0 0.0
        %2649 = vmatpush.msra.mxu0 %v2632
        %2650 = vmatpush.msra.mxu0 %v2631
        %2651 = vmatpush.msra.mxu0 %v2630
        %2652 = vmatpush.msra.mxu0 %v2629
        %2653 = vmatpush.msra.mxu0 %v2628
        %2654 = vmatpush.msra.mxu0 %v2627
        %2655 = vmatpush.msra.mxu0 %v2626
        %2656 = vmatpush.msra.mxu0 %v2625
        %2657 = vmatmul.f32.gmra.mxu0 %v2636
        %v2658 = vpop.f32.mrf.mxu0
        %v2659 = vadd.f32 0.0, %v2658
        %2660 = vmatmul.f32.gmra.mxu0 %v2639
        %v2661 = vpop.f32.mrf.mxu0
        %v2662 = vadd.f32 0.0, %v2661
        %2663 = vdwg.mxu0
        %s2664 = scalar_lea.vmem %s7, 16
        %v2665 = vld [vmem:[%s2664] sm:$0xff]
        %v2666 = vld [vmem:[%s2664 + $0x8] sm:$0xff]
        %v2668 = vsel %vm1650, %v2665, 0
        %v2671 = vsel %vm1650, %v2666, 0
        %2673 = vmatpush.msra.mxu0 0.0
        %2674 = vmatpush.msra.mxu0 0.0
        %2675 = vmatpush.msra.mxu0 0.0
        %2676 = vmatpush.msra.mxu0 0.0
        %2677 = vmatpush.msra.mxu0 0.0
        %2678 = vmatpush.msra.mxu0 0.0
        %2679 = vmatpush.msra.mxu0 0.0
        %2680 = vmatpush.msra.mxu0 0.0
        %2681 = vmatpush.msra.mxu0 %v2632
        %2682 = vmatpush.msra.mxu0 %v2631
        %2683 = vmatpush.msra.mxu0 %v2630
        %2684 = vmatpush.msra.mxu0 %v2629
        %2685 = vmatpush.msra.mxu0 %v2628
        %2686 = vmatpush.msra.mxu0 %v2627
        %2687 = vmatpush.msra.mxu0 %v2626
        %2688 = vmatpush.msra.mxu0 %v2625
        %2689 = vmatmul.f32.gmra.mxu0 %v2668
        %v2690 = vpop.f32.mrf.mxu0
        %v2691 = vadd.f32 0.0, %v2690
        %2692 = vmatmul.f32.gmra.mxu0 %v2671
        %v2693 = vpop.f32.mrf.mxu0
        %v2694 = vadd.f32 0.0, %v2693
        %2695 = vdwg.mxu0
        %v2696 = vmax.f32 %v2659, %v2691
        %v2697 = vmax.f32 %v2662, %v2694
        %s2698 = scalar_lea.vmem %s7, 32
        %v2699 = vld [vmem:[%s2698] sm:$0xff]
        %v2700 = vld [vmem:[%s2698 + $0x8] sm:$0xff]
        %v2702 = vsel %vm1650, %v2699, 0
        %v2705 = vsel %vm1650, %v2700, 0
        %2707 = vmatpush.msra.mxu0 0.0
        %2708 = vmatpush.msra.mxu0 0.0
        %2709 = vmatpush.msra.mxu0 0.0
        %2710 = vmatpush.msra.mxu0 0.0
        %2711 = vmatpush.msra.mxu0 0.0
        %2712 = vmatpush.msra.mxu0 0.0
        %2713 = vmatpush.msra.mxu0 0.0
        %2714 = vmatpush.msra.mxu0 0.0
        %2715 = vmatpush.msra.mxu0 %v2632
        %2716 = vmatpush.msra.mxu0 %v2631
        %2717 = vmatpush.msra.mxu0 %v2630
        %2718 = vmatpush.msra.mxu0 %v2629
        %2719 = vmatpush.msra.mxu0 %v2628
        %2720 = vmatpush.msra.mxu0 %v2627
        %2721 = vmatpush.msra.mxu0 %v2626
        %2722 = vmatpush.msra.mxu0 %v2625
        %2723 = vmatmul.f32.gmra.mxu0 %v2702
        %v2724 = vpop.f32.mrf.mxu0
        %v2725 = vadd.f32 0.0, %v2724
        %2726 = vmatmul.f32.gmra.mxu0 %v2705
        %v2727 = vpop.f32.mrf.mxu0
        %v2728 = vadd.f32 0.0, %v2727
        %2729 = vdwg.mxu0
        %v2730 = vmax.f32 %v2696, %v2725
        %v2731 = vmax.f32 %v2697, %v2728
        %s2732 = scalar_lea.vmem %s7, 48
        %v2733 = vld [vmem:[%s2732] sm:$0xff]
        %v2734 = vld [vmem:[%s2732 + $0x8] sm:$0xff]
        %v2736 = vsel %vm1650, %v2733, 0
        %v2739 = vsel %vm1650, %v2734, 0
        %2741 = vmatpush.msra.mxu0 0.0
        %2742 = vmatpush.msra.mxu0 0.0
        %2743 = vmatpush.msra.mxu0 0.0
        %2744 = vmatpush.msra.mxu0 0.0
        %2745 = vmatpush.msra.mxu0 0.0
        %2746 = vmatpush.msra.mxu0 0.0
        %2747 = vmatpush.msra.mxu0 0.0
        %2748 = vmatpush.msra.mxu0 0.0
        %2749 = vmatpush.msra.mxu0 %v2632
        %2750 = vmatpush.msra.mxu0 %v2631
        %2751 = vmatpush.msra.mxu0 %v2630
        %2752 = vmatpush.msra.mxu0 %v2629
        %2753 = vmatpush.msra.mxu0 %v2628
        %2754 = vmatpush.msra.mxu0 %v2627
        %2755 = vmatpush.msra.mxu0 %v2626
        %2756 = vmatpush.msra.mxu0 %v2625
        %2757 = vmatmul.f32.gmra.mxu0 %v2736
        %v2758 = vpop.f32.mrf.mxu0
        %v2759 = vadd.f32 0.0, %v2758
        %2760 = vmatmul.f32.gmra.mxu0 %v2739
        %v2761 = vpop.f32.mrf.mxu0
        %v2762 = vadd.f32 0.0, %v2761
        %2763 = vdwg.mxu0
        %v2764 = vmax.f32 %v2730, %v2759
        %v2765 = vmax.f32 %v2731, %v2762
        %v2766 = vlaneseq
        %v2767 = vand.u32 %v2766, 127
        %vm2768 = vcmp.eq.s32.totalorder %v2767, 0
        %v2769 = vsel %vm2768, %v2764, 0.0
        %v2770 = vsel %vm2768, %v2765, 0.0
        %vm2771 = vcmask 31744
        %v2772 = vsel %vm2771, %v2769, 0.0
        %2773 = vadd.xlane.f32.xlu0 %v2772
        %v2774 = vpop.xlane.xlu0 %2773
        %v2775 = vsel %vm2771, %v2770, 0.0
        %2776 = vadd.xlane.f32.xlu0 %v2775
        %v2777 = vpop.xlane.xlu0 %2776
        %v2778 = vld [vmem:[%s8] sm:$0xff]
        %v2779 = vld [vmem:[%s8 + $0x8] sm:$0xff]
        %v2780 = vmul.f32 %v2774, %v2778
        %v2781 = vmul.f32 %v2777, %v2779
        %v2782 = vadd.f32 %v2780, 0.0
        %v2783 = vadd.f32 %v2781, 0.0
        %vm2784 = vcmp.eq.s32.totalorder %v2767, 1
        %v2785 = vsel %vm2784, %v2764, 0.0
        %v2786 = vsel %vm2784, %v2765, 0.0
        %v2787 = vsel %vm2771, %v2785, 0.0
        %2788 = vadd.xlane.f32.xlu0 %v2787
        %v2789 = vpop.xlane.xlu0 %2788
        %v2790 = vsel %vm2771, %v2786, 0.0
        %2791 = vadd.xlane.f32.xlu0 %v2790
        %v2792 = vpop.xlane.xlu0 %2791
        %s2793 = scalar_lea.vmem %s8, 16
        %v2794 = vld [vmem:[%s2793] sm:$0xff]
        %v2795 = vld [vmem:[%s2793 + $0x8] sm:$0xff]
        %v2796 = vmul.f32 %v2789, %v2794
        %v2797 = vmul.f32 %v2792, %v2795
        %v2798 = vadd.f32 %v2782, %v2796
        %v2799 = vadd.f32 %v2783, %v2797
        %vm2800 = vcmp.eq.s32.totalorder %v2767, 2
        %v2801 = vsel %vm2800, %v2764, 0.0
        %v2802 = vsel %vm2800, %v2765, 0.0
        %v2803 = vsel %vm2771, %v2801, 0.0
        %2804 = vadd.xlane.f32.xlu0 %v2803
        %v2805 = vpop.xlane.xlu0 %2804
        %v2806 = vsel %vm2771, %v2802, 0.0
        %2807 = vadd.xlane.f32.xlu0 %v2806
        %v2808 = vpop.xlane.xlu0 %2807
        %s2809 = scalar_lea.vmem %s8, 32
        %v2810 = vld [vmem:[%s2809] sm:$0xff]
        %v2811 = vld [vmem:[%s2809 + $0x8] sm:$0xff]
        %v2812 = vmul.f32 %v2805, %v2810
        %v2813 = vmul.f32 %v2808, %v2811
        %v2814 = vadd.f32 %v2798, %v2812
        %v2815 = vadd.f32 %v2799, %v2813
        %vm2816 = vcmp.eq.s32.totalorder %v2767, 3
        %v2817 = vsel %vm2816, %v2764, 0.0
        %v2818 = vsel %vm2816, %v2765, 0.0
        %v2819 = vsel %vm2771, %v2817, 0.0
        %2820 = vadd.xlane.f32.xlu0 %v2819
        %v2821 = vpop.xlane.xlu0 %2820
        %v2822 = vsel %vm2771, %v2818, 0.0
        %2823 = vadd.xlane.f32.xlu0 %v2822
        %v2824 = vpop.xlane.xlu0 %2823
        %s2825 = scalar_lea.vmem %s8, 48
        %v2826 = vld [vmem:[%s2825] sm:$0xff]
        %v2827 = vld [vmem:[%s2825 + $0x8] sm:$0xff]
        %v2828 = vmul.f32 %v2821, %v2826
        %v2829 = vmul.f32 %v2824, %v2827
        %v2830 = vadd.f32 %v2814, %v2828
        %v2831 = vadd.f32 %v2815, %v2829
        %vm2832 = vcmask 261120
        %v2833 = vsel %vm2832, %v2830, 0.0
        %v2834 = vsel %vm2832, %v2831, 0.0
        %v2835 = vadd.f32 %v2833, %v2834
        %v2836 = vrot.slane %v2835, 4
        %v2837 = vadd.f32 %v2835, %v2836
        %v2838 = vrot.slane %v2837, 2
        %v2839 = vadd.f32 %v2837, %v2838
        %v2840 = vrot.slane %v2839, 1
        %v2841 = vadd.f32 %v2839, %v2840
        %v2842 = vld [vmem:[%s9] sm:$0x1]
        %v2843 = vadd.f32 %v2841, %v2842
        %v2844 = vld [vmem:[%s10] sm:$0xff]
        %v2845 = vld [vmem:[%s10 + $0x8] sm:$0xff]
        %v2846 = vmul.f32 %v2774, %v2844
        %v2847 = vmul.f32 %v2777, %v2845
        %v2848 = vadd.f32 %v2846, 0.0
        %v2849 = vadd.f32 %v2847, 0.0
        %s2850 = scalar_lea.vmem %s10, 16
        %v2851 = vld [vmem:[%s2850] sm:$0xff]
        %v2852 = vld [vmem:[%s2850 + $0x8] sm:$0xff]
        %v2853 = vmul.f32 %v2789, %v2851
        %v2854 = vmul.f32 %v2792, %v2852
        %v2855 = vadd.f32 %v2848, %v2853
        %v2856 = vadd.f32 %v2849, %v2854
        %s2857 = scalar_lea.vmem %s10, 32
        %v2858 = vld [vmem:[%s2857] sm:$0xff]
        %v2859 = vld [vmem:[%s2857 + $0x8] sm:$0xff]
        %v2860 = vmul.f32 %v2805, %v2858
        %v2861 = vmul.f32 %v2808, %v2859
        %v2862 = vadd.f32 %v2855, %v2860
        %v2863 = vadd.f32 %v2856, %v2861
        %s2864 = scalar_lea.vmem %s10, 48
        %v2865 = vld [vmem:[%s2864] sm:$0xff]
        %v2866 = vld [vmem:[%s2864 + $0x8] sm:$0xff]
        %v2867 = vmul.f32 %v2821, %v2865
        %v2868 = vmul.f32 %v2824, %v2866
        %v2869 = vadd.f32 %v2862, %v2867
        %v2870 = vadd.f32 %v2863, %v2868
        %v2871 = vsel %vm2832, %v2869, 0.0
        %v2872 = vsel %vm2832, %v2870, 0.0
        %v2873 = vadd.f32 %v2871, %v2872
        %v2874 = vrot.slane %v2873, 4
        %v2875 = vadd.f32 %v2873, %v2874
        %v2876 = vrot.slane %v2875, 2
        %v2877 = vadd.f32 %v2875, %v2876
        %v2878 = vrot.slane %v2877, 1
        %v2879 = vadd.f32 %v2877, %v2878
        %v2880 = vld [vmem:[%s11] sm:$0x1]
        %v2881 = vadd.f32 %v2879, %v2880
        %v2882 = vmul.f32 %v2881, 0.5
        %v2883 = vmul.f32 %v2882, 1.442695
        %v2884 = vpow.pop %v2883
        %v2885 = vld [vmem:[%s806] sm:$0x1]
        %v2886 = vmul.f32 %v2884, %v2885
        %v2887 = vadd.f32 %v2843, %v2886
        %v2888 = vpack.c.bf16 %v2887, %v2887
        %v2889 = vld [vmem:[%s13] sm:$0xf]
        %v2890 = vld [vmem:[%s13 + $0x4] sm:$0xf]
        %v2891 = vld [vmem:[%s13 + $0x8] sm:$0xf]
        %v2892 = vld [vmem:[%s13 + $0xc] sm:$0xf]
        %v2893 = vld [vmem:[%s14] sm:$0x1]
        %v2898 = vunpack.c.l.b16 %v2889
        %v2899 = vunpack.c.l.b16 %v2890
        %v2900 = vunpack.c.l.b16 %v2891
        %v2901 = vunpack.c.l.b16 %v2892
        %v2902 = vpack.c.b16 %v2899, %v2898
        %v2903 = vpack.c.b16 %v2901, %v2900
        %v2907 = vsel %vm2832, %v2888, 0
        %2909 = vmatpush.bf16.msra.mxu0 0
        %2910 = vmatpush.bf16.msra.mxu0 0
        %2911 = vmatpush.bf16.msra.mxu0 0
        %2912 = vmatpush.bf16.msra.mxu0 0
        %2913 = vmatpush.bf16.msra.mxu0 0
        %2914 = vmatpush.bf16.msra.mxu0 0
        %2915 = vmatpush.bf16.msra.mxu0 %v2903
        %2916 = vmatpush.bf16.msra.mxu0 %v2902
        %2917 = vmatmul.bf16.gmra.mxu0 %v2907
        %v2918 = vpop.f32.mrf.mxu0
        %v2919 = vadd.f32 %v2893, %v2918
        %v2920 = vpop.f32.mrf.mxu0
        %2921 = vdwg.mxu0
        %v2922 = vmax.f32 %v2919, 0.0
        %v2923 = vpack.c.bf16 %v2922, %v2922
        %v2924 = vld [vmem:[%s15] sm:$0xff]
        %v2925 = vld [vmem:[%s15 + $0x8] sm:$0xff]
        %v2926 = vld [vmem:[%s15 + $0x10] sm:$0xff]
        %v2927 = vld [vmem:[%s15 + $0x18] sm:$0xff]
        %v2928 = vld [vmem:[%s15 + $0x20] sm:$0xff]
        %v2929 = vld [vmem:[%s15 + $0x28] sm:$0xff]
        %v2930 = vld [vmem:[%s15 + $0x30] sm:$0xff]
        %v2931 = vld [vmem:[%s15 + $0x38] sm:$0xff]
        %v2932 = vld [vmem:[%s15 + $0x40] sm:$0xff]
        %v2933 = vld [vmem:[%s15 + $0x48] sm:$0xff]
        %v2934 = vld [vmem:[%s15 + $0x50] sm:$0xff]
        %v2935 = vld [vmem:[%s15 + $0x58] sm:$0xff]
        %v2936 = vld [vmem:[%s15 + $0x60] sm:$0xff]
        %v2937 = vld [vmem:[%s15 + $0x68] sm:$0xff]
        %v2938 = vld [vmem:[%s15 + $0x70] sm:$0xff]
        %v2939 = vld [vmem:[%s15 + $0x78] sm:$0xff]
        %v2940 = vld [vmem:[%s15 + $0x80] sm:$0xff]
        %v2941 = vld [vmem:[%s15 + $0x88] sm:$0xff]
        %v2942 = vld [vmem:[%s15 + $0x90] sm:$0xff]
        %v2943 = vld [vmem:[%s15 + $0x98] sm:$0xff]
        %v2944 = vld [vmem:[%s15 + $0xa0] sm:$0xff]
        %v2945 = vld [vmem:[%s15 + $0xa8] sm:$0xff]
        %v2946 = vld [vmem:[%s15 + $0xb0] sm:$0xff]
        %v2947 = vld [vmem:[%s15 + $0xb8] sm:$0xff]
        %v2948 = vld [vmem:[%s15 + $0xc0] sm:$0xff]
        %v2949 = vld [vmem:[%s15 + $0xc8] sm:$0xff]
        %v2950 = vld [vmem:[%s15 + $0xd0] sm:$0xff]
        %v2951 = vld [vmem:[%s15 + $0xd8] sm:$0xff]
        %v2952 = vld [vmem:[%s15 + $0xe0] sm:$0xff]
        %v2953 = vld [vmem:[%s15 + $0xe8] sm:$0xff]
        %v2954 = vld [vmem:[%s15 + $0xf0] sm:$0xff]
        %v2955 = vld [vmem:[%s15 + $0xf8] sm:$0xff]
        %v2956 = vld [vmem:[%s16] sm:$0xff]
        %v2989 = vunpack.c.l.b16 %v2924
        %v2990 = vunpack.c.h.b16 %v2924
        %v2991 = vunpack.c.l.b16 %v2925
        %v2992 = vunpack.c.h.b16 %v2925
        %v2993 = vunpack.c.l.b16 %v2926
        %v2994 = vunpack.c.h.b16 %v2926
        %v2995 = vunpack.c.l.b16 %v2927
        %v2996 = vunpack.c.h.b16 %v2927
        %v2997 = vunpack.c.l.b16 %v2928
        %v2998 = vunpack.c.h.b16 %v2928
        %v2999 = vunpack.c.l.b16 %v2929
        %v3000 = vunpack.c.h.b16 %v2929
        %v3001 = vunpack.c.l.b16 %v2930
        %v3002 = vunpack.c.h.b16 %v2930
        %v3003 = vunpack.c.l.b16 %v2931
        %v3004 = vunpack.c.h.b16 %v2931
        %v3005 = vunpack.c.l.b16 %v2932
        %v3006 = vunpack.c.h.b16 %v2932
        %v3007 = vunpack.c.l.b16 %v2933
        %v3008 = vunpack.c.h.b16 %v2933
        %v3009 = vunpack.c.l.b16 %v2934
        %v3010 = vunpack.c.h.b16 %v2934
        %v3011 = vunpack.c.l.b16 %v2935
        %v3012 = vunpack.c.h.b16 %v2935
        %v3013 = vunpack.c.l.b16 %v2936
        %v3014 = vunpack.c.h.b16 %v2936
        %v3015 = vunpack.c.l.b16 %v2937
        %v3016 = vunpack.c.h.b16 %v2937
        %v3017 = vunpack.c.l.b16 %v2938
        %v3018 = vunpack.c.h.b16 %v2938
        %v3019 = vunpack.c.l.b16 %v2939
        %v3020 = vunpack.c.h.b16 %v2939
        %v3021 = vunpack.c.l.b16 %v2940
        %v3022 = vunpack.c.h.b16 %v2940
        %v3023 = vunpack.c.l.b16 %v2941
        %v3024 = vunpack.c.h.b16 %v2941
        %v3025 = vunpack.c.l.b16 %v2942
        %v3026 = vunpack.c.h.b16 %v2942
        %v3027 = vunpack.c.l.b16 %v2943
        %v3028 = vunpack.c.h.b16 %v2943
        %v3029 = vunpack.c.l.b16 %v2944
        %v3030 = vunpack.c.h.b16 %v2944
        %v3031 = vunpack.c.l.b16 %v2945
        %v3032 = vunpack.c.h.b16 %v2945
        %v3033 = vunpack.c.l.b16 %v2946
        %v3034 = vunpack.c.h.b16 %v2946
        %v3035 = vunpack.c.l.b16 %v2947
        %v3036 = vunpack.c.h.b16 %v2947
        %v3037 = vunpack.c.l.b16 %v2948
        %v3038 = vunpack.c.h.b16 %v2948
        %v3039 = vunpack.c.l.b16 %v2949
        %v3040 = vunpack.c.h.b16 %v2949
        %v3041 = vunpack.c.l.b16 %v2950
        %v3042 = vunpack.c.h.b16 %v2950
        %v3043 = vunpack.c.l.b16 %v2951
        %v3044 = vunpack.c.h.b16 %v2951
        %v3045 = vunpack.c.l.b16 %v2952
        %v3046 = vunpack.c.h.b16 %v2952
        %v3047 = vunpack.c.l.b16 %v2953
        %v3048 = vunpack.c.h.b16 %v2953
        %v3049 = vunpack.c.l.b16 %v2954
        %v3050 = vunpack.c.h.b16 %v2954
        %v3051 = vunpack.c.l.b16 %v2955
        %v3052 = vunpack.c.h.b16 %v2955
        %v3053 = vpack.c.b16 %v2997, %v2989
        %v3054 = vpack.c.b16 %v2998, %v2990
        %v3055 = vpack.c.b16 %v2999, %v2991
        %v3056 = vpack.c.b16 %v3000, %v2992
        %v3057 = vpack.c.b16 %v3001, %v2993
        %v3058 = vpack.c.b16 %v3002, %v2994
        %v3059 = vpack.c.b16 %v3003, %v2995
        %v3060 = vpack.c.b16 %v3004, %v2996
        %v3061 = vpack.c.b16 %v3013, %v3005
        %v3062 = vpack.c.b16 %v3014, %v3006
        %v3063 = vpack.c.b16 %v3015, %v3007
        %v3064 = vpack.c.b16 %v3016, %v3008
        %v3065 = vpack.c.b16 %v3017, %v3009
        %v3066 = vpack.c.b16 %v3018, %v3010
        %v3067 = vpack.c.b16 %v3019, %v3011
        %v3068 = vpack.c.b16 %v3020, %v3012
        %v3069 = vpack.c.b16 %v3029, %v3021
        %v3070 = vpack.c.b16 %v3030, %v3022
        %v3071 = vpack.c.b16 %v3031, %v3023
        %v3072 = vpack.c.b16 %v3032, %v3024
        %v3073 = vpack.c.b16 %v3033, %v3025
        %v3074 = vpack.c.b16 %v3034, %v3026
        %v3075 = vpack.c.b16 %v3035, %v3027
        %v3076 = vpack.c.b16 %v3036, %v3028
        %v3077 = vpack.c.b16 %v3045, %v3037
        %v3078 = vpack.c.b16 %v3046, %v3038
        %v3079 = vpack.c.b16 %v3047, %v3039
        %v3080 = vpack.c.b16 %v3048, %v3040
        %v3081 = vpack.c.b16 %v3049, %v3041
        %v3082 = vpack.c.b16 %v3050, %v3042
        %v3083 = vpack.c.b16 %v3051, %v3043
        %v3084 = vpack.c.b16 %v3052, %v3044
        %v3118 = vperm.slane %v2956, 0
        %v3119 = vperm.slane %v2956, 1
        %v3120 = vperm.slane %v2956, 2
        %v3121 = vperm.slane %v2956, 3
        %v3122 = vperm.slane %v2956, 4
        %v3123 = vperm.slane %v2956, 5
        %v3124 = vperm.slane %v2956, 6
        %v3125 = vperm.slane %v2956, 7
        %v3135 = vsel %vm1650, %v2923, 0
        %3137 = vmatpush.bf16.msra.mxu0 0
        %3138 = vmatpush.bf16.msra.mxu0 0
        %3139 = vmatpush.bf16.msra.mxu0 0
        %3140 = vmatpush.bf16.msra.mxu0 0
        %3141 = vmatpush.bf16.msra.mxu0 %v3077
        %3142 = vmatpush.bf16.msra.mxu0 %v3069
        %3143 = vmatpush.bf16.msra.mxu0 %v3061
        %3144 = vmatpush.bf16.msra.mxu0 %v3053
        %3145 = vmatmul.bf16.gmra.mxu0 %v3135
        %v3146 = vpop.f32.mrf.mxu0
        %v3147 = vadd.f32 %v3118, %v3146
        %v3148 = vpop.f32.mrf.mxu0
        %3149 = vdwg.mxu0
        %3150 = vmatpush.bf16.msra.mxu0 0
        %3151 = vmatpush.bf16.msra.mxu0 0
        %3152 = vmatpush.bf16.msra.mxu0 0
        %3153 = vmatpush.bf16.msra.mxu0 0
        %3154 = vmatpush.bf16.msra.mxu0 %v3078
        %3155 = vmatpush.bf16.msra.mxu0 %v3070
        %3156 = vmatpush.bf16.msra.mxu0 %v3062
        %3157 = vmatpush.bf16.msra.mxu0 %v3054
        %3158 = vmatmul.bf16.gmra.mxu0 %v3135
        %v3159 = vpop.f32.mrf.mxu0
        %v3160 = vadd.f32 %v3119, %v3159
        %v3161 = vpop.f32.mrf.mxu0
        %3162 = vdwg.mxu0
        %3163 = vmatpush.bf16.msra.mxu0 0
        %3164 = vmatpush.bf16.msra.mxu0 0
        %3165 = vmatpush.bf16.msra.mxu0 0
        %3166 = vmatpush.bf16.msra.mxu0 0
        %3167 = vmatpush.bf16.msra.mxu0 %v3079
        %3168 = vmatpush.bf16.msra.mxu0 %v3071
        %3169 = vmatpush.bf16.msra.mxu0 %v3063
        %3170 = vmatpush.bf16.msra.mxu0 %v3055
        %3171 = vmatmul.bf16.gmra.mxu0 %v3135
        %v3172 = vpop.f32.mrf.mxu0
        %v3173 = vadd.f32 %v3120, %v3172
        %v3174 = vpop.f32.mrf.mxu0
        %3175 = vdwg.mxu0
        %3176 = vmatpush.bf16.msra.mxu0 0
        %3177 = vmatpush.bf16.msra.mxu0 0
        %3178 = vmatpush.bf16.msra.mxu0 0
        %3179 = vmatpush.bf16.msra.mxu0 0
        %3180 = vmatpush.bf16.msra.mxu0 %v3080
        %3181 = vmatpush.bf16.msra.mxu0 %v3072
        %3182 = vmatpush.bf16.msra.mxu0 %v3064
        %3183 = vmatpush.bf16.msra.mxu0 %v3056
        %3184 = vmatmul.bf16.gmra.mxu0 %v3135
        %v3185 = vpop.f32.mrf.mxu0
        %v3186 = vadd.f32 %v3121, %v3185
        %v3187 = vpop.f32.mrf.mxu0
        %3188 = vdwg.mxu0
        %3189 = vmatpush.bf16.msra.mxu0 0
        %3190 = vmatpush.bf16.msra.mxu0 0
        %3191 = vmatpush.bf16.msra.mxu0 0
        %3192 = vmatpush.bf16.msra.mxu0 0
        %3193 = vmatpush.bf16.msra.mxu0 %v3081
        %3194 = vmatpush.bf16.msra.mxu0 %v3073
        %3195 = vmatpush.bf16.msra.mxu0 %v3065
        %3196 = vmatpush.bf16.msra.mxu0 %v3057
        %3197 = vmatmul.bf16.gmra.mxu0 %v3135
        %v3198 = vpop.f32.mrf.mxu0
        %v3199 = vadd.f32 %v3122, %v3198
        %v3200 = vpop.f32.mrf.mxu0
        %3201 = vdwg.mxu0
        %3202 = vmatpush.bf16.msra.mxu0 0
        %3203 = vmatpush.bf16.msra.mxu0 0
        %3204 = vmatpush.bf16.msra.mxu0 0
        %3205 = vmatpush.bf16.msra.mxu0 0
        %3206 = vmatpush.bf16.msra.mxu0 %v3082
        %3207 = vmatpush.bf16.msra.mxu0 %v3074
        %3208 = vmatpush.bf16.msra.mxu0 %v3066
        %3209 = vmatpush.bf16.msra.mxu0 %v3058
        %3210 = vmatmul.bf16.gmra.mxu0 %v3135
        %v3211 = vpop.f32.mrf.mxu0
        %v3212 = vadd.f32 %v3123, %v3211
        %v3213 = vpop.f32.mrf.mxu0
        %3214 = vdwg.mxu0
        %3215 = vmatpush.bf16.msra.mxu0 0
        %3216 = vmatpush.bf16.msra.mxu0 0
        %3217 = vmatpush.bf16.msra.mxu0 0
        %3218 = vmatpush.bf16.msra.mxu0 0
        %3219 = vmatpush.bf16.msra.mxu0 %v3083
        %3220 = vmatpush.bf16.msra.mxu0 %v3075
        %3221 = vmatpush.bf16.msra.mxu0 %v3067
        %3222 = vmatpush.bf16.msra.mxu0 %v3059
        %3223 = vmatmul.bf16.gmra.mxu0 %v3135
        %v3224 = vpop.f32.mrf.mxu0
        %v3225 = vadd.f32 %v3124, %v3224
        %v3226 = vpop.f32.mrf.mxu0
        %3227 = vdwg.mxu0
        %3228 = vmatpush.bf16.msra.mxu0 0
        %3229 = vmatpush.bf16.msra.mxu0 0
        %3230 = vmatpush.bf16.msra.mxu0 0
        %3231 = vmatpush.bf16.msra.mxu0 0
        %3232 = vmatpush.bf16.msra.mxu0 %v3084
        %3233 = vmatpush.bf16.msra.mxu0 %v3076
        %3234 = vmatpush.bf16.msra.mxu0 %v3068
        %3235 = vmatpush.bf16.msra.mxu0 %v3060
        %3236 = vmatmul.bf16.gmra.mxu0 %v3135
        %v3237 = vpop.f32.mrf.mxu0
        %v3238 = vadd.f32 %v3125, %v3237
        %v3239 = vpop.f32.mrf.mxu0
        %3240 = vdwg.mxu0
        %v3241 = vmax.f32 %v3147, 0.0
        %v3242 = vmax.f32 %v3160, 0.0
        %v3243 = vmax.f32 %v3173, 0.0
        %v3244 = vmax.f32 %v3186, 0.0
        %v3245 = vmax.f32 %v3199, 0.0
        %v3246 = vmax.f32 %v3212, 0.0
        %v3247 = vmax.f32 %v3225, 0.0
        %v3248 = vmax.f32 %v3238, 0.0
        %v3249 = vpack.c.bf16 %v3241, %v3241
        %v3250 = vpack.c.bf16 %v3242, %v3242
        %v3251 = vpack.c.bf16 %v3243, %v3243
        %v3252 = vpack.c.bf16 %v3244, %v3244
        %v3253 = vpack.c.bf16 %v3245, %v3245
        %v3254 = vpack.c.bf16 %v3246, %v3246
        %v3255 = vpack.c.bf16 %v3247, %v3247
        %v3256 = vpack.c.bf16 %v3248, %v3248
        %v3257 = vld [vmem:[%s17] sm:$0xff]
        %v3258 = vld [vmem:[%s17 + $0x8] sm:$0xff]
        %v3259 = vld [vmem:[%s17 + $0x10] sm:$0xff]
        %v3260 = vld [vmem:[%s17 + $0x18] sm:$0xff]
        %v3261 = vld [vmem:[%s17 + $0x20] sm:$0xff]
        %v3262 = vld [vmem:[%s17 + $0x28] sm:$0xff]
        %v3263 = vld [vmem:[%s17 + $0x30] sm:$0xff]
        %v3264 = vld [vmem:[%s17 + $0x38] sm:$0xff]
        %v3265 = vld [vmem:[%s17 + $0x40] sm:$0xff]
        %v3266 = vld [vmem:[%s17 + $0x48] sm:$0xff]
        %v3267 = vld [vmem:[%s17 + $0x50] sm:$0xff]
        %v3268 = vld [vmem:[%s17 + $0x58] sm:$0xff]
        %v3269 = vld [vmem:[%s17 + $0x60] sm:$0xff]
        %v3270 = vld [vmem:[%s17 + $0x68] sm:$0xff]
        %v3271 = vld [vmem:[%s17 + $0x70] sm:$0xff]
        %v3272 = vld [vmem:[%s17 + $0x78] sm:$0xff]
        %v3273 = vld [vmem:[%s17 + $0x80] sm:$0xff]
        %v3274 = vld [vmem:[%s17 + $0x88] sm:$0xff]
        %v3275 = vld [vmem:[%s17 + $0x90] sm:$0xff]
        %v3276 = vld [vmem:[%s17 + $0x98] sm:$0xff]
        %v3277 = vld [vmem:[%s17 + $0xa0] sm:$0xff]
        %v3278 = vld [vmem:[%s17 + $0xa8] sm:$0xff]
        %v3279 = vld [vmem:[%s17 + $0xb0] sm:$0xff]
        %v3280 = vld [vmem:[%s17 + $0xb8] sm:$0xff]
        %v3281 = vld [vmem:[%s17 + $0xc0] sm:$0xff]
        %v3282 = vld [vmem:[%s17 + $0xc8] sm:$0xff]
        %v3283 = vld [vmem:[%s17 + $0xd0] sm:$0xff]
        %v3284 = vld [vmem:[%s17 + $0xd8] sm:$0xff]
        %v3285 = vld [vmem:[%s17 + $0xe0] sm:$0xff]
        %v3286 = vld [vmem:[%s17 + $0xe8] sm:$0xff]
        %v3287 = vld [vmem:[%s17 + $0xf0] sm:$0xff]
        %v3288 = vld [vmem:[%s17 + $0xf8] sm:$0xff]
        %v3289 = vld [vmem:[%s17 + $0x100] sm:$0xff]
        %v3290 = vld [vmem:[%s17 + $0x108] sm:$0xff]
        %v3291 = vld [vmem:[%s17 + $0x110] sm:$0xff]
        %v3292 = vld [vmem:[%s17 + $0x118] sm:$0xff]
        %v3293 = vld [vmem:[%s17 + $0x120] sm:$0xff]
        %v3294 = vld [vmem:[%s17 + $0x128] sm:$0xff]
        %v3295 = vld [vmem:[%s17 + $0x130] sm:$0xff]
        %v3296 = vld [vmem:[%s17 + $0x138] sm:$0xff]
        %v3297 = vld [vmem:[%s17 + $0x140] sm:$0xff]
        %v3298 = vld [vmem:[%s17 + $0x148] sm:$0xff]
        %v3299 = vld [vmem:[%s17 + $0x150] sm:$0xff]
        %v3300 = vld [vmem:[%s17 + $0x158] sm:$0xff]
        %v3301 = vld [vmem:[%s17 + $0x160] sm:$0xff]
        %v3302 = vld [vmem:[%s17 + $0x168] sm:$0xff]
        %v3303 = vld [vmem:[%s17 + $0x170] sm:$0xff]
        %v3304 = vld [vmem:[%s17 + $0x178] sm:$0xff]
        %v3305 = vld [vmem:[%s17 + $0x180] sm:$0xff]
        %v3306 = vld [vmem:[%s17 + $0x188] sm:$0xff]
        %v3307 = vld [vmem:[%s17 + $0x190] sm:$0xff]
        %v3308 = vld [vmem:[%s17 + $0x198] sm:$0xff]
        %v3309 = vld [vmem:[%s17 + $0x1a0] sm:$0xff]
        %v3310 = vld [vmem:[%s17 + $0x1a8] sm:$0xff]
        %v3311 = vld [vmem:[%s17 + $0x1b0] sm:$0xff]
        %v3312 = vld [vmem:[%s17 + $0x1b8] sm:$0xff]
        %v3313 = vld [vmem:[%s17 + $0x1c0] sm:$0xff]
        %v3314 = vld [vmem:[%s17 + $0x1c8] sm:$0xff]
        %v3315 = vld [vmem:[%s17 + $0x1d0] sm:$0xff]
        %v3316 = vld [vmem:[%s17 + $0x1d8] sm:$0xff]
        %v3317 = vld [vmem:[%s17 + $0x1e0] sm:$0xff]
        %v3318 = vld [vmem:[%s17 + $0x1e8] sm:$0xff]
        %v3319 = vld [vmem:[%s17 + $0x1f0] sm:$0xff]
        %v3320 = vld [vmem:[%s17 + $0x1f8] sm:$0xff]
        %v3321 = vld [vmem:[%s17 + $0x200] sm:$0xff]
        %v3322 = vld [vmem:[%s17 + $0x208] sm:$0xff]
        %v3323 = vld [vmem:[%s17 + $0x210] sm:$0xff]
        %v3324 = vld [vmem:[%s17 + $0x218] sm:$0xff]
        %v3325 = vld [vmem:[%s17 + $0x220] sm:$0xff]
        %v3326 = vld [vmem:[%s17 + $0x228] sm:$0xff]
        %v3327 = vld [vmem:[%s17 + $0x230] sm:$0xff]
        %v3328 = vld [vmem:[%s17 + $0x238] sm:$0xff]
        %v3329 = vld [vmem:[%s17 + $0x240] sm:$0xff]
        %v3330 = vld [vmem:[%s17 + $0x248] sm:$0xff]
        %v3331 = vld [vmem:[%s17 + $0x250] sm:$0xff]
        %v3332 = vld [vmem:[%s17 + $0x258] sm:$0xff]
        %v3333 = vld [vmem:[%s17 + $0x260] sm:$0xff]
        %v3334 = vld [vmem:[%s17 + $0x268] sm:$0xff]
        %v3335 = vld [vmem:[%s17 + $0x270] sm:$0xff]
        %v3336 = vld [vmem:[%s17 + $0x278] sm:$0xff]
        %v3337 = vld [vmem:[%s17 + $0x280] sm:$0xff]
        %v3338 = vld [vmem:[%s17 + $0x288] sm:$0xff]
        %v3339 = vld [vmem:[%s17 + $0x290] sm:$0xff]
        %v3340 = vld [vmem:[%s17 + $0x298] sm:$0xff]
        %v3341 = vld [vmem:[%s17 + $0x2a0] sm:$0xff]
        %v3342 = vld [vmem:[%s17 + $0x2a8] sm:$0xff]
        %v3343 = vld [vmem:[%s17 + $0x2b0] sm:$0xff]
        %v3344 = vld [vmem:[%s17 + $0x2b8] sm:$0xff]
        %v3345 = vld [vmem:[%s17 + $0x2c0] sm:$0xff]
        %v3346 = vld [vmem:[%s17 + $0x2c8] sm:$0xff]
        %v3347 = vld [vmem:[%s17 + $0x2d0] sm:$0xff]
        %v3348 = vld [vmem:[%s17 + $0x2d8] sm:$0xff]
        %v3349 = vld [vmem:[%s17 + $0x2e0] sm:$0xff]
        %v3350 = vld [vmem:[%s17 + $0x2e8] sm:$0xff]
        %v3351 = vld [vmem:[%s17 + $0x2f0] sm:$0xff]
        %v3352 = vld [vmem:[%s17 + $0x2f8] sm:$0xff]
        %v3353 = vld [vmem:[%s17 + $0x300] sm:$0xff]
        %v3354 = vld [vmem:[%s17 + $0x308] sm:$0xff]
        %v3355 = vld [vmem:[%s17 + $0x310] sm:$0xff]
        %v3356 = vld [vmem:[%s17 + $0x318] sm:$0xff]
        %v3357 = vld [vmem:[%s17 + $0x320] sm:$0xff]
        %v3358 = vld [vmem:[%s17 + $0x328] sm:$0xff]
        %v3359 = vld [vmem:[%s17 + $0x330] sm:$0xff]
        %v3360 = vld [vmem:[%s17 + $0x338] sm:$0xff]
        %v3361 = vld [vmem:[%s17 + $0x340] sm:$0xff]
        %v3362 = vld [vmem:[%s17 + $0x348] sm:$0xff]
        %v3363 = vld [vmem:[%s17 + $0x350] sm:$0xff]
        %v3364 = vld [vmem:[%s17 + $0x358] sm:$0xff]
        %v3365 = vld [vmem:[%s17 + $0x360] sm:$0xff]
        %v3366 = vld [vmem:[%s17 + $0x368] sm:$0xff]
        %v3367 = vld [vmem:[%s17 + $0x370] sm:$0xff]
        %v3368 = vld [vmem:[%s17 + $0x378] sm:$0xff]
        %v3369 = vld [vmem:[%s17 + $0x380] sm:$0xff]
        %v3370 = vld [vmem:[%s17 + $0x388] sm:$0xff]
        %v3371 = vld [vmem:[%s17 + $0x390] sm:$0xff]
        %v3372 = vld [vmem:[%s17 + $0x398] sm:$0xff]
        %v3373 = vld [vmem:[%s17 + $0x3a0] sm:$0xff]
        %v3374 = vld [vmem:[%s17 + $0x3a8] sm:$0xff]
        %v3375 = vld [vmem:[%s17 + $0x3b0] sm:$0xff]
        %v3376 = vld [vmem:[%s17 + $0x3b8] sm:$0xff]
        %v3377 = vld [vmem:[%s17 + $0x3c0] sm:$0xff]
        %v3378 = vld [vmem:[%s17 + $0x3c8] sm:$0xff]
        %v3379 = vld [vmem:[%s17 + $0x3d0] sm:$0xff]
        %v3380 = vld [vmem:[%s17 + $0x3d8] sm:$0xff]
        %v3381 = vld [vmem:[%s17 + $0x3e0] sm:$0xff]
        %v3382 = vld [vmem:[%s17 + $0x3e8] sm:$0xff]
        %v3383 = vld [vmem:[%s17 + $0x3f0] sm:$0xff]
        %v3384 = vld [vmem:[%s17 + $0x3f8] sm:$0xff]
        %v3385 = vld [vmem:[%s17 + $0x400] sm:$0xff]
        %v3386 = vld [vmem:[%s17 + $0x408] sm:$0xff]
        %v3387 = vld [vmem:[%s17 + $0x410] sm:$0xff]
        %v3388 = vld [vmem:[%s17 + $0x418] sm:$0xff]
        %v3389 = vld [vmem:[%s17 + $0x420] sm:$0xff]
        %v3390 = vld [vmem:[%s17 + $0x428] sm:$0xff]
        %v3391 = vld [vmem:[%s17 + $0x430] sm:$0xff]
        %v3392 = vld [vmem:[%s17 + $0x438] sm:$0xff]
        %v3393 = vld [vmem:[%s17 + $0x440] sm:$0xff]
        %v3394 = vld [vmem:[%s17 + $0x448] sm:$0xff]
        %v3395 = vld [vmem:[%s17 + $0x450] sm:$0xff]
        %v3396 = vld [vmem:[%s17 + $0x458] sm:$0xff]
        %v3397 = vld [vmem:[%s17 + $0x460] sm:$0xff]
        %v3398 = vld [vmem:[%s17 + $0x468] sm:$0xff]
        %v3399 = vld [vmem:[%s17 + $0x470] sm:$0xff]
        %v3400 = vld [vmem:[%s17 + $0x478] sm:$0xff]
        %v3401 = vld [vmem:[%s17 + $0x480] sm:$0xff]
        %v3402 = vld [vmem:[%s17 + $0x488] sm:$0xff]
        %v3403 = vld [vmem:[%s17 + $0x490] sm:$0xff]
        %v3404 = vld [vmem:[%s17 + $0x498] sm:$0xff]
        %v3405 = vld [vmem:[%s17 + $0x4a0] sm:$0xff]
        %v3406 = vld [vmem:[%s17 + $0x4a8] sm:$0xff]
        %v3407 = vld [vmem:[%s17 + $0x4b0] sm:$0xff]
        %v3408 = vld [vmem:[%s17 + $0x4b8] sm:$0xff]
        %v3409 = vld [vmem:[%s17 + $0x4c0] sm:$0xff]
        %v3410 = vld [vmem:[%s17 + $0x4c8] sm:$0xff]
        %v3411 = vld [vmem:[%s17 + $0x4d0] sm:$0xff]
        %v3412 = vld [vmem:[%s17 + $0x4d8] sm:$0xff]
        %v3413 = vld [vmem:[%s17 + $0x4e0] sm:$0xff]
        %v3414 = vld [vmem:[%s17 + $0x4e8] sm:$0xff]
        %v3415 = vld [vmem:[%s17 + $0x4f0] sm:$0xff]
        %v3416 = vld [vmem:[%s17 + $0x4f8] sm:$0xff]
        %v3417 = vld [vmem:[%s17 + $0x500] sm:$0xff]
        %v3418 = vld [vmem:[%s17 + $0x508] sm:$0xff]
        %v3419 = vld [vmem:[%s17 + $0x510] sm:$0xff]
        %v3420 = vld [vmem:[%s17 + $0x518] sm:$0xff]
        %v3421 = vld [vmem:[%s17 + $0x520] sm:$0xff]
        %v3422 = vld [vmem:[%s17 + $0x528] sm:$0xff]
        %v3423 = vld [vmem:[%s17 + $0x530] sm:$0xff]
        %v3424 = vld [vmem:[%s17 + $0x538] sm:$0xff]
        %v3425 = vld [vmem:[%s17 + $0x540] sm:$0xff]
        %v3426 = vld [vmem:[%s17 + $0x548] sm:$0xff]
        %v3427 = vld [vmem:[%s17 + $0x550] sm:$0xff]
        %v3428 = vld [vmem:[%s17 + $0x558] sm:$0xff]
        %v3429 = vld [vmem:[%s17 + $0x560] sm:$0xff]
        %v3430 = vld [vmem:[%s17 + $0x568] sm:$0xff]
        %v3431 = vld [vmem:[%s17 + $0x570] sm:$0xff]
        %v3432 = vld [vmem:[%s17 + $0x578] sm:$0xff]
        %v3433 = vld [vmem:[%s17 + $0x580] sm:$0xff]
        %v3434 = vld [vmem:[%s17 + $0x588] sm:$0xff]
        %v3435 = vld [vmem:[%s17 + $0x590] sm:$0xff]
        %v3436 = vld [vmem:[%s17 + $0x598] sm:$0xff]
        %v3437 = vld [vmem:[%s17 + $0x5a0] sm:$0xff]
        %v3438 = vld [vmem:[%s17 + $0x5a8] sm:$0xff]
        %v3439 = vld [vmem:[%s17 + $0x5b0] sm:$0xff]
        %v3440 = vld [vmem:[%s17 + $0x5b8] sm:$0xff]
        %v3441 = vld [vmem:[%s17 + $0x5c0] sm:$0xff]
        %v3442 = vld [vmem:[%s17 + $0x5c8] sm:$0xff]
        %v3443 = vld [vmem:[%s17 + $0x5d0] sm:$0xff]
        %v3444 = vld [vmem:[%s17 + $0x5d8] sm:$0xff]
        %v3445 = vld [vmem:[%s17 + $0x5e0] sm:$0xff]
        %v3446 = vld [vmem:[%s17 + $0x5e8] sm:$0xff]
        %v3447 = vld [vmem:[%s17 + $0x5f0] sm:$0xff]
        %v3448 = vld [vmem:[%s17 + $0x5f8] sm:$0xff]
        %v3449 = vld [vmem:[%s17 + $0x600] sm:$0xff]
        %v3450 = vld [vmem:[%s17 + $0x608] sm:$0xff]
        %v3451 = vld [vmem:[%s17 + $0x610] sm:$0xff]
        %v3452 = vld [vmem:[%s17 + $0x618] sm:$0xff]
        %v3453 = vld [vmem:[%s17 + $0x620] sm:$0xff]
        %v3454 = vld [vmem:[%s17 + $0x628] sm:$0xff]
        %v3455 = vld [vmem:[%s17 + $0x630] sm:$0xff]
        %v3456 = vld [vmem:[%s17 + $0x638] sm:$0xff]
        %v3457 = vld [vmem:[%s17 + $0x640] sm:$0xff]
        %v3458 = vld [vmem:[%s17 + $0x648] sm:$0xff]
        %v3459 = vld [vmem:[%s17 + $0x650] sm:$0xff]
        %v3460 = vld [vmem:[%s17 + $0x658] sm:$0xff]
        %v3461 = vld [vmem:[%s17 + $0x660] sm:$0xff]
        %v3462 = vld [vmem:[%s17 + $0x668] sm:$0xff]
        %v3463 = vld [vmem:[%s17 + $0x670] sm:$0xff]
        %v3464 = vld [vmem:[%s17 + $0x678] sm:$0xff]
        %v3465 = vld [vmem:[%s17 + $0x680] sm:$0xff]
        %v3466 = vld [vmem:[%s17 + $0x688] sm:$0xff]
        %v3467 = vld [vmem:[%s17 + $0x690] sm:$0xff]
        %v3468 = vld [vmem:[%s17 + $0x698] sm:$0xff]
        %v3469 = vld [vmem:[%s17 + $0x6a0] sm:$0xff]
        %v3470 = vld [vmem:[%s17 + $0x6a8] sm:$0xff]
        %v3471 = vld [vmem:[%s17 + $0x6b0] sm:$0xff]
        %v3472 = vld [vmem:[%s17 + $0x6b8] sm:$0xff]
        %v3473 = vld [vmem:[%s17 + $0x6c0] sm:$0xff]
        %v3474 = vld [vmem:[%s17 + $0x6c8] sm:$0xff]
        %v3475 = vld [vmem:[%s17 + $0x6d0] sm:$0xff]
        %v3476 = vld [vmem:[%s17 + $0x6d8] sm:$0xff]
        %v3477 = vld [vmem:[%s17 + $0x6e0] sm:$0xff]
        %v3478 = vld [vmem:[%s17 + $0x6e8] sm:$0xff]
        %v3479 = vld [vmem:[%s17 + $0x6f0] sm:$0xff]
        %v3480 = vld [vmem:[%s17 + $0x6f8] sm:$0xff]
        %v3481 = vld [vmem:[%s17 + $0x700] sm:$0xff]
        %v3482 = vld [vmem:[%s17 + $0x708] sm:$0xff]
        %v3483 = vld [vmem:[%s17 + $0x710] sm:$0xff]
        %v3484 = vld [vmem:[%s17 + $0x718] sm:$0xff]
        %v3485 = vld [vmem:[%s17 + $0x720] sm:$0xff]
        %v3486 = vld [vmem:[%s17 + $0x728] sm:$0xff]
        %v3487 = vld [vmem:[%s17 + $0x730] sm:$0xff]
        %v3488 = vld [vmem:[%s17 + $0x738] sm:$0xff]
        %v3489 = vld [vmem:[%s17 + $0x740] sm:$0xff]
        %v3490 = vld [vmem:[%s17 + $0x748] sm:$0xff]
        %v3491 = vld [vmem:[%s17 + $0x750] sm:$0xff]
        %v3492 = vld [vmem:[%s17 + $0x758] sm:$0xff]
        %v3493 = vld [vmem:[%s17 + $0x760] sm:$0xff]
        %v3494 = vld [vmem:[%s17 + $0x768] sm:$0xff]
        %v3495 = vld [vmem:[%s17 + $0x770] sm:$0xff]
        %v3496 = vld [vmem:[%s17 + $0x778] sm:$0xff]
        %v3497 = vld [vmem:[%s17 + $0x780] sm:$0xff]
        %v3498 = vld [vmem:[%s17 + $0x788] sm:$0xff]
        %v3499 = vld [vmem:[%s17 + $0x790] sm:$0xff]
        %v3500 = vld [vmem:[%s17 + $0x798] sm:$0xff]
        %v3501 = vld [vmem:[%s17 + $0x7a0] sm:$0xff]
        %v3502 = vld [vmem:[%s17 + $0x7a8] sm:$0xff]
        %v3503 = vld [vmem:[%s17 + $0x7b0] sm:$0xff]
        %v3504 = vld [vmem:[%s17 + $0x7b8] sm:$0xff]
        %v3505 = vld [vmem:[%s17 + $0x7c0] sm:$0xff]
        %v3506 = vld [vmem:[%s17 + $0x7c8] sm:$0xff]
        %v3507 = vld [vmem:[%s17 + $0x7d0] sm:$0xff]
        %v3508 = vld [vmem:[%s17 + $0x7d8] sm:$0xff]
        %v3509 = vld [vmem:[%s17 + $0x7e0] sm:$0xff]
        %v3510 = vld [vmem:[%s17 + $0x7e8] sm:$0xff]
        %v3511 = vld [vmem:[%s17 + $0x7f0] sm:$0xff]
        %v3512 = vld [vmem:[%s17 + $0x7f8] sm:$0xff]
        %v3513 = vld [vmem:[%s17 + $0x800] sm:$0xff]
        %v3514 = vld [vmem:[%s17 + $0x808] sm:$0xff]
        %v3515 = vld [vmem:[%s17 + $0x810] sm:$0xff]
        %v3516 = vld [vmem:[%s17 + $0x818] sm:$0xff]
        %v3517 = vld [vmem:[%s17 + $0x820] sm:$0xff]
        %v3518 = vld [vmem:[%s17 + $0x828] sm:$0xff]
        %v3519 = vld [vmem:[%s17 + $0x830] sm:$0xff]
        %v3520 = vld [vmem:[%s17 + $0x838] sm:$0xff]
        %v3521 = vld [vmem:[%s17 + $0x840] sm:$0xff]
        %v3522 = vld [vmem:[%s17 + $0x848] sm:$0xff]
        %v3523 = vld [vmem:[%s17 + $0x850] sm:$0xff]
        %v3524 = vld [vmem:[%s17 + $0x858] sm:$0xff]
        %v3525 = vld [vmem:[%s17 + $0x860] sm:$0xff]
        %v3526 = vld [vmem:[%s17 + $0x868] sm:$0xff]
        %v3527 = vld [vmem:[%s17 + $0x870] sm:$0xff]
        %v3528 = vld [vmem:[%s17 + $0x878] sm:$0xff]
        %v3529 = vld [vmem:[%s17 + $0x880] sm:$0xff]
        %v3530 = vld [vmem:[%s17 + $0x888] sm:$0xff]
        %v3531 = vld [vmem:[%s17 + $0x890] sm:$0xff]
        %v3532 = vld [vmem:[%s17 + $0x898] sm:$0xff]
        %v3533 = vld [vmem:[%s17 + $0x8a0] sm:$0xff]
        %v3534 = vld [vmem:[%s17 + $0x8a8] sm:$0xff]
        %v3535 = vld [vmem:[%s17 + $0x8b0] sm:$0xff]
        %v3536 = vld [vmem:[%s17 + $0x8b8] sm:$0xff]
        %v3537 = vld [vmem:[%s17 + $0x8c0] sm:$0xff]
        %v3538 = vld [vmem:[%s17 + $0x8c8] sm:$0xff]
        %v3539 = vld [vmem:[%s17 + $0x8d0] sm:$0xff]
        %v3540 = vld [vmem:[%s17 + $0x8d8] sm:$0xff]
        %v3541 = vld [vmem:[%s17 + $0x8e0] sm:$0xff]
        %v3542 = vld [vmem:[%s17 + $0x8e8] sm:$0xff]
        %v3543 = vld [vmem:[%s17 + $0x8f0] sm:$0xff]
        %v3544 = vld [vmem:[%s17 + $0x8f8] sm:$0xff]
        %v3545 = vld [vmem:[%s17 + $0x900] sm:$0xff]
        %v3546 = vld [vmem:[%s17 + $0x908] sm:$0xff]
        %v3547 = vld [vmem:[%s17 + $0x910] sm:$0xff]
        %v3548 = vld [vmem:[%s17 + $0x918] sm:$0xff]
        %v3549 = vld [vmem:[%s17 + $0x920] sm:$0xff]
        %v3550 = vld [vmem:[%s17 + $0x928] sm:$0xff]
        %v3551 = vld [vmem:[%s17 + $0x930] sm:$0xff]
        %v3552 = vld [vmem:[%s17 + $0x938] sm:$0xff]
        %v3553 = vld [vmem:[%s17 + $0x940] sm:$0xff]
        %v3554 = vld [vmem:[%s17 + $0x948] sm:$0xff]
        %v3555 = vld [vmem:[%s17 + $0x950] sm:$0xff]
        %v3556 = vld [vmem:[%s17 + $0x958] sm:$0xff]
        %v3557 = vld [vmem:[%s17 + $0x960] sm:$0xff]
        %v3558 = vld [vmem:[%s17 + $0x968] sm:$0xff]
        %v3559 = vld [vmem:[%s17 + $0x970] sm:$0xff]
        %v3560 = vld [vmem:[%s17 + $0x978] sm:$0xff]
        %v3561 = vld [vmem:[%s17 + $0x980] sm:$0xff]
        %v3562 = vld [vmem:[%s17 + $0x988] sm:$0xff]
        %v3563 = vld [vmem:[%s17 + $0x990] sm:$0xff]
        %v3564 = vld [vmem:[%s17 + $0x998] sm:$0xff]
        %v3565 = vld [vmem:[%s17 + $0x9a0] sm:$0xff]
        %v3566 = vld [vmem:[%s17 + $0x9a8] sm:$0xff]
        %v3567 = vld [vmem:[%s17 + $0x9b0] sm:$0xff]
        %v3568 = vld [vmem:[%s17 + $0x9b8] sm:$0xff]
        %v3569 = vld [vmem:[%s17 + $0x9c0] sm:$0xff]
        %v3570 = vld [vmem:[%s17 + $0x9c8] sm:$0xff]
        %v3571 = vld [vmem:[%s17 + $0x9d0] sm:$0xff]
        %v3572 = vld [vmem:[%s17 + $0x9d8] sm:$0xff]
        %v3573 = vld [vmem:[%s17 + $0x9e0] sm:$0xff]
        %v3574 = vld [vmem:[%s17 + $0x9e8] sm:$0xff]
        %v3575 = vld [vmem:[%s17 + $0x9f0] sm:$0xff]
        %v3576 = vld [vmem:[%s17 + $0x9f8] sm:$0xff]
        %v3577 = vld [vmem:[%s17 + $0xa00] sm:$0xff]
        %v3578 = vld [vmem:[%s17 + $0xa08] sm:$0xff]
        %v3579 = vld [vmem:[%s17 + $0xa10] sm:$0xff]
        %v3580 = vld [vmem:[%s17 + $0xa18] sm:$0xff]
        %v3581 = vld [vmem:[%s17 + $0xa20] sm:$0xff]
        %v3582 = vld [vmem:[%s17 + $0xa28] sm:$0xff]
        %v3583 = vld [vmem:[%s17 + $0xa30] sm:$0xff]
        %v3584 = vld [vmem:[%s17 + $0xa38] sm:$0xff]
        %v3585 = vld [vmem:[%s17 + $0xa40] sm:$0xff]
        %v3586 = vld [vmem:[%s17 + $0xa48] sm:$0xff]
        %v3587 = vld [vmem:[%s17 + $0xa50] sm:$0xff]
        %v3588 = vld [vmem:[%s17 + $0xa58] sm:$0xff]
        %v3589 = vld [vmem:[%s17 + $0xa60] sm:$0xff]
        %v3590 = vld [vmem:[%s17 + $0xa68] sm:$0xff]
        %v3591 = vld [vmem:[%s17 + $0xa70] sm:$0xff]
        %v3592 = vld [vmem:[%s17 + $0xa78] sm:$0xff]
        %v3593 = vld [vmem:[%s17 + $0xa80] sm:$0xff]
        %v3594 = vld [vmem:[%s17 + $0xa88] sm:$0xff]
        %v3595 = vld [vmem:[%s17 + $0xa90] sm:$0xff]
        %v3596 = vld [vmem:[%s17 + $0xa98] sm:$0xff]
        %v3597 = vld [vmem:[%s17 + $0xaa0] sm:$0xff]
        %v3598 = vld [vmem:[%s17 + $0xaa8] sm:$0xff]
        %v3599 = vld [vmem:[%s17 + $0xab0] sm:$0xff]
        %v3600 = vld [vmem:[%s17 + $0xab8] sm:$0xff]
        %v3601 = vld [vmem:[%s17 + $0xac0] sm:$0xff]
        %v3602 = vld [vmem:[%s17 + $0xac8] sm:$0xff]
        %v3603 = vld [vmem:[%s17 + $0xad0] sm:$0xff]
        %v3604 = vld [vmem:[%s17 + $0xad8] sm:$0xff]
        %v3605 = vld [vmem:[%s17 + $0xae0] sm:$0xff]
        %v3606 = vld [vmem:[%s17 + $0xae8] sm:$0xff]
        %v3607 = vld [vmem:[%s17 + $0xaf0] sm:$0xff]
        %v3608 = vld [vmem:[%s17 + $0xaf8] sm:$0xff]
        %v3609 = vld [vmem:[%s17 + $0xb00] sm:$0xff]
        %v3610 = vld [vmem:[%s17 + $0xb08] sm:$0xff]
        %v3611 = vld [vmem:[%s17 + $0xb10] sm:$0xff]
        %v3612 = vld [vmem:[%s17 + $0xb18] sm:$0xff]
        %v3613 = vld [vmem:[%s17 + $0xb20] sm:$0xff]
        %v3614 = vld [vmem:[%s17 + $0xb28] sm:$0xff]
        %v3615 = vld [vmem:[%s17 + $0xb30] sm:$0xff]
        %v3616 = vld [vmem:[%s17 + $0xb38] sm:$0xff]
        %v3617 = vld [vmem:[%s17 + $0xb40] sm:$0xff]
        %v3618 = vld [vmem:[%s17 + $0xb48] sm:$0xff]
        %v3619 = vld [vmem:[%s17 + $0xb50] sm:$0xff]
        %v3620 = vld [vmem:[%s17 + $0xb58] sm:$0xff]
        %v3621 = vld [vmem:[%s17 + $0xb60] sm:$0xff]
        %v3622 = vld [vmem:[%s17 + $0xb68] sm:$0xff]
        %v3623 = vld [vmem:[%s17 + $0xb70] sm:$0xff]
        %v3624 = vld [vmem:[%s17 + $0xb78] sm:$0xff]
        %v3625 = vld [vmem:[%s17 + $0xb80] sm:$0xff]
        %v3626 = vld [vmem:[%s17 + $0xb88] sm:$0xff]
        %v3627 = vld [vmem:[%s17 + $0xb90] sm:$0xff]
        %v3628 = vld [vmem:[%s17 + $0xb98] sm:$0xff]
        %v3629 = vld [vmem:[%s17 + $0xba0] sm:$0xff]
        %v3630 = vld [vmem:[%s17 + $0xba8] sm:$0xff]
        %v3631 = vld [vmem:[%s17 + $0xbb0] sm:$0xff]
        %v3632 = vld [vmem:[%s17 + $0xbb8] sm:$0xff]
        %v3633 = vld [vmem:[%s17 + $0xbc0] sm:$0xff]
        %v3634 = vld [vmem:[%s17 + $0xbc8] sm:$0xff]
        %v3635 = vld [vmem:[%s17 + $0xbd0] sm:$0xff]
        %v3636 = vld [vmem:[%s17 + $0xbd8] sm:$0xff]
        %v3637 = vld [vmem:[%s17 + $0xbe0] sm:$0xff]
        %v3638 = vld [vmem:[%s17 + $0xbe8] sm:$0xff]
        %v3639 = vld [vmem:[%s17 + $0xbf0] sm:$0xff]
        %v3640 = vld [vmem:[%s17 + $0xbf8] sm:$0xff]
        %v3641 = vld [vmem:[%s17 + $0xc00] sm:$0xff]
        %v3642 = vld [vmem:[%s17 + $0xc08] sm:$0xff]
        %v3643 = vld [vmem:[%s17 + $0xc10] sm:$0xff]
        %v3644 = vld [vmem:[%s17 + $0xc18] sm:$0xff]
        %v3645 = vld [vmem:[%s17 + $0xc20] sm:$0xff]
        %v3646 = vld [vmem:[%s17 + $0xc28] sm:$0xff]
        %v3647 = vld [vmem:[%s17 + $0xc30] sm:$0xff]
        %v3648 = vld [vmem:[%s17 + $0xc38] sm:$0xff]
        %v3649 = vld [vmem:[%s17 + $0xc40] sm:$0xff]
        %v3650 = vld [vmem:[%s17 + $0xc48] sm:$0xff]
        %v3651 = vld [vmem:[%s17 + $0xc50] sm:$0xff]
        %v3652 = vld [vmem:[%s17 + $0xc58] sm:$0xff]
        %v3653 = vld [vmem:[%s17 + $0xc60] sm:$0xff]
        %v3654 = vld [vmem:[%s17 + $0xc68] sm:$0xff]
        %v3655 = vld [vmem:[%s17 + $0xc70] sm:$0xff]
        %v3656 = vld [vmem:[%s17 + $0xc78] sm:$0xff]
        %v3657 = vld [vmem:[%s17 + $0xc80] sm:$0xff]
        %v3658 = vld [vmem:[%s17 + $0xc88] sm:$0xff]
        %v3659 = vld [vmem:[%s17 + $0xc90] sm:$0xff]
        %v3660 = vld [vmem:[%s17 + $0xc98] sm:$0xff]
        %v3661 = vld [vmem:[%s17 + $0xca0] sm:$0xff]
        %v3662 = vld [vmem:[%s17 + $0xca8] sm:$0xff]
        %v3663 = vld [vmem:[%s17 + $0xcb0] sm:$0xff]
        %v3664 = vld [vmem:[%s17 + $0xcb8] sm:$0xff]
        %v3665 = vld [vmem:[%s17 + $0xcc0] sm:$0xff]
        %v3666 = vld [vmem:[%s17 + $0xcc8] sm:$0xff]
        %v3667 = vld [vmem:[%s17 + $0xcd0] sm:$0xff]
        %v3668 = vld [vmem:[%s17 + $0xcd8] sm:$0xff]
        %v3669 = vld [vmem:[%s17 + $0xce0] sm:$0xff]
        %v3670 = vld [vmem:[%s17 + $0xce8] sm:$0xff]
        %v3671 = vld [vmem:[%s17 + $0xcf0] sm:$0xff]
        %v3672 = vld [vmem:[%s17 + $0xcf8] sm:$0xff]
        %v3673 = vld [vmem:[%s17 + $0xd00] sm:$0xff]
        %v3674 = vld [vmem:[%s17 + $0xd08] sm:$0xff]
        %v3675 = vld [vmem:[%s17 + $0xd10] sm:$0xff]
        %v3676 = vld [vmem:[%s17 + $0xd18] sm:$0xff]
        %v3677 = vld [vmem:[%s17 + $0xd20] sm:$0xff]
        %v3678 = vld [vmem:[%s17 + $0xd28] sm:$0xff]
        %v3679 = vld [vmem:[%s17 + $0xd30] sm:$0xff]
        %v3680 = vld [vmem:[%s17 + $0xd38] sm:$0xff]
        %v3681 = vld [vmem:[%s17 + $0xd40] sm:$0xff]
        %v3682 = vld [vmem:[%s17 + $0xd48] sm:$0xff]
        %v3683 = vld [vmem:[%s17 + $0xd50] sm:$0xff]
        %v3684 = vld [vmem:[%s17 + $0xd58] sm:$0xff]
        %v3685 = vld [vmem:[%s17 + $0xd60] sm:$0xff]
        %v3686 = vld [vmem:[%s17 + $0xd68] sm:$0xff]
        %v3687 = vld [vmem:[%s17 + $0xd70] sm:$0xff]
        %v3688 = vld [vmem:[%s17 + $0xd78] sm:$0xff]
        %v3689 = vld [vmem:[%s17 + $0xd80] sm:$0xff]
        %v3690 = vld [vmem:[%s17 + $0xd88] sm:$0xff]
        %v3691 = vld [vmem:[%s17 + $0xd90] sm:$0xff]
        %v3692 = vld [vmem:[%s17 + $0xd98] sm:$0xff]
        %v3693 = vld [vmem:[%s17 + $0xda0] sm:$0xff]
        %v3694 = vld [vmem:[%s17 + $0xda8] sm:$0xff]
        %v3695 = vld [vmem:[%s17 + $0xdb0] sm:$0xff]
        %v3696 = vld [vmem:[%s17 + $0xdb8] sm:$0xff]
        %v3697 = vld [vmem:[%s17 + $0xdc0] sm:$0xff]
        %v3698 = vld [vmem:[%s17 + $0xdc8] sm:$0xff]
        %v3699 = vld [vmem:[%s17 + $0xdd0] sm:$0xff]
        %v3700 = vld [vmem:[%s17 + $0xdd8] sm:$0xff]
        %v3701 = vld [vmem:[%s17 + $0xde0] sm:$0xff]
        %v3702 = vld [vmem:[%s17 + $0xde8] sm:$0xff]
        %v3703 = vld [vmem:[%s17 + $0xdf0] sm:$0xff]
        %v3704 = vld [vmem:[%s17 + $0xdf8] sm:$0xff]
        %v3705 = vld [vmem:[%s17 + $0xe00] sm:$0xff]
        %v3706 = vld [vmem:[%s17 + $0xe08] sm:$0xff]
        %v3707 = vld [vmem:[%s17 + $0xe10] sm:$0xff]
        %v3708 = vld [vmem:[%s17 + $0xe18] sm:$0xff]
        %v3709 = vld [vmem:[%s17 + $0xe20] sm:$0xff]
        %v3710 = vld [vmem:[%s17 + $0xe28] sm:$0xff]
        %v3711 = vld [vmem:[%s17 + $0xe30] sm:$0xff]
        %v3712 = vld [vmem:[%s17 + $0xe38] sm:$0xff]
        %v3713 = vld [vmem:[%s17 + $0xe40] sm:$0xff]
        %v3714 = vld [vmem:[%s17 + $0xe48] sm:$0xff]
        %v3715 = vld [vmem:[%s17 + $0xe50] sm:$0xff]
        %v3716 = vld [vmem:[%s17 + $0xe58] sm:$0xff]
        %v3717 = vld [vmem:[%s17 + $0xe60] sm:$0xff]
        %v3718 = vld [vmem:[%s17 + $0xe68] sm:$0xff]
        %v3719 = vld [vmem:[%s17 + $0xe70] sm:$0xff]
        %v3720 = vld [vmem:[%s17 + $0xe78] sm:$0xff]
        %v3721 = vld [vmem:[%s17 + $0xe80] sm:$0xff]
        %v3722 = vld [vmem:[%s17 + $0xe88] sm:$0xff]
        %v3723 = vld [vmem:[%s17 + $0xe90] sm:$0xff]
        %v3724 = vld [vmem:[%s17 + $0xe98] sm:$0xff]
        %v3725 = vld [vmem:[%s17 + $0xea0] sm:$0xff]
        %v3726 = vld [vmem:[%s17 + $0xea8] sm:$0xff]
        %v3727 = vld [vmem:[%s17 + $0xeb0] sm:$0xff]
        %v3728 = vld [vmem:[%s17 + $0xeb8] sm:$0xff]
        %v3729 = vld [vmem:[%s17 + $0xec0] sm:$0xff]
        %v3730 = vld [vmem:[%s17 + $0xec8] sm:$0xff]
        %v3731 = vld [vmem:[%s17 + $0xed0] sm:$0xff]
        %v3732 = vld [vmem:[%s17 + $0xed8] sm:$0xff]
        %v3733 = vld [vmem:[%s17 + $0xee0] sm:$0xff]
        %v3734 = vld [vmem:[%s17 + $0xee8] sm:$0xff]
        %v3735 = vld [vmem:[%s17 + $0xef0] sm:$0xff]
        %v3736 = vld [vmem:[%s17 + $0xef8] sm:$0xff]
        %v3737 = vld [vmem:[%s17 + $0xf00] sm:$0xff]
        %v3738 = vld [vmem:[%s17 + $0xf08] sm:$0xff]
        %v3739 = vld [vmem:[%s17 + $0xf10] sm:$0xff]
        %v3740 = vld [vmem:[%s17 + $0xf18] sm:$0xff]
        %v3741 = vld [vmem:[%s17 + $0xf20] sm:$0xff]
        %v3742 = vld [vmem:[%s17 + $0xf28] sm:$0xff]
        %v3743 = vld [vmem:[%s17 + $0xf30] sm:$0xff]
        %v3744 = vld [vmem:[%s17 + $0xf38] sm:$0xff]
        %v3745 = vld [vmem:[%s17 + $0xf40] sm:$0xff]
        %v3746 = vld [vmem:[%s17 + $0xf48] sm:$0xff]
        %v3747 = vld [vmem:[%s17 + $0xf50] sm:$0xff]
        %v3748 = vld [vmem:[%s17 + $0xf58] sm:$0xff]
        %v3749 = vld [vmem:[%s17 + $0xf60] sm:$0xff]
        %v3750 = vld [vmem:[%s17 + $0xf68] sm:$0xff]
        %v3751 = vld [vmem:[%s17 + $0xf70] sm:$0xff]
        %v3752 = vld [vmem:[%s17 + $0xf78] sm:$0xff]
        %v3753 = vld [vmem:[%s17 + $0xf80] sm:$0xff]
        %v3754 = vld [vmem:[%s17 + $0xf88] sm:$0xff]
        %v3755 = vld [vmem:[%s17 + $0xf90] sm:$0xff]
        %v3756 = vld [vmem:[%s17 + $0xf98] sm:$0xff]
        %v3757 = vld [vmem:[%s17 + $0xfa0] sm:$0xff]
        %v3758 = vld [vmem:[%s17 + $0xfa8] sm:$0xff]
        %v3759 = vld [vmem:[%s17 + $0xfb0] sm:$0xff]
        %v3760 = vld [vmem:[%s17 + $0xfb8] sm:$0xff]
        %v3761 = vld [vmem:[%s17 + $0xfc0] sm:$0xff]
        %v3762 = vld [vmem:[%s17 + $0xfc8] sm:$0xff]
        %v3763 = vld [vmem:[%s17 + $0xfd0] sm:$0xff]
        %v3764 = vld [vmem:[%s17 + $0xfd8] sm:$0xff]
        %v3765 = vld [vmem:[%s17 + $0xfe0] sm:$0xff]
        %v3766 = vld [vmem:[%s17 + $0xfe8] sm:$0xff]
        %v3767 = vld [vmem:[%s17 + $0xff0] sm:$0xff]
        %v3768 = vld [vmem:[%s17 + $0xff8] sm:$0xff]
        %v3769 = vld [vmem:[%s18] sm:$0xff]
        %v4282 = vunpack.c.l.b16 %v3257
        %v4283 = vunpack.c.h.b16 %v3257
        %v4284 = vunpack.c.l.b16 %v3258
        %v4285 = vunpack.c.h.b16 %v3258
        %v4286 = vunpack.c.l.b16 %v3259
        %v4287 = vunpack.c.h.b16 %v3259
        %v4288 = vunpack.c.l.b16 %v3260
        %v4289 = vunpack.c.h.b16 %v3260
        %v4290 = vunpack.c.l.b16 %v3261
        %v4291 = vunpack.c.h.b16 %v3261
        %v4292 = vunpack.c.l.b16 %v3262
        %v4293 = vunpack.c.h.b16 %v3262
        %v4294 = vunpack.c.l.b16 %v3263
        %v4295 = vunpack.c.h.b16 %v3263
        %v4296 = vunpack.c.l.b16 %v3264
        %v4297 = vunpack.c.h.b16 %v3264
        %v4298 = vunpack.c.l.b16 %v3265
        %v4299 = vunpack.c.h.b16 %v3265
        %v4300 = vunpack.c.l.b16 %v3266
        %v4301 = vunpack.c.h.b16 %v3266
        %v4302 = vunpack.c.l.b16 %v3267
        %v4303 = vunpack.c.h.b16 %v3267
        %v4304 = vunpack.c.l.b16 %v3268
        %v4305 = vunpack.c.h.b16 %v3268
        %v4306 = vunpack.c.l.b16 %v3269
        %v4307 = vunpack.c.h.b16 %v3269
        %v4308 = vunpack.c.l.b16 %v3270
        %v4309 = vunpack.c.h.b16 %v3270
        %v4310 = vunpack.c.l.b16 %v3271
        %v4311 = vunpack.c.h.b16 %v3271
        %v4312 = vunpack.c.l.b16 %v3272
        %v4313 = vunpack.c.h.b16 %v3272
        %v4314 = vunpack.c.l.b16 %v3273
        %v4315 = vunpack.c.h.b16 %v3273
        %v4316 = vunpack.c.l.b16 %v3274
        %v4317 = vunpack.c.h.b16 %v3274
        %v4318 = vunpack.c.l.b16 %v3275
        %v4319 = vunpack.c.h.b16 %v3275
        %v4320 = vunpack.c.l.b16 %v3276
        %v4321 = vunpack.c.h.b16 %v3276
        %v4322 = vunpack.c.l.b16 %v3277
        %v4323 = vunpack.c.h.b16 %v3277
        %v4324 = vunpack.c.l.b16 %v3278
        %v4325 = vunpack.c.h.b16 %v3278
        %v4326 = vunpack.c.l.b16 %v3279
        %v4327 = vunpack.c.h.b16 %v3279
        %v4328 = vunpack.c.l.b16 %v3280
        %v4329 = vunpack.c.h.b16 %v3280
        %v4330 = vunpack.c.l.b16 %v3281
        %v4331 = vunpack.c.h.b16 %v3281
        %v4332 = vunpack.c.l.b16 %v3282
        %v4333 = vunpack.c.h.b16 %v3282
        %v4334 = vunpack.c.l.b16 %v3283
        %v4335 = vunpack.c.h.b16 %v3283
        %v4336 = vunpack.c.l.b16 %v3284
        %v4337 = vunpack.c.h.b16 %v3284
        %v4338 = vunpack.c.l.b16 %v3285
        %v4339 = vunpack.c.h.b16 %v3285
        %v4340 = vunpack.c.l.b16 %v3286
        %v4341 = vunpack.c.h.b16 %v3286
        %v4342 = vunpack.c.l.b16 %v3287
        %v4343 = vunpack.c.h.b16 %v3287
        %v4344 = vunpack.c.l.b16 %v3288
        %v4345 = vunpack.c.h.b16 %v3288
        %v4346 = vunpack.c.l.b16 %v3289
        %v4347 = vunpack.c.h.b16 %v3289
        %v4348 = vunpack.c.l.b16 %v3290
        %v4349 = vunpack.c.h.b16 %v3290
        %v4350 = vunpack.c.l.b16 %v3291
        %v4351 = vunpack.c.h.b16 %v3291
        %v4352 = vunpack.c.l.b16 %v3292
        %v4353 = vunpack.c.h.b16 %v3292
        %v4354 = vunpack.c.l.b16 %v3293
        %v4355 = vunpack.c.h.b16 %v3293
        %v4356 = vunpack.c.l.b16 %v3294
        %v4357 = vunpack.c.h.b16 %v3294
        %v4358 = vunpack.c.l.b16 %v3295
        %v4359 = vunpack.c.h.b16 %v3295
        %v4360 = vunpack.c.l.b16 %v3296
        %v4361 = vunpack.c.h.b16 %v3296
        %v4362 = vunpack.c.l.b16 %v3297
        %v4363 = vunpack.c.h.b16 %v3297
        %v4364 = vunpack.c.l.b16 %v3298
        %v4365 = vunpack.c.h.b16 %v3298
        %v4366 = vunpack.c.l.b16 %v3299
        %v4367 = vunpack.c.h.b16 %v3299
        %v4368 = vunpack.c.l.b16 %v3300
        %v4369 = vunpack.c.h.b16 %v3300
        %v4370 = vunpack.c.l.b16 %v3301
        %v4371 = vunpack.c.h.b16 %v3301
        %v4372 = vunpack.c.l.b16 %v3302
        %v4373 = vunpack.c.h.b16 %v3302
        %v4374 = vunpack.c.l.b16 %v3303
        %v4375 = vunpack.c.h.b16 %v3303
        %v4376 = vunpack.c.l.b16 %v3304
        %v4377 = vunpack.c.h.b16 %v3304
        %v4378 = vunpack.c.l.b16 %v3305
        %v4379 = vunpack.c.h.b16 %v3305
        %v4380 = vunpack.c.l.b16 %v3306
        %v4381 = vunpack.c.h.b16 %v3306
        %v4382 = vunpack.c.l.b16 %v3307
        %v4383 = vunpack.c.h.b16 %v3307
        %v4384 = vunpack.c.l.b16 %v3308
        %v4385 = vunpack.c.h.b16 %v3308
        %v4386 = vunpack.c.l.b16 %v3309
        %v4387 = vunpack.c.h.b16 %v3309
        %v4388 = vunpack.c.l.b16 %v3310
        %v4389 = vunpack.c.h.b16 %v3310
        %v4390 = vunpack.c.l.b16 %v3311
        %v4391 = vunpack.c.h.b16 %v3311
        %v4392 = vunpack.c.l.b16 %v3312
        %v4393 = vunpack.c.h.b16 %v3312
        %v4394 = vunpack.c.l.b16 %v3313
        %v4395 = vunpack.c.h.b16 %v3313
        %v4396 = vunpack.c.l.b16 %v3314
        %v4397 = vunpack.c.h.b16 %v3314
        %v4398 = vunpack.c.l.b16 %v3315
        %v4399 = vunpack.c.h.b16 %v3315
        %v4400 = vunpack.c.l.b16 %v3316
        %v4401 = vunpack.c.h.b16 %v3316
        %v4402 = vunpack.c.l.b16 %v3317
        %v4403 = vunpack.c.h.b16 %v3317
        %v4404 = vunpack.c.l.b16 %v3318
        %v4405 = vunpack.c.h.b16 %v3318
        %v4406 = vunpack.c.l.b16 %v3319
        %v4407 = vunpack.c.h.b16 %v3319
        %v4408 = vunpack.c.l.b16 %v3320
        %v4409 = vunpack.c.h.b16 %v3320
        %v4410 = vunpack.c.l.b16 %v3321
        %v4411 = vunpack.c.h.b16 %v3321
        %v4412 = vunpack.c.l.b16 %v3322
        %v4413 = vunpack.c.h.b16 %v3322
        %v4414 = vunpack.c.l.b16 %v3323
        %v4415 = vunpack.c.h.b16 %v3323
        %v4416 = vunpack.c.l.b16 %v3324
        %v4417 = vunpack.c.h.b16 %v3324
        %v4418 = vunpack.c.l.b16 %v3325
        %v4419 = vunpack.c.h.b16 %v3325
        %v4420 = vunpack.c.l.b16 %v3326
        %v4421 = vunpack.c.h.b16 %v3326
        %v4422 = vunpack.c.l.b16 %v3327
        %v4423 = vunpack.c.h.b16 %v3327
        %v4424 = vunpack.c.l.b16 %v3328
        %v4425 = vunpack.c.h.b16 %v3328
        %v4426 = vunpack.c.l.b16 %v3329
        %v4427 = vunpack.c.h.b16 %v3329
        %v4428 = vunpack.c.l.b16 %v3330
        %v4429 = vunpack.c.h.b16 %v3330
        %v4430 = vunpack.c.l.b16 %v3331
        %v4431 = vunpack.c.h.b16 %v3331
        %v4432 = vunpack.c.l.b16 %v3332
        %v4433 = vunpack.c.h.b16 %v3332
        %v4434 = vunpack.c.l.b16 %v3333
        %v4435 = vunpack.c.h.b16 %v3333
        %v4436 = vunpack.c.l.b16 %v3334
        %v4437 = vunpack.c.h.b16 %v3334
        %v4438 = vunpack.c.l.b16 %v3335
        %v4439 = vunpack.c.h.b16 %v3335
        %v4440 = vunpack.c.l.b16 %v3336
        %v4441 = vunpack.c.h.b16 %v3336
        %v4442 = vunpack.c.l.b16 %v3337
        %v4443 = vunpack.c.h.b16 %v3337
        %v4444 = vunpack.c.l.b16 %v3338
        %v4445 = vunpack.c.h.b16 %v3338
        %v4446 = vunpack.c.l.b16 %v3339
        %v4447 = vunpack.c.h.b16 %v3339
        %v4448 = vunpack.c.l.b16 %v3340
        %v4449 = vunpack.c.h.b16 %v3340
        %v4450 = vunpack.c.l.b16 %v3341
        %v4451 = vunpack.c.h.b16 %v3341
        %v4452 = vunpack.c.l.b16 %v3342
        %v4453 = vunpack.c.h.b16 %v3342
        %v4454 = vunpack.c.l.b16 %v3343
        %v4455 = vunpack.c.h.b16 %v3343
        %v4456 = vunpack.c.l.b16 %v3344
        %v4457 = vunpack.c.h.b16 %v3344
        %v4458 = vunpack.c.l.b16 %v3345
        %v4459 = vunpack.c.h.b16 %v3345
        %v4460 = vunpack.c.l.b16 %v3346
        %v4461 = vunpack.c.h.b16 %v3346
        %v4462 = vunpack.c.l.b16 %v3347
        %v4463 = vunpack.c.h.b16 %v3347
        %v4464 = vunpack.c.l.b16 %v3348
        %v4465 = vunpack.c.h.b16 %v3348
        %v4466 = vunpack.c.l.b16 %v3349
        %v4467 = vunpack.c.h.b16 %v3349
        %v4468 = vunpack.c.l.b16 %v3350
        %v4469 = vunpack.c.h.b16 %v3350
        %v4470 = vunpack.c.l.b16 %v3351
        %v4471 = vunpack.c.h.b16 %v3351
        %v4472 = vunpack.c.l.b16 %v3352
        %v4473 = vunpack.c.h.b16 %v3352
        %v4474 = vunpack.c.l.b16 %v3353
        %v4475 = vunpack.c.h.b16 %v3353
        %v4476 = vunpack.c.l.b16 %v3354
        %v4477 = vunpack.c.h.b16 %v3354
        %v4478 = vunpack.c.l.b16 %v3355
        %v4479 = vunpack.c.h.b16 %v3355
        %v4480 = vunpack.c.l.b16 %v3356
        %v4481 = vunpack.c.h.b16 %v3356
        %v4482 = vunpack.c.l.b16 %v3357
        %v4483 = vunpack.c.h.b16 %v3357
        %v4484 = vunpack.c.l.b16 %v3358
        %v4485 = vunpack.c.h.b16 %v3358
        %v4486 = vunpack.c.l.b16 %v3359
        %v4487 = vunpack.c.h.b16 %v3359
        %v4488 = vunpack.c.l.b16 %v3360
        %v4489 = vunpack.c.h.b16 %v3360
        %v4490 = vunpack.c.l.b16 %v3361
        %v4491 = vunpack.c.h.b16 %v3361
        %v4492 = vunpack.c.l.b16 %v3362
        %v4493 = vunpack.c.h.b16 %v3362
        %v4494 = vunpack.c.l.b16 %v3363
        %v4495 = vunpack.c.h.b16 %v3363
        %v4496 = vunpack.c.l.b16 %v3364
        %v4497 = vunpack.c.h.b16 %v3364
        %v4498 = vunpack.c.l.b16 %v3365
        %v4499 = vunpack.c.h.b16 %v3365
        %v4500 = vunpack.c.l.b16 %v3366
        %v4501 = vunpack.c.h.b16 %v3366
        %v4502 = vunpack.c.l.b16 %v3367
        %v4503 = vunpack.c.h.b16 %v3367
        %v4504 = vunpack.c.l.b16 %v3368
        %v4505 = vunpack.c.h.b16 %v3368
        %v4506 = vunpack.c.l.b16 %v3369
        %v4507 = vunpack.c.h.b16 %v3369
        %v4508 = vunpack.c.l.b16 %v3370
        %v4509 = vunpack.c.h.b16 %v3370
        %v4510 = vunpack.c.l.b16 %v3371
        %v4511 = vunpack.c.h.b16 %v3371
        %v4512 = vunpack.c.l.b16 %v3372
        %v4513 = vunpack.c.h.b16 %v3372
        %v4514 = vunpack.c.l.b16 %v3373
        %v4515 = vunpack.c.h.b16 %v3373
        %v4516 = vunpack.c.l.b16 %v3374
        %v4517 = vunpack.c.h.b16 %v3374
        %v4518 = vunpack.c.l.b16 %v3375
        %v4519 = vunpack.c.h.b16 %v3375
        %v4520 = vunpack.c.l.b16 %v3376
        %v4521 = vunpack.c.h.b16 %v3376
        %v4522 = vunpack.c.l.b16 %v3377
        %v4523 = vunpack.c.h.b16 %v3377
        %v4524 = vunpack.c.l.b16 %v3378
        %v4525 = vunpack.c.h.b16 %v3378
        %v4526 = vunpack.c.l.b16 %v3379
        %v4527 = vunpack.c.h.b16 %v3379
        %v4528 = vunpack.c.l.b16 %v3380
        %v4529 = vunpack.c.h.b16 %v3380
        %v4530 = vunpack.c.l.b16 %v3381
        %v4531 = vunpack.c.h.b16 %v3381
        %v4532 = vunpack.c.l.b16 %v3382
        %v4533 = vunpack.c.h.b16 %v3382
        %v4534 = vunpack.c.l.b16 %v3383
        %v4535 = vunpack.c.h.b16 %v3383
        %v4536 = vunpack.c.l.b16 %v3384
        %v4537 = vunpack.c.h.b16 %v3384
        %v4538 = vunpack.c.l.b16 %v3385
        %v4539 = vunpack.c.h.b16 %v3385
        %v4540 = vunpack.c.l.b16 %v3386
        %v4541 = vunpack.c.h.b16 %v3386
        %v4542 = vunpack.c.l.b16 %v3387
        %v4543 = vunpack.c.h.b16 %v3387
        %v4544 = vunpack.c.l.b16 %v3388
        %v4545 = vunpack.c.h.b16 %v3388
        %v4546 = vunpack.c.l.b16 %v3389
        %v4547 = vunpack.c.h.b16 %v3389
        %v4548 = vunpack.c.l.b16 %v3390
        %v4549 = vunpack.c.h.b16 %v3390
        %v4550 = vunpack.c.l.b16 %v3391
        %v4551 = vunpack.c.h.b16 %v3391
        %v4552 = vunpack.c.l.b16 %v3392
        %v4553 = vunpack.c.h.b16 %v3392
        %v4554 = vunpack.c.l.b16 %v3393
        %v4555 = vunpack.c.h.b16 %v3393
        %v4556 = vunpack.c.l.b16 %v3394
        %v4557 = vunpack.c.h.b16 %v3394
        %v4558 = vunpack.c.l.b16 %v3395
        %v4559 = vunpack.c.h.b16 %v3395
        %v4560 = vunpack.c.l.b16 %v3396
        %v4561 = vunpack.c.h.b16 %v3396
        %v4562 = vunpack.c.l.b16 %v3397
        %v4563 = vunpack.c.h.b16 %v3397
        %v4564 = vunpack.c.l.b16 %v3398
        %v4565 = vunpack.c.h.b16 %v3398
        %v4566 = vunpack.c.l.b16 %v3399
        %v4567 = vunpack.c.h.b16 %v3399
        %v4568 = vunpack.c.l.b16 %v3400
        %v4569 = vunpack.c.h.b16 %v3400
        %v4570 = vunpack.c.l.b16 %v3401
        %v4571 = vunpack.c.h.b16 %v3401
        %v4572 = vunpack.c.l.b16 %v3402
        %v4573 = vunpack.c.h.b16 %v3402
        %v4574 = vunpack.c.l.b16 %v3403
        %v4575 = vunpack.c.h.b16 %v3403
        %v4576 = vunpack.c.l.b16 %v3404
        %v4577 = vunpack.c.h.b16 %v3404
        %v4578 = vunpack.c.l.b16 %v3405
        %v4579 = vunpack.c.h.b16 %v3405
        %v4580 = vunpack.c.l.b16 %v3406
        %v4581 = vunpack.c.h.b16 %v3406
        %v4582 = vunpack.c.l.b16 %v3407
        %v4583 = vunpack.c.h.b16 %v3407
        %v4584 = vunpack.c.l.b16 %v3408
        %v4585 = vunpack.c.h.b16 %v3408
        %v4586 = vunpack.c.l.b16 %v3409
        %v4587 = vunpack.c.h.b16 %v3409
        %v4588 = vunpack.c.l.b16 %v3410
        %v4589 = vunpack.c.h.b16 %v3410
        %v4590 = vunpack.c.l.b16 %v3411
        %v4591 = vunpack.c.h.b16 %v3411
        %v4592 = vunpack.c.l.b16 %v3412
        %v4593 = vunpack.c.h.b16 %v3412
        %v4594 = vunpack.c.l.b16 %v3413
        %v4595 = vunpack.c.h.b16 %v3413
        %v4596 = vunpack.c.l.b16 %v3414
        %v4597 = vunpack.c.h.b16 %v3414
        %v4598 = vunpack.c.l.b16 %v3415
        %v4599 = vunpack.c.h.b16 %v3415
        %v4600 = vunpack.c.l.b16 %v3416
        %v4601 = vunpack.c.h.b16 %v3416
        %v4602 = vunpack.c.l.b16 %v3417
        %v4603 = vunpack.c.h.b16 %v3417
        %v4604 = vunpack.c.l.b16 %v3418
        %v4605 = vunpack.c.h.b16 %v3418
        %v4606 = vunpack.c.l.b16 %v3419
        %v4607 = vunpack.c.h.b16 %v3419
        %v4608 = vunpack.c.l.b16 %v3420
        %v4609 = vunpack.c.h.b16 %v3420
        %v4610 = vunpack.c.l.b16 %v3421
        %v4611 = vunpack.c.h.b16 %v3421
        %v4612 = vunpack.c.l.b16 %v3422
        %v4613 = vunpack.c.h.b16 %v3422
        %v4614 = vunpack.c.l.b16 %v3423
        %v4615 = vunpack.c.h.b16 %v3423
        %v4616 = vunpack.c.l.b16 %v3424
        %v4617 = vunpack.c.h.b16 %v3424
        %v4618 = vunpack.c.l.b16 %v3425
        %v4619 = vunpack.c.h.b16 %v3425
        %v4620 = vunpack.c.l.b16 %v3426
        %v4621 = vunpack.c.h.b16 %v3426
        %v4622 = vunpack.c.l.b16 %v3427
        %v4623 = vunpack.c.h.b16 %v3427
        %v4624 = vunpack.c.l.b16 %v3428
        %v4625 = vunpack.c.h.b16 %v3428
        %v4626 = vunpack.c.l.b16 %v3429
        %v4627 = vunpack.c.h.b16 %v3429
        %v4628 = vunpack.c.l.b16 %v3430
        %v4629 = vunpack.c.h.b16 %v3430
        %v4630 = vunpack.c.l.b16 %v3431
        %v4631 = vunpack.c.h.b16 %v3431
        %v4632 = vunpack.c.l.b16 %v3432
        %v4633 = vunpack.c.h.b16 %v3432
        %v4634 = vunpack.c.l.b16 %v3433
        %v4635 = vunpack.c.h.b16 %v3433
        %v4636 = vunpack.c.l.b16 %v3434
        %v4637 = vunpack.c.h.b16 %v3434
        %v4638 = vunpack.c.l.b16 %v3435
        %v4639 = vunpack.c.h.b16 %v3435
        %v4640 = vunpack.c.l.b16 %v3436
        %v4641 = vunpack.c.h.b16 %v3436
        %v4642 = vunpack.c.l.b16 %v3437
        %v4643 = vunpack.c.h.b16 %v3437
        %v4644 = vunpack.c.l.b16 %v3438
        %v4645 = vunpack.c.h.b16 %v3438
        %v4646 = vunpack.c.l.b16 %v3439
        %v4647 = vunpack.c.h.b16 %v3439
        %v4648 = vunpack.c.l.b16 %v3440
        %v4649 = vunpack.c.h.b16 %v3440
        %v4650 = vunpack.c.l.b16 %v3441
        %v4651 = vunpack.c.h.b16 %v3441
        %v4652 = vunpack.c.l.b16 %v3442
        %v4653 = vunpack.c.h.b16 %v3442
        %v4654 = vunpack.c.l.b16 %v3443
        %v4655 = vunpack.c.h.b16 %v3443
        %v4656 = vunpack.c.l.b16 %v3444
        %v4657 = vunpack.c.h.b16 %v3444
        %v4658 = vunpack.c.l.b16 %v3445
        %v4659 = vunpack.c.h.b16 %v3445
        %v4660 = vunpack.c.l.b16 %v3446
        %v4661 = vunpack.c.h.b16 %v3446
        %v4662 = vunpack.c.l.b16 %v3447
        %v4663 = vunpack.c.h.b16 %v3447
        %v4664 = vunpack.c.l.b16 %v3448
        %v4665 = vunpack.c.h.b16 %v3448
        %v4666 = vunpack.c.l.b16 %v3449
        %v4667 = vunpack.c.h.b16 %v3449
        %v4668 = vunpack.c.l.b16 %v3450
        %v4669 = vunpack.c.h.b16 %v3450
        %v4670 = vunpack.c.l.b16 %v3451
        %v4671 = vunpack.c.h.b16 %v3451
        %v4672 = vunpack.c.l.b16 %v3452
        %v4673 = vunpack.c.h.b16 %v3452
        %v4674 = vunpack.c.l.b16 %v3453
        %v4675 = vunpack.c.h.b16 %v3453
        %v4676 = vunpack.c.l.b16 %v3454
        %v4677 = vunpack.c.h.b16 %v3454
        %v4678 = vunpack.c.l.b16 %v3455
        %v4679 = vunpack.c.h.b16 %v3455
        %v4680 = vunpack.c.l.b16 %v3456
        %v4681 = vunpack.c.h.b16 %v3456
        %v4682 = vunpack.c.l.b16 %v3457
        %v4683 = vunpack.c.h.b16 %v3457
        %v4684 = vunpack.c.l.b16 %v3458
        %v4685 = vunpack.c.h.b16 %v3458
        %v4686 = vunpack.c.l.b16 %v3459
        %v4687 = vunpack.c.h.b16 %v3459
        %v4688 = vunpack.c.l.b16 %v3460
        %v4689 = vunpack.c.h.b16 %v3460
        %v4690 = vunpack.c.l.b16 %v3461
        %v4691 = vunpack.c.h.b16 %v3461
        %v4692 = vunpack.c.l.b16 %v3462
        %v4693 = vunpack.c.h.b16 %v3462
        %v4694 = vunpack.c.l.b16 %v3463
        %v4695 = vunpack.c.h.b16 %v3463
        %v4696 = vunpack.c.l.b16 %v3464
        %v4697 = vunpack.c.h.b16 %v3464
        %v4698 = vunpack.c.l.b16 %v3465
        %v4699 = vunpack.c.h.b16 %v3465
        %v4700 = vunpack.c.l.b16 %v3466
        %v4701 = vunpack.c.h.b16 %v3466
        %v4702 = vunpack.c.l.b16 %v3467
        %v4703 = vunpack.c.h.b16 %v3467
        %v4704 = vunpack.c.l.b16 %v3468
        %v4705 = vunpack.c.h.b16 %v3468
        %v4706 = vunpack.c.l.b16 %v3469
        %v4707 = vunpack.c.h.b16 %v3469
        %v4708 = vunpack.c.l.b16 %v3470
        %v4709 = vunpack.c.h.b16 %v3470
        %v4710 = vunpack.c.l.b16 %v3471
        %v4711 = vunpack.c.h.b16 %v3471
        %v4712 = vunpack.c.l.b16 %v3472
        %v4713 = vunpack.c.h.b16 %v3472
        %v4714 = vunpack.c.l.b16 %v3473
        %v4715 = vunpack.c.h.b16 %v3473
        %v4716 = vunpack.c.l.b16 %v3474
        %v4717 = vunpack.c.h.b16 %v3474
        %v4718 = vunpack.c.l.b16 %v3475
        %v4719 = vunpack.c.h.b16 %v3475
        %v4720 = vunpack.c.l.b16 %v3476
        %v4721 = vunpack.c.h.b16 %v3476
        %v4722 = vunpack.c.l.b16 %v3477
        %v4723 = vunpack.c.h.b16 %v3477
        %v4724 = vunpack.c.l.b16 %v3478
        %v4725 = vunpack.c.h.b16 %v3478
        %v4726 = vunpack.c.l.b16 %v3479
        %v4727 = vunpack.c.h.b16 %v3479
        %v4728 = vunpack.c.l.b16 %v3480
        %v4729 = vunpack.c.h.b16 %v3480
        %v4730 = vunpack.c.l.b16 %v3481
        %v4731 = vunpack.c.h.b16 %v3481
        %v4732 = vunpack.c.l.b16 %v3482
        %v4733 = vunpack.c.h.b16 %v3482
        %v4734 = vunpack.c.l.b16 %v3483
        %v4735 = vunpack.c.h.b16 %v3483
        %v4736 = vunpack.c.l.b16 %v3484
        %v4737 = vunpack.c.h.b16 %v3484
        %v4738 = vunpack.c.l.b16 %v3485
        %v4739 = vunpack.c.h.b16 %v3485
        %v4740 = vunpack.c.l.b16 %v3486
        %v4741 = vunpack.c.h.b16 %v3486
        %v4742 = vunpack.c.l.b16 %v3487
        %v4743 = vunpack.c.h.b16 %v3487
        %v4744 = vunpack.c.l.b16 %v3488
        %v4745 = vunpack.c.h.b16 %v3488
        %v4746 = vunpack.c.l.b16 %v3489
        %v4747 = vunpack.c.h.b16 %v3489
        %v4748 = vunpack.c.l.b16 %v3490
        %v4749 = vunpack.c.h.b16 %v3490
        %v4750 = vunpack.c.l.b16 %v3491
        %v4751 = vunpack.c.h.b16 %v3491
        %v4752 = vunpack.c.l.b16 %v3492
        %v4753 = vunpack.c.h.b16 %v3492
        %v4754 = vunpack.c.l.b16 %v3493
        %v4755 = vunpack.c.h.b16 %v3493
        %v4756 = vunpack.c.l.b16 %v3494
        %v4757 = vunpack.c.h.b16 %v3494
        %v4758 = vunpack.c.l.b16 %v3495
        %v4759 = vunpack.c.h.b16 %v3495
        %v4760 = vunpack.c.l.b16 %v3496
        %v4761 = vunpack.c.h.b16 %v3496
        %v4762 = vunpack.c.l.b16 %v3497
        %v4763 = vunpack.c.h.b16 %v3497
        %v4764 = vunpack.c.l.b16 %v3498
        %v4765 = vunpack.c.h.b16 %v3498
        %v4766 = vunpack.c.l.b16 %v3499
        %v4767 = vunpack.c.h.b16 %v3499
        %v4768 = vunpack.c.l.b16 %v3500
        %v4769 = vunpack.c.h.b16 %v3500
        %v4770 = vunpack.c.l.b16 %v3501
        %v4771 = vunpack.c.h.b16 %v3501
        %v4772 = vunpack.c.l.b16 %v3502
        %v4773 = vunpack.c.h.b16 %v3502
        %v4774 = vunpack.c.l.b16 %v3503
        %v4775 = vunpack.c.h.b16 %v3503
        %v4776 = vunpack.c.l.b16 %v3504
        %v4777 = vunpack.c.h.b16 %v3504
        %v4778 = vunpack.c.l.b16 %v3505
        %v4779 = vunpack.c.h.b16 %v3505
        %v4780 = vunpack.c.l.b16 %v3506
        %v4781 = vunpack.c.h.b16 %v3506
        %v4782 = vunpack.c.l.b16 %v3507
        %v4783 = vunpack.c.h.b16 %v3507
        %v4784 = vunpack.c.l.b16 %v3508
        %v4785 = vunpack.c.h.b16 %v3508
        %v4786 = vunpack.c.l.b16 %v3509
        %v4787 = vunpack.c.h.b16 %v3509
        %v4788 = vunpack.c.l.b16 %v3510
        %v4789 = vunpack.c.h.b16 %v3510
        %v4790 = vunpack.c.l.b16 %v3511
        %v4791 = vunpack.c.h.b16 %v3511
        %v4792 = vunpack.c.l.b16 %v3512
        %v4793 = vunpack.c.h.b16 %v3512
        %v4794 = vunpack.c.l.b16 %v3513
        %v4795 = vunpack.c.h.b16 %v3513
        %v4796 = vunpack.c.l.b16 %v3514
        %v4797 = vunpack.c.h.b16 %v3514
        %v4798 = vunpack.c.l.b16 %v3515
        %v4799 = vunpack.c.h.b16 %v3515
        %v4800 = vunpack.c.l.b16 %v3516
        %v4801 = vunpack.c.h.b16 %v3516
        %v4802 = vunpack.c.l.b16 %v3517
        %v4803 = vunpack.c.h.b16 %v3517
        %v4804 = vunpack.c.l.b16 %v3518
        %v4805 = vunpack.c.h.b16 %v3518
        %v4806 = vunpack.c.l.b16 %v3519
        %v4807 = vunpack.c.h.b16 %v3519
        %v4808 = vunpack.c.l.b16 %v3520
        %v4809 = vunpack.c.h.b16 %v3520
        %v4810 = vunpack.c.l.b16 %v3521
        %v4811 = vunpack.c.h.b16 %v3521
        %v4812 = vunpack.c.l.b16 %v3522
        %v4813 = vunpack.c.h.b16 %v3522
        %v4814 = vunpack.c.l.b16 %v3523
        %v4815 = vunpack.c.h.b16 %v3523
        %v4816 = vunpack.c.l.b16 %v3524
        %v4817 = vunpack.c.h.b16 %v3524
        %v4818 = vunpack.c.l.b16 %v3525
        %v4819 = vunpack.c.h.b16 %v3525
        %v4820 = vunpack.c.l.b16 %v3526
        %v4821 = vunpack.c.h.b16 %v3526
        %v4822 = vunpack.c.l.b16 %v3527
        %v4823 = vunpack.c.h.b16 %v3527
        %v4824 = vunpack.c.l.b16 %v3528
        %v4825 = vunpack.c.h.b16 %v3528
        %v4826 = vunpack.c.l.b16 %v3529
        %v4827 = vunpack.c.h.b16 %v3529
        %v4828 = vunpack.c.l.b16 %v3530
        %v4829 = vunpack.c.h.b16 %v3530
        %v4830 = vunpack.c.l.b16 %v3531
        %v4831 = vunpack.c.h.b16 %v3531
        %v4832 = vunpack.c.l.b16 %v3532
        %v4833 = vunpack.c.h.b16 %v3532
        %v4834 = vunpack.c.l.b16 %v3533
        %v4835 = vunpack.c.h.b16 %v3533
        %v4836 = vunpack.c.l.b16 %v3534
        %v4837 = vunpack.c.h.b16 %v3534
        %v4838 = vunpack.c.l.b16 %v3535
        %v4839 = vunpack.c.h.b16 %v3535
        %v4840 = vunpack.c.l.b16 %v3536
        %v4841 = vunpack.c.h.b16 %v3536
        %v4842 = vunpack.c.l.b16 %v3537
        %v4843 = vunpack.c.h.b16 %v3537
        %v4844 = vunpack.c.l.b16 %v3538
        %v4845 = vunpack.c.h.b16 %v3538
        %v4846 = vunpack.c.l.b16 %v3539
        %v4847 = vunpack.c.h.b16 %v3539
        %v4848 = vunpack.c.l.b16 %v3540
        %v4849 = vunpack.c.h.b16 %v3540
        %v4850 = vunpack.c.l.b16 %v3541
        %v4851 = vunpack.c.h.b16 %v3541
        %v4852 = vunpack.c.l.b16 %v3542
        %v4853 = vunpack.c.h.b16 %v3542
        %v4854 = vunpack.c.l.b16 %v3543
        %v4855 = vunpack.c.h.b16 %v3543
        %v4856 = vunpack.c.l.b16 %v3544
        %v4857 = vunpack.c.h.b16 %v3544
        %v4858 = vunpack.c.l.b16 %v3545
        %v4859 = vunpack.c.h.b16 %v3545
        %v4860 = vunpack.c.l.b16 %v3546
        %v4861 = vunpack.c.h.b16 %v3546
        %v4862 = vunpack.c.l.b16 %v3547
        %v4863 = vunpack.c.h.b16 %v3547
        %v4864 = vunpack.c.l.b16 %v3548
        %v4865 = vunpack.c.h.b16 %v3548
        %v4866 = vunpack.c.l.b16 %v3549
        %v4867 = vunpack.c.h.b16 %v3549
        %v4868 = vunpack.c.l.b16 %v3550
        %v4869 = vunpack.c.h.b16 %v3550
        %v4870 = vunpack.c.l.b16 %v3551
        %v4871 = vunpack.c.h.b16 %v3551
        %v4872 = vunpack.c.l.b16 %v3552
        %v4873 = vunpack.c.h.b16 %v3552
        %v4874 = vunpack.c.l.b16 %v3553
        %v4875 = vunpack.c.h.b16 %v3553
        %v4876 = vunpack.c.l.b16 %v3554
        %v4877 = vunpack.c.h.b16 %v3554
        %v4878 = vunpack.c.l.b16 %v3555
        %v4879 = vunpack.c.h.b16 %v3555
        %v4880 = vunpack.c.l.b16 %v3556
        %v4881 = vunpack.c.h.b16 %v3556
        %v4882 = vunpack.c.l.b16 %v3557
        %v4883 = vunpack.c.h.b16 %v3557
        %v4884 = vunpack.c.l.b16 %v3558
        %v4885 = vunpack.c.h.b16 %v3558
        %v4886 = vunpack.c.l.b16 %v3559
        %v4887 = vunpack.c.h.b16 %v3559
        %v4888 = vunpack.c.l.b16 %v3560
        %v4889 = vunpack.c.h.b16 %v3560
        %v4890 = vunpack.c.l.b16 %v3561
        %v4891 = vunpack.c.h.b16 %v3561
        %v4892 = vunpack.c.l.b16 %v3562
        %v4893 = vunpack.c.h.b16 %v3562
        %v4894 = vunpack.c.l.b16 %v3563
        %v4895 = vunpack.c.h.b16 %v3563
        %v4896 = vunpack.c.l.b16 %v3564
        %v4897 = vunpack.c.h.b16 %v3564
        %v4898 = vunpack.c.l.b16 %v3565
        %v4899 = vunpack.c.h.b16 %v3565
        %v4900 = vunpack.c.l.b16 %v3566
        %v4901 = vunpack.c.h.b16 %v3566
        %v4902 = vunpack.c.l.b16 %v3567
        %v4903 = vunpack.c.h.b16 %v3567
        %v4904 = vunpack.c.l.b16 %v3568
        %v4905 = vunpack.c.h.b16 %v3568
        %v4906 = vunpack.c.l.b16 %v3569
        %v4907 = vunpack.c.h.b16 %v3569
        %v4908 = vunpack.c.l.b16 %v3570
        %v4909 = vunpack.c.h.b16 %v3570
        %v4910 = vunpack.c.l.b16 %v3571
        %v4911 = vunpack.c.h.b16 %v3571
        %v4912 = vunpack.c.l.b16 %v3572
        %v4913 = vunpack.c.h.b16 %v3572
        %v4914 = vunpack.c.l.b16 %v3573
        %v4915 = vunpack.c.h.b16 %v3573
        %v4916 = vunpack.c.l.b16 %v3574
        %v4917 = vunpack.c.h.b16 %v3574
        %v4918 = vunpack.c.l.b16 %v3575
        %v4919 = vunpack.c.h.b16 %v3575
        %v4920 = vunpack.c.l.b16 %v3576
        %v4921 = vunpack.c.h.b16 %v3576
        %v4922 = vunpack.c.l.b16 %v3577
        %v4923 = vunpack.c.h.b16 %v3577
        %v4924 = vunpack.c.l.b16 %v3578
        %v4925 = vunpack.c.h.b16 %v3578
        %v4926 = vunpack.c.l.b16 %v3579
        %v4927 = vunpack.c.h.b16 %v3579
        %v4928 = vunpack.c.l.b16 %v3580
        %v4929 = vunpack.c.h.b16 %v3580
        %v4930 = vunpack.c.l.b16 %v3581
        %v4931 = vunpack.c.h.b16 %v3581
        %v4932 = vunpack.c.l.b16 %v3582
        %v4933 = vunpack.c.h.b16 %v3582
        %v4934 = vunpack.c.l.b16 %v3583
        %v4935 = vunpack.c.h.b16 %v3583
        %v4936 = vunpack.c.l.b16 %v3584
        %v4937 = vunpack.c.h.b16 %v3584
        %v4938 = vunpack.c.l.b16 %v3585
        %v4939 = vunpack.c.h.b16 %v3585
        %v4940 = vunpack.c.l.b16 %v3586
        %v4941 = vunpack.c.h.b16 %v3586
        %v4942 = vunpack.c.l.b16 %v3587
        %v4943 = vunpack.c.h.b16 %v3587
        %v4944 = vunpack.c.l.b16 %v3588
        %v4945 = vunpack.c.h.b16 %v3588
        %v4946 = vunpack.c.l.b16 %v3589
        %v4947 = vunpack.c.h.b16 %v3589
        %v4948 = vunpack.c.l.b16 %v3590
        %v4949 = vunpack.c.h.b16 %v3590
        %v4950 = vunpack.c.l.b16 %v3591
        %v4951 = vunpack.c.h.b16 %v3591
        %v4952 = vunpack.c.l.b16 %v3592
        %v4953 = vunpack.c.h.b16 %v3592
        %v4954 = vunpack.c.l.b16 %v3593
        %v4955 = vunpack.c.h.b16 %v3593
        %v4956 = vunpack.c.l.b16 %v3594
        %v4957 = vunpack.c.h.b16 %v3594
        %v4958 = vunpack.c.l.b16 %v3595
        %v4959 = vunpack.c.h.b16 %v3595
        %v4960 = vunpack.c.l.b16 %v3596
        %v4961 = vunpack.c.h.b16 %v3596
        %v4962 = vunpack.c.l.b16 %v3597
        %v4963 = vunpack.c.h.b16 %v3597
        %v4964 = vunpack.c.l.b16 %v3598
        %v4965 = vunpack.c.h.b16 %v3598
        %v4966 = vunpack.c.l.b16 %v3599
        %v4967 = vunpack.c.h.b16 %v3599
        %v4968 = vunpack.c.l.b16 %v3600
        %v4969 = vunpack.c.h.b16 %v3600
        %v4970 = vunpack.c.l.b16 %v3601
        %v4971 = vunpack.c.h.b16 %v3601
        %v4972 = vunpack.c.l.b16 %v3602
        %v4973 = vunpack.c.h.b16 %v3602
        %v4974 = vunpack.c.l.b16 %v3603
        %v4975 = vunpack.c.h.b16 %v3603
        %v4976 = vunpack.c.l.b16 %v3604
        %v4977 = vunpack.c.h.b16 %v3604
        %v4978 = vunpack.c.l.b16 %v3605
        %v4979 = vunpack.c.h.b16 %v3605
        %v4980 = vunpack.c.l.b16 %v3606
        %v4981 = vunpack.c.h.b16 %v3606
        %v4982 = vunpack.c.l.b16 %v3607
        %v4983 = vunpack.c.h.b16 %v3607
        %v4984 = vunpack.c.l.b16 %v3608
        %v4985 = vunpack.c.h.b16 %v3608
        %v4986 = vunpack.c.l.b16 %v3609
        %v4987 = vunpack.c.h.b16 %v3609
        %v4988 = vunpack.c.l.b16 %v3610
        %v4989 = vunpack.c.h.b16 %v3610
        %v4990 = vunpack.c.l.b16 %v3611
        %v4991 = vunpack.c.h.b16 %v3611
        %v4992 = vunpack.c.l.b16 %v3612
        %v4993 = vunpack.c.h.b16 %v3612
        %v4994 = vunpack.c.l.b16 %v3613
        %v4995 = vunpack.c.h.b16 %v3613
        %v4996 = vunpack.c.l.b16 %v3614
        %v4997 = vunpack.c.h.b16 %v3614
        %v4998 = vunpack.c.l.b16 %v3615
        %v4999 = vunpack.c.h.b16 %v3615
        %v5000 = vunpack.c.l.b16 %v3616
        %v5001 = vunpack.c.h.b16 %v3616
        %v5002 = vunpack.c.l.b16 %v3617
        %v5003 = vunpack.c.h.b16 %v3617
        %v5004 = vunpack.c.l.b16 %v3618
        %v5005 = vunpack.c.h.b16 %v3618
        %v5006 = vunpack.c.l.b16 %v3619
        %v5007 = vunpack.c.h.b16 %v3619
        %v5008 = vunpack.c.l.b16 %v3620
        %v5009 = vunpack.c.h.b16 %v3620
        %v5010 = vunpack.c.l.b16 %v3621
        %v5011 = vunpack.c.h.b16 %v3621
        %v5012 = vunpack.c.l.b16 %v3622
        %v5013 = vunpack.c.h.b16 %v3622
        %v5014 = vunpack.c.l.b16 %v3623
        %v5015 = vunpack.c.h.b16 %v3623
        %v5016 = vunpack.c.l.b16 %v3624
        %v5017 = vunpack.c.h.b16 %v3624
        %v5018 = vunpack.c.l.b16 %v3625
        %v5019 = vunpack.c.h.b16 %v3625
        %v5020 = vunpack.c.l.b16 %v3626
        %v5021 = vunpack.c.h.b16 %v3626
        %v5022 = vunpack.c.l.b16 %v3627
        %v5023 = vunpack.c.h.b16 %v3627
        %v5024 = vunpack.c.l.b16 %v3628
        %v5025 = vunpack.c.h.b16 %v3628
        %v5026 = vunpack.c.l.b16 %v3629
        %v5027 = vunpack.c.h.b16 %v3629
        %v5028 = vunpack.c.l.b16 %v3630
        %v5029 = vunpack.c.h.b16 %v3630
        %v5030 = vunpack.c.l.b16 %v3631
        %v5031 = vunpack.c.h.b16 %v3631
        %v5032 = vunpack.c.l.b16 %v3632
        %v5033 = vunpack.c.h.b16 %v3632
        %v5034 = vunpack.c.l.b16 %v3633
        %v5035 = vunpack.c.h.b16 %v3633
        %v5036 = vunpack.c.l.b16 %v3634
        %v5037 = vunpack.c.h.b16 %v3634
        %v5038 = vunpack.c.l.b16 %v3635
        %v5039 = vunpack.c.h.b16 %v3635
        %v5040 = vunpack.c.l.b16 %v3636
        %v5041 = vunpack.c.h.b16 %v3636
        %v5042 = vunpack.c.l.b16 %v3637
        %v5043 = vunpack.c.h.b16 %v3637
        %v5044 = vunpack.c.l.b16 %v3638
        %v5045 = vunpack.c.h.b16 %v3638
        %v5046 = vunpack.c.l.b16 %v3639
        %v5047 = vunpack.c.h.b16 %v3639
        %v5048 = vunpack.c.l.b16 %v3640
        %v5049 = vunpack.c.h.b16 %v3640
        %v5050 = vunpack.c.l.b16 %v3641
        %v5051 = vunpack.c.h.b16 %v3641
        %v5052 = vunpack.c.l.b16 %v3642
        %v5053 = vunpack.c.h.b16 %v3642
        %v5054 = vunpack.c.l.b16 %v3643
        %v5055 = vunpack.c.h.b16 %v3643
        %v5056 = vunpack.c.l.b16 %v3644
        %v5057 = vunpack.c.h.b16 %v3644
        %v5058 = vunpack.c.l.b16 %v3645
        %v5059 = vunpack.c.h.b16 %v3645
        %v5060 = vunpack.c.l.b16 %v3646
        %v5061 = vunpack.c.h.b16 %v3646
        %v5062 = vunpack.c.l.b16 %v3647
        %v5063 = vunpack.c.h.b16 %v3647
        %v5064 = vunpack.c.l.b16 %v3648
        %v5065 = vunpack.c.h.b16 %v3648
        %v5066 = vunpack.c.l.b16 %v3649
        %v5067 = vunpack.c.h.b16 %v3649
        %v5068 = vunpack.c.l.b16 %v3650
        %v5069 = vunpack.c.h.b16 %v3650
        %v5070 = vunpack.c.l.b16 %v3651
        %v5071 = vunpack.c.h.b16 %v3651
        %v5072 = vunpack.c.l.b16 %v3652
        %v5073 = vunpack.c.h.b16 %v3652
        %v5074 = vunpack.c.l.b16 %v3653
        %v5075 = vunpack.c.h.b16 %v3653
        %v5076 = vunpack.c.l.b16 %v3654
        %v5077 = vunpack.c.h.b16 %v3654
        %v5078 = vunpack.c.l.b16 %v3655
        %v5079 = vunpack.c.h.b16 %v3655
        %v5080 = vunpack.c.l.b16 %v3656
        %v5081 = vunpack.c.h.b16 %v3656
        %v5082 = vunpack.c.l.b16 %v3657
        %v5083 = vunpack.c.h.b16 %v3657
        %v5084 = vunpack.c.l.b16 %v3658
        %v5085 = vunpack.c.h.b16 %v3658
        %v5086 = vunpack.c.l.b16 %v3659
        %v5087 = vunpack.c.h.b16 %v3659
        %v5088 = vunpack.c.l.b16 %v3660
        %v5089 = vunpack.c.h.b16 %v3660
        %v5090 = vunpack.c.l.b16 %v3661
        %v5091 = vunpack.c.h.b16 %v3661
        %v5092 = vunpack.c.l.b16 %v3662
        %v5093 = vunpack.c.h.b16 %v3662
        %v5094 = vunpack.c.l.b16 %v3663
        %v5095 = vunpack.c.h.b16 %v3663
        %v5096 = vunpack.c.l.b16 %v3664
        %v5097 = vunpack.c.h.b16 %v3664
        %v5098 = vunpack.c.l.b16 %v3665
        %v5099 = vunpack.c.h.b16 %v3665
        %v5100 = vunpack.c.l.b16 %v3666
        %v5101 = vunpack.c.h.b16 %v3666
        %v5102 = vunpack.c.l.b16 %v3667
        %v5103 = vunpack.c.h.b16 %v3667
        %v5104 = vunpack.c.l.b16 %v3668
        %v5105 = vunpack.c.h.b16 %v3668
        %v5106 = vunpack.c.l.b16 %v3669
        %v5107 = vunpack.c.h.b16 %v3669
        %v5108 = vunpack.c.l.b16 %v3670
        %v5109 = vunpack.c.h.b16 %v3670
        %v5110 = vunpack.c.l.b16 %v3671
        %v5111 = vunpack.c.h.b16 %v3671
        %v5112 = vunpack.c.l.b16 %v3672
        %v5113 = vunpack.c.h.b16 %v3672
        %v5114 = vunpack.c.l.b16 %v3673
        %v5115 = vunpack.c.h.b16 %v3673
        %v5116 = vunpack.c.l.b16 %v3674
        %v5117 = vunpack.c.h.b16 %v3674
        %v5118 = vunpack.c.l.b16 %v3675
        %v5119 = vunpack.c.h.b16 %v3675
        %v5120 = vunpack.c.l.b16 %v3676
        %v5121 = vunpack.c.h.b16 %v3676
        %v5122 = vunpack.c.l.b16 %v3677
        %v5123 = vunpack.c.h.b16 %v3677
        %v5124 = vunpack.c.l.b16 %v3678
        %v5125 = vunpack.c.h.b16 %v3678
        %v5126 = vunpack.c.l.b16 %v3679
        %v5127 = vunpack.c.h.b16 %v3679
        %v5128 = vunpack.c.l.b16 %v3680
        %v5129 = vunpack.c.h.b16 %v3680
        %v5130 = vunpack.c.l.b16 %v3681
        %v5131 = vunpack.c.h.b16 %v3681
        %v5132 = vunpack.c.l.b16 %v3682
        %v5133 = vunpack.c.h.b16 %v3682
        %v5134 = vunpack.c.l.b16 %v3683
        %v5135 = vunpack.c.h.b16 %v3683
        %v5136 = vunpack.c.l.b16 %v3684
        %v5137 = vunpack.c.h.b16 %v3684
        %v5138 = vunpack.c.l.b16 %v3685
        %v5139 = vunpack.c.h.b16 %v3685
        %v5140 = vunpack.c.l.b16 %v3686
        %v5141 = vunpack.c.h.b16 %v3686
        %v5142 = vunpack.c.l.b16 %v3687
        %v5143 = vunpack.c.h.b16 %v3687
        %v5144 = vunpack.c.l.b16 %v3688
        %v5145 = vunpack.c.h.b16 %v3688
        %v5146 = vunpack.c.l.b16 %v3689
        %v5147 = vunpack.c.h.b16 %v3689
        %v5148 = vunpack.c.l.b16 %v3690
        %v5149 = vunpack.c.h.b16 %v3690
        %v5150 = vunpack.c.l.b16 %v3691
        %v5151 = vunpack.c.h.b16 %v3691
        %v5152 = vunpack.c.l.b16 %v3692
        %v5153 = vunpack.c.h.b16 %v3692
        %v5154 = vunpack.c.l.b16 %v3693
        %v5155 = vunpack.c.h.b16 %v3693
        %v5156 = vunpack.c.l.b16 %v3694
        %v5157 = vunpack.c.h.b16 %v3694
        %v5158 = vunpack.c.l.b16 %v3695
        %v5159 = vunpack.c.h.b16 %v3695
        %v5160 = vunpack.c.l.b16 %v3696
        %v5161 = vunpack.c.h.b16 %v3696
        %v5162 = vunpack.c.l.b16 %v3697
        %v5163 = vunpack.c.h.b16 %v3697
        %v5164 = vunpack.c.l.b16 %v3698
        %v5165 = vunpack.c.h.b16 %v3698
        %v5166 = vunpack.c.l.b16 %v3699
        %v5167 = vunpack.c.h.b16 %v3699
        %v5168 = vunpack.c.l.b16 %v3700
        %v5169 = vunpack.c.h.b16 %v3700
        %v5170 = vunpack.c.l.b16 %v3701
        %v5171 = vunpack.c.h.b16 %v3701
        %v5172 = vunpack.c.l.b16 %v3702
        %v5173 = vunpack.c.h.b16 %v3702
        %v5174 = vunpack.c.l.b16 %v3703
        %v5175 = vunpack.c.h.b16 %v3703
        %v5176 = vunpack.c.l.b16 %v3704
        %v5177 = vunpack.c.h.b16 %v3704
        %v5178 = vunpack.c.l.b16 %v3705
        %v5179 = vunpack.c.h.b16 %v3705
        %v5180 = vunpack.c.l.b16 %v3706
        %v5181 = vunpack.c.h.b16 %v3706
        %v5182 = vunpack.c.l.b16 %v3707
        %v5183 = vunpack.c.h.b16 %v3707
        %v5184 = vunpack.c.l.b16 %v3708
        %v5185 = vunpack.c.h.b16 %v3708
        %v5186 = vunpack.c.l.b16 %v3709
        %v5187 = vunpack.c.h.b16 %v3709
        %v5188 = vunpack.c.l.b16 %v3710
        %v5189 = vunpack.c.h.b16 %v3710
        %v5190 = vunpack.c.l.b16 %v3711
        %v5191 = vunpack.c.h.b16 %v3711
        %v5192 = vunpack.c.l.b16 %v3712
        %v5193 = vunpack.c.h.b16 %v3712
        %v5194 = vunpack.c.l.b16 %v3713
        %v5195 = vunpack.c.h.b16 %v3713
        %v5196 = vunpack.c.l.b16 %v3714
        %v5197 = vunpack.c.h.b16 %v3714
        %v5198 = vunpack.c.l.b16 %v3715
        %v5199 = vunpack.c.h.b16 %v3715
        %v5200 = vunpack.c.l.b16 %v3716
        %v5201 = vunpack.c.h.b16 %v3716
        %v5202 = vunpack.c.l.b16 %v3717
        %v5203 = vunpack.c.h.b16 %v3717
        %v5204 = vunpack.c.l.b16 %v3718
        %v5205 = vunpack.c.h.b16 %v3718
        %v5206 = vunpack.c.l.b16 %v3719
        %v5207 = vunpack.c.h.b16 %v3719
        %v5208 = vunpack.c.l.b16 %v3720
        %v5209 = vunpack.c.h.b16 %v3720
        %v5210 = vunpack.c.l.b16 %v3721
        %v5211 = vunpack.c.h.b16 %v3721
        %v5212 = vunpack.c.l.b16 %v3722
        %v5213 = vunpack.c.h.b16 %v3722
        %v5214 = vunpack.c.l.b16 %v3723
        %v5215 = vunpack.c.h.b16 %v3723
        %v5216 = vunpack.c.l.b16 %v3724
        %v5217 = vunpack.c.h.b16 %v3724
        %v5218 = vunpack.c.l.b16 %v3725
        %v5219 = vunpack.c.h.b16 %v3725
        %v5220 = vunpack.c.l.b16 %v3726
        %v5221 = vunpack.c.h.b16 %v3726
        %v5222 = vunpack.c.l.b16 %v3727
        %v5223 = vunpack.c.h.b16 %v3727
        %v5224 = vunpack.c.l.b16 %v3728
        %v5225 = vunpack.c.h.b16 %v3728
        %v5226 = vunpack.c.l.b16 %v3729
        %v5227 = vunpack.c.h.b16 %v3729
        %v5228 = vunpack.c.l.b16 %v3730
        %v5229 = vunpack.c.h.b16 %v3730
        %v5230 = vunpack.c.l.b16 %v3731
        %v5231 = vunpack.c.h.b16 %v3731
        %v5232 = vunpack.c.l.b16 %v3732
        %v5233 = vunpack.c.h.b16 %v3732
        %v5234 = vunpack.c.l.b16 %v3733
        %v5235 = vunpack.c.h.b16 %v3733
        %v5236 = vunpack.c.l.b16 %v3734
        %v5237 = vunpack.c.h.b16 %v3734
        %v5238 = vunpack.c.l.b16 %v3735
        %v5239 = vunpack.c.h.b16 %v3735
        %v5240 = vunpack.c.l.b16 %v3736
        %v5241 = vunpack.c.h.b16 %v3736
        %v5242 = vunpack.c.l.b16 %v3737
        %v5243 = vunpack.c.h.b16 %v3737
        %v5244 = vunpack.c.l.b16 %v3738
        %v5245 = vunpack.c.h.b16 %v3738
        %v5246 = vunpack.c.l.b16 %v3739
        %v5247 = vunpack.c.h.b16 %v3739
        %v5248 = vunpack.c.l.b16 %v3740
        %v5249 = vunpack.c.h.b16 %v3740
        %v5250 = vunpack.c.l.b16 %v3741
        %v5251 = vunpack.c.h.b16 %v3741
        %v5252 = vunpack.c.l.b16 %v3742
        %v5253 = vunpack.c.h.b16 %v3742
        %v5254 = vunpack.c.l.b16 %v3743
        %v5255 = vunpack.c.h.b16 %v3743
        %v5256 = vunpack.c.l.b16 %v3744
        %v5257 = vunpack.c.h.b16 %v3744
        %v5258 = vunpack.c.l.b16 %v3745
        %v5259 = vunpack.c.h.b16 %v3745
        %v5260 = vunpack.c.l.b16 %v3746
        %v5261 = vunpack.c.h.b16 %v3746
        %v5262 = vunpack.c.l.b16 %v3747
        %v5263 = vunpack.c.h.b16 %v3747
        %v5264 = vunpack.c.l.b16 %v3748
        %v5265 = vunpack.c.h.b16 %v3748
        %v5266 = vunpack.c.l.b16 %v3749
        %v5267 = vunpack.c.h.b16 %v3749
        %v5268 = vunpack.c.l.b16 %v3750
        %v5269 = vunpack.c.h.b16 %v3750
        %v5270 = vunpack.c.l.b16 %v3751
        %v5271 = vunpack.c.h.b16 %v3751
        %v5272 = vunpack.c.l.b16 %v3752
        %v5273 = vunpack.c.h.b16 %v3752
        %v5274 = vunpack.c.l.b16 %v3753
        %v5275 = vunpack.c.h.b16 %v3753
        %v5276 = vunpack.c.l.b16 %v3754
        %v5277 = vunpack.c.h.b16 %v3754
        %v5278 = vunpack.c.l.b16 %v3755
        %v5279 = vunpack.c.h.b16 %v3755
        %v5280 = vunpack.c.l.b16 %v3756
        %v5281 = vunpack.c.h.b16 %v3756
        %v5282 = vunpack.c.l.b16 %v3757
        %v5283 = vunpack.c.h.b16 %v3757
        %v5284 = vunpack.c.l.b16 %v3758
        %v5285 = vunpack.c.h.b16 %v3758
        %v5286 = vunpack.c.l.b16 %v3759
        %v5287 = vunpack.c.h.b16 %v3759
        %v5288 = vunpack.c.l.b16 %v3760
        %v5289 = vunpack.c.h.b16 %v3760
        %v5290 = vunpack.c.l.b16 %v3761
        %v5291 = vunpack.c.h.b16 %v3761
        %v5292 = vunpack.c.l.b16 %v3762
        %v5293 = vunpack.c.h.b16 %v3762
        %v5294 = vunpack.c.l.b16 %v3763
        %v5295 = vunpack.c.h.b16 %v3763
        %v5296 = vunpack.c.l.b16 %v3764
        %v5297 = vunpack.c.h.b16 %v3764
        %v5298 = vunpack.c.l.b16 %v3765
        %v5299 = vunpack.c.h.b16 %v3765
        %v5300 = vunpack.c.l.b16 %v3766
        %v5301 = vunpack.c.h.b16 %v3766
        %v5302 = vunpack.c.l.b16 %v3767
        %v5303 = vunpack.c.h.b16 %v3767
        %v5304 = vunpack.c.l.b16 %v3768
        %v5305 = vunpack.c.h.b16 %v3768
        %v5306 = vpack.c.b16 %v4290, %v4282
        %v5307 = vpack.c.b16 %v4291, %v4283
        %v5308 = vpack.c.b16 %v4292, %v4284
        %v5309 = vpack.c.b16 %v4293, %v4285
        %v5310 = vpack.c.b16 %v4294, %v4286
        %v5311 = vpack.c.b16 %v4295, %v4287
        %v5312 = vpack.c.b16 %v4296, %v4288
        %v5313 = vpack.c.b16 %v4297, %v4289
        %v5314 = vpack.c.b16 %v4306, %v4298
        %v5315 = vpack.c.b16 %v4307, %v4299
        %v5316 = vpack.c.b16 %v4308, %v4300
        %v5317 = vpack.c.b16 %v4309, %v4301
        %v5318 = vpack.c.b16 %v4310, %v4302
        %v5319 = vpack.c.b16 %v4311, %v4303
        %v5320 = vpack.c.b16 %v4312, %v4304
        %v5321 = vpack.c.b16 %v4313, %v4305
        %v5322 = vpack.c.b16 %v4322, %v4314
        %v5323 = vpack.c.b16 %v4323, %v4315
        %v5324 = vpack.c.b16 %v4324, %v4316
        %v5325 = vpack.c.b16 %v4325, %v4317
        %v5326 = vpack.c.b16 %v4326, %v4318
        %v5327 = vpack.c.b16 %v4327, %v4319
        %v5328 = vpack.c.b16 %v4328, %v4320
        %v5329 = vpack.c.b16 %v4329, %v4321
        %v5330 = vpack.c.b16 %v4338, %v4330
        %v5331 = vpack.c.b16 %v4339, %v4331
        %v5332 = vpack.c.b16 %v4340, %v4332
        %v5333 = vpack.c.b16 %v4341, %v4333
        %v5334 = vpack.c.b16 %v4342, %v4334
        %v5335 = vpack.c.b16 %v4343, %v4335
        %v5336 = vpack.c.b16 %v4344, %v4336
        %v5337 = vpack.c.b16 %v4345, %v4337
        %v5338 = vpack.c.b16 %v4354, %v4346
        %v5339 = vpack.c.b16 %v4355, %v4347
        %v5340 = vpack.c.b16 %v4356, %v4348
        %v5341 = vpack.c.b16 %v4357, %v4349
        %v5342 = vpack.c.b16 %v4358, %v4350
        %v5343 = vpack.c.b16 %v4359, %v4351
        %v5344 = vpack.c.b16 %v4360, %v4352
        %v5345 = vpack.c.b16 %v4361, %v4353
        %v5346 = vpack.c.b16 %v4370, %v4362
        %v5347 = vpack.c.b16 %v4371, %v4363
        %v5348 = vpack.c.b16 %v4372, %v4364
        %v5349 = vpack.c.b16 %v4373, %v4365
        %v5350 = vpack.c.b16 %v4374, %v4366
        %v5351 = vpack.c.b16 %v4375, %v4367
        %v5352 = vpack.c.b16 %v4376, %v4368
        %v5353 = vpack.c.b16 %v4377, %v4369
        %v5354 = vpack.c.b16 %v4386, %v4378
        %v5355 = vpack.c.b16 %v4387, %v4379
        %v5356 = vpack.c.b16 %v4388, %v4380
        %v5357 = vpack.c.b16 %v4389, %v4381
        %v5358 = vpack.c.b16 %v4390, %v4382
        %v5359 = vpack.c.b16 %v4391, %v4383
        %v5360 = vpack.c.b16 %v4392, %v4384
        %v5361 = vpack.c.b16 %v4393, %v4385
        %v5362 = vpack.c.b16 %v4402, %v4394
        %v5363 = vpack.c.b16 %v4403, %v4395
        %v5364 = vpack.c.b16 %v4404, %v4396
        %v5365 = vpack.c.b16 %v4405, %v4397
        %v5366 = vpack.c.b16 %v4406, %v4398
        %v5367 = vpack.c.b16 %v4407, %v4399
        %v5368 = vpack.c.b16 %v4408, %v4400
        %v5369 = vpack.c.b16 %v4409, %v4401
        %v5370 = vpack.c.b16 %v4418, %v4410
        %v5371 = vpack.c.b16 %v4419, %v4411
        %v5372 = vpack.c.b16 %v4420, %v4412
        %v5373 = vpack.c.b16 %v4421, %v4413
        %v5374 = vpack.c.b16 %v4422, %v4414
        %v5375 = vpack.c.b16 %v4423, %v4415
        %v5376 = vpack.c.b16 %v4424, %v4416
        %v5377 = vpack.c.b16 %v4425, %v4417
        %v5378 = vpack.c.b16 %v4434, %v4426
        %v5379 = vpack.c.b16 %v4435, %v4427
        %v5380 = vpack.c.b16 %v4436, %v4428
        %v5381 = vpack.c.b16 %v4437, %v4429
        %v5382 = vpack.c.b16 %v4438, %v4430
        %v5383 = vpack.c.b16 %v4439, %v4431
        %v5384 = vpack.c.b16 %v4440, %v4432
        %v5385 = vpack.c.b16 %v4441, %v4433
        %v5386 = vpack.c.b16 %v4450, %v4442
        %v5387 = vpack.c.b16 %v4451, %v4443
        %v5388 = vpack.c.b16 %v4452, %v4444
        %v5389 = vpack.c.b16 %v4453, %v4445
        %v5390 = vpack.c.b16 %v4454, %v4446
        %v5391 = vpack.c.b16 %v4455, %v4447
        %v5392 = vpack.c.b16 %v4456, %v4448
        %v5393 = vpack.c.b16 %v4457, %v4449
        %v5394 = vpack.c.b16 %v4466, %v4458
        %v5395 = vpack.c.b16 %v4467, %v4459
        %v5396 = vpack.c.b16 %v4468, %v4460
        %v5397 = vpack.c.b16 %v4469, %v4461
        %v5398 = vpack.c.b16 %v4470, %v4462
        %v5399 = vpack.c.b16 %v4471, %v4463
        %v5400 = vpack.c.b16 %v4472, %v4464
        %v5401 = vpack.c.b16 %v4473, %v4465
        %v5402 = vpack.c.b16 %v4482, %v4474
        %v5403 = vpack.c.b16 %v4483, %v4475
        %v5404 = vpack.c.b16 %v4484, %v4476
        %v5405 = vpack.c.b16 %v4485, %v4477
        %v5406 = vpack.c.b16 %v4486, %v4478
        %v5407 = vpack.c.b16 %v4487, %v4479
        %v5408 = vpack.c.b16 %v4488, %v4480
        %v5409 = vpack.c.b16 %v4489, %v4481
        %v5410 = vpack.c.b16 %v4498, %v4490
        %v5411 = vpack.c.b16 %v4499, %v4491
        %v5412 = vpack.c.b16 %v4500, %v4492
        %v5413 = vpack.c.b16 %v4501, %v4493
        %v5414 = vpack.c.b16 %v4502, %v4494
        %v5415 = vpack.c.b16 %v4503, %v4495
        %v5416 = vpack.c.b16 %v4504, %v4496
        %v5417 = vpack.c.b16 %v4505, %v4497
        %v5418 = vpack.c.b16 %v4514, %v4506
        %v5419 = vpack.c.b16 %v4515, %v4507
        %v5420 = vpack.c.b16 %v4516, %v4508
        %v5421 = vpack.c.b16 %v4517, %v4509
        %v5422 = vpack.c.b16 %v4518, %v4510
        %v5423 = vpack.c.b16 %v4519, %v4511
        %v5424 = vpack.c.b16 %v4520, %v4512
        %v5425 = vpack.c.b16 %v4521, %v4513
        %v5426 = vpack.c.b16 %v4530, %v4522
        %v5427 = vpack.c.b16 %v4531, %v4523
        %v5428 = vpack.c.b16 %v4532, %v4524
        %v5429 = vpack.c.b16 %v4533, %v4525
        %v5430 = vpack.c.b16 %v4534, %v4526
        %v5431 = vpack.c.b16 %v4535, %v4527
        %v5432 = vpack.c.b16 %v4536, %v4528
        %v5433 = vpack.c.b16 %v4537, %v4529
        %v5434 = vpack.c.b16 %v4546, %v4538
        %v5435 = vpack.c.b16 %v4547, %v4539
        %v5436 = vpack.c.b16 %v4548, %v4540
        %v5437 = vpack.c.b16 %v4549, %v4541
        %v5438 = vpack.c.b16 %v4550, %v4542
        %v5439 = vpack.c.b16 %v4551, %v4543
        %v5440 = vpack.c.b16 %v4552, %v4544
        %v5441 = vpack.c.b16 %v4553, %v4545
        %v5442 = vpack.c.b16 %v4562, %v4554
        %v5443 = vpack.c.b16 %v4563, %v4555
        %v5444 = vpack.c.b16 %v4564, %v4556
        %v5445 = vpack.c.b16 %v4565, %v4557
        %v5446 = vpack.c.b16 %v4566, %v4558
        %v5447 = vpack.c.b16 %v4567, %v4559
        %v5448 = vpack.c.b16 %v4568, %v4560
        %v5449 = vpack.c.b16 %v4569, %v4561
        %v5450 = vpack.c.b16 %v4578, %v4570
        %v5451 = vpack.c.b16 %v4579, %v4571
        %v5452 = vpack.c.b16 %v4580, %v4572
        %v5453 = vpack.c.b16 %v4581, %v4573
        %v5454 = vpack.c.b16 %v4582, %v4574
        %v5455 = vpack.c.b16 %v4583, %v4575
        %v5456 = vpack.c.b16 %v4584, %v4576
        %v5457 = vpack.c.b16 %v4585, %v4577
        %v5458 = vpack.c.b16 %v4594, %v4586
        %v5459 = vpack.c.b16 %v4595, %v4587
        %v5460 = vpack.c.b16 %v4596, %v4588
        %v5461 = vpack.c.b16 %v4597, %v4589
        %v5462 = vpack.c.b16 %v4598, %v4590
        %v5463 = vpack.c.b16 %v4599, %v4591
        %v5464 = vpack.c.b16 %v4600, %v4592
        %v5465 = vpack.c.b16 %v4601, %v4593
        %v5466 = vpack.c.b16 %v4610, %v4602
        %v5467 = vpack.c.b16 %v4611, %v4603
        %v5468 = vpack.c.b16 %v4612, %v4604
        %v5469 = vpack.c.b16 %v4613, %v4605
        %v5470 = vpack.c.b16 %v4614, %v4606
        %v5471 = vpack.c.b16 %v4615, %v4607
        %v5472 = vpack.c.b16 %v4616, %v4608
        %v5473 = vpack.c.b16 %v4617, %v4609
        %v5474 = vpack.c.b16 %v4626, %v4618
        %v5475 = vpack.c.b16 %v4627, %v4619
        %v5476 = vpack.c.b16 %v4628, %v4620
        %v5477 = vpack.c.b16 %v4629, %v4621
        %v5478 = vpack.c.b16 %v4630, %v4622
        %v5479 = vpack.c.b16 %v4631, %v4623
        %v5480 = vpack.c.b16 %v4632, %v4624
        %v5481 = vpack.c.b16 %v4633, %v4625
        %v5482 = vpack.c.b16 %v4642, %v4634
        %v5483 = vpack.c.b16 %v4643, %v4635
        %v5484 = vpack.c.b16 %v4644, %v4636
        %v5485 = vpack.c.b16 %v4645, %v4637
        %v5486 = vpack.c.b16 %v4646, %v4638
        %v5487 = vpack.c.b16 %v4647, %v4639
        %v5488 = vpack.c.b16 %v4648, %v4640
        %v5489 = vpack.c.b16 %v4649, %v4641
        %v5490 = vpack.c.b16 %v4658, %v4650
        %v5491 = vpack.c.b16 %v4659, %v4651
        %v5492 = vpack.c.b16 %v4660, %v4652
        %v5493 = vpack.c.b16 %v4661, %v4653
        %v5494 = vpack.c.b16 %v4662, %v4654
        %v5495 = vpack.c.b16 %v4663, %v4655
        %v5496 = vpack.c.b16 %v4664, %v4656
        %v5497 = vpack.c.b16 %v4665, %v4657
        %v5498 = vpack.c.b16 %v4674, %v4666
        %v5499 = vpack.c.b16 %v4675, %v4667
        %v5500 = vpack.c.b16 %v4676, %v4668
        %v5501 = vpack.c.b16 %v4677, %v4669
        %v5502 = vpack.c.b16 %v4678, %v4670
        %v5503 = vpack.c.b16 %v4679, %v4671
        %v5504 = vpack.c.b16 %v4680, %v4672
        %v5505 = vpack.c.b16 %v4681, %v4673
        %v5506 = vpack.c.b16 %v4690, %v4682
        %v5507 = vpack.c.b16 %v4691, %v4683
        %v5508 = vpack.c.b16 %v4692, %v4684
        %v5509 = vpack.c.b16 %v4693, %v4685
        %v5510 = vpack.c.b16 %v4694, %v4686
        %v5511 = vpack.c.b16 %v4695, %v4687
        %v5512 = vpack.c.b16 %v4696, %v4688
        %v5513 = vpack.c.b16 %v4697, %v4689
        %v5514 = vpack.c.b16 %v4706, %v4698
        %v5515 = vpack.c.b16 %v4707, %v4699
        %v5516 = vpack.c.b16 %v4708, %v4700
        %v5517 = vpack.c.b16 %v4709, %v4701
        %v5518 = vpack.c.b16 %v4710, %v4702
        %v5519 = vpack.c.b16 %v4711, %v4703
        %v5520 = vpack.c.b16 %v4712, %v4704
        %v5521 = vpack.c.b16 %v4713, %v4705
        %v5522 = vpack.c.b16 %v4722, %v4714
        %v5523 = vpack.c.b16 %v4723, %v4715
        %v5524 = vpack.c.b16 %v4724, %v4716
        %v5525 = vpack.c.b16 %v4725, %v4717
        %v5526 = vpack.c.b16 %v4726, %v4718
        %v5527 = vpack.c.b16 %v4727, %v4719
        %v5528 = vpack.c.b16 %v4728, %v4720
        %v5529 = vpack.c.b16 %v4729, %v4721
        %v5530 = vpack.c.b16 %v4738, %v4730
        %v5531 = vpack.c.b16 %v4739, %v4731
        %v5532 = vpack.c.b16 %v4740, %v4732
        %v5533 = vpack.c.b16 %v4741, %v4733
        %v5534 = vpack.c.b16 %v4742, %v4734
        %v5535 = vpack.c.b16 %v4743, %v4735
        %v5536 = vpack.c.b16 %v4744, %v4736
        %v5537 = vpack.c.b16 %v4745, %v4737
        %v5538 = vpack.c.b16 %v4754, %v4746
        %v5539 = vpack.c.b16 %v4755, %v4747
        %v5540 = vpack.c.b16 %v4756, %v4748
        %v5541 = vpack.c.b16 %v4757, %v4749
        %v5542 = vpack.c.b16 %v4758, %v4750
        %v5543 = vpack.c.b16 %v4759, %v4751
        %v5544 = vpack.c.b16 %v4760, %v4752
        %v5545 = vpack.c.b16 %v4761, %v4753
        %v5546 = vpack.c.b16 %v4770, %v4762
        %v5547 = vpack.c.b16 %v4771, %v4763
        %v5548 = vpack.c.b16 %v4772, %v4764
        %v5549 = vpack.c.b16 %v4773, %v4765
        %v5550 = vpack.c.b16 %v4774, %v4766
        %v5551 = vpack.c.b16 %v4775, %v4767
        %v5552 = vpack.c.b16 %v4776, %v4768
        %v5553 = vpack.c.b16 %v4777, %v4769
        %v5554 = vpack.c.b16 %v4786, %v4778
        %v5555 = vpack.c.b16 %v4787, %v4779
        %v5556 = vpack.c.b16 %v4788, %v4780
        %v5557 = vpack.c.b16 %v4789, %v4781
        %v5558 = vpack.c.b16 %v4790, %v4782
        %v5559 = vpack.c.b16 %v4791, %v4783
        %v5560 = vpack.c.b16 %v4792, %v4784
        %v5561 = vpack.c.b16 %v4793, %v4785
        %v5562 = vpack.c.b16 %v4802, %v4794
        %v5563 = vpack.c.b16 %v4803, %v4795
        %v5564 = vpack.c.b16 %v4804, %v4796
        %v5565 = vpack.c.b16 %v4805, %v4797
        %v5566 = vpack.c.b16 %v4806, %v4798
        %v5567 = vpack.c.b16 %v4807, %v4799
        %v5568 = vpack.c.b16 %v4808, %v4800
        %v5569 = vpack.c.b16 %v4809, %v4801
        %v5570 = vpack.c.b16 %v4818, %v4810
        %v5571 = vpack.c.b16 %v4819, %v4811
        %v5572 = vpack.c.b16 %v4820, %v4812
        %v5573 = vpack.c.b16 %v4821, %v4813
        %v5574 = vpack.c.b16 %v4822, %v4814
        %v5575 = vpack.c.b16 %v4823, %v4815
        %v5576 = vpack.c.b16 %v4824, %v4816
        %v5577 = vpack.c.b16 %v4825, %v4817
        %v5578 = vpack.c.b16 %v4834, %v4826
        %v5579 = vpack.c.b16 %v4835, %v4827
        %v5580 = vpack.c.b16 %v4836, %v4828
        %v5581 = vpack.c.b16 %v4837, %v4829
        %v5582 = vpack.c.b16 %v4838, %v4830
        %v5583 = vpack.c.b16 %v4839, %v4831
        %v5584 = vpack.c.b16 %v4840, %v4832
        %v5585 = vpack.c.b16 %v4841, %v4833
        %v5586 = vpack.c.b16 %v4850, %v4842
        %v5587 = vpack.c.b16 %v4851, %v4843
        %v5588 = vpack.c.b16 %v4852, %v4844
        %v5589 = vpack.c.b16 %v4853, %v4845
        %v5590 = vpack.c.b16 %v4854, %v4846
        %v5591 = vpack.c.b16 %v4855, %v4847
        %v5592 = vpack.c.b16 %v4856, %v4848
        %v5593 = vpack.c.b16 %v4857, %v4849
        %v5594 = vpack.c.b16 %v4866, %v4858
        %v5595 = vpack.c.b16 %v4867, %v4859
        %v5596 = vpack.c.b16 %v4868, %v4860
        %v5597 = vpack.c.b16 %v4869, %v4861
        %v5598 = vpack.c.b16 %v4870, %v4862
        %v5599 = vpack.c.b16 %v4871, %v4863
        %v5600 = vpack.c.b16 %v4872, %v4864
        %v5601 = vpack.c.b16 %v4873, %v4865
        %v5602 = vpack.c.b16 %v4882, %v4874
        %v5603 = vpack.c.b16 %v4883, %v4875
        %v5604 = vpack.c.b16 %v4884, %v4876
        %v5605 = vpack.c.b16 %v4885, %v4877
        %v5606 = vpack.c.b16 %v4886, %v4878
        %v5607 = vpack.c.b16 %v4887, %v4879
        %v5608 = vpack.c.b16 %v4888, %v4880
        %v5609 = vpack.c.b16 %v4889, %v4881
        %v5610 = vpack.c.b16 %v4898, %v4890
        %v5611 = vpack.c.b16 %v4899, %v4891
        %v5612 = vpack.c.b16 %v4900, %v4892
        %v5613 = vpack.c.b16 %v4901, %v4893
        %v5614 = vpack.c.b16 %v4902, %v4894
        %v5615 = vpack.c.b16 %v4903, %v4895
        %v5616 = vpack.c.b16 %v4904, %v4896
        %v5617 = vpack.c.b16 %v4905, %v4897
        %v5618 = vpack.c.b16 %v4914, %v4906
        %v5619 = vpack.c.b16 %v4915, %v4907
        %v5620 = vpack.c.b16 %v4916, %v4908
        %v5621 = vpack.c.b16 %v4917, %v4909
        %v5622 = vpack.c.b16 %v4918, %v4910
        %v5623 = vpack.c.b16 %v4919, %v4911
        %v5624 = vpack.c.b16 %v4920, %v4912
        %v5625 = vpack.c.b16 %v4921, %v4913
        %v5626 = vpack.c.b16 %v4930, %v4922
        %v5627 = vpack.c.b16 %v4931, %v4923
        %v5628 = vpack.c.b16 %v4932, %v4924
        %v5629 = vpack.c.b16 %v4933, %v4925
        %v5630 = vpack.c.b16 %v4934, %v4926
        %v5631 = vpack.c.b16 %v4935, %v4927
        %v5632 = vpack.c.b16 %v4936, %v4928
        %v5633 = vpack.c.b16 %v4937, %v4929
        %v5634 = vpack.c.b16 %v4946, %v4938
        %v5635 = vpack.c.b16 %v4947, %v4939
        %v5636 = vpack.c.b16 %v4948, %v4940
        %v5637 = vpack.c.b16 %v4949, %v4941
        %v5638 = vpack.c.b16 %v4950, %v4942
        %v5639 = vpack.c.b16 %v4951, %v4943
        %v5640 = vpack.c.b16 %v4952, %v4944
        %v5641 = vpack.c.b16 %v4953, %v4945
        %v5642 = vpack.c.b16 %v4962, %v4954
        %v5643 = vpack.c.b16 %v4963, %v4955
        %v5644 = vpack.c.b16 %v4964, %v4956
        %v5645 = vpack.c.b16 %v4965, %v4957
        %v5646 = vpack.c.b16 %v4966, %v4958
        %v5647 = vpack.c.b16 %v4967, %v4959
        %v5648 = vpack.c.b16 %v4968, %v4960
        %v5649 = vpack.c.b16 %v4969, %v4961
        %v5650 = vpack.c.b16 %v4978, %v4970
        %v5651 = vpack.c.b16 %v4979, %v4971
        %v5652 = vpack.c.b16 %v4980, %v4972
        %v5653 = vpack.c.b16 %v4981, %v4973
        %v5654 = vpack.c.b16 %v4982, %v4974
        %v5655 = vpack.c.b16 %v4983, %v4975
        %v5656 = vpack.c.b16 %v4984, %v4976
        %v5657 = vpack.c.b16 %v4985, %v4977
        %v5658 = vpack.c.b16 %v4994, %v4986
        %v5659 = vpack.c.b16 %v4995, %v4987
        %v5660 = vpack.c.b16 %v4996, %v4988
        %v5661 = vpack.c.b16 %v4997, %v4989
        %v5662 = vpack.c.b16 %v4998, %v4990
        %v5663 = vpack.c.b16 %v4999, %v4991
        %v5664 = vpack.c.b16 %v5000, %v4992
        %v5665 = vpack.c.b16 %v5001, %v4993
        %v5666 = vpack.c.b16 %v5010, %v5002
        %v5667 = vpack.c.b16 %v5011, %v5003
        %v5668 = vpack.c.b16 %v5012, %v5004
        %v5669 = vpack.c.b16 %v5013, %v5005
        %v5670 = vpack.c.b16 %v5014, %v5006
        %v5671 = vpack.c.b16 %v5015, %v5007
        %v5672 = vpack.c.b16 %v5016, %v5008
        %v5673 = vpack.c.b16 %v5017, %v5009
        %v5674 = vpack.c.b16 %v5026, %v5018
        %v5675 = vpack.c.b16 %v5027, %v5019
        %v5676 = vpack.c.b16 %v5028, %v5020
        %v5677 = vpack.c.b16 %v5029, %v5021
        %v5678 = vpack.c.b16 %v5030, %v5022
        %v5679 = vpack.c.b16 %v5031, %v5023
        %v5680 = vpack.c.b16 %v5032, %v5024
        %v5681 = vpack.c.b16 %v5033, %v5025
        %v5682 = vpack.c.b16 %v5042, %v5034
        %v5683 = vpack.c.b16 %v5043, %v5035
        %v5684 = vpack.c.b16 %v5044, %v5036
        %v5685 = vpack.c.b16 %v5045, %v5037
        %v5686 = vpack.c.b16 %v5046, %v5038
        %v5687 = vpack.c.b16 %v5047, %v5039
        %v5688 = vpack.c.b16 %v5048, %v5040
        %v5689 = vpack.c.b16 %v5049, %v5041
        %v5690 = vpack.c.b16 %v5058, %v5050
        %v5691 = vpack.c.b16 %v5059, %v5051
        %v5692 = vpack.c.b16 %v5060, %v5052
        %v5693 = vpack.c.b16 %v5061, %v5053
        %v5694 = vpack.c.b16 %v5062, %v5054
        %v5695 = vpack.c.b16 %v5063, %v5055
        %v5696 = vpack.c.b16 %v5064, %v5056
        %v5697 = vpack.c.b16 %v5065, %v5057
        %v5698 = vpack.c.b16 %v5074, %v5066
        %v5699 = vpack.c.b16 %v5075, %v5067
        %v5700 = vpack.c.b16 %v5076, %v5068
        %v5701 = vpack.c.b16 %v5077, %v5069
        %v5702 = vpack.c.b16 %v5078, %v5070
        %v5703 = vpack.c.b16 %v5079, %v5071
        %v5704 = vpack.c.b16 %v5080, %v5072
        %v5705 = vpack.c.b16 %v5081, %v5073
        %v5706 = vpack.c.b16 %v5090, %v5082
        %v5707 = vpack.c.b16 %v5091, %v5083
        %v5708 = vpack.c.b16 %v5092, %v5084
        %v5709 = vpack.c.b16 %v5093, %v5085
        %v5710 = vpack.c.b16 %v5094, %v5086
        %v5711 = vpack.c.b16 %v5095, %v5087
        %v5712 = vpack.c.b16 %v5096, %v5088
        %v5713 = vpack.c.b16 %v5097, %v5089
        %v5714 = vpack.c.b16 %v5106, %v5098
        %v5715 = vpack.c.b16 %v5107, %v5099
        %v5716 = vpack.c.b16 %v5108, %v5100
        %v5717 = vpack.c.b16 %v5109, %v5101
        %v5718 = vpack.c.b16 %v5110, %v5102
        %v5719 = vpack.c.b16 %v5111, %v5103
        %v5720 = vpack.c.b16 %v5112, %v5104
        %v5721 = vpack.c.b16 %v5113, %v5105
        %v5722 = vpack.c.b16 %v5122, %v5114
        %v5723 = vpack.c.b16 %v5123, %v5115
        %v5724 = vpack.c.b16 %v5124, %v5116
        %v5725 = vpack.c.b16 %v5125, %v5117
        %v5726 = vpack.c.b16 %v5126, %v5118
        %v5727 = vpack.c.b16 %v5127, %v5119
        %v5728 = vpack.c.b16 %v5128, %v5120
        %v5729 = vpack.c.b16 %v5129, %v5121
        %v5730 = vpack.c.b16 %v5138, %v5130
        %v5731 = vpack.c.b16 %v5139, %v5131
        %v5732 = vpack.c.b16 %v5140, %v5132
        %v5733 = vpack.c.b16 %v5141, %v5133
        %v5734 = vpack.c.b16 %v5142, %v5134
        %v5735 = vpack.c.b16 %v5143, %v5135
        %v5736 = vpack.c.b16 %v5144, %v5136
        %v5737 = vpack.c.b16 %v5145, %v5137
        %v5738 = vpack.c.b16 %v5154, %v5146
        %v5739 = vpack.c.b16 %v5155, %v5147
        %v5740 = vpack.c.b16 %v5156, %v5148
        %v5741 = vpack.c.b16 %v5157, %v5149
        %v5742 = vpack.c.b16 %v5158, %v5150
        %v5743 = vpack.c.b16 %v5159, %v5151
        %v5744 = vpack.c.b16 %v5160, %v5152
        %v5745 = vpack.c.b16 %v5161, %v5153
        %v5746 = vpack.c.b16 %v5170, %v5162
        %v5747 = vpack.c.b16 %v5171, %v5163
        %v5748 = vpack.c.b16 %v5172, %v5164
        %v5749 = vpack.c.b16 %v5173, %v5165
        %v5750 = vpack.c.b16 %v5174, %v5166
        %v5751 = vpack.c.b16 %v5175, %v5167
        %v5752 = vpack.c.b16 %v5176, %v5168
        %v5753 = vpack.c.b16 %v5177, %v5169
        %v5754 = vpack.c.b16 %v5186, %v5178
        %v5755 = vpack.c.b16 %v5187, %v5179
        %v5756 = vpack.c.b16 %v5188, %v5180
        %v5757 = vpack.c.b16 %v5189, %v5181
        %v5758 = vpack.c.b16 %v5190, %v5182
        %v5759 = vpack.c.b16 %v5191, %v5183
        %v5760 = vpack.c.b16 %v5192, %v5184
        %v5761 = vpack.c.b16 %v5193, %v5185
        %v5762 = vpack.c.b16 %v5202, %v5194
        %v5763 = vpack.c.b16 %v5203, %v5195
        %v5764 = vpack.c.b16 %v5204, %v5196
        %v5765 = vpack.c.b16 %v5205, %v5197
        %v5766 = vpack.c.b16 %v5206, %v5198
        %v5767 = vpack.c.b16 %v5207, %v5199
        %v5768 = vpack.c.b16 %v5208, %v5200
        %v5769 = vpack.c.b16 %v5209, %v5201
        %v5770 = vpack.c.b16 %v5218, %v5210
        %v5771 = vpack.c.b16 %v5219, %v5211
        %v5772 = vpack.c.b16 %v5220, %v5212
        %v5773 = vpack.c.b16 %v5221, %v5213
        %v5774 = vpack.c.b16 %v5222, %v5214
        %v5775 = vpack.c.b16 %v5223, %v5215
        %v5776 = vpack.c.b16 %v5224, %v5216
        %v5777 = vpack.c.b16 %v5225, %v5217
        %v5778 = vpack.c.b16 %v5234, %v5226
        %v5779 = vpack.c.b16 %v5235, %v5227
        %v5780 = vpack.c.b16 %v5236, %v5228
        %v5781 = vpack.c.b16 %v5237, %v5229
        %v5782 = vpack.c.b16 %v5238, %v5230
        %v5783 = vpack.c.b16 %v5239, %v5231
        %v5784 = vpack.c.b16 %v5240, %v5232
        %v5785 = vpack.c.b16 %v5241, %v5233
        %v5786 = vpack.c.b16 %v5250, %v5242
        %v5787 = vpack.c.b16 %v5251, %v5243
        %v5788 = vpack.c.b16 %v5252, %v5244
        %v5789 = vpack.c.b16 %v5253, %v5245
        %v5790 = vpack.c.b16 %v5254, %v5246
        %v5791 = vpack.c.b16 %v5255, %v5247
        %v5792 = vpack.c.b16 %v5256, %v5248
        %v5793 = vpack.c.b16 %v5257, %v5249
        %v5794 = vpack.c.b16 %v5266, %v5258
        %v5795 = vpack.c.b16 %v5267, %v5259
        %v5796 = vpack.c.b16 %v5268, %v5260
        %v5797 = vpack.c.b16 %v5269, %v5261
        %v5798 = vpack.c.b16 %v5270, %v5262
        %v5799 = vpack.c.b16 %v5271, %v5263
        %v5800 = vpack.c.b16 %v5272, %v5264
        %v5801 = vpack.c.b16 %v5273, %v5265
        %v5802 = vpack.c.b16 %v5282, %v5274
        %v5803 = vpack.c.b16 %v5283, %v5275
        %v5804 = vpack.c.b16 %v5284, %v5276
        %v5805 = vpack.c.b16 %v5285, %v5277
        %v5806 = vpack.c.b16 %v5286, %v5278
        %v5807 = vpack.c.b16 %v5287, %v5279
        %v5808 = vpack.c.b16 %v5288, %v5280
        %v5809 = vpack.c.b16 %v5289, %v5281
        %v5810 = vpack.c.b16 %v5298, %v5290
        %v5811 = vpack.c.b16 %v5299, %v5291
        %v5812 = vpack.c.b16 %v5300, %v5292
        %v5813 = vpack.c.b16 %v5301, %v5293
        %v5814 = vpack.c.b16 %v5302, %v5294
        %v5815 = vpack.c.b16 %v5303, %v5295
        %v5816 = vpack.c.b16 %v5304, %v5296
        %v5817 = vpack.c.b16 %v5305, %v5297
        %v6331 = vperm.slane %v3769, 0
        %v6332 = vperm.slane %v3769, 1
        %v6333 = vperm.slane %v3769, 2
        %v6334 = vperm.slane %v3769, 3
        %v6335 = vperm.slane %v3769, 4
        %v6336 = vperm.slane %v3769, 5
        %v6337 = vperm.slane %v3769, 6
        %v6338 = vperm.slane %v3769, 7
        %6347 = vmatpush.bf16.msra.mxu0 %v5362
        %6348 = vmatpush.bf16.msra.mxu0 %v5354
        %6349 = vmatpush.bf16.msra.mxu0 %v5346
        %6350 = vmatpush.bf16.msra.mxu0 %v5338
        %6351 = vmatpush.bf16.msra.mxu0 %v5330
        %6352 = vmatpush.bf16.msra.mxu0 %v5322
        %6353 = vmatpush.bf16.msra.mxu0 %v5314
        %6354 = vmatpush.bf16.msra.mxu0 %v5306
        %6355 = vmatmul.bf16.gmra.mxu0 %v3249
        %v6356 = vpop.f32.mrf.mxu0
        %v6357 = vadd.f32 %v6331, %v6356
        %v6358 = vpop.f32.mrf.mxu0
        %6359 = vdwg.mxu0
        %6360 = vmatpush.bf16.msra.mxu0 %v5426
        %6361 = vmatpush.bf16.msra.mxu0 %v5418
        %6362 = vmatpush.bf16.msra.mxu0 %v5410
        %6363 = vmatpush.bf16.msra.mxu0 %v5402
        %6364 = vmatpush.bf16.msra.mxu0 %v5394
        %6365 = vmatpush.bf16.msra.mxu0 %v5386
        %6366 = vmatpush.bf16.msra.mxu0 %v5378
        %6367 = vmatpush.bf16.msra.mxu0 %v5370
        %6368 = vmatmul.bf16.gmra.mxu0 %v3250
        %v6369 = vpop.f32.mrf.mxu0
        %v6370 = vadd.f32 %v6357, %v6369
        %v6371 = vpop.f32.mrf.mxu0
        %6372 = vdwg.mxu0
        %6373 = vmatpush.bf16.msra.mxu0 %v5490
        %6374 = vmatpush.bf16.msra.mxu0 %v5482
        %6375 = vmatpush.bf16.msra.mxu0 %v5474
        %6376 = vmatpush.bf16.msra.mxu0 %v5466
        %6377 = vmatpush.bf16.msra.mxu0 %v5458
        %6378 = vmatpush.bf16.msra.mxu0 %v5450
        %6379 = vmatpush.bf16.msra.mxu0 %v5442
        %6380 = vmatpush.bf16.msra.mxu0 %v5434
        %6381 = vmatmul.bf16.gmra.mxu0 %v3251
        %v6382 = vpop.f32.mrf.mxu0
        %v6383 = vadd.f32 %v6370, %v6382
        %v6384 = vpop.f32.mrf.mxu0
        %6385 = vdwg.mxu0
        %6386 = vmatpush.bf16.msra.mxu0 %v5554
        %6387 = vmatpush.bf16.msra.mxu0 %v5546
        %6388 = vmatpush.bf16.msra.mxu0 %v5538
        %6389 = vmatpush.bf16.msra.mxu0 %v5530
        %6390 = vmatpush.bf16.msra.mxu0 %v5522
        %6391 = vmatpush.bf16.msra.mxu0 %v5514
        %6392 = vmatpush.bf16.msra.mxu0 %v5506
        %6393 = vmatpush.bf16.msra.mxu0 %v5498
        %6394 = vmatmul.bf16.gmra.mxu0 %v3252
        %v6395 = vpop.f32.mrf.mxu0
        %v6396 = vadd.f32 %v6383, %v6395
        %v6397 = vpop.f32.mrf.mxu0
        %6398 = vdwg.mxu0
        %6399 = vmatpush.bf16.msra.mxu0 %v5618
        %6400 = vmatpush.bf16.msra.mxu0 %v5610
        %6401 = vmatpush.bf16.msra.mxu0 %v5602
        %6402 = vmatpush.bf16.msra.mxu0 %v5594
        %6403 = vmatpush.bf16.msra.mxu0 %v5586
        %6404 = vmatpush.bf16.msra.mxu0 %v5578
        %6405 = vmatpush.bf16.msra.mxu0 %v5570
        %6406 = vmatpush.bf16.msra.mxu0 %v5562
        %6407 = vmatmul.bf16.gmra.mxu0 %v3253
        %v6408 = vpop.f32.mrf.mxu0
        %v6409 = vadd.f32 %v6396, %v6408
        %v6410 = vpop.f32.mrf.mxu0
        %6411 = vdwg.mxu0
        %6412 = vmatpush.bf16.msra.mxu0 %v5682
        %6413 = vmatpush.bf16.msra.mxu0 %v5674
        %6414 = vmatpush.bf16.msra.mxu0 %v5666
        %6415 = vmatpush.bf16.msra.mxu0 %v5658
        %6416 = vmatpush.bf16.msra.mxu0 %v5650
        %6417 = vmatpush.bf16.msra.mxu0 %v5642
        %6418 = vmatpush.bf16.msra.mxu0 %v5634
        %6419 = vmatpush.bf16.msra.mxu0 %v5626
        %6420 = vmatmul.bf16.gmra.mxu0 %v3254
        %v6421 = vpop.f32.mrf.mxu0
        %v6422 = vadd.f32 %v6409, %v6421
        %v6423 = vpop.f32.mrf.mxu0
        %6424 = vdwg.mxu0
        %6425 = vmatpush.bf16.msra.mxu0 %v5746
        %6426 = vmatpush.bf16.msra.mxu0 %v5738
        %6427 = vmatpush.bf16.msra.mxu0 %v5730
        %6428 = vmatpush.bf16.msra.mxu0 %v5722
        %6429 = vmatpush.bf16.msra.mxu0 %v5714
        %6430 = vmatpush.bf16.msra.mxu0 %v5706
        %6431 = vmatpush.bf16.msra.mxu0 %v5698
        %6432 = vmatpush.bf16.msra.mxu0 %v5690
        %6433 = vmatmul.bf16.gmra.mxu0 %v3255
        %v6434 = vpop.f32.mrf.mxu0
        %v6435 = vadd.f32 %v6422, %v6434
        %v6436 = vpop.f32.mrf.mxu0
        %6437 = vdwg.mxu0
        %6438 = vmatpush.bf16.msra.mxu0 %v5810
        %6439 = vmatpush.bf16.msra.mxu0 %v5802
        %6440 = vmatpush.bf16.msra.mxu0 %v5794
        %6441 = vmatpush.bf16.msra.mxu0 %v5786
        %6442 = vmatpush.bf16.msra.mxu0 %v5778
        %6443 = vmatpush.bf16.msra.mxu0 %v5770
        %6444 = vmatpush.bf16.msra.mxu0 %v5762
        %6445 = vmatpush.bf16.msra.mxu0 %v5754
        %6446 = vmatmul.bf16.gmra.mxu0 %v3256
        %v6447 = vpop.f32.mrf.mxu0
        %v6448 = vadd.f32 %v6435, %v6447
        %v6449 = vpop.f32.mrf.mxu0
        %6450 = vdwg.mxu0
        %6451 = vmatpush.bf16.msra.mxu0 %v5363
        %6452 = vmatpush.bf16.msra.mxu0 %v5355
        %6453 = vmatpush.bf16.msra.mxu0 %v5347
        %6454 = vmatpush.bf16.msra.mxu0 %v5339
        %6455 = vmatpush.bf16.msra.mxu0 %v5331
        %6456 = vmatpush.bf16.msra.mxu0 %v5323
        %6457 = vmatpush.bf16.msra.mxu0 %v5315
        %6458 = vmatpush.bf16.msra.mxu0 %v5307
        %6459 = vmatmul.bf16.gmra.mxu0 %v3249
        %v6460 = vpop.f32.mrf.mxu0
        %v6461 = vadd.f32 %v6332, %v6460
        %v6462 = vpop.f32.mrf.mxu0
        %6463 = vdwg.mxu0
        %6464 = vmatpush.bf16.msra.mxu0 %v5427
        %6465 = vmatpush.bf16.msra.mxu0 %v5419
        %6466 = vmatpush.bf16.msra.mxu0 %v5411
        %6467 = vmatpush.bf16.msra.mxu0 %v5403
        %6468 = vmatpush.bf16.msra.mxu0 %v5395
        %6469 = vmatpush.bf16.msra.mxu0 %v5387
        %6470 = vmatpush.bf16.msra.mxu0 %v5379
        %6471 = vmatpush.bf16.msra.mxu0 %v5371
        %6472 = vmatmul.bf16.gmra.mxu0 %v3250
        %v6473 = vpop.f32.mrf.mxu0
        %v6474 = vadd.f32 %v6461, %v6473
        %v6475 = vpop.f32.mrf.mxu0
        %6476 = vdwg.mxu0
        %6477 = vmatpush.bf16.msra.mxu0 %v5491
        %6478 = vmatpush.bf16.msra.mxu0 %v5483
        %6479 = vmatpush.bf16.msra.mxu0 %v5475
        %6480 = vmatpush.bf16.msra.mxu0 %v5467
        %6481 = vmatpush.bf16.msra.mxu0 %v5459
        %6482 = vmatpush.bf16.msra.mxu0 %v5451
        %6483 = vmatpush.bf16.msra.mxu0 %v5443
        %6484 = vmatpush.bf16.msra.mxu0 %v5435
        %6485 = vmatmul.bf16.gmra.mxu0 %v3251
        %v6486 = vpop.f32.mrf.mxu0
        %v6487 = vadd.f32 %v6474, %v6486
        %v6488 = vpop.f32.mrf.mxu0
        %6489 = vdwg.mxu0
        %6490 = vmatpush.bf16.msra.mxu0 %v5555
        %6491 = vmatpush.bf16.msra.mxu0 %v5547
        %6492 = vmatpush.bf16.msra.mxu0 %v5539
        %6493 = vmatpush.bf16.msra.mxu0 %v5531
        %6494 = vmatpush.bf16.msra.mxu0 %v5523
        %6495 = vmatpush.bf16.msra.mxu0 %v5515
        %6496 = vmatpush.bf16.msra.mxu0 %v5507
        %6497 = vmatpush.bf16.msra.mxu0 %v5499
        %6498 = vmatmul.bf16.gmra.mxu0 %v3252
        %v6499 = vpop.f32.mrf.mxu0
        %v6500 = vadd.f32 %v6487, %v6499
        %v6501 = vpop.f32.mrf.mxu0
        %6502 = vdwg.mxu0
        %6503 = vmatpush.bf16.msra.mxu0 %v5619
        %6504 = vmatpush.bf16.msra.mxu0 %v5611
        %6505 = vmatpush.bf16.msra.mxu0 %v5603
        %6506 = vmatpush.bf16.msra.mxu0 %v5595
        %6507 = vmatpush.bf16.msra.mxu0 %v5587
        %6508 = vmatpush.bf16.msra.mxu0 %v5579
        %6509 = vmatpush.bf16.msra.mxu0 %v5571
        %6510 = vmatpush.bf16.msra.mxu0 %v5563
        %6511 = vmatmul.bf16.gmra.mxu0 %v3253
        %v6512 = vpop.f32.mrf.mxu0
        %v6513 = vadd.f32 %v6500, %v6512
        %v6514 = vpop.f32.mrf.mxu0
        %6515 = vdwg.mxu0
        %6516 = vmatpush.bf16.msra.mxu0 %v5683
        %6517 = vmatpush.bf16.msra.mxu0 %v5675
        %6518 = vmatpush.bf16.msra.mxu0 %v5667
        %6519 = vmatpush.bf16.msra.mxu0 %v5659
        %6520 = vmatpush.bf16.msra.mxu0 %v5651
        %6521 = vmatpush.bf16.msra.mxu0 %v5643
        %6522 = vmatpush.bf16.msra.mxu0 %v5635
        %6523 = vmatpush.bf16.msra.mxu0 %v5627
        %6524 = vmatmul.bf16.gmra.mxu0 %v3254
        %v6525 = vpop.f32.mrf.mxu0
        %v6526 = vadd.f32 %v6513, %v6525
        %v6527 = vpop.f32.mrf.mxu0
        %6528 = vdwg.mxu0
        %6529 = vmatpush.bf16.msra.mxu0 %v5747
        %6530 = vmatpush.bf16.msra.mxu0 %v5739
        %6531 = vmatpush.bf16.msra.mxu0 %v5731
        %6532 = vmatpush.bf16.msra.mxu0 %v5723
        %6533 = vmatpush.bf16.msra.mxu0 %v5715
        %6534 = vmatpush.bf16.msra.mxu0 %v5707
        %6535 = vmatpush.bf16.msra.mxu0 %v5699
        %6536 = vmatpush.bf16.msra.mxu0 %v5691
        %6537 = vmatmul.bf16.gmra.mxu0 %v3255
        %v6538 = vpop.f32.mrf.mxu0
        %v6539 = vadd.f32 %v6526, %v6538
        %v6540 = vpop.f32.mrf.mxu0
        %6541 = vdwg.mxu0
        %6542 = vmatpush.bf16.msra.mxu0 %v5811
        %6543 = vmatpush.bf16.msra.mxu0 %v5803
        %6544 = vmatpush.bf16.msra.mxu0 %v5795
        %6545 = vmatpush.bf16.msra.mxu0 %v5787
        %6546 = vmatpush.bf16.msra.mxu0 %v5779
        %6547 = vmatpush.bf16.msra.mxu0 %v5771
        %6548 = vmatpush.bf16.msra.mxu0 %v5763
        %6549 = vmatpush.bf16.msra.mxu0 %v5755
        %6550 = vmatmul.bf16.gmra.mxu0 %v3256
        %v6551 = vpop.f32.mrf.mxu0
        %v6552 = vadd.f32 %v6539, %v6551
        %v6553 = vpop.f32.mrf.mxu0
        %6554 = vdwg.mxu0
        %6555 = vmatpush.bf16.msra.mxu0 %v5364
        %6556 = vmatpush.bf16.msra.mxu0 %v5356
        %6557 = vmatpush.bf16.msra.mxu0 %v5348
        %6558 = vmatpush.bf16.msra.mxu0 %v5340
        %6559 = vmatpush.bf16.msra.mxu0 %v5332
        %6560 = vmatpush.bf16.msra.mxu0 %v5324
        %6561 = vmatpush.bf16.msra.mxu0 %v5316
        %6562 = vmatpush.bf16.msra.mxu0 %v5308
        %6563 = vmatmul.bf16.gmra.mxu0 %v3249
        %v6564 = vpop.f32.mrf.mxu0
        %v6565 = vadd.f32 %v6333, %v6564
        %v6566 = vpop.f32.mrf.mxu0
        %6567 = vdwg.mxu0
        %6568 = vmatpush.bf16.msra.mxu0 %v5428
        %6569 = vmatpush.bf16.msra.mxu0 %v5420
        %6570 = vmatpush.bf16.msra.mxu0 %v5412
        %6571 = vmatpush.bf16.msra.mxu0 %v5404
        %6572 = vmatpush.bf16.msra.mxu0 %v5396
        %6573 = vmatpush.bf16.msra.mxu0 %v5388
        %6574 = vmatpush.bf16.msra.mxu0 %v5380
        %6575 = vmatpush.bf16.msra.mxu0 %v5372
        %6576 = vmatmul.bf16.gmra.mxu0 %v3250
        %v6577 = vpop.f32.mrf.mxu0
        %v6578 = vadd.f32 %v6565, %v6577
        %v6579 = vpop.f32.mrf.mxu0
        %6580 = vdwg.mxu0
        %6581 = vmatpush.bf16.msra.mxu0 %v5492
        %6582 = vmatpush.bf16.msra.mxu0 %v5484
        %6583 = vmatpush.bf16.msra.mxu0 %v5476
        %6584 = vmatpush.bf16.msra.mxu0 %v5468
        %6585 = vmatpush.bf16.msra.mxu0 %v5460
        %6586 = vmatpush.bf16.msra.mxu0 %v5452
        %6587 = vmatpush.bf16.msra.mxu0 %v5444
        %6588 = vmatpush.bf16.msra.mxu0 %v5436
        %6589 = vmatmul.bf16.gmra.mxu0 %v3251
        %v6590 = vpop.f32.mrf.mxu0
        %v6591 = vadd.f32 %v6578, %v6590
        %v6592 = vpop.f32.mrf.mxu0
        %6593 = vdwg.mxu0
        %6594 = vmatpush.bf16.msra.mxu0 %v5556
        %6595 = vmatpush.bf16.msra.mxu0 %v5548
        %6596 = vmatpush.bf16.msra.mxu0 %v5540
        %6597 = vmatpush.bf16.msra.mxu0 %v5532
        %6598 = vmatpush.bf16.msra.mxu0 %v5524
        %6599 = vmatpush.bf16.msra.mxu0 %v5516
        %6600 = vmatpush.bf16.msra.mxu0 %v5508
        %6601 = vmatpush.bf16.msra.mxu0 %v5500
        %6602 = vmatmul.bf16.gmra.mxu0 %v3252
        %v6603 = vpop.f32.mrf.mxu0
        %v6604 = vadd.f32 %v6591, %v6603
        %v6605 = vpop.f32.mrf.mxu0
        %6606 = vdwg.mxu0
        %6607 = vmatpush.bf16.msra.mxu0 %v5620
        %6608 = vmatpush.bf16.msra.mxu0 %v5612
        %6609 = vmatpush.bf16.msra.mxu0 %v5604
        %6610 = vmatpush.bf16.msra.mxu0 %v5596
        %6611 = vmatpush.bf16.msra.mxu0 %v5588
        %6612 = vmatpush.bf16.msra.mxu0 %v5580
        %6613 = vmatpush.bf16.msra.mxu0 %v5572
        %6614 = vmatpush.bf16.msra.mxu0 %v5564
        %6615 = vmatmul.bf16.gmra.mxu0 %v3253
        %v6616 = vpop.f32.mrf.mxu0
        %v6617 = vadd.f32 %v6604, %v6616
        %v6618 = vpop.f32.mrf.mxu0
        %6619 = vdwg.mxu0
        %6620 = vmatpush.bf16.msra.mxu0 %v5684
        %6621 = vmatpush.bf16.msra.mxu0 %v5676
        %6622 = vmatpush.bf16.msra.mxu0 %v5668
        %6623 = vmatpush.bf16.msra.mxu0 %v5660
        %6624 = vmatpush.bf16.msra.mxu0 %v5652
        %6625 = vmatpush.bf16.msra.mxu0 %v5644
        %6626 = vmatpush.bf16.msra.mxu0 %v5636
        %6627 = vmatpush.bf16.msra.mxu0 %v5628
        %6628 = vmatmul.bf16.gmra.mxu0 %v3254
        %v6629 = vpop.f32.mrf.mxu0
        %v6630 = vadd.f32 %v6617, %v6629
        %v6631 = vpop.f32.mrf.mxu0
        %6632 = vdwg.mxu0
        %6633 = vmatpush.bf16.msra.mxu0 %v5748
        %6634 = vmatpush.bf16.msra.mxu0 %v5740
        %6635 = vmatpush.bf16.msra.mxu0 %v5732
        %6636 = vmatpush.bf16.msra.mxu0 %v5724
        %6637 = vmatpush.bf16.msra.mxu0 %v5716
        %6638 = vmatpush.bf16.msra.mxu0 %v5708
        %6639 = vmatpush.bf16.msra.mxu0 %v5700
        %6640 = vmatpush.bf16.msra.mxu0 %v5692
        %6641 = vmatmul.bf16.gmra.mxu0 %v3255
        %v6642 = vpop.f32.mrf.mxu0
        %v6643 = vadd.f32 %v6630, %v6642
        %v6644 = vpop.f32.mrf.mxu0
        %6645 = vdwg.mxu0
        %6646 = vmatpush.bf16.msra.mxu0 %v5812
        %6647 = vmatpush.bf16.msra.mxu0 %v5804
        %6648 = vmatpush.bf16.msra.mxu0 %v5796
        %6649 = vmatpush.bf16.msra.mxu0 %v5788
        %6650 = vmatpush.bf16.msra.mxu0 %v5780
        %6651 = vmatpush.bf16.msra.mxu0 %v5772
        %6652 = vmatpush.bf16.msra.mxu0 %v5764
        %6653 = vmatpush.bf16.msra.mxu0 %v5756
        %6654 = vmatmul.bf16.gmra.mxu0 %v3256
        %v6655 = vpop.f32.mrf.mxu0
        %v6656 = vadd.f32 %v6643, %v6655
        %v6657 = vpop.f32.mrf.mxu0
        %6658 = vdwg.mxu0
        %6659 = vmatpush.bf16.msra.mxu0 %v5365
        %6660 = vmatpush.bf16.msra.mxu0 %v5357
        %6661 = vmatpush.bf16.msra.mxu0 %v5349
        %6662 = vmatpush.bf16.msra.mxu0 %v5341
        %6663 = vmatpush.bf16.msra.mxu0 %v5333
        %6664 = vmatpush.bf16.msra.mxu0 %v5325
        %6665 = vmatpush.bf16.msra.mxu0 %v5317
        %6666 = vmatpush.bf16.msra.mxu0 %v5309
        %6667 = vmatmul.bf16.gmra.mxu0 %v3249
        %v6668 = vpop.f32.mrf.mxu0
        %v6669 = vadd.f32 %v6334, %v6668
        %v6670 = vpop.f32.mrf.mxu0
        %6671 = vdwg.mxu0
        %6672 = vmatpush.bf16.msra.mxu0 %v5429
        %6673 = vmatpush.bf16.msra.mxu0 %v5421
        %6674 = vmatpush.bf16.msra.mxu0 %v5413
        %6675 = vmatpush.bf16.msra.mxu0 %v5405
        %6676 = vmatpush.bf16.msra.mxu0 %v5397
        %6677 = vmatpush.bf16.msra.mxu0 %v5389
        %6678 = vmatpush.bf16.msra.mxu0 %v5381
        %6679 = vmatpush.bf16.msra.mxu0 %v5373
        %6680 = vmatmul.bf16.gmra.mxu0 %v3250
        %v6681 = vpop.f32.mrf.mxu0
        %v6682 = vadd.f32 %v6669, %v6681
        %v6683 = vpop.f32.mrf.mxu0
        %6684 = vdwg.mxu0
        %6685 = vmatpush.bf16.msra.mxu0 %v5493
        %6686 = vmatpush.bf16.msra.mxu0 %v5485
        %6687 = vmatpush.bf16.msra.mxu0 %v5477
        %6688 = vmatpush.bf16.msra.mxu0 %v5469
        %6689 = vmatpush.bf16.msra.mxu0 %v5461
        %6690 = vmatpush.bf16.msra.mxu0 %v5453
        %6691 = vmatpush.bf16.msra.mxu0 %v5445
        %6692 = vmatpush.bf16.msra.mxu0 %v5437
        %6693 = vmatmul.bf16.gmra.mxu0 %v3251
        %v6694 = vpop.f32.mrf.mxu0
        %v6695 = vadd.f32 %v6682, %v6694
        %v6696 = vpop.f32.mrf.mxu0
        %6697 = vdwg.mxu0
        %6698 = vmatpush.bf16.msra.mxu0 %v5557
        %6699 = vmatpush.bf16.msra.mxu0 %v5549
        %6700 = vmatpush.bf16.msra.mxu0 %v5541
        %6701 = vmatpush.bf16.msra.mxu0 %v5533
        %6702 = vmatpush.bf16.msra.mxu0 %v5525
        %6703 = vmatpush.bf16.msra.mxu0 %v5517
        %6704 = vmatpush.bf16.msra.mxu0 %v5509
        %6705 = vmatpush.bf16.msra.mxu0 %v5501
        %6706 = vmatmul.bf16.gmra.mxu0 %v3252
        %v6707 = vpop.f32.mrf.mxu0
        %v6708 = vadd.f32 %v6695, %v6707
        %v6709 = vpop.f32.mrf.mxu0
        %6710 = vdwg.mxu0
        %6711 = vmatpush.bf16.msra.mxu0 %v5621
        %6712 = vmatpush.bf16.msra.mxu0 %v5613
        %6713 = vmatpush.bf16.msra.mxu0 %v5605
        %6714 = vmatpush.bf16.msra.mxu0 %v5597
        %6715 = vmatpush.bf16.msra.mxu0 %v5589
        %6716 = vmatpush.bf16.msra.mxu0 %v5581
        %6717 = vmatpush.bf16.msra.mxu0 %v5573
        %6718 = vmatpush.bf16.msra.mxu0 %v5565
        %6719 = vmatmul.bf16.gmra.mxu0 %v3253
        %v6720 = vpop.f32.mrf.mxu0
        %v6721 = vadd.f32 %v6708, %v6720
        %v6722 = vpop.f32.mrf.mxu0
        %6723 = vdwg.mxu0
        %6724 = vmatpush.bf16.msra.mxu0 %v5685
        %6725 = vmatpush.bf16.msra.mxu0 %v5677
        %6726 = vmatpush.bf16.msra.mxu0 %v5669
        %6727 = vmatpush.bf16.msra.mxu0 %v5661
        %6728 = vmatpush.bf16.msra.mxu0 %v5653
        %6729 = vmatpush.bf16.msra.mxu0 %v5645
        %6730 = vmatpush.bf16.msra.mxu0 %v5637
        %6731 = vmatpush.bf16.msra.mxu0 %v5629
        %6732 = vmatmul.bf16.gmra.mxu0 %v3254
        %v6733 = vpop.f32.mrf.mxu0
        %v6734 = vadd.f32 %v6721, %v6733
        %v6735 = vpop.f32.mrf.mxu0
        %6736 = vdwg.mxu0
        %6737 = vmatpush.bf16.msra.mxu0 %v5749
        %6738 = vmatpush.bf16.msra.mxu0 %v5741
        %6739 = vmatpush.bf16.msra.mxu0 %v5733
        %6740 = vmatpush.bf16.msra.mxu0 %v5725
        %6741 = vmatpush.bf16.msra.mxu0 %v5717
        %6742 = vmatpush.bf16.msra.mxu0 %v5709
        %6743 = vmatpush.bf16.msra.mxu0 %v5701
        %6744 = vmatpush.bf16.msra.mxu0 %v5693
        %6745 = vmatmul.bf16.gmra.mxu0 %v3255
        %v6746 = vpop.f32.mrf.mxu0
        %v6747 = vadd.f32 %v6734, %v6746
        %v6748 = vpop.f32.mrf.mxu0
        %6749 = vdwg.mxu0
        %6750 = vmatpush.bf16.msra.mxu0 %v5813
        %6751 = vmatpush.bf16.msra.mxu0 %v5805
        %6752 = vmatpush.bf16.msra.mxu0 %v5797
        %6753 = vmatpush.bf16.msra.mxu0 %v5789
        %6754 = vmatpush.bf16.msra.mxu0 %v5781
        %6755 = vmatpush.bf16.msra.mxu0 %v5773
        %6756 = vmatpush.bf16.msra.mxu0 %v5765
        %6757 = vmatpush.bf16.msra.mxu0 %v5757
        %6758 = vmatmul.bf16.gmra.mxu0 %v3256
        %v6759 = vpop.f32.mrf.mxu0
        %v6760 = vadd.f32 %v6747, %v6759
        %v6761 = vpop.f32.mrf.mxu0
        %6762 = vdwg.mxu0
        %6763 = vmatpush.bf16.msra.mxu0 %v5366
        %6764 = vmatpush.bf16.msra.mxu0 %v5358
        %6765 = vmatpush.bf16.msra.mxu0 %v5350
        %6766 = vmatpush.bf16.msra.mxu0 %v5342
        %6767 = vmatpush.bf16.msra.mxu0 %v5334
        %6768 = vmatpush.bf16.msra.mxu0 %v5326
        %6769 = vmatpush.bf16.msra.mxu0 %v5318
        %6770 = vmatpush.bf16.msra.mxu0 %v5310
        %6771 = vmatmul.bf16.gmra.mxu0 %v3249
        %v6772 = vpop.f32.mrf.mxu0
        %v6773 = vadd.f32 %v6335, %v6772
        %v6774 = vpop.f32.mrf.mxu0
        %6775 = vdwg.mxu0
        %6776 = vmatpush.bf16.msra.mxu0 %v5430
        %6777 = vmatpush.bf16.msra.mxu0 %v5422
        %6778 = vmatpush.bf16.msra.mxu0 %v5414
        %6779 = vmatpush.bf16.msra.mxu0 %v5406
        %6780 = vmatpush.bf16.msra.mxu0 %v5398
        %6781 = vmatpush.bf16.msra.mxu0 %v5390
        %6782 = vmatpush.bf16.msra.mxu0 %v5382
        %6783 = vmatpush.bf16.msra.mxu0 %v5374
        %6784 = vmatmul.bf16.gmra.mxu0 %v3250
        %v6785 = vpop.f32.mrf.mxu0
        %v6786 = vadd.f32 %v6773, %v6785
        %v6787 = vpop.f32.mrf.mxu0
        %6788 = vdwg.mxu0
        %6789 = vmatpush.bf16.msra.mxu0 %v5494
        %6790 = vmatpush.bf16.msra.mxu0 %v5486
        %6791 = vmatpush.bf16.msra.mxu0 %v5478
        %6792 = vmatpush.bf16.msra.mxu0 %v5470
        %6793 = vmatpush.bf16.msra.mxu0 %v5462
        %6794 = vmatpush.bf16.msra.mxu0 %v5454
        %6795 = vmatpush.bf16.msra.mxu0 %v5446
        %6796 = vmatpush.bf16.msra.mxu0 %v5438
        %6797 = vmatmul.bf16.gmra.mxu0 %v3251
        %v6798 = vpop.f32.mrf.mxu0
        %v6799 = vadd.f32 %v6786, %v6798
        %v6800 = vpop.f32.mrf.mxu0
        %6801 = vdwg.mxu0
        %6802 = vmatpush.bf16.msra.mxu0 %v5558
        %6803 = vmatpush.bf16.msra.mxu0 %v5550
        %6804 = vmatpush.bf16.msra.mxu0 %v5542
        %6805 = vmatpush.bf16.msra.mxu0 %v5534
        %6806 = vmatpush.bf16.msra.mxu0 %v5526
        %6807 = vmatpush.bf16.msra.mxu0 %v5518
        %6808 = vmatpush.bf16.msra.mxu0 %v5510
        %6809 = vmatpush.bf16.msra.mxu0 %v5502
        %6810 = vmatmul.bf16.gmra.mxu0 %v3252
        %v6811 = vpop.f32.mrf.mxu0
        %v6812 = vadd.f32 %v6799, %v6811
        %v6813 = vpop.f32.mrf.mxu0
        %6814 = vdwg.mxu0
        %6815 = vmatpush.bf16.msra.mxu0 %v5622
        %6816 = vmatpush.bf16.msra.mxu0 %v5614
        %6817 = vmatpush.bf16.msra.mxu0 %v5606
        %6818 = vmatpush.bf16.msra.mxu0 %v5598
        %6819 = vmatpush.bf16.msra.mxu0 %v5590
        %6820 = vmatpush.bf16.msra.mxu0 %v5582
        %6821 = vmatpush.bf16.msra.mxu0 %v5574
        %6822 = vmatpush.bf16.msra.mxu0 %v5566
        %6823 = vmatmul.bf16.gmra.mxu0 %v3253
        %v6824 = vpop.f32.mrf.mxu0
        %v6825 = vadd.f32 %v6812, %v6824
        %v6826 = vpop.f32.mrf.mxu0
        %6827 = vdwg.mxu0
        %6828 = vmatpush.bf16.msra.mxu0 %v5686
        %6829 = vmatpush.bf16.msra.mxu0 %v5678
        %6830 = vmatpush.bf16.msra.mxu0 %v5670
        %6831 = vmatpush.bf16.msra.mxu0 %v5662
        %6832 = vmatpush.bf16.msra.mxu0 %v5654
        %6833 = vmatpush.bf16.msra.mxu0 %v5646
        %6834 = vmatpush.bf16.msra.mxu0 %v5638
        %6835 = vmatpush.bf16.msra.mxu0 %v5630
        %6836 = vmatmul.bf16.gmra.mxu0 %v3254
        %v6837 = vpop.f32.mrf.mxu0
        %v6838 = vadd.f32 %v6825, %v6837
        %v6839 = vpop.f32.mrf.mxu0
        %6840 = vdwg.mxu0
        %6841 = vmatpush.bf16.msra.mxu0 %v5750
        %6842 = vmatpush.bf16.msra.mxu0 %v5742
        %6843 = vmatpush.bf16.msra.mxu0 %v5734
        %6844 = vmatpush.bf16.msra.mxu0 %v5726
        %6845 = vmatpush.bf16.msra.mxu0 %v5718
        %6846 = vmatpush.bf16.msra.mxu0 %v5710
        %6847 = vmatpush.bf16.msra.mxu0 %v5702
        %6848 = vmatpush.bf16.msra.mxu0 %v5694
        %6849 = vmatmul.bf16.gmra.mxu0 %v3255
        %v6850 = vpop.f32.mrf.mxu0
        %v6851 = vadd.f32 %v6838, %v6850
        %v6852 = vpop.f32.mrf.mxu0
        %6853 = vdwg.mxu0
        %6854 = vmatpush.bf16.msra.mxu0 %v5814
        %6855 = vmatpush.bf16.msra.mxu0 %v5806
        %6856 = vmatpush.bf16.msra.mxu0 %v5798
        %6857 = vmatpush.bf16.msra.mxu0 %v5790
        %6858 = vmatpush.bf16.msra.mxu0 %v5782
        %6859 = vmatpush.bf16.msra.mxu0 %v5774
        %6860 = vmatpush.bf16.msra.mxu0 %v5766
        %6861 = vmatpush.bf16.msra.mxu0 %v5758
        %6862 = vmatmul.bf16.gmra.mxu0 %v3256
        %v6863 = vpop.f32.mrf.mxu0
        %v6864 = vadd.f32 %v6851, %v6863
        %v6865 = vpop.f32.mrf.mxu0
        %6866 = vdwg.mxu0
        %6867 = vmatpush.bf16.msra.mxu0 %v5367
        %6868 = vmatpush.bf16.msra.mxu0 %v5359
        %6869 = vmatpush.bf16.msra.mxu0 %v5351
        %6870 = vmatpush.bf16.msra.mxu0 %v5343
        %6871 = vmatpush.bf16.msra.mxu0 %v5335
        %6872 = vmatpush.bf16.msra.mxu0 %v5327
        %6873 = vmatpush.bf16.msra.mxu0 %v5319
        %6874 = vmatpush.bf16.msra.mxu0 %v5311
        %6875 = vmatmul.bf16.gmra.mxu0 %v3249
        %v6876 = vpop.f32.mrf.mxu0
        %v6877 = vadd.f32 %v6336, %v6876
        %v6878 = vpop.f32.mrf.mxu0
        %6879 = vdwg.mxu0
        %6880 = vmatpush.bf16.msra.mxu0 %v5431
        %6881 = vmatpush.bf16.msra.mxu0 %v5423
        %6882 = vmatpush.bf16.msra.mxu0 %v5415
        %6883 = vmatpush.bf16.msra.mxu0 %v5407
        %6884 = vmatpush.bf16.msra.mxu0 %v5399
        %6885 = vmatpush.bf16.msra.mxu0 %v5391
        %6886 = vmatpush.bf16.msra.mxu0 %v5383
        %6887 = vmatpush.bf16.msra.mxu0 %v5375
        %6888 = vmatmul.bf16.gmra.mxu0 %v3250
        %v6889 = vpop.f32.mrf.mxu0
        %v6890 = vadd.f32 %v6877, %v6889
        %v6891 = vpop.f32.mrf.mxu0
        %6892 = vdwg.mxu0
        %6893 = vmatpush.bf16.msra.mxu0 %v5495
        %6894 = vmatpush.bf16.msra.mxu0 %v5487
        %6895 = vmatpush.bf16.msra.mxu0 %v5479
        %6896 = vmatpush.bf16.msra.mxu0 %v5471
        %6897 = vmatpush.bf16.msra.mxu0 %v5463
        %6898 = vmatpush.bf16.msra.mxu0 %v5455
        %6899 = vmatpush.bf16.msra.mxu0 %v5447
        %6900 = vmatpush.bf16.msra.mxu0 %v5439
        %6901 = vmatmul.bf16.gmra.mxu0 %v3251
        %v6902 = vpop.f32.mrf.mxu0
        %v6903 = vadd.f32 %v6890, %v6902
        %v6904 = vpop.f32.mrf.mxu0
        %6905 = vdwg.mxu0
        %6906 = vmatpush.bf16.msra.mxu0 %v5559
        %6907 = vmatpush.bf16.msra.mxu0 %v5551
        %6908 = vmatpush.bf16.msra.mxu0 %v5543
        %6909 = vmatpush.bf16.msra.mxu0 %v5535
        %6910 = vmatpush.bf16.msra.mxu0 %v5527
        %6911 = vmatpush.bf16.msra.mxu0 %v5519
        %6912 = vmatpush.bf16.msra.mxu0 %v5511
        %6913 = vmatpush.bf16.msra.mxu0 %v5503
        %6914 = vmatmul.bf16.gmra.mxu0 %v3252
        %v6915 = vpop.f32.mrf.mxu0
        %v6916 = vadd.f32 %v6903, %v6915
        %v6917 = vpop.f32.mrf.mxu0
        %6918 = vdwg.mxu0
        %6919 = vmatpush.bf16.msra.mxu0 %v5623
        %6920 = vmatpush.bf16.msra.mxu0 %v5615
        %6921 = vmatpush.bf16.msra.mxu0 %v5607
        %6922 = vmatpush.bf16.msra.mxu0 %v5599
        %6923 = vmatpush.bf16.msra.mxu0 %v5591
        %6924 = vmatpush.bf16.msra.mxu0 %v5583
        %6925 = vmatpush.bf16.msra.mxu0 %v5575
        %6926 = vmatpush.bf16.msra.mxu0 %v5567
        %6927 = vmatmul.bf16.gmra.mxu0 %v3253
        %v6928 = vpop.f32.mrf.mxu0
        %v6929 = vadd.f32 %v6916, %v6928
        %v6930 = vpop.f32.mrf.mxu0
        %6931 = vdwg.mxu0
        %6932 = vmatpush.bf16.msra.mxu0 %v5687
        %6933 = vmatpush.bf16.msra.mxu0 %v5679
        %6934 = vmatpush.bf16.msra.mxu0 %v5671
        %6935 = vmatpush.bf16.msra.mxu0 %v5663
        %6936 = vmatpush.bf16.msra.mxu0 %v5655
        %6937 = vmatpush.bf16.msra.mxu0 %v5647
        %6938 = vmatpush.bf16.msra.mxu0 %v5639
        %6939 = vmatpush.bf16.msra.mxu0 %v5631
        %6940 = vmatmul.bf16.gmra.mxu0 %v3254
        %v6941 = vpop.f32.mrf.mxu0
        %v6942 = vadd.f32 %v6929, %v6941
        %v6943 = vpop.f32.mrf.mxu0
        %6944 = vdwg.mxu0
        %6945 = vmatpush.bf16.msra.mxu0 %v5751
        %6946 = vmatpush.bf16.msra.mxu0 %v5743
        %6947 = vmatpush.bf16.msra.mxu0 %v5735
        %6948 = vmatpush.bf16.msra.mxu0 %v5727
        %6949 = vmatpush.bf16.msra.mxu0 %v5719
        %6950 = vmatpush.bf16.msra.mxu0 %v5711
        %6951 = vmatpush.bf16.msra.mxu0 %v5703
        %6952 = vmatpush.bf16.msra.mxu0 %v5695
        %6953 = vmatmul.bf16.gmra.mxu0 %v3255
        %v6954 = vpop.f32.mrf.mxu0
        %v6955 = vadd.f32 %v6942, %v6954
        %v6956 = vpop.f32.mrf.mxu0
        %6957 = vdwg.mxu0
        %6958 = vmatpush.bf16.msra.mxu0 %v5815
        %6959 = vmatpush.bf16.msra.mxu0 %v5807
        %6960 = vmatpush.bf16.msra.mxu0 %v5799
        %6961 = vmatpush.bf16.msra.mxu0 %v5791
        %6962 = vmatpush.bf16.msra.mxu0 %v5783
        %6963 = vmatpush.bf16.msra.mxu0 %v5775
        %6964 = vmatpush.bf16.msra.mxu0 %v5767
        %6965 = vmatpush.bf16.msra.mxu0 %v5759
        %6966 = vmatmul.bf16.gmra.mxu0 %v3256
        %v6967 = vpop.f32.mrf.mxu0
        %v6968 = vadd.f32 %v6955, %v6967
        %v6969 = vpop.f32.mrf.mxu0
        %6970 = vdwg.mxu0
        %6971 = vmatpush.bf16.msra.mxu0 %v5368
        %6972 = vmatpush.bf16.msra.mxu0 %v5360
        %6973 = vmatpush.bf16.msra.mxu0 %v5352
        %6974 = vmatpush.bf16.msra.mxu0 %v5344
        %6975 = vmatpush.bf16.msra.mxu0 %v5336
        %6976 = vmatpush.bf16.msra.mxu0 %v5328
        %6977 = vmatpush.bf16.msra.mxu0 %v5320
        %6978 = vmatpush.bf16.msra.mxu0 %v5312
        %6979 = vmatmul.bf16.gmra.mxu0 %v3249
        %v6980 = vpop.f32.mrf.mxu0
        %v6981 = vadd.f32 %v6337, %v6980
        %v6982 = vpop.f32.mrf.mxu0
        %6983 = vdwg.mxu0
        %6984 = vmatpush.bf16.msra.mxu0 %v5432
        %6985 = vmatpush.bf16.msra.mxu0 %v5424
        %6986 = vmatpush.bf16.msra.mxu0 %v5416
        %6987 = vmatpush.bf16.msra.mxu0 %v5408
        %6988 = vmatpush.bf16.msra.mxu0 %v5400
        %6989 = vmatpush.bf16.msra.mxu0 %v5392
        %6990 = vmatpush.bf16.msra.mxu0 %v5384
        %6991 = vmatpush.bf16.msra.mxu0 %v5376
        %6992 = vmatmul.bf16.gmra.mxu0 %v3250
        %v6993 = vpop.f32.mrf.mxu0
        %v6994 = vadd.f32 %v6981, %v6993
        %v6995 = vpop.f32.mrf.mxu0
        %6996 = vdwg.mxu0
        %6997 = vmatpush.bf16.msra.mxu0 %v5496
        %6998 = vmatpush.bf16.msra.mxu0 %v5488
        %6999 = vmatpush.bf16.msra.mxu0 %v5480
        %7000 = vmatpush.bf16.msra.mxu0 %v5472
        %7001 = vmatpush.bf16.msra.mxu0 %v5464
        %7002 = vmatpush.bf16.msra.mxu0 %v5456
        %7003 = vmatpush.bf16.msra.mxu0 %v5448
        %7004 = vmatpush.bf16.msra.mxu0 %v5440
        %7005 = vmatmul.bf16.gmra.mxu0 %v3251
        %v7006 = vpop.f32.mrf.mxu0
        %v7007 = vadd.f32 %v6994, %v7006
        %v7008 = vpop.f32.mrf.mxu0
        %7009 = vdwg.mxu0
        %7010 = vmatpush.bf16.msra.mxu0 %v5560
        %7011 = vmatpush.bf16.msra.mxu0 %v5552
        %7012 = vmatpush.bf16.msra.mxu0 %v5544
        %7013 = vmatpush.bf16.msra.mxu0 %v5536
        %7014 = vmatpush.bf16.msra.mxu0 %v5528
        %7015 = vmatpush.bf16.msra.mxu0 %v5520
        %7016 = vmatpush.bf16.msra.mxu0 %v5512
        %7017 = vmatpush.bf16.msra.mxu0 %v5504
        %7018 = vmatmul.bf16.gmra.mxu0 %v3252
        %v7019 = vpop.f32.mrf.mxu0
        %v7020 = vadd.f32 %v7007, %v7019
        %v7021 = vpop.f32.mrf.mxu0
        %7022 = vdwg.mxu0
        %7023 = vmatpush.bf16.msra.mxu0 %v5624
        %7024 = vmatpush.bf16.msra.mxu0 %v5616
        %7025 = vmatpush.bf16.msra.mxu0 %v5608
        %7026 = vmatpush.bf16.msra.mxu0 %v5600
        %7027 = vmatpush.bf16.msra.mxu0 %v5592
        %7028 = vmatpush.bf16.msra.mxu0 %v5584
        %7029 = vmatpush.bf16.msra.mxu0 %v5576
        %7030 = vmatpush.bf16.msra.mxu0 %v5568
        %7031 = vmatmul.bf16.gmra.mxu0 %v3253
        %v7032 = vpop.f32.mrf.mxu0
        %v7033 = vadd.f32 %v7020, %v7032
        %v7034 = vpop.f32.mrf.mxu0
        %7035 = vdwg.mxu0
        %7036 = vmatpush.bf16.msra.mxu0 %v5688
        %7037 = vmatpush.bf16.msra.mxu0 %v5680
        %7038 = vmatpush.bf16.msra.mxu0 %v5672
        %7039 = vmatpush.bf16.msra.mxu0 %v5664
        %7040 = vmatpush.bf16.msra.mxu0 %v5656
        %7041 = vmatpush.bf16.msra.mxu0 %v5648
        %7042 = vmatpush.bf16.msra.mxu0 %v5640
        %7043 = vmatpush.bf16.msra.mxu0 %v5632
        %7044 = vmatmul.bf16.gmra.mxu0 %v3254
        %v7045 = vpop.f32.mrf.mxu0
        %v7046 = vadd.f32 %v7033, %v7045
        %v7047 = vpop.f32.mrf.mxu0
        %7048 = vdwg.mxu0
        %7049 = vmatpush.bf16.msra.mxu0 %v5752
        %7050 = vmatpush.bf16.msra.mxu0 %v5744
        %7051 = vmatpush.bf16.msra.mxu0 %v5736
        %7052 = vmatpush.bf16.msra.mxu0 %v5728
        %7053 = vmatpush.bf16.msra.mxu0 %v5720
        %7054 = vmatpush.bf16.msra.mxu0 %v5712
        %7055 = vmatpush.bf16.msra.mxu0 %v5704
        %7056 = vmatpush.bf16.msra.mxu0 %v5696
        %7057 = vmatmul.bf16.gmra.mxu0 %v3255
        %v7058 = vpop.f32.mrf.mxu0
        %v7059 = vadd.f32 %v7046, %v7058
        %v7060 = vpop.f32.mrf.mxu0
        %7061 = vdwg.mxu0
        %7062 = vmatpush.bf16.msra.mxu0 %v5816
        %7063 = vmatpush.bf16.msra.mxu0 %v5808
        %7064 = vmatpush.bf16.msra.mxu0 %v5800
        %7065 = vmatpush.bf16.msra.mxu0 %v5792
        %7066 = vmatpush.bf16.msra.mxu0 %v5784
        %7067 = vmatpush.bf16.msra.mxu0 %v5776
        %7068 = vmatpush.bf16.msra.mxu0 %v5768
        %7069 = vmatpush.bf16.msra.mxu0 %v5760
        %7070 = vmatmul.bf16.gmra.mxu0 %v3256
        %v7071 = vpop.f32.mrf.mxu0
        %v7072 = vadd.f32 %v7059, %v7071
        %v7073 = vpop.f32.mrf.mxu0
        %7074 = vdwg.mxu0
        %7075 = vmatpush.bf16.msra.mxu0 %v5369
        %7076 = vmatpush.bf16.msra.mxu0 %v5361
        %7077 = vmatpush.bf16.msra.mxu0 %v5353
        %7078 = vmatpush.bf16.msra.mxu0 %v5345
        %7079 = vmatpush.bf16.msra.mxu0 %v5337
        %7080 = vmatpush.bf16.msra.mxu0 %v5329
        %7081 = vmatpush.bf16.msra.mxu0 %v5321
        %7082 = vmatpush.bf16.msra.mxu0 %v5313
        %7083 = vmatmul.bf16.gmra.mxu0 %v3249
        %v7084 = vpop.f32.mrf.mxu0
        %v7085 = vadd.f32 %v6338, %v7084
        %v7086 = vpop.f32.mrf.mxu0
        %7087 = vdwg.mxu0
        %7088 = vmatpush.bf16.msra.mxu0 %v5433
        %7089 = vmatpush.bf16.msra.mxu0 %v5425
        %7090 = vmatpush.bf16.msra.mxu0 %v5417
        %7091 = vmatpush.bf16.msra.mxu0 %v5409
        %7092 = vmatpush.bf16.msra.mxu0 %v5401
        %7093 = vmatpush.bf16.msra.mxu0 %v5393
        %7094 = vmatpush.bf16.msra.mxu0 %v5385
        %7095 = vmatpush.bf16.msra.mxu0 %v5377
        %7096 = vmatmul.bf16.gmra.mxu0 %v3250
        %v7097 = vpop.f32.mrf.mxu0
        %v7098 = vadd.f32 %v7085, %v7097
        %v7099 = vpop.f32.mrf.mxu0
        %7100 = vdwg.mxu0
        %7101 = vmatpush.bf16.msra.mxu0 %v5497
        %7102 = vmatpush.bf16.msra.mxu0 %v5489
        %7103 = vmatpush.bf16.msra.mxu0 %v5481
        %7104 = vmatpush.bf16.msra.mxu0 %v5473
        %7105 = vmatpush.bf16.msra.mxu0 %v5465
        %7106 = vmatpush.bf16.msra.mxu0 %v5457
        %7107 = vmatpush.bf16.msra.mxu0 %v5449
        %7108 = vmatpush.bf16.msra.mxu0 %v5441
        %7109 = vmatmul.bf16.gmra.mxu0 %v3251
        %v7110 = vpop.f32.mrf.mxu0
        %v7111 = vadd.f32 %v7098, %v7110
        %v7112 = vpop.f32.mrf.mxu0
        %7113 = vdwg.mxu0
        %7114 = vmatpush.bf16.msra.mxu0 %v5561
        %7115 = vmatpush.bf16.msra.mxu0 %v5553
        %7116 = vmatpush.bf16.msra.mxu0 %v5545
        %7117 = vmatpush.bf16.msra.mxu0 %v5537
        %7118 = vmatpush.bf16.msra.mxu0 %v5529
        %7119 = vmatpush.bf16.msra.mxu0 %v5521
        %7120 = vmatpush.bf16.msra.mxu0 %v5513
        %7121 = vmatpush.bf16.msra.mxu0 %v5505
        %7122 = vmatmul.bf16.gmra.mxu0 %v3252
        %v7123 = vpop.f32.mrf.mxu0
        %v7124 = vadd.f32 %v7111, %v7123
        %v7125 = vpop.f32.mrf.mxu0
        %7126 = vdwg.mxu0
        %7127 = vmatpush.bf16.msra.mxu0 %v5625
        %7128 = vmatpush.bf16.msra.mxu0 %v5617
        %7129 = vmatpush.bf16.msra.mxu0 %v5609
        %7130 = vmatpush.bf16.msra.mxu0 %v5601
        %7131 = vmatpush.bf16.msra.mxu0 %v5593
        %7132 = vmatpush.bf16.msra.mxu0 %v5585
        %7133 = vmatpush.bf16.msra.mxu0 %v5577
        %7134 = vmatpush.bf16.msra.mxu0 %v5569
        %7135 = vmatmul.bf16.gmra.mxu0 %v3253
        %v7136 = vpop.f32.mrf.mxu0
        %v7137 = vadd.f32 %v7124, %v7136
        %v7138 = vpop.f32.mrf.mxu0
        %7139 = vdwg.mxu0
        %7140 = vmatpush.bf16.msra.mxu0 %v5689
        %7141 = vmatpush.bf16.msra.mxu0 %v5681
        %7142 = vmatpush.bf16.msra.mxu0 %v5673
        %7143 = vmatpush.bf16.msra.mxu0 %v5665
        %7144 = vmatpush.bf16.msra.mxu0 %v5657
        %7145 = vmatpush.bf16.msra.mxu0 %v5649
        %7146 = vmatpush.bf16.msra.mxu0 %v5641
        %7147 = vmatpush.bf16.msra.mxu0 %v5633
        %7148 = vmatmul.bf16.gmra.mxu0 %v3254
        %v7149 = vpop.f32.mrf.mxu0
        %v7150 = vadd.f32 %v7137, %v7149
        %v7151 = vpop.f32.mrf.mxu0
        %7152 = vdwg.mxu0
        %7153 = vmatpush.bf16.msra.mxu0 %v5753
        %7154 = vmatpush.bf16.msra.mxu0 %v5745
        %7155 = vmatpush.bf16.msra.mxu0 %v5737
        %7156 = vmatpush.bf16.msra.mxu0 %v5729
        %7157 = vmatpush.bf16.msra.mxu0 %v5721
        %7158 = vmatpush.bf16.msra.mxu0 %v5713
        %7159 = vmatpush.bf16.msra.mxu0 %v5705
        %7160 = vmatpush.bf16.msra.mxu0 %v5697
        %7161 = vmatmul.bf16.gmra.mxu0 %v3255
        %v7162 = vpop.f32.mrf.mxu0
        %v7163 = vadd.f32 %v7150, %v7162
        %v7164 = vpop.f32.mrf.mxu0
        %7165 = vdwg.mxu0
        %7166 = vmatpush.bf16.msra.mxu0 %v5817
        %7167 = vmatpush.bf16.msra.mxu0 %v5809
        %7168 = vmatpush.bf16.msra.mxu0 %v5801
        %7169 = vmatpush.bf16.msra.mxu0 %v5793
        %7170 = vmatpush.bf16.msra.mxu0 %v5785
        %7171 = vmatpush.bf16.msra.mxu0 %v5777
        %7172 = vmatpush.bf16.msra.mxu0 %v5769
        %7173 = vmatpush.bf16.msra.mxu0 %v5761
        %7174 = vmatmul.bf16.gmra.mxu0 %v3256
        %v7175 = vpop.f32.mrf.mxu0
        %v7176 = vadd.f32 %v7163, %v7175
        %v7177 = vpop.f32.mrf.mxu0
        %7178 = vdwg.mxu0
        %v7179 = vsub.f32 0.0, %v6448
        %v7180 = vsub.f32 0.0, %v6552
        %v7181 = vsub.f32 0.0, %v6656
        %v7182 = vsub.f32 0.0, %v6760
        %v7183 = vsub.f32 0.0, %v6864
        %v7184 = vsub.f32 0.0, %v6968
        %v7185 = vsub.f32 0.0, %v7072
        %v7186 = vsub.f32 0.0, %v7176
        %v7187 = vmul.f32 %v7179, 1.442695
        %v7188 = vpow.pop %v7187
        %v7189 = vmul.f32 %v7180, 1.442695
        %v7190 = vpow.pop %v7189
        %v7191 = vmul.f32 %v7181, 1.442695
        %v7192 = vpow.pop %v7191
        %v7193 = vmul.f32 %v7182, 1.442695
        %v7194 = vpow.pop %v7193
        %v7195 = vmul.f32 %v7183, 1.442695
        %v7196 = vpow.pop %v7195
        %v7197 = vmul.f32 %v7184, 1.442695
        %v7198 = vpow.pop %v7197
        %v7199 = vmul.f32 %v7185, 1.442695
        %v7200 = vpow.pop %v7199
        %v7201 = vmul.f32 %v7186, 1.442695
        %v7202 = vpow.pop %v7201
        %v7203 = vadd.f32 %v7188, 1.0
        %v7204 = vadd.f32 %v7190, 1.0
        %v7205 = vadd.f32 %v7192, 1.0
        %v7206 = vadd.f32 %v7194, 1.0
        %v7207 = vadd.f32 %v7196, 1.0
        %v7208 = vadd.f32 %v7198, 1.0
        %v7209 = vadd.f32 %v7200, 1.0
        %v7210 = vadd.f32 %v7202, 1.0
        %v7211 = vrcp.pop %v7203
        %v7212 = vrcp.pop %v7204
        %v7213 = vrcp.pop %v7205
        %v7214 = vrcp.pop %v7206
        %v7215 = vrcp.pop %v7207
        %v7216 = vrcp.pop %v7208
        %v7217 = vrcp.pop %v7209
        %v7218 = vrcp.pop %v7210
        %v7219 = vld [vmem:[%s19] sm:$0xf]
        %v7220 = vld [vmem:[%s19 + $0x4] sm:$0xf]
        %v7221 = vld [vmem:[%s19 + $0x8] sm:$0xf]
        %v7222 = vld [vmem:[%s19 + $0xc] sm:$0xf]
        %v7223 = vld [vmem:[%s20] sm:$0x1]
        %v7228 = vunpack.c.l.b16 %v7219
        %v7229 = vunpack.c.l.b16 %v7220
        %v7230 = vunpack.c.l.b16 %v7221
        %v7231 = vunpack.c.l.b16 %v7222
        %v7232 = vpack.c.b16 %v7229, %v7228
        %v7233 = vpack.c.b16 %v7231, %v7230
        %7236 = vmatpush.bf16.msra.mxu0 0
        %7237 = vmatpush.bf16.msra.mxu0 0
        %7238 = vmatpush.bf16.msra.mxu0 0
        %7239 = vmatpush.bf16.msra.mxu0 0
        %7240 = vmatpush.bf16.msra.mxu0 0
        %7241 = vmatpush.bf16.msra.mxu0 0
        %7242 = vmatpush.bf16.msra.mxu0 %v7233
        %7243 = vmatpush.bf16.msra.mxu0 %v7232
        %7244 = vmatmul.bf16.gmra.mxu0 %v2907
        %v7245 = vpop.f32.mrf.mxu0
        %v7246 = vadd.f32 %v7223, %v7245
        %v7247 = vpop.f32.mrf.mxu0
        %7248 = vdwg.mxu0
        %vm7249 = vcmask 73728
        %v7250 = vsel %vm7249, %v7246, -inf
        %7251 = vmax.xlane.f32.xlu0 %v7250
        %v7252 = vpop.xlane.xlu0 %7251
        %v7253 = vsub.f32 %v7246, %v7252
        %v7254 = vmul.f32 %v7253, 1.442695
        %v7255 = vpow.pop %v7254
        %v7256 = vsel %vm7249, %v7255, 0.0
        %7257 = vadd.xlane.f32.xlu0 %v7256
        %v7258 = vpop.xlane.xlu0 %7257
        %v7259 = vrcp.pop %v7258
        %v7260 = vmul.f32 %v7255, %v7259
        %v7269 = vrot.slane %v7212, 7
        %v7270 = vrot.slane %v7213, 6
        %v7271 = vrot.slane %v7214, 5
        %v7272 = vrot.slane %v7215, 4
        %v7273 = vrot.slane %v7216, 3
        %v7274 = vrot.slane %v7217, 2
        %v7275 = vrot.slane %v7218, 1
        %vm7276 = vcmask 1040384
        %v7277 = vsel %vm7276, %v7211, %v7269
        %vm7278 = vcmask 1042434
        %v7279 = vsel %vm7278, %v7270, %v7271
        %v7280 = vsel %vm997, %v7277, %v7279
        %vm7281 = vcmask 1044484
        %v7282 = vsel %vm7281, %v7272, %v7273
        %vm7283 = vcmask 1046534
        %v7284 = vsel %vm7283, %v7274, %v7275
        %vm7285 = vcmask 1045508
        %v7286 = vsel %vm7285, %v7282, %v7284
        %vm7287 = vcmask 1043456
        %v7288 = vsel %vm7287, %v7280, %v7286
        %7290 = vst [vmem:[%s810] sm:$0xff] %v7288
        %vm7291 = vcmask 253952
        %7292 = vst.msk [vmem:[%s780] sm:$0x1] %vm7291, %v2887
        %7293 = vst.msk [vmem:[%s786] sm:$0x1] %vm7291, %v2843
        %7294 = vst.msk [vmem:[%s792] sm:$0x1] %vm7291, %v2881
        %7295 = vst.msk [vmem:[%s798] sm:$0x1] %vm7249, %v7260
        %p7296 = scmp.lt.s32.totalorder %s46, 1
        %s7297 = scalar_select %p7296, %s46, 1
        %s7298 = smul.addr %s7297, 8
        %s7299 = scalar_lea.vmem %s21, %s7298
        %s7300 = sand.u32 %s531, 1
        %s7301 = scalar_lea.sflag [#allocation3], %s7300
        %s7302 = sand.u32 %s531, 1
        %s7303 = scalar_lea.vmem [#allocation2], %s7302
        %s7304 = sand.u32 %s46, 1
        %s7305 = scalar_lea.sflag [#allocation5], %s7304
        %s7306 = sand.u32 %s557, 1
        %s7307 = scalar_lea.vmem [#allocation4], %s7306
        %s7308 = sand.u32 %s46, 1
        %s7309 = scalar_lea.sflag [#allocation5], %s7308
        %s7310 = sand.u32 %s583, 1
        %s7311 = scalar_lea.vmem [#allocation6], %s7310
        %s7312 = sand.u32 %s609, 1
        %s7313 = scalar_lea.sflag [#allocation8], %s7312
        %s7314 = sand.u32 %s609, 1
        %s7315 = scalar_lea.vmem [#allocation7], %s7314
        // Predicated region
        $region105: #{net_cnn_forward.1} parent=103 // pred_check
          %p7316 = pneg %p515
        $region106: #{net_cnn_forward.1} parent=103 // pred_check_branch
          %7318 = sbr.rel (%p7316) target = $region108
        $region107: #{net_cnn_forward.1} parent=103 // pred_region
          _
        $region108: #{net_cnn_forward.1} parent=103 // pred_fallthru
          _
        // Predicated region
        $region109: #{net_cnn_forward.1} parent=103 // pred_check
          %p7319 = pneg %p541
        $region110: #{net_cnn_forward.1} parent=103 // pred_check_branch
          %7321 = sbr.rel (%p7319) target = $region112
        $region111: #{net_cnn_forward.1} parent=103 // pred_region
          %7323 = vsyncadd %s7301, 0
          %s7324 = scalar_lea.hbm %s22, %s46
          %s7326 = sshll.u32 %s7303, 4
          %s7327 = int_to_ptr.vmem [resolvable:$true] %s7326
          %s7328 = sshll.u32 %s7324, 4
          %s7329 = int_to_ptr.hbm [resolvable:$true] %s7328
          %7331 = dma.vmem_to_hbm [thread:$0]  %s7327, 16, %s7329, %s7301
        $region112: #{net_cnn_forward.1} parent=103 // pred_fallthru
          _
        // Predicated region
        $region113: #{net_cnn_forward.1} parent=103 // pred_check
          %p7332 = pneg %p567
        $region114: #{net_cnn_forward.1} parent=103 // pred_check_branch
          %7334 = sbr.rel (%p7332) target = $region116
        $region115: #{net_cnn_forward.1} parent=103 // pred_region
          %7336 = vsyncadd %s7305, 0
          %s7337 = scalar_lea.hbm %s23, %s46
          %s7339 = sshll.u32 %s7307, 4
          %s7340 = int_to_ptr.vmem [resolvable:$true] %s7339
          %s7341 = sshll.u32 %s7337, 4
          %s7342 = int_to_ptr.hbm [resolvable:$true] %s7341
          %7344 = dma.vmem_to_hbm [thread:$0]  %s7340, 16, %s7342, %s7305
        $region116: #{net_cnn_forward.1} parent=103 // pred_fallthru
          _
        // Predicated region
        $region117: #{net_cnn_forward.1} parent=103 // pred_check
          %p7345 = pneg %p593
        $region118: #{net_cnn_forward.1} parent=103 // pred_check_branch
          %7347 = sbr.rel (%p7345) target = $region120
        $region119: #{net_cnn_forward.1} parent=103 // pred_region
          %7349 = vsyncadd %s7309, 0
          %s7350 = scalar_lea.hbm %s24, %s46
          %s7352 = sshll.u32 %s7311, 4
          %s7353 = int_to_ptr.vmem [resolvable:$true] %s7352
          %s7354 = sshll.u32 %s7350, 4
          %s7355 = int_to_ptr.hbm [resolvable:$true] %s7354
          %7357 = dma.vmem_to_hbm [thread:$0]  %s7353, 16, %s7355, %s7309
        $region120: #{net_cnn_forward.1} parent=103 // pred_fallthru
          _
        // Predicated region
        $region121: #{net_cnn_forward.1} parent=103 // pred_check
          %p7358 = pneg %p619
        $region122: #{net_cnn_forward.1} parent=103 // pred_check_branch
          %7360 = sbr.rel (%p7358) target = $region124
        $region123: #{net_cnn_forward.1} parent=103 // pred_region
          %7362 = vsyncadd %s7313, 0
          %s7363 = scalar_lea.hbm %s25, %s46
          %s7365 = sshll.u32 %s7315, 4
          %s7366 = int_to_ptr.vmem [resolvable:$true] %s7365
          %s7367 = sshll.u32 %s7363, 4
          %s7368 = int_to_ptr.hbm [resolvable:$true] %s7367
          %7370 = dma.vmem_to_hbm [thread:$0]  %s7366, 16, %s7368, %s7313
        $region124: #{net_cnn_forward.1} parent=103 // pred_fallthru
          _
      $region104: #{net_cnn_forward.1} parent=5 // pred_fallthru
        _
      %p7371 = scmp.le.s32.totalorder 2, %s41
      // Predicated region
      $region125: #{net_cnn_forward.1} parent=5 // pred_check
        %p7372 = pneg %p7371
      $region126: #{net_cnn_forward.1} parent=5 // pred_check_branch
        %7374 = sbr.rel (%p7372) target = $region128
      $region127: #{net_cnn_forward.1} parent=5 // pred_region
        %s7375 = ssub.s32 %s41, 2
        // Predicated region
        $region129: #{net_cnn_forward.1} parent=127 // pred_check
          %p7376 = pneg %p521
        $region130: #{net_cnn_forward.1} parent=127 // pred_check_branch
          %7378 = sbr.rel (%p7376) target = $region132
        $region131: #{net_cnn_forward.1} parent=127 // pred_region
          %p7379 = scmp.lt.s32.totalorder %s47, 1
          %s7380 = scalar_select %p7379, %s47, 1
          %s7381 = smul.addr %s7380, 8
          %s7382 = scalar_lea.vmem %s21, %s7381
        $region132: #{net_cnn_forward.1} parent=127 // pred_fallthru
          _
        // Predicated region
        $region133: #{net_cnn_forward.1} parent=127 // pred_check
          %p7383 = pneg %p547
        $region134: #{net_cnn_forward.1} parent=127 // pred_check_branch
          %7385 = sbr.rel (%p7383) target = $region136
        $region135: #{net_cnn_forward.1} parent=127 // pred_region
          %s7386 = sand.u32 %s532, 1
          %s7387 = scalar_lea.sflag [#allocation3], %s7386
          %s7388 = sand.u32 %s532, 1
          %s7389 = scalar_lea.vmem [#allocation2], %s7388
          %7391 = dma.done %s7387, 16
        $region136: #{net_cnn_forward.1} parent=127 // pred_fallthru
          _
        // Predicated region
        $region137: #{net_cnn_forward.1} parent=127 // pred_check
          %p7392 = pneg %p573
        $region138: #{net_cnn_forward.1} parent=127 // pred_check_branch
          %7394 = sbr.rel (%p7392) target = $region140
        $region139: #{net_cnn_forward.1} parent=127 // pred_region
          %s7395 = sand.u32 %s47, 1
          %s7396 = scalar_lea.sflag [#allocation5], %s7395
          %s7397 = sand.u32 %s558, 1
          %s7398 = scalar_lea.vmem [#allocation4], %s7397
          %7400 = dma.done %s7396, 16
        $region140: #{net_cnn_forward.1} parent=127 // pred_fallthru
          _
        // Predicated region
        $region141: #{net_cnn_forward.1} parent=127 // pred_check
          %p7401 = pneg %p599
        $region142: #{net_cnn_forward.1} parent=127 // pred_check_branch
          %7403 = sbr.rel (%p7401) target = $region144
        $region143: #{net_cnn_forward.1} parent=127 // pred_region
          %s7404 = sand.u32 %s47, 1
          %s7405 = scalar_lea.sflag [#allocation5], %s7404
          %s7406 = sand.u32 %s584, 1
          %s7407 = scalar_lea.vmem [#allocation6], %s7406
          %7409 = dma.done %s7405, 16
        $region144: #{net_cnn_forward.1} parent=127 // pred_fallthru
          _
        // Predicated region
        $region145: #{net_cnn_forward.1} parent=127 // pred_check
          %p7410 = pneg %p625
        $region146: #{net_cnn_forward.1} parent=127 // pred_check_branch
          %7412 = sbr.rel (%p7410) target = $region148
        $region147: #{net_cnn_forward.1} parent=127 // pred_region
          %s7413 = sand.u32 %s610, 1
          %s7414 = scalar_lea.sflag [#allocation8], %s7413
          %s7415 = sand.u32 %s610, 1
          %s7416 = scalar_lea.vmem [#allocation7], %s7415
          %7418 = dma.done %s7414, 16
        $region148: #{net_cnn_forward.1} parent=127 // pred_fallthru
          _
      $region128: #{net_cnn_forward.1} parent=5 // pred_fallthru
        _
    $region6: #{net_cnn_forward.1} parent=1 // loop_footer
      %s45 = sadd.s32 1, %s41
    $region7: #{net_cnn_forward.1} parent=1 // loop_footer_branch
      %40 = sbr.rel target = $region3
    $region8: #{net_cnn_forward.1} parent=1 // loop_exit
      _
    %7419 = vsyncpa [#allocation3], 1
    %s7420 = scalar_lea.sflag [#allocation3], 1
    %7421 = vsyncpa %s7420, 1
    %7422 = vsyncpa [#allocation5], 1
    %s7423 = scalar_lea.sflag [#allocation5], 1
    %7424 = vsyncpa %s7423, 1
    %7425 = vsyncpa [#allocation8], 1
    %s7426 = scalar_lea.sflag [#allocation8], 1
    %7427 = vsyncpa %s7426, 1

</llo_original>
